<compile_context>
chip_gen: v5e
topology: v5e:2x2
jax: 0.10.0
libtpu: 0.0.40
codegen_flags: <defaults>
</compile_context>

<pallas_src>
import jax
import jax.numpy as jnp
import numpy as np
from jax.experimental import pallas as pl
from jax.experimental.pallas import tpu as pltpu

EPS = 1e-5


def make_block_kernel(N, H, W, CP, K, P):
    """Builds the fused Block kernel for static shapes. CP = channel dim padded to 128x."""
    HP, WP = H + 2 * P, W + 2 * P
    NHW = N * H * W

    def kernel(xpad_ref, xres_ref, w1_ref, b1_ref, g1_ref, be1_ref,
               w2_ref, b2_ref, g2_ref, be2_ref, out_ref, hpad_ref):

        # ---- conv as per-tap MXU GEMMs ------------------------------------
        def conv(pad_ref, w_ref, b_ref):
            # pad_ref: (N, HP, WP, CP) zero-padded NHWC activation
            # w_ref:   (K*K, CP, CP) per-tap weight matrices (Cin, Cout)
            acc = jnp.zeros((NHW, CP), jnp.float32)
            for kh in range(K):
                for kw in range(K):
                    win = pad_ref[:, kh:kh + H, kw:kw + W, :].reshape(NHW, CP)
                    acc = acc + jnp.dot(win, w_ref[kh * K + kw],
                                        preferred_element_type=jnp.float32)
            return acc + b_ref[...]                       # bias (1, CP) broadcast

        # ---- BatchNorm (torch training mode), single traversal for stats ---
        def batchnorm(h, g_ref, be_ref):
            inv_cnt = jnp.float32(1.0 / NHW)
            mean = jnp.sum(h, axis=0, keepdims=True) * inv_cnt           # (1, CP)
            mean_sq = jnp.sum(h * h, axis=0, keepdims=True) * inv_cnt    # (1, CP)
            var = mean_sq - mean * mean                                  # biased variance
            scale = jax.lax.rsqrt(var + jnp.float32(EPS)) * g_ref[...]   # EUP rsqrt
            return (h - mean) * scale + be_ref[...]

        # ---- conv1 -> bn1 -> relu ------------------------------------------
        h = conv(xpad_ref, w1_ref, b1_ref)
        h = jnp.maximum(batchnorm(h, g1_ref, be1_ref), jnp.float32(0.0))

        # ---- stage h into padded scratch for conv2 (halo ring zeroed once) --
        if P > 0:
            zrow = jnp.zeros((N, P, WP, CP), jnp.float32)
            zcol = jnp.zeros((N, H, P, CP), jnp.float32)
            hpad_ref[:, 0:P, :, :] = zrow                      # top halo (incl. corners)
            hpad_ref[:, P + H:HP, :, :] = zrow                 # bottom halo
            hpad_ref[:, P:P + H, 0:P, :] = zcol                # left halo
            hpad_ref[:, P:P + H, P + W:WP, :] = zcol           # right halo
        hpad_ref[:, P:P + H, P:P + W, :] = h.reshape(N, H, W, CP)   # interior, stored once

        # ---- conv2 -> bn2 -> +residual -> relu ------------------------------
        h2 = conv(hpad_ref, w2_ref, b2_ref)
        h2 = batchnorm(h2, g2_ref, be2_ref)
        out_ref[...] = jnp.maximum(h2 + xres_ref[...], jnp.float32(0.0))

    return kernel


def block_forward(x_nchw, params):
    """Wrapper: NCHW in / NCHW out. Layout transforms + channel/spatial zero-padding are
    plain-JAX glue; all conv / BN / relu compute runs inside the Pallas kernel."""
    N, Cin, H, W = x_nchw.shape
    K, P, CP, Cout = params["K"], params["P"], params["CP"], params["C_out"]
    assert Cin == Cout, "residual add requires in_channels == out_channels"
    assert K == 2 * P + 1, "same-padding conv required for residual add"
    HP, WP = H + 2 * P, W + 2 * P
    NHW = N * H * W

    # plain-JAX glue: NCHW -> NHWC, pad channels to CP (lane-dense), spatial zero-pad
    x_nhwc = jnp.transpose(x_nchw, (0, 2, 3, 1)).astype(jnp.float32)
    x_cpad = jnp.pad(x_nhwc, ((0, 0), (0, 0), (0, 0), (0, CP - Cin)))
    x_pad = jnp.pad(x_cpad, ((0, 0), (P, P), (P, P), (0, 0)))          # (N, HP, WP, CP)
    x_res = x_cpad.reshape(NHW, CP)                                     # aligned residual

    kernel = make_block_kernel(N, H, W, CP, K, P)
    vmem = pl.BlockSpec(memory_space=pltpu.MemorySpace.VMEM)

    out2d = pl.pallas_call(
        kernel,
        out_shape=jax.ShapeDtypeStruct((NHW, CP), jnp.float32),
        in_specs=[vmem] * 10,
        out_specs=vmem,
        scratch_shapes=[pltpu.VMEM((N, HP, WP, CP), jnp.float32)],
        compiler_params=pltpu.CompilerParams(vmem_limit_bytes=64 << 20),
    )(x_pad, x_res,
      params["w1"], params["b1"], params["g1"], params["be1"],
      params["w2"], params["b2"], params["g2"], params["be2"])

    out = out2d.reshape(N, H, W, CP)[:, :, :, :Cout]
    return jnp.transpose(out, (0, 3, 1, 2))                             # back to NCHW


# ---------------------------- pure-JAX reference --------------------------------
def ref_block(x, w1_oihw, b1, g1, be1, w2_oihw, b2, g2, be2, P):
    def conv(h, w, b):
        y = jax.lax.conv_general_dilated(
            h, w, window_strides=(1, 1), padding=[(P, P), (P, P)],
            dimension_numbers=("NCHW", "OIHW", "NCHW"))
        return y + b[None, :, None, None]

    def bn(h, g, be):
        mean = jnp.mean(h, axis=(0, 2, 3), keepdims=True)
        var = jnp.mean((h - mean) ** 2, axis=(0, 2, 3), keepdims=True)
        return (h - mean) / jnp.sqrt(var + EPS) * g[None, :, None, None] + be[None, :, None, None]

    y = x
    h = jnp.maximum(bn(conv(x, w1_oihw, b1), g1, be1), 0.0)
    h = bn(conv(h, w2_oihw, b2), g2, be2)
    return jnp.maximum(h + y, 0.0)


if __name__ == "__main__":
    N, C, H, W = 2, 4, 16, 16          # in_channels == out_channels == 4
    K, P = 3, 1
    CP = ((C + 127) // 128) * 128      # channels padded to lane-dense multiple of 128

    key = jax.random.PRNGKey(0)
    ks = jax.random.split(key, 9)
    # torch-layout (OIHW) conv weights, deterministic synthetic init
    w1_oihw = jax.random.normal(ks[0], (C, C, K, K), jnp.float32) * 0.1
    b1 = jax.random.normal(ks[1], (C,), jnp.float32) * 0.1
    w2_oihw = jax.random.normal(ks[2], (C, C, K, K), jnp.float32) * 0.1
    b2 = jax.random.normal(ks[3], (C,), jnp.float32) * 0.1
    g1 = 1.0 + 0.1 * jax.random.normal(ks[4], (C,), jnp.float32)
    be1 = 0.1 * jax.random.normal(ks[5], (C,), jnp.float32)
    g2 = 1.0 + 0.1 * jax.random.normal(ks[6], (C,), jnp.float32)
    be2 = 0.1 * jax.random.normal(ks[7], (C,), jnp.float32)
    x = jax.random.normal(ks[8], (N, C, H, W), jnp.float32)

    def to_kernel_w(w_oihw):
        # OIHW -> (KH, KW, Cin, Cout), zero-pad channels to CP, stack taps: (K*K, CP, CP)
        w = jnp.transpose(w_oihw, (2, 3, 1, 0))
        w = jnp.pad(w, ((0, 0), (0, 0), (0, CP - C), (0, CP - C)))
        return w.reshape(K * K, CP, CP)

    def pad_row(v, fill=0.0):
        return jnp.pad(v, (0, CP - v.shape[0]), constant_values=fill).reshape(1, CP)

    params = dict(
        K=K, P=P, CP=CP, C_out=C,
        w1=to_kernel_w(w1_oihw), b1=pad_row(b1), g1=pad_row(g1, 1.0), be1=pad_row(be1),
        w2=to_kernel_w(w2_oihw), b2=pad_row(b2), g2=pad_row(g2, 1.0), be2=pad_row(be2),
    )

    out = block_forward(x, params)
    jax.block_until_ready(out)

    ref = ref_block(x, w1_oihw, b1, g1, be1, w2_oihw, b2, g2, be2, P)
    assert out.shape == (N, C, H, W)
    assert np.allclose(np.asarray(out), np.asarray(ref), atol=2e-4, rtol=2e-4), "mismatch vs reference"

    print("KERNEL_OK")
</pallas_src>

<mosaic_0001>
module attributes {stable_mosaic.version = 11 : i64} {
  func.func @kernel(%arg0: memref<2x18x18x128xf32, #tpu.memory_space<vmem>>, %arg1: memref<512x128xf32, #tpu.memory_space<vmem>>, %arg2: memref<9x128x128xf32, #tpu.memory_space<vmem>>, %arg3: memref<1x128xf32, #tpu.memory_space<vmem>>, %arg4: memref<1x128xf32, #tpu.memory_space<vmem>>, %arg5: memref<1x128xf32, #tpu.memory_space<vmem>>, %arg6: memref<9x128x128xf32, #tpu.memory_space<vmem>>, %arg7: memref<1x128xf32, #tpu.memory_space<vmem>>, %arg8: memref<1x128xf32, #tpu.memory_space<vmem>>, %arg9: memref<1x128xf32, #tpu.memory_space<vmem>>, %arg10: memref<512x128xf32, #tpu.memory_space<vmem>>, %arg11: memref<2x18x18x128xf32, #tpu.memory_space<vmem>>) attributes {dimension_semantics = [], scalar_prefetch = 0 : i64, scratch_operands = 1 : i64, tpu.core_type = #tpu.core_type<tc>} {
    %cst = arith.constant 0.000000e+00 : f32
    %0 = vector.broadcast %cst : f32 to vector<512x128xf32>
    %c0 = arith.constant 0 : index
    %c0_0 = arith.constant 0 : index
    %c0_1 = arith.constant 0 : index
    %c0_2 = arith.constant 0 : index
    %1 = vector.load %arg0[%c0, %c0_0, %c0_1, %c0_2] : memref<2x18x18x128xf32, #tpu.memory_space<vmem>>, vector<2x16x16x128xf32>
    %2 = vector.shape_cast %1 : vector<2x16x16x128xf32> to vector<512x128xf32>
    %c0_3 = arith.constant 0 : index
    %c0_4 = arith.constant 0 : index
    %c0_5 = arith.constant 0 : index
    %3 = vector.load %arg2[%c0_3, %c0_4, %c0_5] : memref<9x128x128xf32, #tpu.memory_space<vmem>>, vector<1x128x128xf32>
    %4 = vector.shape_cast %3 : vector<1x128x128xf32> to vector<128x128xf32>
    %cst_6 = arith.constant dense<0.000000e+00> : vector<512x128xf32>
    %5 = tpu.matmul %2, %4, %cst_6 {dimension_numbers = #tpu.dot_dimension_numbers<[1], [0], [0], [1], [0, 0, 1, 1], [], []>} : vector<512x128xf32>, vector<128x128xf32>, vector<512x128xf32> -> vector<512x128xf32>
    %6 = arith.addf %0, %5 : vector<512x128xf32>
    %c0_7 = arith.constant 0 : index
    %c0_8 = arith.constant 0 : index
    %c1 = arith.constant 1 : index
    %c0_9 = arith.constant 0 : index
    %7 = vector.load %arg0[%c0_7, %c0_8, %c1, %c0_9] : memref<2x18x18x128xf32, #tpu.memory_space<vmem>>, vector<2x16x16x128xf32>
    %8 = vector.shape_cast %7 : vector<2x16x16x128xf32> to vector<512x128xf32>
    %c1_10 = arith.constant 1 : index
    %c0_11 = arith.constant 0 : index
    %c0_12 = arith.constant 0 : index
    %9 = vector.load %arg2[%c1_10, %c0_11, %c0_12] : memref<9x128x128xf32, #tpu.memory_space<vmem>>, vector<1x128x128xf32>
    %10 = vector.shape_cast %9 : vector<1x128x128xf32> to vector<128x128xf32>
    %cst_13 = arith.constant dense<0.000000e+00> : vector<512x128xf32>
    %11 = tpu.matmul %8, %10, %cst_13 {dimension_numbers = #tpu.dot_dimension_numbers<[1], [0], [0], [1], [0, 0, 1, 1], [], []>} : vector<512x128xf32>, vector<128x128xf32>, vector<512x128xf32> -> vector<512x128xf32>
    %12 = arith.addf %6, %11 : vector<512x128xf32>
    %c0_14 = arith.constant 0 : index
    %c0_15 = arith.constant 0 : index
    %c2 = arith.constant 2 : index
    %c0_16 = arith.constant 0 : index
    %13 = vector.load %arg0[%c0_14, %c0_15, %c2, %c0_16] : memref<2x18x18x128xf32, #tpu.memory_space<vmem>>, vector<2x16x16x128xf32>
    %14 = vector.shape_cast %13 : vector<2x16x16x128xf32> to vector<512x128xf32>
    %c2_17 = arith.constant 2 : index
    %c0_18 = arith.constant 0 : index
    %c0_19 = arith.constant 0 : index
    %15 = vector.load %arg2[%c2_17, %c0_18, %c0_19] : memref<9x128x128xf32, #tpu.memory_space<vmem>>, vector<1x128x128xf32>
    %16 = vector.shape_cast %15 : vector<1x128x128xf32> to vector<128x128xf32>
    %cst_20 = arith.constant dense<0.000000e+00> : vector<512x128xf32>
    %17 = tpu.matmul %14, %16, %cst_20 {dimension_numbers = #tpu.dot_dimension_numbers<[1], [0], [0], [1], [0, 0, 1, 1], [], []>} : vector<512x128xf32>, vector<128x128xf32>, vector<512x128xf32> -> vector<512x128xf32>
    %18 = arith.addf %12, %17 : vector<512x128xf32>
    %c0_21 = arith.constant 0 : index
    %c1_22 = arith.constant 1 : index
    %c0_23 = arith.constant 0 : index
    %c0_24 = arith.constant 0 : index
    %19 = vector.load %arg0[%c0_21, %c1_22, %c0_23, %c0_24] : memref<2x18x18x128xf32, #tpu.memory_space<vmem>>, vector<2x16x16x128xf32>
    %20 = vector.shape_cast %19 : vector<2x16x16x128xf32> to vector<512x128xf32>
    %c3 = arith.constant 3 : index
    %c0_25 = arith.constant 0 : index
    %c0_26 = arith.constant 0 : index
    %21 = vector.load %arg2[%c3, %c0_25, %c0_26] : memref<9x128x128xf32, #tpu.memory_space<vmem>>, vector<1x128x128xf32>
    %22 = vector.shape_cast %21 : vector<1x128x128xf32> to vector<128x128xf32>
    %cst_27 = arith.constant dense<0.000000e+00> : vector<512x128xf32>
    %23 = tpu.matmul %20, %22, %cst_27 {dimension_numbers = #tpu.dot_dimension_numbers<[1], [0], [0], [1], [0, 0, 1, 1], [], []>} : vector<512x128xf32>, vector<128x128xf32>, vector<512x128xf32> -> vector<512x128xf32>
    %24 = arith.addf %18, %23 : vector<512x128xf32>
    %c0_28 = arith.constant 0 : index
    %c1_29 = arith.constant 1 : index
    %c1_30 = arith.constant 1 : index
    %c0_31 = arith.constant 0 : index
    %25 = vector.load %arg0[%c0_28, %c1_29, %c1_30, %c0_31] : memref<2x18x18x128xf32, #tpu.memory_space<vmem>>, vector<2x16x16x128xf32>
    %26 = vector.shape_cast %25 : vector<2x16x16x128xf32> to vector<512x128xf32>
    %c4 = arith.constant 4 : index
    %c0_32 = arith.constant 0 : index
    %c0_33 = arith.constant 0 : index
    %27 = vector.load %arg2[%c4, %c0_32, %c0_33] : memref<9x128x128xf32, #tpu.memory_space<vmem>>, vector<1x128x128xf32>
    %28 = vector.shape_cast %27 : vector<1x128x128xf32> to vector<128x128xf32>
    %cst_34 = arith.constant dense<0.000000e+00> : vector<512x128xf32>
    %29 = tpu.matmul %26, %28, %cst_34 {dimension_numbers = #tpu.dot_dimension_numbers<[1], [0], [0], [1], [0, 0, 1, 1], [], []>} : vector<512x128xf32>, vector<128x128xf32>, vector<512x128xf32> -> vector<512x128xf32>
    %30 = arith.addf %24, %29 : vector<512x128xf32>
    %c0_35 = arith.constant 0 : index
    %c1_36 = arith.constant 1 : index
    %c2_37 = arith.constant 2 : index
    %c0_38 = arith.constant 0 : index
    %31 = vector.load %arg0[%c0_35, %c1_36, %c2_37, %c0_38] : memref<2x18x18x128xf32, #tpu.memory_space<vmem>>, vector<2x16x16x128xf32>
    %32 = vector.shape_cast %31 : vector<2x16x16x128xf32> to vector<512x128xf32>
    %c5 = arith.constant 5 : index
    %c0_39 = arith.constant 0 : index
    %c0_40 = arith.constant 0 : index
    %33 = vector.load %arg2[%c5, %c0_39, %c0_40] : memref<9x128x128xf32, #tpu.memory_space<vmem>>, vector<1x128x128xf32>
    %34 = vector.shape_cast %33 : vector<1x128x128xf32> to vector<128x128xf32>
    %cst_41 = arith.constant dense<0.000000e+00> : vector<512x128xf32>
    %35 = tpu.matmul %32, %34, %cst_41 {dimension_numbers = #tpu.dot_dimension_numbers<[1], [0], [0], [1], [0, 0, 1, 1], [], []>} : vector<512x128xf32>, vector<128x128xf32>, vector<512x128xf32> -> vector<512x128xf32>
    %36 = arith.addf %30, %35 : vector<512x128xf32>
    %c0_42 = arith.constant 0 : index
    %c2_43 = arith.constant 2 : index
    %c0_44 = arith.constant 0 : index
    %c0_45 = arith.constant 0 : index
    %37 = vector.load %arg0[%c0_42, %c2_43, %c0_44, %c0_45] : memref<2x18x18x128xf32, #tpu.memory_space<vmem>>, vector<2x16x16x128xf32>
    %38 = vector.shape_cast %37 : vector<2x16x16x128xf32> to vector<512x128xf32>
    %c6 = arith.constant 6 : index
    %c0_46 = arith.constant 0 : index
    %c0_47 = arith.constant 0 : index
    %39 = vector.load %arg2[%c6, %c0_46, %c0_47] : memref<9x128x128xf32, #tpu.memory_space<vmem>>, vector<1x128x128xf32>
    %40 = vector.shape_cast %39 : vector<1x128x128xf32> to vector<128x128xf32>
    %cst_48 = arith.constant dense<0.000000e+00> : vector<512x128xf32>
    %41 = tpu.matmul %38, %40, %cst_48 {dimension_numbers = #tpu.dot_dimension_numbers<[1], [0], [0], [1], [0, 0, 1, 1], [], []>} : vector<512x128xf32>, vector<128x128xf32>, vector<512x128xf32> -> vector<512x128xf32>
    %42 = arith.addf %36, %41 : vector<512x128xf32>
    %c0_49 = arith.constant 0 : index
    %c2_50 = arith.constant 2 : index
    %c1_51 = arith.constant 1 : index
    %c0_52 = arith.constant 0 : index
    %43 = vector.load %arg0[%c0_49, %c2_50, %c1_51, %c0_52] : memref<2x18x18x128xf32, #tpu.memory_space<vmem>>, vector<2x16x16x128xf32>
    %44 = vector.shape_cast %43 : vector<2x16x16x128xf32> to vector<512x128xf32>
    %c7 = arith.constant 7 : index
    %c0_53 = arith.constant 0 : index
    %c0_54 = arith.constant 0 : index
    %45 = vector.load %arg2[%c7, %c0_53, %c0_54] : memref<9x128x128xf32, #tpu.memory_space<vmem>>, vector<1x128x128xf32>
    %46 = vector.shape_cast %45 : vector<1x128x128xf32> to vector<128x128xf32>
    %cst_55 = arith.constant dense<0.000000e+00> : vector<512x128xf32>
    %47 = tpu.matmul %44, %46, %cst_55 {dimension_numbers = #tpu.dot_dimension_numbers<[1], [0], [0], [1], [0, 0, 1, 1], [], []>} : vector<512x128xf32>, vector<128x128xf32>, vector<512x128xf32> -> vector<512x128xf32>
    %48 = arith.addf %42, %47 : vector<512x128xf32>
    %c0_56 = arith.constant 0 : index
    %c2_57 = arith.constant 2 : index
    %c2_58 = arith.constant 2 : index
    %c0_59 = arith.constant 0 : index
    %49 = vector.load %arg0[%c0_56, %c2_57, %c2_58, %c0_59] : memref<2x18x18x128xf32, #tpu.memory_space<vmem>>, vector<2x16x16x128xf32>
    %50 = vector.shape_cast %49 : vector<2x16x16x128xf32> to vector<512x128xf32>
    %c8 = arith.constant 8 : index
    %c0_60 = arith.constant 0 : index
    %c0_61 = arith.constant 0 : index
    %51 = vector.load %arg2[%c8, %c0_60, %c0_61] : memref<9x128x128xf32, #tpu.memory_space<vmem>>, vector<1x128x128xf32>
    %52 = vector.shape_cast %51 : vector<1x128x128xf32> to vector<128x128xf32>
    %cst_62 = arith.constant dense<0.000000e+00> : vector<512x128xf32>
    %53 = tpu.matmul %50, %52, %cst_62 {dimension_numbers = #tpu.dot_dimension_numbers<[1], [0], [0], [1], [0, 0, 1, 1], [], []>} : vector<512x128xf32>, vector<128x128xf32>, vector<512x128xf32> -> vector<512x128xf32>
    %54 = arith.addf %48, %53 : vector<512x128xf32>
    %c0_63 = arith.constant 0 : index
    %c0_64 = arith.constant 0 : index
    %55 = vector.load %arg3[%c0_63, %c0_64] : memref<1x128xf32, #tpu.memory_space<vmem>>, vector<1x128xf32>
    %56 = vector.broadcast %55 : vector<1x128xf32> to vector<512x128xf32>
    %57 = arith.addf %54, %56 : vector<512x128xf32>
    %cst_65 = arith.constant dense<0.000000e+00> : vector<128xf32>
    %58 = vector.multi_reduction <add>, %57, %cst_65 [0] : vector<512x128xf32> to vector<128xf32>
    %59 = vector.shape_cast %58 : vector<128xf32> to vector<1x128xf32>
    %cst_66 = arith.constant 0.001953125 : f32
    %60 = vector.broadcast %cst_66 : f32 to vector<1x128xf32>
    %61 = arith.mulf %59, %60 : vector<1x128xf32>
    %62 = arith.mulf %57, %57 : vector<512x128xf32>
    %cst_67 = arith.constant dense<0.000000e+00> : vector<128xf32>
    %63 = vector.multi_reduction <add>, %62, %cst_67 [0] : vector<512x128xf32> to vector<128xf32>
    %64 = vector.shape_cast %63 : vector<128xf32> to vector<1x128xf32>
    %cst_68 = arith.constant 0.001953125 : f32
    %65 = vector.broadcast %cst_68 : f32 to vector<1x128xf32>
    %66 = arith.mulf %64, %65 : vector<1x128xf32>
    %67 = arith.mulf %61, %61 : vector<1x128xf32>
    %68 = arith.subf %66, %67 : vector<1x128xf32>
    %cst_69 = arith.constant 9.99999974E-6 : f32
    %69 = vector.broadcast %cst_69 : f32 to vector<1x128xf32>
    %70 = arith.addf %68, %69 : vector<1x128xf32>
    %71 = math.rsqrt %70 : vector<1x128xf32>
    %c0_70 = arith.constant 0 : index
    %c0_71 = arith.constant 0 : index
    %72 = vector.load %arg4[%c0_70, %c0_71] : memref<1x128xf32, #tpu.memory_space<vmem>>, vector<1x128xf32>
    %73 = arith.mulf %71, %72 : vector<1x128xf32>
    %74 = vector.broadcast %61 : vector<1x128xf32> to vector<512x128xf32>
    %75 = arith.subf %57, %74 : vector<512x128xf32>
    %76 = vector.broadcast %73 : vector<1x128xf32> to vector<512x128xf32>
    %77 = arith.mulf %75, %76 : vector<512x128xf32>
    %c0_72 = arith.constant 0 : index
    %c0_73 = arith.constant 0 : index
    %78 = vector.load %arg5[%c0_72, %c0_73] : memref<1x128xf32, #tpu.memory_space<vmem>>, vector<1x128xf32>
    %79 = vector.broadcast %78 : vector<1x128xf32> to vector<512x128xf32>
    %80 = arith.addf %77, %79 : vector<512x128xf32>
    %cst_74 = arith.constant 0.000000e+00 : f32
    %81 = vector.broadcast %cst_74 : f32 to vector<512x128xf32>
    %82 = arith.maximumf %80, %81 : vector<512x128xf32>
    %cst_75 = arith.constant 0.000000e+00 : f32
    %83 = vector.broadcast %cst_75 : f32 to vector<2x1x18x128xf32>
    %cst_76 = arith.constant 0.000000e+00 : f32
    %84 = vector.broadcast %cst_76 : f32 to vector<2x16x1x128xf32>
    %c0_77 = arith.constant 0 : index
    %c0_78 = arith.constant 0 : index
    %c0_79 = arith.constant 0 : index
    %c0_80 = arith.constant 0 : index
    %85 = vector.load %arg11[%c0_77, %c0_78, %c0_79, %c0_80] : memref<2x18x18x128xf32, #tpu.memory_space<vmem>>, vector<2x1x18x128xf32>
    tpu.vector_store %arg11[%c0_77, %c0_78, %c0_79, %c0_80], %83 {strides = array<i32>} : memref<2x18x18x128xf32, #tpu.memory_space<vmem>>, vector<2x1x18x128xf32>,
    %c0_81 = arith.constant 0 : index
    %c17 = arith.constant 17 : index
    %c0_82 = arith.constant 0 : index
    %c0_83 = arith.constant 0 : index
    %86 = vector.load %arg11[%c0_81, %c17, %c0_82, %c0_83] : memref<2x18x18x128xf32, #tpu.memory_space<vmem>>, vector<2x1x18x128xf32>
    tpu.vector_store %arg11[%c0_81, %c17, %c0_82, %c0_83], %83 {strides = array<i32>} : memref<2x18x18x128xf32, #tpu.memory_space<vmem>>, vector<2x1x18x128xf32>,
    %c0_84 = arith.constant 0 : index
    %c1_85 = arith.constant 1 : index
    %c0_86 = arith.constant 0 : index
    %c0_87 = arith.constant 0 : index
    %87 = vector.load %arg11[%c0_84, %c1_85, %c0_86, %c0_87] : memref<2x18x18x128xf32, #tpu.memory_space<vmem>>, vector<2x16x1x128xf32>
    tpu.vector_store %arg11[%c0_84, %c1_85, %c0_86, %c0_87], %84 {strides = array<i32>} : memref<2x18x18x128xf32, #tpu.memory_space<vmem>>, vector<2x16x1x128xf32>,
    %c0_88 = arith.constant 0 : index
    %c1_89 = arith.constant 1 : index
    %c17_90 = arith.constant 17 : index
    %c0_91 = arith.constant 0 : index
    %88 = vector.load %arg11[%c0_88, %c1_89, %c17_90, %c0_91] : memref<2x18x18x128xf32, #tpu.memory_space<vmem>>, vector<2x16x1x128xf32>
    tpu.vector_store %arg11[%c0_88, %c1_89, %c17_90, %c0_91], %84 {strides = array<i32>} : memref<2x18x18x128xf32, #tpu.memory_space<vmem>>, vector<2x16x1x128xf32>,
    %89 = vector.shape_cast %82 : vector<512x128xf32> to vector<2x16x16x128xf32>
    %c0_92 = arith.constant 0 : index
    %c1_93 = arith.constant 1 : index
    %c1_94 = arith.constant 1 : index
    %c0_95 = arith.constant 0 : index
    %90 = vector.load %arg11[%c0_92, %c1_93, %c1_94, %c0_95] : memref<2x18x18x128xf32, #tpu.memory_space<vmem>>, vector<2x16x16x128xf32>
    tpu.vector_store %arg11[%c0_92, %c1_93, %c1_94, %c0_95], %89 {strides = array<i32>} : memref<2x18x18x128xf32, #tpu.memory_space<vmem>>, vector<2x16x16x128xf32>,
    %cst_96 = arith.constant 0.000000e+00 : f32
    %91 = vector.broadcast %cst_96 : f32 to vector<512x128xf32>
    %c0_97 = arith.constant 0 : index
    %c0_98 = arith.constant 0 : index
    %c0_99 = arith.constant 0 : index
    %c0_100 = arith.constant 0 : index
    %92 = vector.load %arg11[%c0_97, %c0_98, %c0_99, %c0_100] : memref<2x18x18x128xf32, #tpu.memory_space<vmem>>, vector<2x16x16x128xf32>
    %93 = vector.shape_cast %92 : vector<2x16x16x128xf32> to vector<512x128xf32>
    %c0_101 = arith.constant 0 : index
    %c0_102 = arith.constant 0 : index
    %c0_103 = arith.constant 0 : index
    %94 = vector.load %arg6[%c0_101, %c0_102, %c0_103] : memref<9x128x128xf32, #tpu.memory_space<vmem>>, vector<1x128x128xf32>
    %95 = vector.shape_cast %94 : vector<1x128x128xf32> to vector<128x128xf32>
    %cst_104 = arith.constant dense<0.000000e+00> : vector<512x128xf32>
    %96 = tpu.matmul %93, %95, %cst_104 {dimension_numbers = #tpu.dot_dimension_numbers<[1], [0], [0], [1], [0, 0, 1, 1], [], []>} : vector<512x128xf32>, vector<128x128xf32>, vector<512x128xf32> -> vector<512x128xf32>
    %97 = arith.addf %91, %96 : vector<512x128xf32>
    %c0_105 = arith.constant 0 : index
    %c0_106 = arith.constant 0 : index
    %c1_107 = arith.constant 1 : index
    %c0_108 = arith.constant 0 : index
    %98 = vector.load %arg11[%c0_105, %c0_106, %c1_107, %c0_108] : memref<2x18x18x128xf32, #tpu.memory_space<vmem>>, vector<2x16x16x128xf32>
    %99 = vector.shape_cast %98 : vector<2x16x16x128xf32> to vector<512x128xf32>
    %c1_109 = arith.constant 1 : index
    %c0_110 = arith.constant 0 : index
    %c0_111 = arith.constant 0 : index
    %100 = vector.load %arg6[%c1_109, %c0_110, %c0_111] : memref<9x128x128xf32, #tpu.memory_space<vmem>>, vector<1x128x128xf32>
    %101 = vector.shape_cast %100 : vector<1x128x128xf32> to vector<128x128xf32>
    %cst_112 = arith.constant dense<0.000000e+00> : vector<512x128xf32>
    %102 = tpu.matmul %99, %101, %cst_112 {dimension_numbers = #tpu.dot_dimension_numbers<[1], [0], [0], [1], [0, 0, 1, 1], [], []>} : vector<512x128xf32>, vector<128x128xf32>, vector<512x128xf32> -> vector<512x128xf32>
    %103 = arith.addf %97, %102 : vector<512x128xf32>
    %c0_113 = arith.constant 0 : index
    %c0_114 = arith.constant 0 : index
    %c2_115 = arith.constant 2 : index
    %c0_116 = arith.constant 0 : index
    %104 = vector.load %arg11[%c0_113, %c0_114, %c2_115, %c0_116] : memref<2x18x18x128xf32, #tpu.memory_space<vmem>>, vector<2x16x16x128xf32>
    %105 = vector.shape_cast %104 : vector<2x16x16x128xf32> to vector<512x128xf32>
    %c2_117 = arith.constant 2 : index
    %c0_118 = arith.constant 0 : index
    %c0_119 = arith.constant 0 : index
    %106 = vector.load %arg6[%c2_117, %c0_118, %c0_119] : memref<9x128x128xf32, #tpu.memory_space<vmem>>, vector<1x128x128xf32>
    %107 = vector.shape_cast %106 : vector<1x128x128xf32> to vector<128x128xf32>
    %cst_120 = arith.constant dense<0.000000e+00> : vector<512x128xf32>
    %108 = tpu.matmul %105, %107, %cst_120 {dimension_numbers = #tpu.dot_dimension_numbers<[1], [0], [0], [1], [0, 0, 1, 1], [], []>} : vector<512x128xf32>, vector<128x128xf32>, vector<512x128xf32> -> vector<512x128xf32>
    %109 = arith.addf %103, %108 : vector<512x128xf32>
    %c0_121 = arith.constant 0 : index
    %c1_122 = arith.constant 1 : index
    %c0_123 = arith.constant 0 : index
    %c0_124 = arith.constant 0 : index
    %110 = vector.load %arg11[%c0_121, %c1_122, %c0_123, %c0_124] : memref<2x18x18x128xf32, #tpu.memory_space<vmem>>, vector<2x16x16x128xf32>
    %111 = vector.shape_cast %110 : vector<2x16x16x128xf32> to vector<512x128xf32>
    %c3_125 = arith.constant 3 : index
    %c0_126 = arith.constant 0 : index
    %c0_127 = arith.constant 0 : index
    %112 = vector.load %arg6[%c3_125, %c0_126, %c0_127] : memref<9x128x128xf32, #tpu.memory_space<vmem>>, vector<1x128x128xf32>
    %113 = vector.shape_cast %112 : vector<1x128x128xf32> to vector<128x128xf32>
    %cst_128 = arith.constant dense<0.000000e+00> : vector<512x128xf32>
    %114 = tpu.matmul %111, %113, %cst_128 {dimension_numbers = #tpu.dot_dimension_numbers<[1], [0], [0], [1], [0, 0, 1, 1], [], []>} : vector<512x128xf32>, vector<128x128xf32>, vector<512x128xf32> -> vector<512x128xf32>
    %115 = arith.addf %109, %114 : vector<512x128xf32>
    %c0_129 = arith.constant 0 : index
    %c1_130 = arith.constant 1 : index
    %c1_131 = arith.constant 1 : index
    %c0_132 = arith.constant 0 : index
    %116 = vector.load %arg11[%c0_129, %c1_130, %c1_131, %c0_132] : memref<2x18x18x128xf32, #tpu.memory_space<vmem>>, vector<2x16x16x128xf32>
    %117 = vector.shape_cast %116 : vector<2x16x16x128xf32> to vector<512x128xf32>
    %c4_133 = arith.constant 4 : index
    %c0_134 = arith.constant 0 : index
    %c0_135 = arith.constant 0 : index
    %118 = vector.load %arg6[%c4_133, %c0_134, %c0_135] : memref<9x128x128xf32, #tpu.memory_space<vmem>>, vector<1x128x128xf32>
    %119 = vector.shape_cast %118 : vector<1x128x128xf32> to vector<128x128xf32>
    %cst_136 = arith.constant dense<0.000000e+00> : vector<512x128xf32>
    %120 = tpu.matmul %117, %119, %cst_136 {dimension_numbers = #tpu.dot_dimension_numbers<[1], [0], [0], [1], [0, 0, 1, 1], [], []>} : vector<512x128xf32>, vector<128x128xf32>, vector<512x128xf32> -> vector<512x128xf32>
    %121 = arith.addf %115, %120 : vector<512x128xf32>
    %c0_137 = arith.constant 0 : index
    %c1_138 = arith.constant 1 : index
    %c2_139 = arith.constant 2 : index
    %c0_140 = arith.constant 0 : index
    %122 = vector.load %arg11[%c0_137, %c1_138, %c2_139, %c0_140] : memref<2x18x18x128xf32, #tpu.memory_space<vmem>>, vector<2x16x16x128xf32>
    %123 = vector.shape_cast %122 : vector<2x16x16x128xf32> to vector<512x128xf32>
    %c5_141 = arith.constant 5 : index
    %c0_142 = arith.constant 0 : index
    %c0_143 = arith.constant 0 : index
    %124 = vector.load %arg6[%c5_141, %c0_142, %c0_143] : memref<9x128x128xf32, #tpu.memory_space<vmem>>, vector<1x128x128xf32>
    %125 = vector.shape_cast %124 : vector<1x128x128xf32> to vector<128x128xf32>
    %cst_144 = arith.constant dense<0.000000e+00> : vector<512x128xf32>
    %126 = tpu.matmul %123, %125, %cst_144 {dimension_numbers = #tpu.dot_dimension_numbers<[1], [0], [0], [1], [0, 0, 1, 1], [], []>} : vector<512x128xf32>, vector<128x128xf32>, vector<512x128xf32> -> vector<512x128xf32>
    %127 = arith.addf %121, %126 : vector<512x128xf32>
    %c0_145 = arith.constant 0 : index
    %c2_146 = arith.constant 2 : index
    %c0_147 = arith.constant 0 : index
    %c0_148 = arith.constant 0 : index
    %128 = vector.load %arg11[%c0_145, %c2_146, %c0_147, %c0_148] : memref<2x18x18x128xf32, #tpu.memory_space<vmem>>, vector<2x16x16x128xf32>
    %129 = vector.shape_cast %128 : vector<2x16x16x128xf32> to vector<512x128xf32>
    %c6_149 = arith.constant 6 : index
    %c0_150 = arith.constant 0 : index
    %c0_151 = arith.constant 0 : index
    %130 = vector.load %arg6[%c6_149, %c0_150, %c0_151] : memref<9x128x128xf32, #tpu.memory_space<vmem>>, vector<1x128x128xf32>
    %131 = vector.shape_cast %130 : vector<1x128x128xf32> to vector<128x128xf32>
    %cst_152 = arith.constant dense<0.000000e+00> : vector<512x128xf32>
    %132 = tpu.matmul %129, %131, %cst_152 {dimension_numbers = #tpu.dot_dimension_numbers<[1], [0], [0], [1], [0, 0, 1, 1], [], []>} : vector<512x128xf32>, vector<128x128xf32>, vector<512x128xf32> -> vector<512x128xf32>
    %133 = arith.addf %127, %132 : vector<512x128xf32>
    %c0_153 = arith.constant 0 : index
    %c2_154 = arith.constant 2 : index
    %c1_155 = arith.constant 1 : index
    %c0_156 = arith.constant 0 : index
    %134 = vector.load %arg11[%c0_153, %c2_154, %c1_155, %c0_156] : memref<2x18x18x128xf32, #tpu.memory_space<vmem>>, vector<2x16x16x128xf32>
    %135 = vector.shape_cast %134 : vector<2x16x16x128xf32> to vector<512x128xf32>
    %c7_157 = arith.constant 7 : index
    %c0_158 = arith.constant 0 : index
    %c0_159 = arith.constant 0 : index
    %136 = vector.load %arg6[%c7_157, %c0_158, %c0_159] : memref<9x128x128xf32, #tpu.memory_space<vmem>>, vector<1x128x128xf32>
    %137 = vector.shape_cast %136 : vector<1x128x128xf32> to vector<128x128xf32>
    %cst_160 = arith.constant dense<0.000000e+00> : vector<512x128xf32>
    %138 = tpu.matmul %135, %137, %cst_160 {dimension_numbers = #tpu.dot_dimension_numbers<[1], [0], [0], [1], [0, 0, 1, 1], [], []>} : vector<512x128xf32>, vector<128x128xf32>, vector<512x128xf32> -> vector<512x128xf32>
    %139 = arith.addf %133, %138 : vector<512x128xf32>
    %c0_161 = arith.constant 0 : index
    %c2_162 = arith.constant 2 : index
    %c2_163 = arith.constant 2 : index
    %c0_164 = arith.constant 0 : index
    %140 = vector.load %arg11[%c0_161, %c2_162, %c2_163, %c0_164] : memref<2x18x18x128xf32, #tpu.memory_space<vmem>>, vector<2x16x16x128xf32>
    %141 = vector.shape_cast %140 : vector<2x16x16x128xf32> to vector<512x128xf32>
    %c8_165 = arith.constant 8 : index
    %c0_166 = arith.constant 0 : index
    %c0_167 = arith.constant 0 : index
    %142 = vector.load %arg6[%c8_165, %c0_166, %c0_167] : memref<9x128x128xf32, #tpu.memory_space<vmem>>, vector<1x128x128xf32>
    %143 = vector.shape_cast %142 : vector<1x128x128xf32> to vector<128x128xf32>
    %cst_168 = arith.constant dense<0.000000e+00> : vector<512x128xf32>
    %144 = tpu.matmul %141, %143, %cst_168 {dimension_numbers = #tpu.dot_dimension_numbers<[1], [0], [0], [1], [0, 0, 1, 1], [], []>} : vector<512x128xf32>, vector<128x128xf32>, vector<512x128xf32> -> vector<512x128xf32>
    %145 = arith.addf %139, %144 : vector<512x128xf32>
    %c0_169 = arith.constant 0 : index
    %c0_170 = arith.constant 0 : index
    %146 = vector.load %arg7[%c0_169, %c0_170] : memref<1x128xf32, #tpu.memory_space<vmem>>, vector<1x128xf32>
    %147 = vector.broadcast %146 : vector<1x128xf32> to vector<512x128xf32>
    %148 = arith.addf %145, %147 : vector<512x128xf32>
    %cst_171 = arith.constant dense<0.000000e+00> : vector<128xf32>
    %149 = vector.multi_reduction <add>, %148, %cst_171 [0] : vector<512x128xf32> to vector<128xf32>
    %150 = vector.shape_cast %149 : vector<128xf32> to vector<1x128xf32>
    %cst_172 = arith.constant 0.001953125 : f32
    %151 = vector.broadcast %cst_172 : f32 to vector<1x128xf32>
    %152 = arith.mulf %150, %151 : vector<1x128xf32>
    %153 = arith.mulf %148, %148 : vector<512x128xf32>
    %cst_173 = arith.constant dense<0.000000e+00> : vector<128xf32>
    %154 = vector.multi_reduction <add>, %153, %cst_173 [0] : vector<512x128xf32> to vector<128xf32>
    %155 = vector.shape_cast %154 : vector<128xf32> to vector<1x128xf32>
    %cst_174 = arith.constant 0.001953125 : f32
    %156 = vector.broadcast %cst_174 : f32 to vector<1x128xf32>
    %157 = arith.mulf %155, %156 : vector<1x128xf32>
    %158 = arith.mulf %152, %152 : vector<1x128xf32>
    %159 = arith.subf %157, %158 : vector<1x128xf32>
    %cst_175 = arith.constant 9.99999974E-6 : f32
    %160 = vector.broadcast %cst_175 : f32 to vector<1x128xf32>
    %161 = arith.addf %159, %160 : vector<1x128xf32>
    %162 = math.rsqrt %161 : vector<1x128xf32>
    %c0_176 = arith.constant 0 : index
    %c0_177 = arith.constant 0 : index
    %163 = vector.load %arg8[%c0_176, %c0_177] : memref<1x128xf32, #tpu.memory_space<vmem>>, vector<1x128xf32>
    %164 = arith.mulf %162, %163 : vector<1x128xf32>
    %165 = vector.broadcast %152 : vector<1x128xf32> to vector<512x128xf32>
    %166 = arith.subf %148, %165 : vector<512x128xf32>
    %167 = vector.broadcast %164 : vector<1x128xf32> to vector<512x128xf32>
    %168 = arith.mulf %166, %167 : vector<512x128xf32>
    %c0_178 = arith.constant 0 : index
    %c0_179 = arith.constant 0 : index
    %169 = vector.load %arg9[%c0_178, %c0_179] : memref<1x128xf32, #tpu.memory_space<vmem>>, vector<1x128xf32>
    %170 = vector.broadcast %169 : vector<1x128xf32> to vector<512x128xf32>
    %171 = arith.addf %168, %170 : vector<512x128xf32>
    %c0_180 = arith.constant 0 : index
    %c0_181 = arith.constant 0 : index
    %172 = vector.load %arg1[%c0_180, %c0_181] : memref<512x128xf32, #tpu.memory_space<vmem>>, vector<512x128xf32>
    %173 = arith.addf %171, %172 : vector<512x128xf32>
    %cst_182 = arith.constant 0.000000e+00 : f32
    %174 = vector.broadcast %cst_182 : f32 to vector<512x128xf32>
    %175 = arith.maximumf %173, %174 : vector<512x128xf32>
    %c0_183 = arith.constant 0 : index
    %c0_184 = arith.constant 0 : index
    %176 = vector.load %arg10[%c0_183, %c0_184] : memref<512x128xf32, #tpu.memory_space<vmem>>, vector<512x128xf32>
    tpu.vector_store %arg10[%c0_183, %c0_184], %175 {strides = array<i32>} : memref<512x128xf32, #tpu.memory_space<vmem>>, vector<512x128xf32>,
    return
  }
}

</mosaic_0001>

<llo_original>
// kernel: tpu_custom_call.1
$region0: #{tpu_custom_call.1}
  #allocation0 [shape = 'u32[]', space=smem, size = 0x4, offset = 0x4, fixed_abs, tag = 'smem constant byte address 0x4 - core index']
  #allocation1 [shape = 'u32[72,128]{1,0:T(1,128)}', space=vmem, size = 0x9000, scoped, tag = 'internal scratch']
  #allocation2 [shape = 'f32[2,18,18,128]{3,2,1,0:T(8,128)}', space=vmem, size = 0x6c000, scoped, tag = 'scratch operand']
  %s0 = inlined_call_operand.vmem [shape: f32[2,18,18,128], index: 0, kind: input, shape index: {}]
  %s1 = inlined_call_operand.hbm [shape: f32[512,128], index: 1, kind: input, shape index: {}]
  %s2 = inlined_call_operand.vmem [shape: f32[9,128,128], index: 2, kind: input, shape index: {}]
  %s3 = inlined_call_operand.vmem [shape: f32[1,128], index: 3, kind: input, shape index: {}]
  %s4 = inlined_call_operand.vmem [shape: f32[1,128], index: 4, kind: input, shape index: {}]
  %s5 = inlined_call_operand.vmem [shape: f32[1,128], index: 5, kind: input, shape index: {}]
  %s6 = inlined_call_operand.hbm [shape: f32[9,128,128], index: 6, kind: input, shape index: {}]
  %s7 = inlined_call_operand.vmem [shape: f32[1,128], index: 7, kind: input, shape index: {}]
  %s8 = inlined_call_operand.vmem [shape: f32[1,128], index: 8, kind: input, shape index: {}]
  %s9 = inlined_call_operand.vmem [shape: f32[1,128], index: 9, kind: input, shape index: {}]
  %s10 = inlined_call_operand.hbm [shape: f32[512,128], index: 10, kind: output, shape index: {}]
  %s11 = sld [smem:[#allocation0]]
  $region58: #{tpu_custom_call.1} parent=0
    _
  %s13 = ssub.s32 1, %s11
  %s14 = scalar_select 0, %s13, %s11
  $region1: #{tpu_custom_call.1} parent=0
    #allocation3 [shape = 'u8[262144]{0}', space=vmem, size = 0x40000, scoped, tag = 'input window, operand 1, single buffered']
    #allocation4 [shape = 's32[1]{0}', space=sflag, size = 0x4, scoped, tag = 'scoped memory for tpu_custom_call.1']
    #allocation5 [shape = 's32[1]{0}', space=sflag, size = 0x4, scoped, tag = 'scoped memory for tpu_custom_call.1']
    #allocation6 [shape = 'u8[589824]{0}', space=vmem, size = 0x90000, scoped, tag = 'input window, operand 6, single buffered']
    #allocation7 [shape = 's32[1]{0}', space=sflag, size = 0x4, scoped, tag = 'scoped memory for tpu_custom_call.1']
    #allocation8 [shape = 'u8[262144]{0}', space=vmem, size = 0x40000, scoped, tag = 'output window, operand 0, single buffered']
    %15 = vsyncpa [#allocation4], 0
    %16 = vsyncpa [#allocation7], 0
    %17 = vsyncpa [#allocation5], 0
    // Predicated region
    $region2: #{tpu_custom_call.1} parent=1 // pred_check
      _
    $region3: #{tpu_custom_call.1} parent=1 // pred_check_branch
      %19 = sbr.rel (0) target = $region5
    $region4: #{tpu_custom_call.1} parent=1 // pred_region
      _
    $region5: #{tpu_custom_call.1} parent=1 // pred_fallthru
      _
    // Predicated region
    $region6: #{tpu_custom_call.1} parent=1 // pred_check
      _
    $region7: #{tpu_custom_call.1} parent=1 // pred_check_branch
      %21 = sbr.rel (0) target = $region9
    $region8: #{tpu_custom_call.1} parent=1 // pred_region
      %23 = vsyncadd [#allocation4], 0
      %s24 = sshll.u32 %s1, 4
      %s25 = int_to_ptr.hbm [resolvable:$true] %s24
      %s26 = sshll.u32 [#allocation3], 4
      %s27 = int_to_ptr.vmem [resolvable:$true] %s26
      %32 = dma.hbm_to_vmem [thread:$0]  %s25, 8192, %s27, [#allocation4], 128, 128, 8
    $region9: #{tpu_custom_call.1} parent=1 // pred_fallthru
      _
    // Predicated region
    $region10: #{tpu_custom_call.1} parent=1 // pred_check
      _
    $region11: #{tpu_custom_call.1} parent=1 // pred_check_branch
      %34 = sbr.rel (0) target = $region13
    $region12: #{tpu_custom_call.1} parent=1 // pred_region
      _
    $region13: #{tpu_custom_call.1} parent=1 // pred_fallthru
      _
    // Predicated region
    $region14: #{tpu_custom_call.1} parent=1 // pred_check
      _
    $region15: #{tpu_custom_call.1} parent=1 // pred_check_branch
      %36 = sbr.rel (0) target = $region17
    $region16: #{tpu_custom_call.1} parent=1 // pred_region
      _
    $region17: #{tpu_custom_call.1} parent=1 // pred_fallthru
      _
    // Predicated region
    $region18: #{tpu_custom_call.1} parent=1 // pred_check
      _
    $region19: #{tpu_custom_call.1} parent=1 // pred_check_branch
      %38 = sbr.rel (0) target = $region21
    $region20: #{tpu_custom_call.1} parent=1 // pred_region
      _
    $region21: #{tpu_custom_call.1} parent=1 // pred_fallthru
      _
    // Predicated region
    $region22: #{tpu_custom_call.1} parent=1 // pred_check
      _
    $region23: #{tpu_custom_call.1} parent=1 // pred_check_branch
      %40 = sbr.rel (0) target = $region25
    $region24: #{tpu_custom_call.1} parent=1 // pred_region
      _
    $region25: #{tpu_custom_call.1} parent=1 // pred_fallthru
      _
    // Predicated region
    $region26: #{tpu_custom_call.1} parent=1 // pred_check
      _
    $region27: #{tpu_custom_call.1} parent=1 // pred_check_branch
      %42 = sbr.rel (0) target = $region29
    $region28: #{tpu_custom_call.1} parent=1 // pred_region
      %44 = vsyncadd [#allocation7], 0
      %s45 = sshll.u32 %s6, 4
      %s46 = int_to_ptr.hbm [resolvable:$true] %s45
      %s47 = sshll.u32 [#allocation6], 4
      %s48 = int_to_ptr.vmem [resolvable:$true] %s47
      %53 = dma.hbm_to_vmem [thread:$0]  %s46, 18432, %s48, [#allocation7], 128, 128, 8
    $region29: #{tpu_custom_call.1} parent=1 // pred_fallthru
      _
    // Predicated region
    $region30: #{tpu_custom_call.1} parent=1 // pred_check
      _
    $region31: #{tpu_custom_call.1} parent=1 // pred_check_branch
      %55 = sbr.rel (0) target = $region33
    $region32: #{tpu_custom_call.1} parent=1 // pred_region
      _
    $region33: #{tpu_custom_call.1} parent=1 // pred_fallthru
      _
    // Predicated region
    $region34: #{tpu_custom_call.1} parent=1 // pred_check
      _
    $region35: #{tpu_custom_call.1} parent=1 // pred_check_branch
      %57 = sbr.rel (0) target = $region37
    $region36: #{tpu_custom_call.1} parent=1 // pred_region
      _
    $region37: #{tpu_custom_call.1} parent=1 // pred_fallthru
      _
    // Predicated region
    $region38: #{tpu_custom_call.1} parent=1 // pred_check
      _
    $region39: #{tpu_custom_call.1} parent=1 // pred_check_branch
      %59 = sbr.rel (0) target = $region41
    $region40: #{tpu_custom_call.1} parent=1 // pred_region
      _
    $region41: #{tpu_custom_call.1} parent=1 // pred_fallthru
      _
    // Predicated region
    $region42: #{tpu_custom_call.1} parent=1 // pred_check
      _
    $region43: #{tpu_custom_call.1} parent=1 // pred_check_branch
      %61 = sbr.rel (0) target = $region45
    $region44: #{tpu_custom_call.1} parent=1 // pred_region
      %63 = dma.done [#allocation4], 8192
    $region45: #{tpu_custom_call.1} parent=1 // pred_fallthru
      _
    // Predicated region
    $region46: #{tpu_custom_call.1} parent=1 // pred_check
      _
    $region47: #{tpu_custom_call.1} parent=1 // pred_check_branch
      %65 = sbr.rel (0) target = $region49
    $region48: #{tpu_custom_call.1} parent=1 // pred_region
      %67 = dma.done [#allocation7], 18432
    $region49: #{tpu_custom_call.1} parent=1 // pred_fallthru
      _
    %v68 = vld [vmem:[%s0] sm:$0xff]
    %v69 = vld [vmem:[%s0 + $0x8] sm:$0xff]
    %v70 = vld [vmem:[%s0 + $0x18] sm:$0xff]
    %v71 = vld [vmem:[%s0 + $0x20] sm:$0xff]
    %v72 = vld [vmem:[%s0 + $0x30] sm:$0xff]
    %v73 = vld [vmem:[%s0 + $0x38] sm:$0xff]
    %v74 = vld [vmem:[%s0 + $0x48] sm:$0xff]
    %v75 = vld [vmem:[%s0 + $0x50] sm:$0xff]
    %v76 = vld [vmem:[%s0 + $0x60] sm:$0xff]
    %v77 = vld [vmem:[%s0 + $0x68] sm:$0xff]
    %v78 = vld [vmem:[%s0 + $0x78] sm:$0xff]
    %v79 = vld [vmem:[%s0 + $0x80] sm:$0xff]
    %v80 = vld [vmem:[%s0 + $0x90] sm:$0xff]
    %v81 = vld [vmem:[%s0 + $0x98] sm:$0xff]
    %v82 = vld [vmem:[%s0 + $0xa8] sm:$0xff]
    %v83 = vld [vmem:[%s0 + $0xb0] sm:$0xff]
    %v84 = vld [vmem:[%s0 + $0xc0] sm:$0xff]
    %v85 = vld [vmem:[%s0 + $0xc8] sm:$0xff]
    %v86 = vld [vmem:[%s0 + $0xd8] sm:$0xff]
    %v87 = vld [vmem:[%s0 + $0xe0] sm:$0xff]
    %v88 = vld [vmem:[%s0 + $0xf0] sm:$0xff]
    %v89 = vld [vmem:[%s0 + $0xf8] sm:$0xff]
    %v90 = vld [vmem:[%s0 + $0x108] sm:$0xff]
    %v91 = vld [vmem:[%s0 + $0x110] sm:$0xff]
    %v92 = vld [vmem:[%s0 + $0x120] sm:$0xff]
    %v93 = vld [vmem:[%s0 + $0x128] sm:$0xff]
    %v94 = vld [vmem:[%s0 + $0x138] sm:$0xff]
    %v95 = vld [vmem:[%s0 + $0x140] sm:$0xff]
    %v96 = vld [vmem:[%s0 + $0x150] sm:$0xff]
    %v97 = vld [vmem:[%s0 + $0x158] sm:$0xff]
    %v98 = vld [vmem:[%s0 + $0x168] sm:$0xff]
    %v99 = vld [vmem:[%s0 + $0x170] sm:$0xff]
    %v100 = vld [vmem:[%s0 + $0x1b0] sm:$0xff]
    %v101 = vld [vmem:[%s0 + $0x1b8] sm:$0xff]
    %v102 = vld [vmem:[%s0 + $0x1c8] sm:$0xff]
    %v103 = vld [vmem:[%s0 + $0x1d0] sm:$0xff]
    %v104 = vld [vmem:[%s0 + $0x1e0] sm:$0xff]
    %v105 = vld [vmem:[%s0 + $0x1e8] sm:$0xff]
    %v106 = vld [vmem:[%s0 + $0x1f8] sm:$0xff]
    %v107 = vld [vmem:[%s0 + $0x200] sm:$0xff]
    %v108 = vld [vmem:[%s0 + $0x210] sm:$0xff]
    %v109 = vld [vmem:[%s0 + $0x218] sm:$0xff]
    %v110 = vld [vmem:[%s0 + $0x228] sm:$0xff]
    %v111 = vld [vmem:[%s0 + $0x230] sm:$0xff]
    %v112 = vld [vmem:[%s0 + $0x240] sm:$0xff]
    %v113 = vld [vmem:[%s0 + $0x248] sm:$0xff]
    %v114 = vld [vmem:[%s0 + $0x258] sm:$0xff]
    %v115 = vld [vmem:[%s0 + $0x260] sm:$0xff]
    %v116 = vld [vmem:[%s0 + $0x270] sm:$0xff]
    %v117 = vld [vmem:[%s0 + $0x278] sm:$0xff]
    %v118 = vld [vmem:[%s0 + $0x288] sm:$0xff]
    %v119 = vld [vmem:[%s0 + $0x290] sm:$0xff]
    %v120 = vld [vmem:[%s0 + $0x2a0] sm:$0xff]
    %v121 = vld [vmem:[%s0 + $0x2a8] sm:$0xff]
    %v122 = vld [vmem:[%s0 + $0x2b8] sm:$0xff]
    %v123 = vld [vmem:[%s0 + $0x2c0] sm:$0xff]
    %v124 = vld [vmem:[%s0 + $0x2d0] sm:$0xff]
    %v125 = vld [vmem:[%s0 + $0x2d8] sm:$0xff]
    %v126 = vld [vmem:[%s0 + $0x2e8] sm:$0xff]
    %v127 = vld [vmem:[%s0 + $0x2f0] sm:$0xff]
    %v128 = vld [vmem:[%s0 + $0x300] sm:$0xff]
    %v129 = vld [vmem:[%s0 + $0x308] sm:$0xff]
    %v130 = vld [vmem:[%s0 + $0x318] sm:$0xff]
    %v131 = vld [vmem:[%s0 + $0x320] sm:$0xff]
    %v132 = vld [vmem:[%s2] sm:$0xff]
    %v133 = vld [vmem:[%s2 + $0x8] sm:$0xff]
    %v134 = vld [vmem:[%s2 + $0x10] sm:$0xff]
    %v135 = vld [vmem:[%s2 + $0x18] sm:$0xff]
    %v136 = vld [vmem:[%s2 + $0x20] sm:$0xff]
    %v137 = vld [vmem:[%s2 + $0x28] sm:$0xff]
    %v138 = vld [vmem:[%s2 + $0x30] sm:$0xff]
    %v139 = vld [vmem:[%s2 + $0x38] sm:$0xff]
    %v140 = vld [vmem:[%s2 + $0x40] sm:$0xff]
    %v141 = vld [vmem:[%s2 + $0x48] sm:$0xff]
    %v142 = vld [vmem:[%s2 + $0x50] sm:$0xff]
    %v143 = vld [vmem:[%s2 + $0x58] sm:$0xff]
    %v144 = vld [vmem:[%s2 + $0x60] sm:$0xff]
    %v145 = vld [vmem:[%s2 + $0x68] sm:$0xff]
    %v146 = vld [vmem:[%s2 + $0x70] sm:$0xff]
    %v147 = vld [vmem:[%s2 + $0x78] sm:$0xff]
    %v148 = vld [vmem:[%s0 + $0x1] sm:$0xff]
    %v149 = vld [vmem:[%s0 + $0x9] sm:$0xff]
    %v150 = vld [vmem:[%s0 + $0x19] sm:$0xff]
    %v151 = vld [vmem:[%s0 + $0x21] sm:$0xff]
    %v152 = vld [vmem:[%s0 + $0x31] sm:$0xff]
    %v153 = vld [vmem:[%s0 + $0x39] sm:$0xff]
    %v154 = vld [vmem:[%s0 + $0x49] sm:$0xff]
    %v155 = vld [vmem:[%s0 + $0x51] sm:$0xff]
    %v156 = vld [vmem:[%s0 + $0x61] sm:$0xff]
    %v157 = vld [vmem:[%s0 + $0x69] sm:$0xff]
    %v158 = vld [vmem:[%s0 + $0x79] sm:$0xff]
    %v159 = vld [vmem:[%s0 + $0x81] sm:$0xff]
    %v160 = vld [vmem:[%s0 + $0x91] sm:$0xff]
    %v161 = vld [vmem:[%s0 + $0x99] sm:$0xff]
    %v162 = vld [vmem:[%s0 + $0xa9] sm:$0xff]
    %v163 = vld [vmem:[%s0 + $0xb1] sm:$0xff]
    %v164 = vld [vmem:[%s0 + $0xc1] sm:$0xff]
    %v165 = vld [vmem:[%s0 + $0xc9] sm:$0xff]
    %v166 = vld [vmem:[%s0 + $0xd9] sm:$0xff]
    %v167 = vld [vmem:[%s0 + $0xe1] sm:$0xff]
    %v168 = vld [vmem:[%s0 + $0xf1] sm:$0xff]
    %v169 = vld [vmem:[%s0 + $0xf9] sm:$0xff]
    %v170 = vld [vmem:[%s0 + $0x109] sm:$0xff]
    %v171 = vld [vmem:[%s0 + $0x111] sm:$0xff]
    %v172 = vld [vmem:[%s0 + $0x121] sm:$0xff]
    %v173 = vld [vmem:[%s0 + $0x129] sm:$0xff]
    %v174 = vld [vmem:[%s0 + $0x139] sm:$0xff]
    %v175 = vld [vmem:[%s0 + $0x141] sm:$0xff]
    %v176 = vld [vmem:[%s0 + $0x151] sm:$0xff]
    %v177 = vld [vmem:[%s0 + $0x159] sm:$0xff]
    %v178 = vld [vmem:[%s0 + $0x169] sm:$0xff]
    %v179 = vld [vmem:[%s0 + $0x171] sm:$0xff]
    %v180 = vld [vmem:[%s0 + $0x1b1] sm:$0xff]
    %v181 = vld [vmem:[%s0 + $0x1b9] sm:$0xff]
    %v182 = vld [vmem:[%s0 + $0x1c9] sm:$0xff]
    %v183 = vld [vmem:[%s0 + $0x1d1] sm:$0xff]
    %v184 = vld [vmem:[%s0 + $0x1e1] sm:$0xff]
    %v185 = vld [vmem:[%s0 + $0x1e9] sm:$0xff]
    %v186 = vld [vmem:[%s0 + $0x1f9] sm:$0xff]
    %v187 = vld [vmem:[%s0 + $0x201] sm:$0xff]
    %v188 = vld [vmem:[%s0 + $0x211] sm:$0xff]
    %v189 = vld [vmem:[%s0 + $0x219] sm:$0xff]
    %v190 = vld [vmem:[%s0 + $0x229] sm:$0xff]
    %v191 = vld [vmem:[%s0 + $0x231] sm:$0xff]
    %v192 = vld [vmem:[%s0 + $0x241] sm:$0xff]
    %v193 = vld [vmem:[%s0 + $0x249] sm:$0xff]
    %v194 = vld [vmem:[%s0 + $0x259] sm:$0xff]
    %v195 = vld [vmem:[%s0 + $0x261] sm:$0xff]
    %v196 = vld [vmem:[%s0 + $0x271] sm:$0xff]
    %v197 = vld [vmem:[%s0 + $0x279] sm:$0xff]
    %v198 = vld [vmem:[%s0 + $0x289] sm:$0xff]
    %v199 = vld [vmem:[%s0 + $0x291] sm:$0xff]
    %v200 = vld [vmem:[%s0 + $0x2a1] sm:$0xff]
    %v201 = vld [vmem:[%s0 + $0x2a9] sm:$0xff]
    %v202 = vld [vmem:[%s0 + $0x2b9] sm:$0xff]
    %v203 = vld [vmem:[%s0 + $0x2c1] sm:$0xff]
    %v204 = vld [vmem:[%s0 + $0x2d1] sm:$0xff]
    %v205 = vld [vmem:[%s0 + $0x2d9] sm:$0xff]
    %v206 = vld [vmem:[%s0 + $0x2e9] sm:$0xff]
    %v207 = vld [vmem:[%s0 + $0x2f1] sm:$0xff]
    %v208 = vld [vmem:[%s0 + $0x301] sm:$0xff]
    %v209 = vld [vmem:[%s0 + $0x309] sm:$0xff]
    %v210 = vld [vmem:[%s0 + $0x319] sm:$0xff]
    %v211 = vld [vmem:[%s0 + $0x321] sm:$0xff]
    %s212 = scalar_lea.vmem %s2, 128
    %v213 = vld [vmem:[%s212] sm:$0xff]
    %v214 = vld [vmem:[%s212 + $0x8] sm:$0xff]
    %v215 = vld [vmem:[%s212 + $0x10] sm:$0xff]
    %v216 = vld [vmem:[%s212 + $0x18] sm:$0xff]
    %v217 = vld [vmem:[%s212 + $0x20] sm:$0xff]
    %v218 = vld [vmem:[%s212 + $0x28] sm:$0xff]
    %v219 = vld [vmem:[%s212 + $0x30] sm:$0xff]
    %v220 = vld [vmem:[%s212 + $0x38] sm:$0xff]
    %v221 = vld [vmem:[%s212 + $0x40] sm:$0xff]
    %v222 = vld [vmem:[%s212 + $0x48] sm:$0xff]
    %v223 = vld [vmem:[%s212 + $0x50] sm:$0xff]
    %v224 = vld [vmem:[%s212 + $0x58] sm:$0xff]
    %v225 = vld [vmem:[%s212 + $0x60] sm:$0xff]
    %v226 = vld [vmem:[%s212 + $0x68] sm:$0xff]
    %v227 = vld [vmem:[%s212 + $0x70] sm:$0xff]
    %v228 = vld [vmem:[%s212 + $0x78] sm:$0xff]
    %229 = vmatpush.msra.mxu0 %v228
    %230 = vmatpush.msra.mxu0 %v227
    %231 = vmatpush.msra.mxu0 %v226
    %232 = vmatpush.msra.mxu0 %v225
    %233 = vmatpush.msra.mxu0 %v224
    %234 = vmatpush.msra.mxu0 %v223
    %235 = vmatpush.msra.mxu0 %v222
    %236 = vmatpush.msra.mxu0 %v221
    %237 = vmatpush.msra.mxu0 %v220
    %238 = vmatpush.msra.mxu0 %v219
    %239 = vmatpush.msra.mxu0 %v218
    %240 = vmatpush.msra.mxu0 %v217
    %241 = vmatpush.msra.mxu0 %v216
    %242 = vmatpush.msra.mxu0 %v215
    %243 = vmatpush.msra.mxu0 %v214
    %244 = vmatpush.msra.mxu0 %v213
    %245 = vmatmul.f32.gmra.mxu0 %v148
    %v246 = vpop.f32.mrf.mxu0
    %v247 = vadd.f32 0.0, %v246
    %248 = vmatmul.f32.gmra.mxu0 %v149
    %v249 = vpop.f32.mrf.mxu0
    %v250 = vadd.f32 0.0, %v249
    %251 = vmatmul.f32.gmra.mxu0 %v150
    %v252 = vpop.f32.mrf.mxu0
    %v253 = vadd.f32 0.0, %v252
    %254 = vmatmul.f32.gmra.mxu0 %v151
    %v255 = vpop.f32.mrf.mxu0
    %v256 = vadd.f32 0.0, %v255
    %257 = vmatmul.f32.gmra.mxu0 %v152
    %v258 = vpop.f32.mrf.mxu0
    %v259 = vadd.f32 0.0, %v258
    %260 = vmatmul.f32.gmra.mxu0 %v153
    %v261 = vpop.f32.mrf.mxu0
    %v262 = vadd.f32 0.0, %v261
    %263 = vmatmul.f32.gmra.mxu0 %v154
    %v264 = vpop.f32.mrf.mxu0
    %v265 = vadd.f32 0.0, %v264
    %266 = vmatmul.f32.gmra.mxu0 %v155
    %v267 = vpop.f32.mrf.mxu0
    %v268 = vadd.f32 0.0, %v267
    %269 = vmatmul.f32.gmra.mxu0 %v156
    %v270 = vpop.f32.mrf.mxu0
    %v271 = vadd.f32 0.0, %v270
    %272 = vmatmul.f32.gmra.mxu0 %v157
    %v273 = vpop.f32.mrf.mxu0
    %v274 = vadd.f32 0.0, %v273
    %275 = vmatmul.f32.gmra.mxu0 %v158
    %v276 = vpop.f32.mrf.mxu0
    %v277 = vadd.f32 0.0, %v276
    %278 = vmatmul.f32.gmra.mxu0 %v159
    %v279 = vpop.f32.mrf.mxu0
    %v280 = vadd.f32 0.0, %v279
    %281 = vmatmul.f32.gmra.mxu0 %v160
    %v282 = vpop.f32.mrf.mxu0
    %v283 = vadd.f32 0.0, %v282
    %284 = vmatmul.f32.gmra.mxu0 %v161
    %v285 = vpop.f32.mrf.mxu0
    %v286 = vadd.f32 0.0, %v285
    %287 = vmatmul.f32.gmra.mxu0 %v162
    %v288 = vpop.f32.mrf.mxu0
    %v289 = vadd.f32 0.0, %v288
    %290 = vmatmul.f32.gmra.mxu0 %v163
    %v291 = vpop.f32.mrf.mxu0
    %v292 = vadd.f32 0.0, %v291
    %293 = vmatmul.f32.gmra.mxu0 %v164
    %v294 = vpop.f32.mrf.mxu0
    %v295 = vadd.f32 0.0, %v294
    %296 = vmatmul.f32.gmra.mxu0 %v165
    %v297 = vpop.f32.mrf.mxu0
    %v298 = vadd.f32 0.0, %v297
    %299 = vmatmul.f32.gmra.mxu0 %v166
    %v300 = vpop.f32.mrf.mxu0
    %v301 = vadd.f32 0.0, %v300
    %302 = vmatmul.f32.gmra.mxu0 %v167
    %v303 = vpop.f32.mrf.mxu0
    %v304 = vadd.f32 0.0, %v303
    %305 = vmatmul.f32.gmra.mxu0 %v168
    %v306 = vpop.f32.mrf.mxu0
    %v307 = vadd.f32 0.0, %v306
    %308 = vmatmul.f32.gmra.mxu0 %v169
    %v309 = vpop.f32.mrf.mxu0
    %v310 = vadd.f32 0.0, %v309
    %311 = vmatmul.f32.gmra.mxu0 %v170
    %v312 = vpop.f32.mrf.mxu0
    %v313 = vadd.f32 0.0, %v312
    %314 = vmatmul.f32.gmra.mxu0 %v171
    %v315 = vpop.f32.mrf.mxu0
    %v316 = vadd.f32 0.0, %v315
    %317 = vmatmul.f32.gmra.mxu0 %v172
    %v318 = vpop.f32.mrf.mxu0
    %v319 = vadd.f32 0.0, %v318
    %320 = vmatmul.f32.gmra.mxu0 %v173
    %v321 = vpop.f32.mrf.mxu0
    %v322 = vadd.f32 0.0, %v321
    %323 = vmatmul.f32.gmra.mxu0 %v174
    %v324 = vpop.f32.mrf.mxu0
    %v325 = vadd.f32 0.0, %v324
    %326 = vmatmul.f32.gmra.mxu0 %v175
    %v327 = vpop.f32.mrf.mxu0
    %v328 = vadd.f32 0.0, %v327
    %329 = vmatmul.f32.gmra.mxu0 %v176
    %v330 = vpop.f32.mrf.mxu0
    %v331 = vadd.f32 0.0, %v330
    %332 = vmatmul.f32.gmra.mxu0 %v177
    %v333 = vpop.f32.mrf.mxu0
    %v334 = vadd.f32 0.0, %v333
    %335 = vmatmul.f32.gmra.mxu0 %v178
    %v336 = vpop.f32.mrf.mxu0
    %v337 = vadd.f32 0.0, %v336
    %338 = vmatmul.f32.gmra.mxu0 %v179
    %v339 = vpop.f32.mrf.mxu0
    %v340 = vadd.f32 0.0, %v339
    %341 = vmatmul.f32.gmra.mxu0 %v180
    %v342 = vpop.f32.mrf.mxu0
    %v343 = vadd.f32 0.0, %v342
    %344 = vmatmul.f32.gmra.mxu0 %v181
    %v345 = vpop.f32.mrf.mxu0
    %v346 = vadd.f32 0.0, %v345
    %347 = vmatmul.f32.gmra.mxu0 %v182
    %v348 = vpop.f32.mrf.mxu0
    %v349 = vadd.f32 0.0, %v348
    %350 = vmatmul.f32.gmra.mxu0 %v183
    %v351 = vpop.f32.mrf.mxu0
    %v352 = vadd.f32 0.0, %v351
    %353 = vmatmul.f32.gmra.mxu0 %v184
    %v354 = vpop.f32.mrf.mxu0
    %v355 = vadd.f32 0.0, %v354
    %356 = vmatmul.f32.gmra.mxu0 %v185
    %v357 = vpop.f32.mrf.mxu0
    %v358 = vadd.f32 0.0, %v357
    %359 = vmatmul.f32.gmra.mxu0 %v186
    %v360 = vpop.f32.mrf.mxu0
    %v361 = vadd.f32 0.0, %v360
    %362 = vmatmul.f32.gmra.mxu0 %v187
    %v363 = vpop.f32.mrf.mxu0
    %v364 = vadd.f32 0.0, %v363
    %365 = vmatmul.f32.gmra.mxu0 %v188
    %v366 = vpop.f32.mrf.mxu0
    %v367 = vadd.f32 0.0, %v366
    %368 = vmatmul.f32.gmra.mxu0 %v189
    %v369 = vpop.f32.mrf.mxu0
    %v370 = vadd.f32 0.0, %v369
    %371 = vmatmul.f32.gmra.mxu0 %v190
    %v372 = vpop.f32.mrf.mxu0
    %v373 = vadd.f32 0.0, %v372
    %374 = vmatmul.f32.gmra.mxu0 %v191
    %v375 = vpop.f32.mrf.mxu0
    %v376 = vadd.f32 0.0, %v375
    %377 = vmatmul.f32.gmra.mxu0 %v192
    %v378 = vpop.f32.mrf.mxu0
    %v379 = vadd.f32 0.0, %v378
    %380 = vmatmul.f32.gmra.mxu0 %v193
    %v381 = vpop.f32.mrf.mxu0
    %v382 = vadd.f32 0.0, %v381
    %383 = vmatmul.f32.gmra.mxu0 %v194
    %v384 = vpop.f32.mrf.mxu0
    %v385 = vadd.f32 0.0, %v384
    %386 = vmatmul.f32.gmra.mxu0 %v195
    %v387 = vpop.f32.mrf.mxu0
    %v388 = vadd.f32 0.0, %v387
    %389 = vmatmul.f32.gmra.mxu0 %v196
    %v390 = vpop.f32.mrf.mxu0
    %v391 = vadd.f32 0.0, %v390
    %392 = vmatmul.f32.gmra.mxu0 %v197
    %v393 = vpop.f32.mrf.mxu0
    %v394 = vadd.f32 0.0, %v393
    %395 = vmatmul.f32.gmra.mxu0 %v198
    %v396 = vpop.f32.mrf.mxu0
    %v397 = vadd.f32 0.0, %v396
    %398 = vmatmul.f32.gmra.mxu0 %v199
    %v399 = vpop.f32.mrf.mxu0
    %v400 = vadd.f32 0.0, %v399
    %401 = vmatmul.f32.gmra.mxu0 %v200
    %v402 = vpop.f32.mrf.mxu0
    %v403 = vadd.f32 0.0, %v402
    %404 = vmatmul.f32.gmra.mxu0 %v201
    %v405 = vpop.f32.mrf.mxu0
    %v406 = vadd.f32 0.0, %v405
    %407 = vmatmul.f32.gmra.mxu0 %v202
    %v408 = vpop.f32.mrf.mxu0
    %v409 = vadd.f32 0.0, %v408
    %410 = vmatmul.f32.gmra.mxu0 %v203
    %v411 = vpop.f32.mrf.mxu0
    %v412 = vadd.f32 0.0, %v411
    %413 = vmatmul.f32.gmra.mxu0 %v204
    %v414 = vpop.f32.mrf.mxu0
    %v415 = vadd.f32 0.0, %v414
    %416 = vmatmul.f32.gmra.mxu0 %v205
    %v417 = vpop.f32.mrf.mxu0
    %v418 = vadd.f32 0.0, %v417
    %419 = vmatmul.f32.gmra.mxu0 %v206
    %v420 = vpop.f32.mrf.mxu0
    %v421 = vadd.f32 0.0, %v420
    %422 = vmatmul.f32.gmra.mxu0 %v207
    %v423 = vpop.f32.mrf.mxu0
    %v424 = vadd.f32 0.0, %v423
    %425 = vmatmul.f32.gmra.mxu0 %v208
    %v426 = vpop.f32.mrf.mxu0
    %v427 = vadd.f32 0.0, %v426
    %428 = vmatmul.f32.gmra.mxu0 %v209
    %v429 = vpop.f32.mrf.mxu0
    %v430 = vadd.f32 0.0, %v429
    %431 = vmatmul.f32.gmra.mxu0 %v210
    %v432 = vpop.f32.mrf.mxu0
    %v433 = vadd.f32 0.0, %v432
    %434 = vmatmul.f32.gmra.mxu0 %v211
    %v435 = vpop.f32.mrf.mxu0
    %v436 = vadd.f32 0.0, %v435
    %437 = vdwg.mxu0
    %438 = vmatpush.msra.mxu0 %v147
    %439 = vmatpush.msra.mxu0 %v146
    %440 = vmatpush.msra.mxu0 %v145
    %441 = vmatpush.msra.mxu0 %v144
    %442 = vmatpush.msra.mxu0 %v143
    %443 = vmatpush.msra.mxu0 %v142
    %444 = vmatpush.msra.mxu0 %v141
    %445 = vmatpush.msra.mxu0 %v140
    %446 = vmatpush.msra.mxu0 %v139
    %447 = vmatpush.msra.mxu0 %v138
    %448 = vmatpush.msra.mxu0 %v137
    %449 = vmatpush.msra.mxu0 %v136
    %450 = vmatpush.msra.mxu0 %v135
    %451 = vmatpush.msra.mxu0 %v134
    %452 = vmatpush.msra.mxu0 %v133
    %453 = vmatpush.msra.mxu0 %v132
    %454 = vmatmul.f32.gmra.mxu0 %v68
    %v455 = vpop.f32.mrf.mxu0
    %v456 = vadd.f32 %v247, %v455
    %457 = vmatmul.f32.gmra.mxu0 %v69
    %v458 = vpop.f32.mrf.mxu0
    %v459 = vadd.f32 %v250, %v458
    %460 = vmatmul.f32.gmra.mxu0 %v70
    %v461 = vpop.f32.mrf.mxu0
    %v462 = vadd.f32 %v253, %v461
    %463 = vmatmul.f32.gmra.mxu0 %v71
    %v464 = vpop.f32.mrf.mxu0
    %v465 = vadd.f32 %v256, %v464
    %466 = vmatmul.f32.gmra.mxu0 %v72
    %v467 = vpop.f32.mrf.mxu0
    %v468 = vadd.f32 %v259, %v467
    %469 = vmatmul.f32.gmra.mxu0 %v73
    %v470 = vpop.f32.mrf.mxu0
    %v471 = vadd.f32 %v262, %v470
    %472 = vmatmul.f32.gmra.mxu0 %v74
    %v473 = vpop.f32.mrf.mxu0
    %v474 = vadd.f32 %v265, %v473
    %475 = vmatmul.f32.gmra.mxu0 %v75
    %v476 = vpop.f32.mrf.mxu0
    %v477 = vadd.f32 %v268, %v476
    %478 = vmatmul.f32.gmra.mxu0 %v76
    %v479 = vpop.f32.mrf.mxu0
    %v480 = vadd.f32 %v271, %v479
    %481 = vmatmul.f32.gmra.mxu0 %v77
    %v482 = vpop.f32.mrf.mxu0
    %v483 = vadd.f32 %v274, %v482
    %484 = vmatmul.f32.gmra.mxu0 %v78
    %v485 = vpop.f32.mrf.mxu0
    %v486 = vadd.f32 %v277, %v485
    %487 = vmatmul.f32.gmra.mxu0 %v79
    %v488 = vpop.f32.mrf.mxu0
    %v489 = vadd.f32 %v280, %v488
    %490 = vmatmul.f32.gmra.mxu0 %v80
    %v491 = vpop.f32.mrf.mxu0
    %v492 = vadd.f32 %v283, %v491
    %493 = vmatmul.f32.gmra.mxu0 %v81
    %v494 = vpop.f32.mrf.mxu0
    %v495 = vadd.f32 %v286, %v494
    %496 = vmatmul.f32.gmra.mxu0 %v82
    %v497 = vpop.f32.mrf.mxu0
    %v498 = vadd.f32 %v289, %v497
    %499 = vmatmul.f32.gmra.mxu0 %v83
    %v500 = vpop.f32.mrf.mxu0
    %v501 = vadd.f32 %v292, %v500
    %502 = vmatmul.f32.gmra.mxu0 %v84
    %v503 = vpop.f32.mrf.mxu0
    %v504 = vadd.f32 %v295, %v503
    %505 = vmatmul.f32.gmra.mxu0 %v85
    %v506 = vpop.f32.mrf.mxu0
    %v507 = vadd.f32 %v298, %v506
    %508 = vmatmul.f32.gmra.mxu0 %v86
    %v509 = vpop.f32.mrf.mxu0
    %v510 = vadd.f32 %v301, %v509
    %511 = vmatmul.f32.gmra.mxu0 %v87
    %v512 = vpop.f32.mrf.mxu0
    %v513 = vadd.f32 %v304, %v512
    %514 = vmatmul.f32.gmra.mxu0 %v88
    %v515 = vpop.f32.mrf.mxu0
    %v516 = vadd.f32 %v307, %v515
    %517 = vmatmul.f32.gmra.mxu0 %v89
    %v518 = vpop.f32.mrf.mxu0
    %v519 = vadd.f32 %v310, %v518
    %520 = vmatmul.f32.gmra.mxu0 %v90
    %v521 = vpop.f32.mrf.mxu0
    %v522 = vadd.f32 %v313, %v521
    %523 = vmatmul.f32.gmra.mxu0 %v91
    %v524 = vpop.f32.mrf.mxu0
    %v525 = vadd.f32 %v316, %v524
    %526 = vmatmul.f32.gmra.mxu0 %v92
    %v527 = vpop.f32.mrf.mxu0
    %v528 = vadd.f32 %v319, %v527
    %529 = vmatmul.f32.gmra.mxu0 %v93
    %v530 = vpop.f32.mrf.mxu0
    %v531 = vadd.f32 %v322, %v530
    %532 = vmatmul.f32.gmra.mxu0 %v94
    %v533 = vpop.f32.mrf.mxu0
    %v534 = vadd.f32 %v325, %v533
    %535 = vmatmul.f32.gmra.mxu0 %v95
    %v536 = vpop.f32.mrf.mxu0
    %v537 = vadd.f32 %v328, %v536
    %538 = vmatmul.f32.gmra.mxu0 %v96
    %v539 = vpop.f32.mrf.mxu0
    %v540 = vadd.f32 %v331, %v539
    %541 = vmatmul.f32.gmra.mxu0 %v97
    %v542 = vpop.f32.mrf.mxu0
    %v543 = vadd.f32 %v334, %v542
    %544 = vmatmul.f32.gmra.mxu0 %v98
    %v545 = vpop.f32.mrf.mxu0
    %v546 = vadd.f32 %v337, %v545
    %547 = vmatmul.f32.gmra.mxu0 %v99
    %v548 = vpop.f32.mrf.mxu0
    %v549 = vadd.f32 %v340, %v548
    %550 = vmatmul.f32.gmra.mxu0 %v100
    %v551 = vpop.f32.mrf.mxu0
    %v552 = vadd.f32 %v343, %v551
    %553 = vmatmul.f32.gmra.mxu0 %v101
    %v554 = vpop.f32.mrf.mxu0
    %v555 = vadd.f32 %v346, %v554
    %556 = vmatmul.f32.gmra.mxu0 %v102
    %v557 = vpop.f32.mrf.mxu0
    %v558 = vadd.f32 %v349, %v557
    %559 = vmatmul.f32.gmra.mxu0 %v103
    %v560 = vpop.f32.mrf.mxu0
    %v561 = vadd.f32 %v352, %v560
    %562 = vmatmul.f32.gmra.mxu0 %v104
    %v563 = vpop.f32.mrf.mxu0
    %v564 = vadd.f32 %v355, %v563
    %565 = vmatmul.f32.gmra.mxu0 %v105
    %v566 = vpop.f32.mrf.mxu0
    %v567 = vadd.f32 %v358, %v566
    %568 = vmatmul.f32.gmra.mxu0 %v106
    %v569 = vpop.f32.mrf.mxu0
    %v570 = vadd.f32 %v361, %v569
    %571 = vmatmul.f32.gmra.mxu0 %v107
    %v572 = vpop.f32.mrf.mxu0
    %v573 = vadd.f32 %v364, %v572
    %574 = vmatmul.f32.gmra.mxu0 %v108
    %v575 = vpop.f32.mrf.mxu0
    %v576 = vadd.f32 %v367, %v575
    %577 = vmatmul.f32.gmra.mxu0 %v109
    %v578 = vpop.f32.mrf.mxu0
    %v579 = vadd.f32 %v370, %v578
    %580 = vmatmul.f32.gmra.mxu0 %v110
    %v581 = vpop.f32.mrf.mxu0
    %v582 = vadd.f32 %v373, %v581
    %583 = vmatmul.f32.gmra.mxu0 %v111
    %v584 = vpop.f32.mrf.mxu0
    %v585 = vadd.f32 %v376, %v584
    %586 = vmatmul.f32.gmra.mxu0 %v112
    %v587 = vpop.f32.mrf.mxu0
    %v588 = vadd.f32 %v379, %v587
    %589 = vmatmul.f32.gmra.mxu0 %v113
    %v590 = vpop.f32.mrf.mxu0
    %v591 = vadd.f32 %v382, %v590
    %592 = vmatmul.f32.gmra.mxu0 %v114
    %v593 = vpop.f32.mrf.mxu0
    %v594 = vadd.f32 %v385, %v593
    %595 = vmatmul.f32.gmra.mxu0 %v115
    %v596 = vpop.f32.mrf.mxu0
    %v597 = vadd.f32 %v388, %v596
    %598 = vmatmul.f32.gmra.mxu0 %v116
    %v599 = vpop.f32.mrf.mxu0
    %v600 = vadd.f32 %v391, %v599
    %601 = vmatmul.f32.gmra.mxu0 %v117
    %v602 = vpop.f32.mrf.mxu0
    %v603 = vadd.f32 %v394, %v602
    %604 = vmatmul.f32.gmra.mxu0 %v118
    %v605 = vpop.f32.mrf.mxu0
    %v606 = vadd.f32 %v397, %v605
    %607 = vmatmul.f32.gmra.mxu0 %v119
    %v608 = vpop.f32.mrf.mxu0
    %v609 = vadd.f32 %v400, %v608
    %610 = vmatmul.f32.gmra.mxu0 %v120
    %v611 = vpop.f32.mrf.mxu0
    %v612 = vadd.f32 %v403, %v611
    %613 = vmatmul.f32.gmra.mxu0 %v121
    %v614 = vpop.f32.mrf.mxu0
    %v615 = vadd.f32 %v406, %v614
    %616 = vmatmul.f32.gmra.mxu0 %v122
    %v617 = vpop.f32.mrf.mxu0
    %v618 = vadd.f32 %v409, %v617
    %619 = vmatmul.f32.gmra.mxu0 %v123
    %v620 = vpop.f32.mrf.mxu0
    %v621 = vadd.f32 %v412, %v620
    %622 = vmatmul.f32.gmra.mxu0 %v124
    %v623 = vpop.f32.mrf.mxu0
    %v624 = vadd.f32 %v415, %v623
    %625 = vmatmul.f32.gmra.mxu0 %v125
    %v626 = vpop.f32.mrf.mxu0
    %v627 = vadd.f32 %v418, %v626
    %628 = vmatmul.f32.gmra.mxu0 %v126
    %v629 = vpop.f32.mrf.mxu0
    %v630 = vadd.f32 %v421, %v629
    %631 = vmatmul.f32.gmra.mxu0 %v127
    %v632 = vpop.f32.mrf.mxu0
    %v633 = vadd.f32 %v424, %v632
    %634 = vmatmul.f32.gmra.mxu0 %v128
    %v635 = vpop.f32.mrf.mxu0
    %v636 = vadd.f32 %v427, %v635
    %637 = vmatmul.f32.gmra.mxu0 %v129
    %v638 = vpop.f32.mrf.mxu0
    %v639 = vadd.f32 %v430, %v638
    %640 = vmatmul.f32.gmra.mxu0 %v130
    %v641 = vpop.f32.mrf.mxu0
    %v642 = vadd.f32 %v433, %v641
    %643 = vmatmul.f32.gmra.mxu0 %v131
    %v644 = vpop.f32.mrf.mxu0
    %v645 = vadd.f32 %v436, %v644
    %646 = vdwg.mxu0
    %v647 = vld [vmem:[%s0 + $0x2] sm:$0xff]
    %v648 = vld [vmem:[%s0 + $0xa] sm:$0xff]
    %v649 = vld [vmem:[%s0 + $0x1a] sm:$0xff]
    %v650 = vld [vmem:[%s0 + $0x22] sm:$0xff]
    %v651 = vld [vmem:[%s0 + $0x32] sm:$0xff]
    %v652 = vld [vmem:[%s0 + $0x3a] sm:$0xff]
    %v653 = vld [vmem:[%s0 + $0x4a] sm:$0xff]
    %v654 = vld [vmem:[%s0 + $0x52] sm:$0xff]
    %v655 = vld [vmem:[%s0 + $0x62] sm:$0xff]
    %v656 = vld [vmem:[%s0 + $0x6a] sm:$0xff]
    %v657 = vld [vmem:[%s0 + $0x7a] sm:$0xff]
    %v658 = vld [vmem:[%s0 + $0x82] sm:$0xff]
    %v659 = vld [vmem:[%s0 + $0x92] sm:$0xff]
    %v660 = vld [vmem:[%s0 + $0x9a] sm:$0xff]
    %v661 = vld [vmem:[%s0 + $0xaa] sm:$0xff]
    %v662 = vld [vmem:[%s0 + $0xb2] sm:$0xff]
    %v663 = vld [vmem:[%s0 + $0xc2] sm:$0xff]
    %v664 = vld [vmem:[%s0 + $0xca] sm:$0xff]
    %v665 = vld [vmem:[%s0 + $0xda] sm:$0xff]
    %v666 = vld [vmem:[%s0 + $0xe2] sm:$0xff]
    %v667 = vld [vmem:[%s0 + $0xf2] sm:$0xff]
    %v668 = vld [vmem:[%s0 + $0xfa] sm:$0xff]
    %v669 = vld [vmem:[%s0 + $0x10a] sm:$0xff]
    %v670 = vld [vmem:[%s0 + $0x112] sm:$0xff]
    %v671 = vld [vmem:[%s0 + $0x122] sm:$0xff]
    %v672 = vld [vmem:[%s0 + $0x12a] sm:$0xff]
    %v673 = vld [vmem:[%s0 + $0x13a] sm:$0xff]
    %v674 = vld [vmem:[%s0 + $0x142] sm:$0xff]
    %v675 = vld [vmem:[%s0 + $0x152] sm:$0xff]
    %v676 = vld [vmem:[%s0 + $0x15a] sm:$0xff]
    %v677 = vld [vmem:[%s0 + $0x16a] sm:$0xff]
    %v678 = vld [vmem:[%s0 + $0x172] sm:$0xff]
    %v679 = vld [vmem:[%s0 + $0x1b2] sm:$0xff]
    %v680 = vld [vmem:[%s0 + $0x1ba] sm:$0xff]
    %v681 = vld [vmem:[%s0 + $0x1ca] sm:$0xff]
    %v682 = vld [vmem:[%s0 + $0x1d2] sm:$0xff]
    %v683 = vld [vmem:[%s0 + $0x1e2] sm:$0xff]
    %v684 = vld [vmem:[%s0 + $0x1ea] sm:$0xff]
    %v685 = vld [vmem:[%s0 + $0x1fa] sm:$0xff]
    %v686 = vld [vmem:[%s0 + $0x202] sm:$0xff]
    %v687 = vld [vmem:[%s0 + $0x212] sm:$0xff]
    %v688 = vld [vmem:[%s0 + $0x21a] sm:$0xff]
    %v689 = vld [vmem:[%s0 + $0x22a] sm:$0xff]
    %v690 = vld [vmem:[%s0 + $0x232] sm:$0xff]
    %v691 = vld [vmem:[%s0 + $0x242] sm:$0xff]
    %v692 = vld [vmem:[%s0 + $0x24a] sm:$0xff]
    %v693 = vld [vmem:[%s0 + $0x25a] sm:$0xff]
    %v694 = vld [vmem:[%s0 + $0x262] sm:$0xff]
    %v695 = vld [vmem:[%s0 + $0x272] sm:$0xff]
    %v696 = vld [vmem:[%s0 + $0x27a] sm:$0xff]
    %v697 = vld [vmem:[%s0 + $0x28a] sm:$0xff]
    %v698 = vld [vmem:[%s0 + $0x292] sm:$0xff]
    %v699 = vld [vmem:[%s0 + $0x2a2] sm:$0xff]
    %v700 = vld [vmem:[%s0 + $0x2aa] sm:$0xff]
    %v701 = vld [vmem:[%s0 + $0x2ba] sm:$0xff]
    %v702 = vld [vmem:[%s0 + $0x2c2] sm:$0xff]
    %v703 = vld [vmem:[%s0 + $0x2d2] sm:$0xff]
    %v704 = vld [vmem:[%s0 + $0x2da] sm:$0xff]
    %v705 = vld [vmem:[%s0 + $0x2ea] sm:$0xff]
    %v706 = vld [vmem:[%s0 + $0x2f2] sm:$0xff]
    %v707 = vld [vmem:[%s0 + $0x302] sm:$0xff]
    %v708 = vld [vmem:[%s0 + $0x30a] sm:$0xff]
    %v709 = vld [vmem:[%s0 + $0x31a] sm:$0xff]
    %v710 = vld [vmem:[%s0 + $0x322] sm:$0xff]
    %s711 = scalar_lea.vmem %s2, 256
    %v712 = vld [vmem:[%s711] sm:$0xff]
    %v713 = vld [vmem:[%s711 + $0x8] sm:$0xff]
    %v714 = vld [vmem:[%s711 + $0x10] sm:$0xff]
    %v715 = vld [vmem:[%s711 + $0x18] sm:$0xff]
    %v716 = vld [vmem:[%s711 + $0x20] sm:$0xff]
    %v717 = vld [vmem:[%s711 + $0x28] sm:$0xff]
    %v718 = vld [vmem:[%s711 + $0x30] sm:$0xff]
    %v719 = vld [vmem:[%s711 + $0x38] sm:$0xff]
    %v720 = vld [vmem:[%s711 + $0x40] sm:$0xff]
    %v721 = vld [vmem:[%s711 + $0x48] sm:$0xff]
    %v722 = vld [vmem:[%s711 + $0x50] sm:$0xff]
    %v723 = vld [vmem:[%s711 + $0x58] sm:$0xff]
    %v724 = vld [vmem:[%s711 + $0x60] sm:$0xff]
    %v725 = vld [vmem:[%s711 + $0x68] sm:$0xff]
    %v726 = vld [vmem:[%s711 + $0x70] sm:$0xff]
    %v727 = vld [vmem:[%s711 + $0x78] sm:$0xff]
    %728 = vmatpush.msra.mxu0 %v727
    %729 = vmatpush.msra.mxu0 %v726
    %730 = vmatpush.msra.mxu0 %v725
    %731 = vmatpush.msra.mxu0 %v724
    %732 = vmatpush.msra.mxu0 %v723
    %733 = vmatpush.msra.mxu0 %v722
    %734 = vmatpush.msra.mxu0 %v721
    %735 = vmatpush.msra.mxu0 %v720
    %736 = vmatpush.msra.mxu0 %v719
    %737 = vmatpush.msra.mxu0 %v718
    %738 = vmatpush.msra.mxu0 %v717
    %739 = vmatpush.msra.mxu0 %v716
    %740 = vmatpush.msra.mxu0 %v715
    %741 = vmatpush.msra.mxu0 %v714
    %742 = vmatpush.msra.mxu0 %v713
    %743 = vmatpush.msra.mxu0 %v712
    %744 = vmatmul.f32.gmra.mxu0 %v647
    %v745 = vpop.f32.mrf.mxu0
    %v746 = vadd.f32 0.0, %v745
    %747 = vmatmul.f32.gmra.mxu0 %v648
    %v748 = vpop.f32.mrf.mxu0
    %v749 = vadd.f32 0.0, %v748
    %750 = vmatmul.f32.gmra.mxu0 %v649
    %v751 = vpop.f32.mrf.mxu0
    %v752 = vadd.f32 0.0, %v751
    %753 = vmatmul.f32.gmra.mxu0 %v650
    %v754 = vpop.f32.mrf.mxu0
    %v755 = vadd.f32 0.0, %v754
    %756 = vmatmul.f32.gmra.mxu0 %v651
    %v757 = vpop.f32.mrf.mxu0
    %v758 = vadd.f32 0.0, %v757
    %759 = vmatmul.f32.gmra.mxu0 %v652
    %v760 = vpop.f32.mrf.mxu0
    %v761 = vadd.f32 0.0, %v760
    %762 = vmatmul.f32.gmra.mxu0 %v653
    %v763 = vpop.f32.mrf.mxu0
    %v764 = vadd.f32 0.0, %v763
    %765 = vmatmul.f32.gmra.mxu0 %v654
    %v766 = vpop.f32.mrf.mxu0
    %v767 = vadd.f32 0.0, %v766
    %768 = vmatmul.f32.gmra.mxu0 %v655
    %v769 = vpop.f32.mrf.mxu0
    %v770 = vadd.f32 0.0, %v769
    %771 = vmatmul.f32.gmra.mxu0 %v656
    %v772 = vpop.f32.mrf.mxu0
    %v773 = vadd.f32 0.0, %v772
    %774 = vmatmul.f32.gmra.mxu0 %v657
    %v775 = vpop.f32.mrf.mxu0
    %v776 = vadd.f32 0.0, %v775
    %777 = vmatmul.f32.gmra.mxu0 %v658
    %v778 = vpop.f32.mrf.mxu0
    %v779 = vadd.f32 0.0, %v778
    %780 = vmatmul.f32.gmra.mxu0 %v659
    %v781 = vpop.f32.mrf.mxu0
    %v782 = vadd.f32 0.0, %v781
    %783 = vmatmul.f32.gmra.mxu0 %v660
    %v784 = vpop.f32.mrf.mxu0
    %v785 = vadd.f32 0.0, %v784
    %786 = vmatmul.f32.gmra.mxu0 %v661
    %v787 = vpop.f32.mrf.mxu0
    %v788 = vadd.f32 0.0, %v787
    %789 = vmatmul.f32.gmra.mxu0 %v662
    %v790 = vpop.f32.mrf.mxu0
    %v791 = vadd.f32 0.0, %v790
    %792 = vmatmul.f32.gmra.mxu0 %v663
    %v793 = vpop.f32.mrf.mxu0
    %v794 = vadd.f32 0.0, %v793
    %795 = vmatmul.f32.gmra.mxu0 %v664
    %v796 = vpop.f32.mrf.mxu0
    %v797 = vadd.f32 0.0, %v796
    %798 = vmatmul.f32.gmra.mxu0 %v665
    %v799 = vpop.f32.mrf.mxu0
    %v800 = vadd.f32 0.0, %v799
    %801 = vmatmul.f32.gmra.mxu0 %v666
    %v802 = vpop.f32.mrf.mxu0
    %v803 = vadd.f32 0.0, %v802
    %804 = vmatmul.f32.gmra.mxu0 %v667
    %v805 = vpop.f32.mrf.mxu0
    %v806 = vadd.f32 0.0, %v805
    %807 = vmatmul.f32.gmra.mxu0 %v668
    %v808 = vpop.f32.mrf.mxu0
    %v809 = vadd.f32 0.0, %v808
    %810 = vmatmul.f32.gmra.mxu0 %v669
    %v811 = vpop.f32.mrf.mxu0
    %v812 = vadd.f32 0.0, %v811
    %813 = vmatmul.f32.gmra.mxu0 %v670
    %v814 = vpop.f32.mrf.mxu0
    %v815 = vadd.f32 0.0, %v814
    %816 = vmatmul.f32.gmra.mxu0 %v671
    %v817 = vpop.f32.mrf.mxu0
    %v818 = vadd.f32 0.0, %v817
    %819 = vmatmul.f32.gmra.mxu0 %v672
    %v820 = vpop.f32.mrf.mxu0
    %v821 = vadd.f32 0.0, %v820
    %822 = vmatmul.f32.gmra.mxu0 %v673
    %v823 = vpop.f32.mrf.mxu0
    %v824 = vadd.f32 0.0, %v823
    %825 = vmatmul.f32.gmra.mxu0 %v674
    %v826 = vpop.f32.mrf.mxu0
    %v827 = vadd.f32 0.0, %v826
    %828 = vmatmul.f32.gmra.mxu0 %v675
    %v829 = vpop.f32.mrf.mxu0
    %v830 = vadd.f32 0.0, %v829
    %831 = vmatmul.f32.gmra.mxu0 %v676
    %v832 = vpop.f32.mrf.mxu0
    %v833 = vadd.f32 0.0, %v832
    %834 = vmatmul.f32.gmra.mxu0 %v677
    %v835 = vpop.f32.mrf.mxu0
    %v836 = vadd.f32 0.0, %v835
    %837 = vmatmul.f32.gmra.mxu0 %v678
    %v838 = vpop.f32.mrf.mxu0
    %v839 = vadd.f32 0.0, %v838
    %840 = vmatmul.f32.gmra.mxu0 %v679
    %v841 = vpop.f32.mrf.mxu0
    %v842 = vadd.f32 0.0, %v841
    %843 = vmatmul.f32.gmra.mxu0 %v680
    %v844 = vpop.f32.mrf.mxu0
    %v845 = vadd.f32 0.0, %v844
    %846 = vmatmul.f32.gmra.mxu0 %v681
    %v847 = vpop.f32.mrf.mxu0
    %v848 = vadd.f32 0.0, %v847
    %849 = vmatmul.f32.gmra.mxu0 %v682
    %v850 = vpop.f32.mrf.mxu0
    %v851 = vadd.f32 0.0, %v850
    %852 = vmatmul.f32.gmra.mxu0 %v683
    %v853 = vpop.f32.mrf.mxu0
    %v854 = vadd.f32 0.0, %v853
    %855 = vmatmul.f32.gmra.mxu0 %v684
    %v856 = vpop.f32.mrf.mxu0
    %v857 = vadd.f32 0.0, %v856
    %858 = vmatmul.f32.gmra.mxu0 %v685
    %v859 = vpop.f32.mrf.mxu0
    %v860 = vadd.f32 0.0, %v859
    %861 = vmatmul.f32.gmra.mxu0 %v686
    %v862 = vpop.f32.mrf.mxu0
    %v863 = vadd.f32 0.0, %v862
    %864 = vmatmul.f32.gmra.mxu0 %v687
    %v865 = vpop.f32.mrf.mxu0
    %v866 = vadd.f32 0.0, %v865
    %867 = vmatmul.f32.gmra.mxu0 %v688
    %v868 = vpop.f32.mrf.mxu0
    %v869 = vadd.f32 0.0, %v868
    %870 = vmatmul.f32.gmra.mxu0 %v689
    %v871 = vpop.f32.mrf.mxu0
    %v872 = vadd.f32 0.0, %v871
    %873 = vmatmul.f32.gmra.mxu0 %v690
    %v874 = vpop.f32.mrf.mxu0
    %v875 = vadd.f32 0.0, %v874
    %876 = vmatmul.f32.gmra.mxu0 %v691
    %v877 = vpop.f32.mrf.mxu0
    %v878 = vadd.f32 0.0, %v877
    %879 = vmatmul.f32.gmra.mxu0 %v692
    %v880 = vpop.f32.mrf.mxu0
    %v881 = vadd.f32 0.0, %v880
    %882 = vmatmul.f32.gmra.mxu0 %v693
    %v883 = vpop.f32.mrf.mxu0
    %v884 = vadd.f32 0.0, %v883
    %885 = vmatmul.f32.gmra.mxu0 %v694
    %v886 = vpop.f32.mrf.mxu0
    %v887 = vadd.f32 0.0, %v886
    %888 = vmatmul.f32.gmra.mxu0 %v695
    %v889 = vpop.f32.mrf.mxu0
    %v890 = vadd.f32 0.0, %v889
    %891 = vmatmul.f32.gmra.mxu0 %v696
    %v892 = vpop.f32.mrf.mxu0
    %v893 = vadd.f32 0.0, %v892
    %894 = vmatmul.f32.gmra.mxu0 %v697
    %v895 = vpop.f32.mrf.mxu0
    %v896 = vadd.f32 0.0, %v895
    %897 = vmatmul.f32.gmra.mxu0 %v698
    %v898 = vpop.f32.mrf.mxu0
    %v899 = vadd.f32 0.0, %v898
    %900 = vmatmul.f32.gmra.mxu0 %v699
    %v901 = vpop.f32.mrf.mxu0
    %v902 = vadd.f32 0.0, %v901
    %903 = vmatmul.f32.gmra.mxu0 %v700
    %v904 = vpop.f32.mrf.mxu0
    %v905 = vadd.f32 0.0, %v904
    %906 = vmatmul.f32.gmra.mxu0 %v701
    %v907 = vpop.f32.mrf.mxu0
    %v908 = vadd.f32 0.0, %v907
    %909 = vmatmul.f32.gmra.mxu0 %v702
    %v910 = vpop.f32.mrf.mxu0
    %v911 = vadd.f32 0.0, %v910
    %912 = vmatmul.f32.gmra.mxu0 %v703
    %v913 = vpop.f32.mrf.mxu0
    %v914 = vadd.f32 0.0, %v913
    %915 = vmatmul.f32.gmra.mxu0 %v704
    %v916 = vpop.f32.mrf.mxu0
    %v917 = vadd.f32 0.0, %v916
    %918 = vmatmul.f32.gmra.mxu0 %v705
    %v919 = vpop.f32.mrf.mxu0
    %v920 = vadd.f32 0.0, %v919
    %921 = vmatmul.f32.gmra.mxu0 %v706
    %v922 = vpop.f32.mrf.mxu0
    %v923 = vadd.f32 0.0, %v922
    %924 = vmatmul.f32.gmra.mxu0 %v707
    %v925 = vpop.f32.mrf.mxu0
    %v926 = vadd.f32 0.0, %v925
    %927 = vmatmul.f32.gmra.mxu0 %v708
    %v928 = vpop.f32.mrf.mxu0
    %v929 = vadd.f32 0.0, %v928
    %930 = vmatmul.f32.gmra.mxu0 %v709
    %v931 = vpop.f32.mrf.mxu0
    %v932 = vadd.f32 0.0, %v931
    %933 = vmatmul.f32.gmra.mxu0 %v710
    %v934 = vpop.f32.mrf.mxu0
    %v935 = vadd.f32 0.0, %v934
    %936 = vdwg.mxu0
    %v937 = vadd.f32 %v456, %v746
    %v938 = vadd.f32 %v459, %v749
    %v939 = vadd.f32 %v462, %v752
    %v940 = vadd.f32 %v465, %v755
    %v941 = vadd.f32 %v468, %v758
    %v942 = vadd.f32 %v471, %v761
    %v943 = vadd.f32 %v474, %v764
    %v944 = vadd.f32 %v477, %v767
    %v945 = vadd.f32 %v480, %v770
    %v946 = vadd.f32 %v483, %v773
    %v947 = vadd.f32 %v486, %v776
    %v948 = vadd.f32 %v489, %v779
    %v949 = vadd.f32 %v492, %v782
    %v950 = vadd.f32 %v495, %v785
    %v951 = vadd.f32 %v498, %v788
    %v952 = vadd.f32 %v501, %v791
    %v953 = vadd.f32 %v504, %v794
    %v954 = vadd.f32 %v507, %v797
    %v955 = vadd.f32 %v510, %v800
    %v956 = vadd.f32 %v513, %v803
    %v957 = vadd.f32 %v516, %v806
    %v958 = vadd.f32 %v519, %v809
    %v959 = vadd.f32 %v522, %v812
    %v960 = vadd.f32 %v525, %v815
    %v961 = vadd.f32 %v528, %v818
    %v962 = vadd.f32 %v531, %v821
    %v963 = vadd.f32 %v534, %v824
    %v964 = vadd.f32 %v537, %v827
    %v965 = vadd.f32 %v540, %v830
    %v966 = vadd.f32 %v543, %v833
    %v967 = vadd.f32 %v546, %v836
    %v968 = vadd.f32 %v549, %v839
    %v969 = vadd.f32 %v552, %v842
    %v970 = vadd.f32 %v555, %v845
    %v971 = vadd.f32 %v558, %v848
    %v972 = vadd.f32 %v561, %v851
    %v973 = vadd.f32 %v564, %v854
    %v974 = vadd.f32 %v567, %v857
    %v975 = vadd.f32 %v570, %v860
    %v976 = vadd.f32 %v573, %v863
    %v977 = vadd.f32 %v576, %v866
    %v978 = vadd.f32 %v579, %v869
    %v979 = vadd.f32 %v582, %v872
    %v980 = vadd.f32 %v585, %v875
    %v981 = vadd.f32 %v588, %v878
    %v982 = vadd.f32 %v591, %v881
    %v983 = vadd.f32 %v594, %v884
    %v984 = vadd.f32 %v597, %v887
    %v985 = vadd.f32 %v600, %v890
    %v986 = vadd.f32 %v603, %v893
    %v987 = vadd.f32 %v606, %v896
    %v988 = vadd.f32 %v609, %v899
    %v989 = vadd.f32 %v612, %v902
    %v990 = vadd.f32 %v615, %v905
    %v991 = vadd.f32 %v618, %v908
    %v992 = vadd.f32 %v621, %v911
    %v993 = vadd.f32 %v624, %v914
    %v994 = vadd.f32 %v627, %v917
    %v995 = vadd.f32 %v630, %v920
    %v996 = vadd.f32 %v633, %v923
    %v997 = vadd.f32 %v636, %v926
    %v998 = vadd.f32 %v639, %v929
    %v999 = vadd.f32 %v642, %v932
    %v1000 = vadd.f32 %v645, %v935
    %s1001 = scalar_lea.vmem %s0, 24
    %v1002 = vld [vmem:[%s1001] sm:$0xff]
    %v1003 = vld [vmem:[%s1001 + $0x8] sm:$0xff]
    %v1004 = vld [vmem:[%s1001 + $0x18] sm:$0xff]
    %v1005 = vld [vmem:[%s1001 + $0x20] sm:$0xff]
    %v1006 = vld [vmem:[%s1001 + $0x30] sm:$0xff]
    %v1007 = vld [vmem:[%s1001 + $0x38] sm:$0xff]
    %v1008 = vld [vmem:[%s1001 + $0x48] sm:$0xff]
    %v1009 = vld [vmem:[%s1001 + $0x50] sm:$0xff]
    %v1010 = vld [vmem:[%s1001 + $0x60] sm:$0xff]
    %v1011 = vld [vmem:[%s1001 + $0x68] sm:$0xff]
    %v1012 = vld [vmem:[%s1001 + $0x78] sm:$0xff]
    %v1013 = vld [vmem:[%s1001 + $0x80] sm:$0xff]
    %v1014 = vld [vmem:[%s1001 + $0x90] sm:$0xff]
    %v1015 = vld [vmem:[%s1001 + $0x98] sm:$0xff]
    %v1016 = vld [vmem:[%s1001 + $0xa8] sm:$0xff]
    %v1017 = vld [vmem:[%s1001 + $0xb0] sm:$0xff]
    %v1018 = vld [vmem:[%s1001 + $0xc0] sm:$0xff]
    %v1019 = vld [vmem:[%s1001 + $0xc8] sm:$0xff]
    %v1020 = vld [vmem:[%s1001 + $0xd8] sm:$0xff]
    %v1021 = vld [vmem:[%s1001 + $0xe0] sm:$0xff]
    %v1022 = vld [vmem:[%s1001 + $0xf0] sm:$0xff]
    %v1023 = vld [vmem:[%s1001 + $0xf8] sm:$0xff]
    %v1024 = vld [vmem:[%s1001 + $0x108] sm:$0xff]
    %v1025 = vld [vmem:[%s1001 + $0x110] sm:$0xff]
    %v1026 = vld [vmem:[%s1001 + $0x120] sm:$0xff]
    %v1027 = vld [vmem:[%s1001 + $0x128] sm:$0xff]
    %v1028 = vld [vmem:[%s1001 + $0x138] sm:$0xff]
    %v1029 = vld [vmem:[%s1001 + $0x140] sm:$0xff]
    %v1030 = vld [vmem:[%s1001 + $0x150] sm:$0xff]
    %v1031 = vld [vmem:[%s1001 + $0x158] sm:$0xff]
    %v1032 = vld [vmem:[%s1001 + $0x168] sm:$0xff]
    %v1033 = vld [vmem:[%s1001 + $0x170] sm:$0xff]
    %v1034 = vld [vmem:[%s1001 + $0x1b0] sm:$0xff]
    %v1035 = vld [vmem:[%s1001 + $0x1b8] sm:$0xff]
    %v1036 = vld [vmem:[%s1001 + $0x1c8] sm:$0xff]
    %v1037 = vld [vmem:[%s1001 + $0x1d0] sm:$0xff]
    %v1038 = vld [vmem:[%s1001 + $0x1e0] sm:$0xff]
    %v1039 = vld [vmem:[%s1001 + $0x1e8] sm:$0xff]
    %v1040 = vld [vmem:[%s1001 + $0x1f8] sm:$0xff]
    %v1041 = vld [vmem:[%s1001 + $0x200] sm:$0xff]
    %v1042 = vld [vmem:[%s1001 + $0x210] sm:$0xff]
    %v1043 = vld [vmem:[%s1001 + $0x218] sm:$0xff]
    %v1044 = vld [vmem:[%s1001 + $0x228] sm:$0xff]
    %v1045 = vld [vmem:[%s1001 + $0x230] sm:$0xff]
    %v1046 = vld [vmem:[%s1001 + $0x240] sm:$0xff]
    %v1047 = vld [vmem:[%s1001 + $0x248] sm:$0xff]
    %v1048 = vld [vmem:[%s1001 + $0x258] sm:$0xff]
    %v1049 = vld [vmem:[%s1001 + $0x260] sm:$0xff]
    %v1050 = vld [vmem:[%s1001 + $0x270] sm:$0xff]
    %v1051 = vld [vmem:[%s1001 + $0x278] sm:$0xff]
    %v1052 = vld [vmem:[%s1001 + $0x288] sm:$0xff]
    %v1053 = vld [vmem:[%s1001 + $0x290] sm:$0xff]
    %v1054 = vld [vmem:[%s1001 + $0x2a0] sm:$0xff]
    %v1055 = vld [vmem:[%s1001 + $0x2a8] sm:$0xff]
    %v1056 = vld [vmem:[%s1001 + $0x2b8] sm:$0xff]
    %v1057 = vld [vmem:[%s1001 + $0x2c0] sm:$0xff]
    %v1058 = vld [vmem:[%s1001 + $0x2d0] sm:$0xff]
    %v1059 = vld [vmem:[%s1001 + $0x2d8] sm:$0xff]
    %v1060 = vld [vmem:[%s1001 + $0x2e8] sm:$0xff]
    %v1061 = vld [vmem:[%s1001 + $0x2f0] sm:$0xff]
    %v1062 = vld [vmem:[%s1001 + $0x300] sm:$0xff]
    %v1063 = vld [vmem:[%s1001 + $0x308] sm:$0xff]
    %v1064 = vld [vmem:[%s1001 + $0x318] sm:$0xff]
    %v1065 = vld [vmem:[%s1001 + $0x320] sm:$0xff]
    %s1066 = scalar_lea.vmem %s2, 384
    %v1067 = vld [vmem:[%s1066] sm:$0xff]
    %v1068 = vld [vmem:[%s1066 + $0x8] sm:$0xff]
    %v1069 = vld [vmem:[%s1066 + $0x10] sm:$0xff]
    %v1070 = vld [vmem:[%s1066 + $0x18] sm:$0xff]
    %v1071 = vld [vmem:[%s1066 + $0x20] sm:$0xff]
    %v1072 = vld [vmem:[%s1066 + $0x28] sm:$0xff]
    %v1073 = vld [vmem:[%s1066 + $0x30] sm:$0xff]
    %v1074 = vld [vmem:[%s1066 + $0x38] sm:$0xff]
    %v1075 = vld [vmem:[%s1066 + $0x40] sm:$0xff]
    %v1076 = vld [vmem:[%s1066 + $0x48] sm:$0xff]
    %v1077 = vld [vmem:[%s1066 + $0x50] sm:$0xff]
    %v1078 = vld [vmem:[%s1066 + $0x58] sm:$0xff]
    %v1079 = vld [vmem:[%s1066 + $0x60] sm:$0xff]
    %v1080 = vld [vmem:[%s1066 + $0x68] sm:$0xff]
    %v1081 = vld [vmem:[%s1066 + $0x70] sm:$0xff]
    %v1082 = vld [vmem:[%s1066 + $0x78] sm:$0xff]
    %1083 = vmatpush.msra.mxu0 %v1082
    %1084 = vmatpush.msra.mxu0 %v1081
    %1085 = vmatpush.msra.mxu0 %v1080
    %1086 = vmatpush.msra.mxu0 %v1079
    %1087 = vmatpush.msra.mxu0 %v1078
    %1088 = vmatpush.msra.mxu0 %v1077
    %1089 = vmatpush.msra.mxu0 %v1076
    %1090 = vmatpush.msra.mxu0 %v1075
    %1091 = vmatpush.msra.mxu0 %v1074
    %1092 = vmatpush.msra.mxu0 %v1073
    %1093 = vmatpush.msra.mxu0 %v1072
    %1094 = vmatpush.msra.mxu0 %v1071
    %1095 = vmatpush.msra.mxu0 %v1070
    %1096 = vmatpush.msra.mxu0 %v1069
    %1097 = vmatpush.msra.mxu0 %v1068
    %1098 = vmatpush.msra.mxu0 %v1067
    %1099 = vmatmul.f32.gmra.mxu0 %v1002
    %v1100 = vpop.f32.mrf.mxu0
    %v1101 = vadd.f32 0.0, %v1100
    %1102 = vmatmul.f32.gmra.mxu0 %v1003
    %v1103 = vpop.f32.mrf.mxu0
    %v1104 = vadd.f32 0.0, %v1103
    %1105 = vmatmul.f32.gmra.mxu0 %v1004
    %v1106 = vpop.f32.mrf.mxu0
    %v1107 = vadd.f32 0.0, %v1106
    %1108 = vmatmul.f32.gmra.mxu0 %v1005
    %v1109 = vpop.f32.mrf.mxu0
    %v1110 = vadd.f32 0.0, %v1109
    %1111 = vmatmul.f32.gmra.mxu0 %v1006
    %v1112 = vpop.f32.mrf.mxu0
    %v1113 = vadd.f32 0.0, %v1112
    %1114 = vmatmul.f32.gmra.mxu0 %v1007
    %v1115 = vpop.f32.mrf.mxu0
    %v1116 = vadd.f32 0.0, %v1115
    %1117 = vmatmul.f32.gmra.mxu0 %v1008
    %v1118 = vpop.f32.mrf.mxu0
    %v1119 = vadd.f32 0.0, %v1118
    %1120 = vmatmul.f32.gmra.mxu0 %v1009
    %v1121 = vpop.f32.mrf.mxu0
    %v1122 = vadd.f32 0.0, %v1121
    %1123 = vmatmul.f32.gmra.mxu0 %v1010
    %v1124 = vpop.f32.mrf.mxu0
    %v1125 = vadd.f32 0.0, %v1124
    %1126 = vmatmul.f32.gmra.mxu0 %v1011
    %v1127 = vpop.f32.mrf.mxu0
    %v1128 = vadd.f32 0.0, %v1127
    %1129 = vmatmul.f32.gmra.mxu0 %v1012
    %v1130 = vpop.f32.mrf.mxu0
    %v1131 = vadd.f32 0.0, %v1130
    %1132 = vmatmul.f32.gmra.mxu0 %v1013
    %v1133 = vpop.f32.mrf.mxu0
    %v1134 = vadd.f32 0.0, %v1133
    %1135 = vmatmul.f32.gmra.mxu0 %v1014
    %v1136 = vpop.f32.mrf.mxu0
    %v1137 = vadd.f32 0.0, %v1136
    %1138 = vmatmul.f32.gmra.mxu0 %v1015
    %v1139 = vpop.f32.mrf.mxu0
    %v1140 = vadd.f32 0.0, %v1139
    %1141 = vmatmul.f32.gmra.mxu0 %v1016
    %v1142 = vpop.f32.mrf.mxu0
    %v1143 = vadd.f32 0.0, %v1142
    %1144 = vmatmul.f32.gmra.mxu0 %v1017
    %v1145 = vpop.f32.mrf.mxu0
    %v1146 = vadd.f32 0.0, %v1145
    %1147 = vmatmul.f32.gmra.mxu0 %v1018
    %v1148 = vpop.f32.mrf.mxu0
    %v1149 = vadd.f32 0.0, %v1148
    %1150 = vmatmul.f32.gmra.mxu0 %v1019
    %v1151 = vpop.f32.mrf.mxu0
    %v1152 = vadd.f32 0.0, %v1151
    %1153 = vmatmul.f32.gmra.mxu0 %v1020
    %v1154 = vpop.f32.mrf.mxu0
    %v1155 = vadd.f32 0.0, %v1154
    %1156 = vmatmul.f32.gmra.mxu0 %v1021
    %v1157 = vpop.f32.mrf.mxu0
    %v1158 = vadd.f32 0.0, %v1157
    %1159 = vmatmul.f32.gmra.mxu0 %v1022
    %v1160 = vpop.f32.mrf.mxu0
    %v1161 = vadd.f32 0.0, %v1160
    %1162 = vmatmul.f32.gmra.mxu0 %v1023
    %v1163 = vpop.f32.mrf.mxu0
    %v1164 = vadd.f32 0.0, %v1163
    %1165 = vmatmul.f32.gmra.mxu0 %v1024
    %v1166 = vpop.f32.mrf.mxu0
    %v1167 = vadd.f32 0.0, %v1166
    %1168 = vmatmul.f32.gmra.mxu0 %v1025
    %v1169 = vpop.f32.mrf.mxu0
    %v1170 = vadd.f32 0.0, %v1169
    %1171 = vmatmul.f32.gmra.mxu0 %v1026
    %v1172 = vpop.f32.mrf.mxu0
    %v1173 = vadd.f32 0.0, %v1172
    %1174 = vmatmul.f32.gmra.mxu0 %v1027
    %v1175 = vpop.f32.mrf.mxu0
    %v1176 = vadd.f32 0.0, %v1175
    %1177 = vmatmul.f32.gmra.mxu0 %v1028
    %v1178 = vpop.f32.mrf.mxu0
    %v1179 = vadd.f32 0.0, %v1178
    %1180 = vmatmul.f32.gmra.mxu0 %v1029
    %v1181 = vpop.f32.mrf.mxu0
    %v1182 = vadd.f32 0.0, %v1181
    %1183 = vmatmul.f32.gmra.mxu0 %v1030
    %v1184 = vpop.f32.mrf.mxu0
    %v1185 = vadd.f32 0.0, %v1184
    %1186 = vmatmul.f32.gmra.mxu0 %v1031
    %v1187 = vpop.f32.mrf.mxu0
    %v1188 = vadd.f32 0.0, %v1187
    %1189 = vmatmul.f32.gmra.mxu0 %v1032
    %v1190 = vpop.f32.mrf.mxu0
    %v1191 = vadd.f32 0.0, %v1190
    %1192 = vmatmul.f32.gmra.mxu0 %v1033
    %v1193 = vpop.f32.mrf.mxu0
    %v1194 = vadd.f32 0.0, %v1193
    %1195 = vmatmul.f32.gmra.mxu0 %v1034
    %v1196 = vpop.f32.mrf.mxu0
    %v1197 = vadd.f32 0.0, %v1196
    %1198 = vmatmul.f32.gmra.mxu0 %v1035
    %v1199 = vpop.f32.mrf.mxu0
    %v1200 = vadd.f32 0.0, %v1199
    %1201 = vmatmul.f32.gmra.mxu0 %v1036
    %v1202 = vpop.f32.mrf.mxu0
    %v1203 = vadd.f32 0.0, %v1202
    %1204 = vmatmul.f32.gmra.mxu0 %v1037
    %v1205 = vpop.f32.mrf.mxu0
    %v1206 = vadd.f32 0.0, %v1205
    %1207 = vmatmul.f32.gmra.mxu0 %v1038
    %v1208 = vpop.f32.mrf.mxu0
    %v1209 = vadd.f32 0.0, %v1208
    %1210 = vmatmul.f32.gmra.mxu0 %v1039
    %v1211 = vpop.f32.mrf.mxu0
    %v1212 = vadd.f32 0.0, %v1211
    %1213 = vmatmul.f32.gmra.mxu0 %v1040
    %v1214 = vpop.f32.mrf.mxu0
    %v1215 = vadd.f32 0.0, %v1214
    %1216 = vmatmul.f32.gmra.mxu0 %v1041
    %v1217 = vpop.f32.mrf.mxu0
    %v1218 = vadd.f32 0.0, %v1217
    %1219 = vmatmul.f32.gmra.mxu0 %v1042
    %v1220 = vpop.f32.mrf.mxu0
    %v1221 = vadd.f32 0.0, %v1220
    %1222 = vmatmul.f32.gmra.mxu0 %v1043
    %v1223 = vpop.f32.mrf.mxu0
    %v1224 = vadd.f32 0.0, %v1223
    %1225 = vmatmul.f32.gmra.mxu0 %v1044
    %v1226 = vpop.f32.mrf.mxu0
    %v1227 = vadd.f32 0.0, %v1226
    %1228 = vmatmul.f32.gmra.mxu0 %v1045
    %v1229 = vpop.f32.mrf.mxu0
    %v1230 = vadd.f32 0.0, %v1229
    %1231 = vmatmul.f32.gmra.mxu0 %v1046
    %v1232 = vpop.f32.mrf.mxu0
    %v1233 = vadd.f32 0.0, %v1232
    %1234 = vmatmul.f32.gmra.mxu0 %v1047
    %v1235 = vpop.f32.mrf.mxu0
    %v1236 = vadd.f32 0.0, %v1235
    %1237 = vmatmul.f32.gmra.mxu0 %v1048
    %v1238 = vpop.f32.mrf.mxu0
    %v1239 = vadd.f32 0.0, %v1238
    %1240 = vmatmul.f32.gmra.mxu0 %v1049
    %v1241 = vpop.f32.mrf.mxu0
    %v1242 = vadd.f32 0.0, %v1241
    %1243 = vmatmul.f32.gmra.mxu0 %v1050
    %v1244 = vpop.f32.mrf.mxu0
    %v1245 = vadd.f32 0.0, %v1244
    %1246 = vmatmul.f32.gmra.mxu0 %v1051
    %v1247 = vpop.f32.mrf.mxu0
    %v1248 = vadd.f32 0.0, %v1247
    %1249 = vmatmul.f32.gmra.mxu0 %v1052
    %v1250 = vpop.f32.mrf.mxu0
    %v1251 = vadd.f32 0.0, %v1250
    %1252 = vmatmul.f32.gmra.mxu0 %v1053
    %v1253 = vpop.f32.mrf.mxu0
    %v1254 = vadd.f32 0.0, %v1253
    %1255 = vmatmul.f32.gmra.mxu0 %v1054
    %v1256 = vpop.f32.mrf.mxu0
    %v1257 = vadd.f32 0.0, %v1256
    %1258 = vmatmul.f32.gmra.mxu0 %v1055
    %v1259 = vpop.f32.mrf.mxu0
    %v1260 = vadd.f32 0.0, %v1259
    %1261 = vmatmul.f32.gmra.mxu0 %v1056
    %v1262 = vpop.f32.mrf.mxu0
    %v1263 = vadd.f32 0.0, %v1262
    %1264 = vmatmul.f32.gmra.mxu0 %v1057
    %v1265 = vpop.f32.mrf.mxu0
    %v1266 = vadd.f32 0.0, %v1265
    %1267 = vmatmul.f32.gmra.mxu0 %v1058
    %v1268 = vpop.f32.mrf.mxu0
    %v1269 = vadd.f32 0.0, %v1268
    %1270 = vmatmul.f32.gmra.mxu0 %v1059
    %v1271 = vpop.f32.mrf.mxu0
    %v1272 = vadd.f32 0.0, %v1271
    %1273 = vmatmul.f32.gmra.mxu0 %v1060
    %v1274 = vpop.f32.mrf.mxu0
    %v1275 = vadd.f32 0.0, %v1274
    %1276 = vmatmul.f32.gmra.mxu0 %v1061
    %v1277 = vpop.f32.mrf.mxu0
    %v1278 = vadd.f32 0.0, %v1277
    %1279 = vmatmul.f32.gmra.mxu0 %v1062
    %v1280 = vpop.f32.mrf.mxu0
    %v1281 = vadd.f32 0.0, %v1280
    %1282 = vmatmul.f32.gmra.mxu0 %v1063
    %v1283 = vpop.f32.mrf.mxu0
    %v1284 = vadd.f32 0.0, %v1283
    %1285 = vmatmul.f32.gmra.mxu0 %v1064
    %v1286 = vpop.f32.mrf.mxu0
    %v1287 = vadd.f32 0.0, %v1286
    %1288 = vmatmul.f32.gmra.mxu0 %v1065
    %v1289 = vpop.f32.mrf.mxu0
    %v1290 = vadd.f32 0.0, %v1289
    %1291 = vdwg.mxu0
    %v1292 = vadd.f32 %v937, %v1101
    %v1293 = vadd.f32 %v938, %v1104
    %v1294 = vadd.f32 %v939, %v1107
    %v1295 = vadd.f32 %v940, %v1110
    %v1296 = vadd.f32 %v941, %v1113
    %v1297 = vadd.f32 %v942, %v1116
    %v1298 = vadd.f32 %v943, %v1119
    %v1299 = vadd.f32 %v944, %v1122
    %v1300 = vadd.f32 %v945, %v1125
    %v1301 = vadd.f32 %v946, %v1128
    %v1302 = vadd.f32 %v947, %v1131
    %v1303 = vadd.f32 %v948, %v1134
    %v1304 = vadd.f32 %v949, %v1137
    %v1305 = vadd.f32 %v950, %v1140
    %v1306 = vadd.f32 %v951, %v1143
    %v1307 = vadd.f32 %v952, %v1146
    %v1308 = vadd.f32 %v953, %v1149
    %v1309 = vadd.f32 %v954, %v1152
    %v1310 = vadd.f32 %v955, %v1155
    %v1311 = vadd.f32 %v956, %v1158
    %v1312 = vadd.f32 %v957, %v1161
    %v1313 = vadd.f32 %v958, %v1164
    %v1314 = vadd.f32 %v959, %v1167
    %v1315 = vadd.f32 %v960, %v1170
    %v1316 = vadd.f32 %v961, %v1173
    %v1317 = vadd.f32 %v962, %v1176
    %v1318 = vadd.f32 %v963, %v1179
    %v1319 = vadd.f32 %v964, %v1182
    %v1320 = vadd.f32 %v965, %v1185
    %v1321 = vadd.f32 %v966, %v1188
    %v1322 = vadd.f32 %v967, %v1191
    %v1323 = vadd.f32 %v968, %v1194
    %v1324 = vadd.f32 %v969, %v1197
    %v1325 = vadd.f32 %v970, %v1200
    %v1326 = vadd.f32 %v971, %v1203
    %v1327 = vadd.f32 %v972, %v1206
    %v1328 = vadd.f32 %v973, %v1209
    %v1329 = vadd.f32 %v974, %v1212
    %v1330 = vadd.f32 %v975, %v1215
    %v1331 = vadd.f32 %v976, %v1218
    %v1332 = vadd.f32 %v977, %v1221
    %v1333 = vadd.f32 %v978, %v1224
    %v1334 = vadd.f32 %v979, %v1227
    %v1335 = vadd.f32 %v980, %v1230
    %v1336 = vadd.f32 %v981, %v1233
    %v1337 = vadd.f32 %v982, %v1236
    %v1338 = vadd.f32 %v983, %v1239
    %v1339 = vadd.f32 %v984, %v1242
    %v1340 = vadd.f32 %v985, %v1245
    %v1341 = vadd.f32 %v986, %v1248
    %v1342 = vadd.f32 %v987, %v1251
    %v1343 = vadd.f32 %v988, %v1254
    %v1344 = vadd.f32 %v989, %v1257
    %v1345 = vadd.f32 %v990, %v1260
    %v1346 = vadd.f32 %v991, %v1263
    %v1347 = vadd.f32 %v992, %v1266
    %v1348 = vadd.f32 %v993, %v1269
    %v1349 = vadd.f32 %v994, %v1272
    %v1350 = vadd.f32 %v995, %v1275
    %v1351 = vadd.f32 %v996, %v1278
    %v1352 = vadd.f32 %v997, %v1281
    %v1353 = vadd.f32 %v998, %v1284
    %v1354 = vadd.f32 %v999, %v1287
    %v1355 = vadd.f32 %v1000, %v1290
    %v1356 = vld [vmem:[%s1001 + $0x1] sm:$0xff]
    %v1357 = vld [vmem:[%s1001 + $0x9] sm:$0xff]
    %v1358 = vld [vmem:[%s1001 + $0x19] sm:$0xff]
    %v1359 = vld [vmem:[%s1001 + $0x21] sm:$0xff]
    %v1360 = vld [vmem:[%s1001 + $0x31] sm:$0xff]
    %v1361 = vld [vmem:[%s1001 + $0x39] sm:$0xff]
    %v1362 = vld [vmem:[%s1001 + $0x49] sm:$0xff]
    %v1363 = vld [vmem:[%s1001 + $0x51] sm:$0xff]
    %v1364 = vld [vmem:[%s1001 + $0x61] sm:$0xff]
    %v1365 = vld [vmem:[%s1001 + $0x69] sm:$0xff]
    %v1366 = vld [vmem:[%s1001 + $0x79] sm:$0xff]
    %v1367 = vld [vmem:[%s1001 + $0x81] sm:$0xff]
    %v1368 = vld [vmem:[%s1001 + $0x91] sm:$0xff]
    %v1369 = vld [vmem:[%s1001 + $0x99] sm:$0xff]
    %v1370 = vld [vmem:[%s1001 + $0xa9] sm:$0xff]
    %v1371 = vld [vmem:[%s1001 + $0xb1] sm:$0xff]
    %v1372 = vld [vmem:[%s1001 + $0xc1] sm:$0xff]
    %v1373 = vld [vmem:[%s1001 + $0xc9] sm:$0xff]
    %v1374 = vld [vmem:[%s1001 + $0xd9] sm:$0xff]
    %v1375 = vld [vmem:[%s1001 + $0xe1] sm:$0xff]
    %v1376 = vld [vmem:[%s1001 + $0xf1] sm:$0xff]
    %v1377 = vld [vmem:[%s1001 + $0xf9] sm:$0xff]
    %v1378 = vld [vmem:[%s1001 + $0x109] sm:$0xff]
    %v1379 = vld [vmem:[%s1001 + $0x111] sm:$0xff]
    %v1380 = vld [vmem:[%s1001 + $0x121] sm:$0xff]
    %v1381 = vld [vmem:[%s1001 + $0x129] sm:$0xff]
    %v1382 = vld [vmem:[%s1001 + $0x139] sm:$0xff]
    %v1383 = vld [vmem:[%s1001 + $0x141] sm:$0xff]
    %v1384 = vld [vmem:[%s1001 + $0x151] sm:$0xff]
    %v1385 = vld [vmem:[%s1001 + $0x159] sm:$0xff]
    %v1386 = vld [vmem:[%s1001 + $0x169] sm:$0xff]
    %v1387 = vld [vmem:[%s1001 + $0x171] sm:$0xff]
    %v1388 = vld [vmem:[%s1001 + $0x1b1] sm:$0xff]
    %v1389 = vld [vmem:[%s1001 + $0x1b9] sm:$0xff]
    %v1390 = vld [vmem:[%s1001 + $0x1c9] sm:$0xff]
    %v1391 = vld [vmem:[%s1001 + $0x1d1] sm:$0xff]
    %v1392 = vld [vmem:[%s1001 + $0x1e1] sm:$0xff]
    %v1393 = vld [vmem:[%s1001 + $0x1e9] sm:$0xff]
    %v1394 = vld [vmem:[%s1001 + $0x1f9] sm:$0xff]
    %v1395 = vld [vmem:[%s1001 + $0x201] sm:$0xff]
    %v1396 = vld [vmem:[%s1001 + $0x211] sm:$0xff]
    %v1397 = vld [vmem:[%s1001 + $0x219] sm:$0xff]
    %v1398 = vld [vmem:[%s1001 + $0x229] sm:$0xff]
    %v1399 = vld [vmem:[%s1001 + $0x231] sm:$0xff]
    %v1400 = vld [vmem:[%s1001 + $0x241] sm:$0xff]
    %v1401 = vld [vmem:[%s1001 + $0x249] sm:$0xff]
    %v1402 = vld [vmem:[%s1001 + $0x259] sm:$0xff]
    %v1403 = vld [vmem:[%s1001 + $0x261] sm:$0xff]
    %v1404 = vld [vmem:[%s1001 + $0x271] sm:$0xff]
    %v1405 = vld [vmem:[%s1001 + $0x279] sm:$0xff]
    %v1406 = vld [vmem:[%s1001 + $0x289] sm:$0xff]
    %v1407 = vld [vmem:[%s1001 + $0x291] sm:$0xff]
    %v1408 = vld [vmem:[%s1001 + $0x2a1] sm:$0xff]
    %v1409 = vld [vmem:[%s1001 + $0x2a9] sm:$0xff]
    %v1410 = vld [vmem:[%s1001 + $0x2b9] sm:$0xff]
    %v1411 = vld [vmem:[%s1001 + $0x2c1] sm:$0xff]
    %v1412 = vld [vmem:[%s1001 + $0x2d1] sm:$0xff]
    %v1413 = vld [vmem:[%s1001 + $0x2d9] sm:$0xff]
    %v1414 = vld [vmem:[%s1001 + $0x2e9] sm:$0xff]
    %v1415 = vld [vmem:[%s1001 + $0x2f1] sm:$0xff]
    %v1416 = vld [vmem:[%s1001 + $0x301] sm:$0xff]
    %v1417 = vld [vmem:[%s1001 + $0x309] sm:$0xff]
    %v1418 = vld [vmem:[%s1001 + $0x319] sm:$0xff]
    %v1419 = vld [vmem:[%s1001 + $0x321] sm:$0xff]
    %s1420 = scalar_lea.vmem %s2, 512
    %v1421 = vld [vmem:[%s1420] sm:$0xff]
    %v1422 = vld [vmem:[%s1420 + $0x8] sm:$0xff]
    %v1423 = vld [vmem:[%s1420 + $0x10] sm:$0xff]
    %v1424 = vld [vmem:[%s1420 + $0x18] sm:$0xff]
    %v1425 = vld [vmem:[%s1420 + $0x20] sm:$0xff]
    %v1426 = vld [vmem:[%s1420 + $0x28] sm:$0xff]
    %v1427 = vld [vmem:[%s1420 + $0x30] sm:$0xff]
    %v1428 = vld [vmem:[%s1420 + $0x38] sm:$0xff]
    %v1429 = vld [vmem:[%s1420 + $0x40] sm:$0xff]
    %v1430 = vld [vmem:[%s1420 + $0x48] sm:$0xff]
    %v1431 = vld [vmem:[%s1420 + $0x50] sm:$0xff]
    %v1432 = vld [vmem:[%s1420 + $0x58] sm:$0xff]
    %v1433 = vld [vmem:[%s1420 + $0x60] sm:$0xff]
    %v1434 = vld [vmem:[%s1420 + $0x68] sm:$0xff]
    %v1435 = vld [vmem:[%s1420 + $0x70] sm:$0xff]
    %v1436 = vld [vmem:[%s1420 + $0x78] sm:$0xff]
    %1437 = vmatpush.msra.mxu0 %v1436
    %1438 = vmatpush.msra.mxu0 %v1435
    %1439 = vmatpush.msra.mxu0 %v1434
    %1440 = vmatpush.msra.mxu0 %v1433
    %1441 = vmatpush.msra.mxu0 %v1432
    %1442 = vmatpush.msra.mxu0 %v1431
    %1443 = vmatpush.msra.mxu0 %v1430
    %1444 = vmatpush.msra.mxu0 %v1429
    %1445 = vmatpush.msra.mxu0 %v1428
    %1446 = vmatpush.msra.mxu0 %v1427
    %1447 = vmatpush.msra.mxu0 %v1426
    %1448 = vmatpush.msra.mxu0 %v1425
    %1449 = vmatpush.msra.mxu0 %v1424
    %1450 = vmatpush.msra.mxu0 %v1423
    %1451 = vmatpush.msra.mxu0 %v1422
    %1452 = vmatpush.msra.mxu0 %v1421
    %1453 = vmatmul.f32.gmra.mxu0 %v1356
    %v1454 = vpop.f32.mrf.mxu0
    %v1455 = vadd.f32 0.0, %v1454
    %1456 = vmatmul.f32.gmra.mxu0 %v1357
    %v1457 = vpop.f32.mrf.mxu0
    %v1458 = vadd.f32 0.0, %v1457
    %1459 = vmatmul.f32.gmra.mxu0 %v1358
    %v1460 = vpop.f32.mrf.mxu0
    %v1461 = vadd.f32 0.0, %v1460
    %1462 = vmatmul.f32.gmra.mxu0 %v1359
    %v1463 = vpop.f32.mrf.mxu0
    %v1464 = vadd.f32 0.0, %v1463
    %1465 = vmatmul.f32.gmra.mxu0 %v1360
    %v1466 = vpop.f32.mrf.mxu0
    %v1467 = vadd.f32 0.0, %v1466
    %1468 = vmatmul.f32.gmra.mxu0 %v1361
    %v1469 = vpop.f32.mrf.mxu0
    %v1470 = vadd.f32 0.0, %v1469
    %1471 = vmatmul.f32.gmra.mxu0 %v1362
    %v1472 = vpop.f32.mrf.mxu0
    %v1473 = vadd.f32 0.0, %v1472
    %1474 = vmatmul.f32.gmra.mxu0 %v1363
    %v1475 = vpop.f32.mrf.mxu0
    %v1476 = vadd.f32 0.0, %v1475
    %1477 = vmatmul.f32.gmra.mxu0 %v1364
    %v1478 = vpop.f32.mrf.mxu0
    %v1479 = vadd.f32 0.0, %v1478
    %1480 = vmatmul.f32.gmra.mxu0 %v1365
    %v1481 = vpop.f32.mrf.mxu0
    %v1482 = vadd.f32 0.0, %v1481
    %1483 = vmatmul.f32.gmra.mxu0 %v1366
    %v1484 = vpop.f32.mrf.mxu0
    %v1485 = vadd.f32 0.0, %v1484
    %1486 = vmatmul.f32.gmra.mxu0 %v1367
    %v1487 = vpop.f32.mrf.mxu0
    %v1488 = vadd.f32 0.0, %v1487
    %1489 = vmatmul.f32.gmra.mxu0 %v1368
    %v1490 = vpop.f32.mrf.mxu0
    %v1491 = vadd.f32 0.0, %v1490
    %1492 = vmatmul.f32.gmra.mxu0 %v1369
    %v1493 = vpop.f32.mrf.mxu0
    %v1494 = vadd.f32 0.0, %v1493
    %1495 = vmatmul.f32.gmra.mxu0 %v1370
    %v1496 = vpop.f32.mrf.mxu0
    %v1497 = vadd.f32 0.0, %v1496
    %1498 = vmatmul.f32.gmra.mxu0 %v1371
    %v1499 = vpop.f32.mrf.mxu0
    %v1500 = vadd.f32 0.0, %v1499
    %1501 = vmatmul.f32.gmra.mxu0 %v1372
    %v1502 = vpop.f32.mrf.mxu0
    %v1503 = vadd.f32 0.0, %v1502
    %1504 = vmatmul.f32.gmra.mxu0 %v1373
    %v1505 = vpop.f32.mrf.mxu0
    %v1506 = vadd.f32 0.0, %v1505
    %1507 = vmatmul.f32.gmra.mxu0 %v1374
    %v1508 = vpop.f32.mrf.mxu0
    %v1509 = vadd.f32 0.0, %v1508
    %1510 = vmatmul.f32.gmra.mxu0 %v1375
    %v1511 = vpop.f32.mrf.mxu0
    %v1512 = vadd.f32 0.0, %v1511
    %1513 = vmatmul.f32.gmra.mxu0 %v1376
    %v1514 = vpop.f32.mrf.mxu0
    %v1515 = vadd.f32 0.0, %v1514
    %1516 = vmatmul.f32.gmra.mxu0 %v1377
    %v1517 = vpop.f32.mrf.mxu0
    %v1518 = vadd.f32 0.0, %v1517
    %1519 = vmatmul.f32.gmra.mxu0 %v1378
    %v1520 = vpop.f32.mrf.mxu0
    %v1521 = vadd.f32 0.0, %v1520
    %1522 = vmatmul.f32.gmra.mxu0 %v1379
    %v1523 = vpop.f32.mrf.mxu0
    %v1524 = vadd.f32 0.0, %v1523
    %1525 = vmatmul.f32.gmra.mxu0 %v1380
    %v1526 = vpop.f32.mrf.mxu0
    %v1527 = vadd.f32 0.0, %v1526
    %1528 = vmatmul.f32.gmra.mxu0 %v1381
    %v1529 = vpop.f32.mrf.mxu0
    %v1530 = vadd.f32 0.0, %v1529
    %1531 = vmatmul.f32.gmra.mxu0 %v1382
    %v1532 = vpop.f32.mrf.mxu0
    %v1533 = vadd.f32 0.0, %v1532
    %1534 = vmatmul.f32.gmra.mxu0 %v1383
    %v1535 = vpop.f32.mrf.mxu0
    %v1536 = vadd.f32 0.0, %v1535
    %1537 = vmatmul.f32.gmra.mxu0 %v1384
    %v1538 = vpop.f32.mrf.mxu0
    %v1539 = vadd.f32 0.0, %v1538
    %1540 = vmatmul.f32.gmra.mxu0 %v1385
    %v1541 = vpop.f32.mrf.mxu0
    %v1542 = vadd.f32 0.0, %v1541
    %1543 = vmatmul.f32.gmra.mxu0 %v1386
    %v1544 = vpop.f32.mrf.mxu0
    %v1545 = vadd.f32 0.0, %v1544
    %1546 = vmatmul.f32.gmra.mxu0 %v1387
    %v1547 = vpop.f32.mrf.mxu0
    %v1548 = vadd.f32 0.0, %v1547
    %1549 = vmatmul.f32.gmra.mxu0 %v1388
    %v1550 = vpop.f32.mrf.mxu0
    %v1551 = vadd.f32 0.0, %v1550
    %1552 = vmatmul.f32.gmra.mxu0 %v1389
    %v1553 = vpop.f32.mrf.mxu0
    %v1554 = vadd.f32 0.0, %v1553
    %1555 = vmatmul.f32.gmra.mxu0 %v1390
    %v1556 = vpop.f32.mrf.mxu0
    %v1557 = vadd.f32 0.0, %v1556
    %1558 = vmatmul.f32.gmra.mxu0 %v1391
    %v1559 = vpop.f32.mrf.mxu0
    %v1560 = vadd.f32 0.0, %v1559
    %1561 = vmatmul.f32.gmra.mxu0 %v1392
    %v1562 = vpop.f32.mrf.mxu0
    %v1563 = vadd.f32 0.0, %v1562
    %1564 = vmatmul.f32.gmra.mxu0 %v1393
    %v1565 = vpop.f32.mrf.mxu0
    %v1566 = vadd.f32 0.0, %v1565
    %1567 = vmatmul.f32.gmra.mxu0 %v1394
    %v1568 = vpop.f32.mrf.mxu0
    %v1569 = vadd.f32 0.0, %v1568
    %1570 = vmatmul.f32.gmra.mxu0 %v1395
    %v1571 = vpop.f32.mrf.mxu0
    %v1572 = vadd.f32 0.0, %v1571
    %1573 = vmatmul.f32.gmra.mxu0 %v1396
    %v1574 = vpop.f32.mrf.mxu0
    %v1575 = vadd.f32 0.0, %v1574
    %1576 = vmatmul.f32.gmra.mxu0 %v1397
    %v1577 = vpop.f32.mrf.mxu0
    %v1578 = vadd.f32 0.0, %v1577
    %1579 = vmatmul.f32.gmra.mxu0 %v1398
    %v1580 = vpop.f32.mrf.mxu0
    %v1581 = vadd.f32 0.0, %v1580
    %1582 = vmatmul.f32.gmra.mxu0 %v1399
    %v1583 = vpop.f32.mrf.mxu0
    %v1584 = vadd.f32 0.0, %v1583
    %1585 = vmatmul.f32.gmra.mxu0 %v1400
    %v1586 = vpop.f32.mrf.mxu0
    %v1587 = vadd.f32 0.0, %v1586
    %1588 = vmatmul.f32.gmra.mxu0 %v1401
    %v1589 = vpop.f32.mrf.mxu0
    %v1590 = vadd.f32 0.0, %v1589
    %1591 = vmatmul.f32.gmra.mxu0 %v1402
    %v1592 = vpop.f32.mrf.mxu0
    %v1593 = vadd.f32 0.0, %v1592
    %1594 = vmatmul.f32.gmra.mxu0 %v1403
    %v1595 = vpop.f32.mrf.mxu0
    %v1596 = vadd.f32 0.0, %v1595
    %1597 = vmatmul.f32.gmra.mxu0 %v1404
    %v1598 = vpop.f32.mrf.mxu0
    %v1599 = vadd.f32 0.0, %v1598
    %1600 = vmatmul.f32.gmra.mxu0 %v1405
    %v1601 = vpop.f32.mrf.mxu0
    %v1602 = vadd.f32 0.0, %v1601
    %1603 = vmatmul.f32.gmra.mxu0 %v1406
    %v1604 = vpop.f32.mrf.mxu0
    %v1605 = vadd.f32 0.0, %v1604
    %1606 = vmatmul.f32.gmra.mxu0 %v1407
    %v1607 = vpop.f32.mrf.mxu0
    %v1608 = vadd.f32 0.0, %v1607
    %1609 = vmatmul.f32.gmra.mxu0 %v1408
    %v1610 = vpop.f32.mrf.mxu0
    %v1611 = vadd.f32 0.0, %v1610
    %1612 = vmatmul.f32.gmra.mxu0 %v1409
    %v1613 = vpop.f32.mrf.mxu0
    %v1614 = vadd.f32 0.0, %v1613
    %1615 = vmatmul.f32.gmra.mxu0 %v1410
    %v1616 = vpop.f32.mrf.mxu0
    %v1617 = vadd.f32 0.0, %v1616
    %1618 = vmatmul.f32.gmra.mxu0 %v1411
    %v1619 = vpop.f32.mrf.mxu0
    %v1620 = vadd.f32 0.0, %v1619
    %1621 = vmatmul.f32.gmra.mxu0 %v1412
    %v1622 = vpop.f32.mrf.mxu0
    %v1623 = vadd.f32 0.0, %v1622
    %1624 = vmatmul.f32.gmra.mxu0 %v1413
    %v1625 = vpop.f32.mrf.mxu0
    %v1626 = vadd.f32 0.0, %v1625
    %1627 = vmatmul.f32.gmra.mxu0 %v1414
    %v1628 = vpop.f32.mrf.mxu0
    %v1629 = vadd.f32 0.0, %v1628
    %1630 = vmatmul.f32.gmra.mxu0 %v1415
    %v1631 = vpop.f32.mrf.mxu0
    %v1632 = vadd.f32 0.0, %v1631
    %1633 = vmatmul.f32.gmra.mxu0 %v1416
    %v1634 = vpop.f32.mrf.mxu0
    %v1635 = vadd.f32 0.0, %v1634
    %1636 = vmatmul.f32.gmra.mxu0 %v1417
    %v1637 = vpop.f32.mrf.mxu0
    %v1638 = vadd.f32 0.0, %v1637
    %1639 = vmatmul.f32.gmra.mxu0 %v1418
    %v1640 = vpop.f32.mrf.mxu0
    %v1641 = vadd.f32 0.0, %v1640
    %1642 = vmatmul.f32.gmra.mxu0 %v1419
    %v1643 = vpop.f32.mrf.mxu0
    %v1644 = vadd.f32 0.0, %v1643
    %1645 = vdwg.mxu0
    %v1646 = vadd.f32 %v1292, %v1455
    %v1647 = vadd.f32 %v1293, %v1458
    %v1648 = vadd.f32 %v1294, %v1461
    %v1649 = vadd.f32 %v1295, %v1464
    %v1650 = vadd.f32 %v1296, %v1467
    %v1651 = vadd.f32 %v1297, %v1470
    %v1652 = vadd.f32 %v1298, %v1473
    %v1653 = vadd.f32 %v1299, %v1476
    %v1654 = vadd.f32 %v1300, %v1479
    %v1655 = vadd.f32 %v1301, %v1482
    %v1656 = vadd.f32 %v1302, %v1485
    %v1657 = vadd.f32 %v1303, %v1488
    %v1658 = vadd.f32 %v1304, %v1491
    %v1659 = vadd.f32 %v1305, %v1494
    %v1660 = vadd.f32 %v1306, %v1497
    %v1661 = vadd.f32 %v1307, %v1500
    %v1662 = vadd.f32 %v1308, %v1503
    %v1663 = vadd.f32 %v1309, %v1506
    %v1664 = vadd.f32 %v1310, %v1509
    %v1665 = vadd.f32 %v1311, %v1512
    %v1666 = vadd.f32 %v1312, %v1515
    %v1667 = vadd.f32 %v1313, %v1518
    %v1668 = vadd.f32 %v1314, %v1521
    %v1669 = vadd.f32 %v1315, %v1524
    %v1670 = vadd.f32 %v1316, %v1527
    %v1671 = vadd.f32 %v1317, %v1530
    %v1672 = vadd.f32 %v1318, %v1533
    %v1673 = vadd.f32 %v1319, %v1536
    %v1674 = vadd.f32 %v1320, %v1539
    %v1675 = vadd.f32 %v1321, %v1542
    %v1676 = vadd.f32 %v1322, %v1545
    %v1677 = vadd.f32 %v1323, %v1548
    %v1678 = vadd.f32 %v1324, %v1551
    %v1679 = vadd.f32 %v1325, %v1554
    %v1680 = vadd.f32 %v1326, %v1557
    %v1681 = vadd.f32 %v1327, %v1560
    %v1682 = vadd.f32 %v1328, %v1563
    %v1683 = vadd.f32 %v1329, %v1566
    %v1684 = vadd.f32 %v1330, %v1569
    %v1685 = vadd.f32 %v1331, %v1572
    %v1686 = vadd.f32 %v1332, %v1575
    %v1687 = vadd.f32 %v1333, %v1578
    %v1688 = vadd.f32 %v1334, %v1581
    %v1689 = vadd.f32 %v1335, %v1584
    %v1690 = vadd.f32 %v1336, %v1587
    %v1691 = vadd.f32 %v1337, %v1590
    %v1692 = vadd.f32 %v1338, %v1593
    %v1693 = vadd.f32 %v1339, %v1596
    %v1694 = vadd.f32 %v1340, %v1599
    %v1695 = vadd.f32 %v1341, %v1602
    %v1696 = vadd.f32 %v1342, %v1605
    %v1697 = vadd.f32 %v1343, %v1608
    %v1698 = vadd.f32 %v1344, %v1611
    %v1699 = vadd.f32 %v1345, %v1614
    %v1700 = vadd.f32 %v1346, %v1617
    %v1701 = vadd.f32 %v1347, %v1620
    %v1702 = vadd.f32 %v1348, %v1623
    %v1703 = vadd.f32 %v1349, %v1626
    %v1704 = vadd.f32 %v1350, %v1629
    %v1705 = vadd.f32 %v1351, %v1632
    %v1706 = vadd.f32 %v1352, %v1635
    %v1707 = vadd.f32 %v1353, %v1638
    %v1708 = vadd.f32 %v1354, %v1641
    %v1709 = vadd.f32 %v1355, %v1644
    %v1710 = vld [vmem:[%s1001 + $0x2] sm:$0xff]
    %v1711 = vld [vmem:[%s1001 + $0xa] sm:$0xff]
    %v1712 = vld [vmem:[%s1001 + $0x1a] sm:$0xff]
    %v1713 = vld [vmem:[%s1001 + $0x22] sm:$0xff]
    %v1714 = vld [vmem:[%s1001 + $0x32] sm:$0xff]
    %v1715 = vld [vmem:[%s1001 + $0x3a] sm:$0xff]
    %v1716 = vld [vmem:[%s1001 + $0x4a] sm:$0xff]
    %v1717 = vld [vmem:[%s1001 + $0x52] sm:$0xff]
    %v1718 = vld [vmem:[%s1001 + $0x62] sm:$0xff]
    %v1719 = vld [vmem:[%s1001 + $0x6a] sm:$0xff]
    %v1720 = vld [vmem:[%s1001 + $0x7a] sm:$0xff]
    %v1721 = vld [vmem:[%s1001 + $0x82] sm:$0xff]
    %v1722 = vld [vmem:[%s1001 + $0x92] sm:$0xff]
    %v1723 = vld [vmem:[%s1001 + $0x9a] sm:$0xff]
    %v1724 = vld [vmem:[%s1001 + $0xaa] sm:$0xff]
    %v1725 = vld [vmem:[%s1001 + $0xb2] sm:$0xff]
    %v1726 = vld [vmem:[%s1001 + $0xc2] sm:$0xff]
    %v1727 = vld [vmem:[%s1001 + $0xca] sm:$0xff]
    %v1728 = vld [vmem:[%s1001 + $0xda] sm:$0xff]
    %v1729 = vld [vmem:[%s1001 + $0xe2] sm:$0xff]
    %v1730 = vld [vmem:[%s1001 + $0xf2] sm:$0xff]
    %v1731 = vld [vmem:[%s1001 + $0xfa] sm:$0xff]
    %v1732 = vld [vmem:[%s1001 + $0x10a] sm:$0xff]
    %v1733 = vld [vmem:[%s1001 + $0x112] sm:$0xff]
    %v1734 = vld [vmem:[%s1001 + $0x122] sm:$0xff]
    %v1735 = vld [vmem:[%s1001 + $0x12a] sm:$0xff]
    %v1736 = vld [vmem:[%s1001 + $0x13a] sm:$0xff]
    %v1737 = vld [vmem:[%s1001 + $0x142] sm:$0xff]
    %v1738 = vld [vmem:[%s1001 + $0x152] sm:$0xff]
    %v1739 = vld [vmem:[%s1001 + $0x15a] sm:$0xff]
    %v1740 = vld [vmem:[%s1001 + $0x16a] sm:$0xff]
    %v1741 = vld [vmem:[%s1001 + $0x172] sm:$0xff]
    %v1742 = vld [vmem:[%s1001 + $0x1b2] sm:$0xff]
    %v1743 = vld [vmem:[%s1001 + $0x1ba] sm:$0xff]
    %v1744 = vld [vmem:[%s1001 + $0x1ca] sm:$0xff]
    %v1745 = vld [vmem:[%s1001 + $0x1d2] sm:$0xff]
    %v1746 = vld [vmem:[%s1001 + $0x1e2] sm:$0xff]
    %v1747 = vld [vmem:[%s1001 + $0x1ea] sm:$0xff]
    %v1748 = vld [vmem:[%s1001 + $0x1fa] sm:$0xff]
    %v1749 = vld [vmem:[%s1001 + $0x202] sm:$0xff]
    %v1750 = vld [vmem:[%s1001 + $0x212] sm:$0xff]
    %v1751 = vld [vmem:[%s1001 + $0x21a] sm:$0xff]
    %v1752 = vld [vmem:[%s1001 + $0x22a] sm:$0xff]
    %v1753 = vld [vmem:[%s1001 + $0x232] sm:$0xff]
    %v1754 = vld [vmem:[%s1001 + $0x242] sm:$0xff]
    %v1755 = vld [vmem:[%s1001 + $0x24a] sm:$0xff]
    %v1756 = vld [vmem:[%s1001 + $0x25a] sm:$0xff]
    %v1757 = vld [vmem:[%s1001 + $0x262] sm:$0xff]
    %v1758 = vld [vmem:[%s1001 + $0x272] sm:$0xff]
    %v1759 = vld [vmem:[%s1001 + $0x27a] sm:$0xff]
    %v1760 = vld [vmem:[%s1001 + $0x28a] sm:$0xff]
    %v1761 = vld [vmem:[%s1001 + $0x292] sm:$0xff]
    %v1762 = vld [vmem:[%s1001 + $0x2a2] sm:$0xff]
    %v1763 = vld [vmem:[%s1001 + $0x2aa] sm:$0xff]
    %v1764 = vld [vmem:[%s1001 + $0x2ba] sm:$0xff]
    %v1765 = vld [vmem:[%s1001 + $0x2c2] sm:$0xff]
    %v1766 = vld [vmem:[%s1001 + $0x2d2] sm:$0xff]
    %v1767 = vld [vmem:[%s1001 + $0x2da] sm:$0xff]
    %v1768 = vld [vmem:[%s1001 + $0x2ea] sm:$0xff]
    %v1769 = vld [vmem:[%s1001 + $0x2f2] sm:$0xff]
    %v1770 = vld [vmem:[%s1001 + $0x302] sm:$0xff]
    %v1771 = vld [vmem:[%s1001 + $0x30a] sm:$0xff]
    %v1772 = vld [vmem:[%s1001 + $0x31a] sm:$0xff]
    %v1773 = vld [vmem:[%s1001 + $0x322] sm:$0xff]
    %s1774 = scalar_lea.vmem %s2, 640
    %v1775 = vld [vmem:[%s1774] sm:$0xff]
    %v1776 = vld [vmem:[%s1774 + $0x8] sm:$0xff]
    %v1777 = vld [vmem:[%s1774 + $0x10] sm:$0xff]
    %v1778 = vld [vmem:[%s1774 + $0x18] sm:$0xff]
    %v1779 = vld [vmem:[%s1774 + $0x20] sm:$0xff]
    %v1780 = vld [vmem:[%s1774 + $0x28] sm:$0xff]
    %v1781 = vld [vmem:[%s1774 + $0x30] sm:$0xff]
    %v1782 = vld [vmem:[%s1774 + $0x38] sm:$0xff]
    %v1783 = vld [vmem:[%s1774 + $0x40] sm:$0xff]
    %v1784 = vld [vmem:[%s1774 + $0x48] sm:$0xff]
    %v1785 = vld [vmem:[%s1774 + $0x50] sm:$0xff]
    %v1786 = vld [vmem:[%s1774 + $0x58] sm:$0xff]
    %v1787 = vld [vmem:[%s1774 + $0x60] sm:$0xff]
    %v1788 = vld [vmem:[%s1774 + $0x68] sm:$0xff]
    %v1789 = vld [vmem:[%s1774 + $0x70] sm:$0xff]
    %v1790 = vld [vmem:[%s1774 + $0x78] sm:$0xff]
    %1791 = vmatpush.msra.mxu0 %v1790
    %1792 = vmatpush.msra.mxu0 %v1789
    %1793 = vmatpush.msra.mxu0 %v1788
    %1794 = vmatpush.msra.mxu0 %v1787
    %1795 = vmatpush.msra.mxu0 %v1786
    %1796 = vmatpush.msra.mxu0 %v1785
    %1797 = vmatpush.msra.mxu0 %v1784
    %1798 = vmatpush.msra.mxu0 %v1783
    %1799 = vmatpush.msra.mxu0 %v1782
    %1800 = vmatpush.msra.mxu0 %v1781
    %1801 = vmatpush.msra.mxu0 %v1780
    %1802 = vmatpush.msra.mxu0 %v1779
    %1803 = vmatpush.msra.mxu0 %v1778
    %1804 = vmatpush.msra.mxu0 %v1777
    %1805 = vmatpush.msra.mxu0 %v1776
    %1806 = vmatpush.msra.mxu0 %v1775
    %1807 = vmatmul.f32.gmra.mxu0 %v1710
    %v1808 = vpop.f32.mrf.mxu0
    %v1809 = vadd.f32 0.0, %v1808
    %1810 = vmatmul.f32.gmra.mxu0 %v1711
    %v1811 = vpop.f32.mrf.mxu0
    %v1812 = vadd.f32 0.0, %v1811
    %1813 = vmatmul.f32.gmra.mxu0 %v1712
    %v1814 = vpop.f32.mrf.mxu0
    %v1815 = vadd.f32 0.0, %v1814
    %1816 = vmatmul.f32.gmra.mxu0 %v1713
    %v1817 = vpop.f32.mrf.mxu0
    %v1818 = vadd.f32 0.0, %v1817
    %1819 = vmatmul.f32.gmra.mxu0 %v1714
    %v1820 = vpop.f32.mrf.mxu0
    %v1821 = vadd.f32 0.0, %v1820
    %1822 = vmatmul.f32.gmra.mxu0 %v1715
    %v1823 = vpop.f32.mrf.mxu0
    %v1824 = vadd.f32 0.0, %v1823
    %1825 = vmatmul.f32.gmra.mxu0 %v1716
    %v1826 = vpop.f32.mrf.mxu0
    %v1827 = vadd.f32 0.0, %v1826
    %1828 = vmatmul.f32.gmra.mxu0 %v1717
    %v1829 = vpop.f32.mrf.mxu0
    %v1830 = vadd.f32 0.0, %v1829
    %1831 = vmatmul.f32.gmra.mxu0 %v1718
    %v1832 = vpop.f32.mrf.mxu0
    %v1833 = vadd.f32 0.0, %v1832
    %1834 = vmatmul.f32.gmra.mxu0 %v1719
    %v1835 = vpop.f32.mrf.mxu0
    %v1836 = vadd.f32 0.0, %v1835
    %1837 = vmatmul.f32.gmra.mxu0 %v1720
    %v1838 = vpop.f32.mrf.mxu0
    %v1839 = vadd.f32 0.0, %v1838
    %1840 = vmatmul.f32.gmra.mxu0 %v1721
    %v1841 = vpop.f32.mrf.mxu0
    %v1842 = vadd.f32 0.0, %v1841
    %1843 = vmatmul.f32.gmra.mxu0 %v1722
    %v1844 = vpop.f32.mrf.mxu0
    %v1845 = vadd.f32 0.0, %v1844
    %1846 = vmatmul.f32.gmra.mxu0 %v1723
    %v1847 = vpop.f32.mrf.mxu0
    %v1848 = vadd.f32 0.0, %v1847
    %1849 = vmatmul.f32.gmra.mxu0 %v1724
    %v1850 = vpop.f32.mrf.mxu0
    %v1851 = vadd.f32 0.0, %v1850
    %1852 = vmatmul.f32.gmra.mxu0 %v1725
    %v1853 = vpop.f32.mrf.mxu0
    %v1854 = vadd.f32 0.0, %v1853
    %1855 = vmatmul.f32.gmra.mxu0 %v1726
    %v1856 = vpop.f32.mrf.mxu0
    %v1857 = vadd.f32 0.0, %v1856
    %1858 = vmatmul.f32.gmra.mxu0 %v1727
    %v1859 = vpop.f32.mrf.mxu0
    %v1860 = vadd.f32 0.0, %v1859
    %1861 = vmatmul.f32.gmra.mxu0 %v1728
    %v1862 = vpop.f32.mrf.mxu0
    %v1863 = vadd.f32 0.0, %v1862
    %1864 = vmatmul.f32.gmra.mxu0 %v1729
    %v1865 = vpop.f32.mrf.mxu0
    %v1866 = vadd.f32 0.0, %v1865
    %1867 = vmatmul.f32.gmra.mxu0 %v1730
    %v1868 = vpop.f32.mrf.mxu0
    %v1869 = vadd.f32 0.0, %v1868
    %1870 = vmatmul.f32.gmra.mxu0 %v1731
    %v1871 = vpop.f32.mrf.mxu0
    %v1872 = vadd.f32 0.0, %v1871
    %1873 = vmatmul.f32.gmra.mxu0 %v1732
    %v1874 = vpop.f32.mrf.mxu0
    %v1875 = vadd.f32 0.0, %v1874
    %1876 = vmatmul.f32.gmra.mxu0 %v1733
    %v1877 = vpop.f32.mrf.mxu0
    %v1878 = vadd.f32 0.0, %v1877
    %1879 = vmatmul.f32.gmra.mxu0 %v1734
    %v1880 = vpop.f32.mrf.mxu0
    %v1881 = vadd.f32 0.0, %v1880
    %1882 = vmatmul.f32.gmra.mxu0 %v1735
    %v1883 = vpop.f32.mrf.mxu0
    %v1884 = vadd.f32 0.0, %v1883
    %1885 = vmatmul.f32.gmra.mxu0 %v1736
    %v1886 = vpop.f32.mrf.mxu0
    %v1887 = vadd.f32 0.0, %v1886
    %1888 = vmatmul.f32.gmra.mxu0 %v1737
    %v1889 = vpop.f32.mrf.mxu0
    %v1890 = vadd.f32 0.0, %v1889
    %1891 = vmatmul.f32.gmra.mxu0 %v1738
    %v1892 = vpop.f32.mrf.mxu0
    %v1893 = vadd.f32 0.0, %v1892
    %1894 = vmatmul.f32.gmra.mxu0 %v1739
    %v1895 = vpop.f32.mrf.mxu0
    %v1896 = vadd.f32 0.0, %v1895
    %1897 = vmatmul.f32.gmra.mxu0 %v1740
    %v1898 = vpop.f32.mrf.mxu0
    %v1899 = vadd.f32 0.0, %v1898
    %1900 = vmatmul.f32.gmra.mxu0 %v1741
    %v1901 = vpop.f32.mrf.mxu0
    %v1902 = vadd.f32 0.0, %v1901
    %1903 = vmatmul.f32.gmra.mxu0 %v1742
    %v1904 = vpop.f32.mrf.mxu0
    %v1905 = vadd.f32 0.0, %v1904
    %1906 = vmatmul.f32.gmra.mxu0 %v1743
    %v1907 = vpop.f32.mrf.mxu0
    %v1908 = vadd.f32 0.0, %v1907
    %1909 = vmatmul.f32.gmra.mxu0 %v1744
    %v1910 = vpop.f32.mrf.mxu0
    %v1911 = vadd.f32 0.0, %v1910
    %1912 = vmatmul.f32.gmra.mxu0 %v1745
    %v1913 = vpop.f32.mrf.mxu0
    %v1914 = vadd.f32 0.0, %v1913
    %1915 = vmatmul.f32.gmra.mxu0 %v1746
    %v1916 = vpop.f32.mrf.mxu0
    %v1917 = vadd.f32 0.0, %v1916
    %1918 = vmatmul.f32.gmra.mxu0 %v1747
    %v1919 = vpop.f32.mrf.mxu0
    %v1920 = vadd.f32 0.0, %v1919
    %1921 = vmatmul.f32.gmra.mxu0 %v1748
    %v1922 = vpop.f32.mrf.mxu0
    %v1923 = vadd.f32 0.0, %v1922
    %1924 = vmatmul.f32.gmra.mxu0 %v1749
    %v1925 = vpop.f32.mrf.mxu0
    %v1926 = vadd.f32 0.0, %v1925
    %1927 = vmatmul.f32.gmra.mxu0 %v1750
    %v1928 = vpop.f32.mrf.mxu0
    %v1929 = vadd.f32 0.0, %v1928
    %1930 = vmatmul.f32.gmra.mxu0 %v1751
    %v1931 = vpop.f32.mrf.mxu0
    %v1932 = vadd.f32 0.0, %v1931
    %1933 = vmatmul.f32.gmra.mxu0 %v1752
    %v1934 = vpop.f32.mrf.mxu0
    %v1935 = vadd.f32 0.0, %v1934
    %1936 = vmatmul.f32.gmra.mxu0 %v1753
    %v1937 = vpop.f32.mrf.mxu0
    %v1938 = vadd.f32 0.0, %v1937
    %1939 = vmatmul.f32.gmra.mxu0 %v1754
    %v1940 = vpop.f32.mrf.mxu0
    %v1941 = vadd.f32 0.0, %v1940
    %1942 = vmatmul.f32.gmra.mxu0 %v1755
    %v1943 = vpop.f32.mrf.mxu0
    %v1944 = vadd.f32 0.0, %v1943
    %1945 = vmatmul.f32.gmra.mxu0 %v1756
    %v1946 = vpop.f32.mrf.mxu0
    %v1947 = vadd.f32 0.0, %v1946
    %1948 = vmatmul.f32.gmra.mxu0 %v1757
    %v1949 = vpop.f32.mrf.mxu0
    %v1950 = vadd.f32 0.0, %v1949
    %1951 = vmatmul.f32.gmra.mxu0 %v1758
    %v1952 = vpop.f32.mrf.mxu0
    %v1953 = vadd.f32 0.0, %v1952
    %1954 = vmatmul.f32.gmra.mxu0 %v1759
    %v1955 = vpop.f32.mrf.mxu0
    %v1956 = vadd.f32 0.0, %v1955
    %1957 = vmatmul.f32.gmra.mxu0 %v1760
    %v1958 = vpop.f32.mrf.mxu0
    %v1959 = vadd.f32 0.0, %v1958
    %1960 = vmatmul.f32.gmra.mxu0 %v1761
    %v1961 = vpop.f32.mrf.mxu0
    %v1962 = vadd.f32 0.0, %v1961
    %1963 = vmatmul.f32.gmra.mxu0 %v1762
    %v1964 = vpop.f32.mrf.mxu0
    %v1965 = vadd.f32 0.0, %v1964
    %1966 = vmatmul.f32.gmra.mxu0 %v1763
    %v1967 = vpop.f32.mrf.mxu0
    %v1968 = vadd.f32 0.0, %v1967
    %1969 = vmatmul.f32.gmra.mxu0 %v1764
    %v1970 = vpop.f32.mrf.mxu0
    %v1971 = vadd.f32 0.0, %v1970
    %1972 = vmatmul.f32.gmra.mxu0 %v1765
    %v1973 = vpop.f32.mrf.mxu0
    %v1974 = vadd.f32 0.0, %v1973
    %1975 = vmatmul.f32.gmra.mxu0 %v1766
    %v1976 = vpop.f32.mrf.mxu0
    %v1977 = vadd.f32 0.0, %v1976
    %1978 = vmatmul.f32.gmra.mxu0 %v1767
    %v1979 = vpop.f32.mrf.mxu0
    %v1980 = vadd.f32 0.0, %v1979
    %1981 = vmatmul.f32.gmra.mxu0 %v1768
    %v1982 = vpop.f32.mrf.mxu0
    %v1983 = vadd.f32 0.0, %v1982
    %1984 = vmatmul.f32.gmra.mxu0 %v1769
    %v1985 = vpop.f32.mrf.mxu0
    %v1986 = vadd.f32 0.0, %v1985
    %1987 = vmatmul.f32.gmra.mxu0 %v1770
    %v1988 = vpop.f32.mrf.mxu0
    %v1989 = vadd.f32 0.0, %v1988
    %1990 = vmatmul.f32.gmra.mxu0 %v1771
    %v1991 = vpop.f32.mrf.mxu0
    %v1992 = vadd.f32 0.0, %v1991
    %1993 = vmatmul.f32.gmra.mxu0 %v1772
    %v1994 = vpop.f32.mrf.mxu0
    %v1995 = vadd.f32 0.0, %v1994
    %1996 = vmatmul.f32.gmra.mxu0 %v1773
    %v1997 = vpop.f32.mrf.mxu0
    %v1998 = vadd.f32 0.0, %v1997
    %1999 = vdwg.mxu0
    %v2000 = vadd.f32 %v1646, %v1809
    %v2001 = vadd.f32 %v1647, %v1812
    %v2002 = vadd.f32 %v1648, %v1815
    %v2003 = vadd.f32 %v1649, %v1818
    %v2004 = vadd.f32 %v1650, %v1821
    %v2005 = vadd.f32 %v1651, %v1824
    %v2006 = vadd.f32 %v1652, %v1827
    %v2007 = vadd.f32 %v1653, %v1830
    %v2008 = vadd.f32 %v1654, %v1833
    %v2009 = vadd.f32 %v1655, %v1836
    %v2010 = vadd.f32 %v1656, %v1839
    %v2011 = vadd.f32 %v1657, %v1842
    %v2012 = vadd.f32 %v1658, %v1845
    %v2013 = vadd.f32 %v1659, %v1848
    %v2014 = vadd.f32 %v1660, %v1851
    %v2015 = vadd.f32 %v1661, %v1854
    %v2016 = vadd.f32 %v1662, %v1857
    %v2017 = vadd.f32 %v1663, %v1860
    %v2018 = vadd.f32 %v1664, %v1863
    %v2019 = vadd.f32 %v1665, %v1866
    %v2020 = vadd.f32 %v1666, %v1869
    %v2021 = vadd.f32 %v1667, %v1872
    %v2022 = vadd.f32 %v1668, %v1875
    %v2023 = vadd.f32 %v1669, %v1878
    %v2024 = vadd.f32 %v1670, %v1881
    %v2025 = vadd.f32 %v1671, %v1884
    %v2026 = vadd.f32 %v1672, %v1887
    %v2027 = vadd.f32 %v1673, %v1890
    %v2028 = vadd.f32 %v1674, %v1893
    %v2029 = vadd.f32 %v1675, %v1896
    %v2030 = vadd.f32 %v1676, %v1899
    %v2031 = vadd.f32 %v1677, %v1902
    %v2032 = vadd.f32 %v1678, %v1905
    %v2033 = vadd.f32 %v1679, %v1908
    %v2034 = vadd.f32 %v1680, %v1911
    %v2035 = vadd.f32 %v1681, %v1914
    %v2036 = vadd.f32 %v1682, %v1917
    %v2037 = vadd.f32 %v1683, %v1920
    %v2038 = vadd.f32 %v1684, %v1923
    %v2039 = vadd.f32 %v1685, %v1926
    %v2040 = vadd.f32 %v1686, %v1929
    %v2041 = vadd.f32 %v1687, %v1932
    %v2042 = vadd.f32 %v1688, %v1935
    %v2043 = vadd.f32 %v1689, %v1938
    %v2044 = vadd.f32 %v1690, %v1941
    %v2045 = vadd.f32 %v1691, %v1944
    %v2046 = vadd.f32 %v1692, %v1947
    %v2047 = vadd.f32 %v1693, %v1950
    %v2048 = vadd.f32 %v1694, %v1953
    %v2049 = vadd.f32 %v1695, %v1956
    %v2050 = vadd.f32 %v1696, %v1959
    %v2051 = vadd.f32 %v1697, %v1962
    %v2052 = vadd.f32 %v1698, %v1965
    %v2053 = vadd.f32 %v1699, %v1968
    %v2054 = vadd.f32 %v1700, %v1971
    %v2055 = vadd.f32 %v1701, %v1974
    %v2056 = vadd.f32 %v1702, %v1977
    %v2057 = vadd.f32 %v1703, %v1980
    %v2058 = vadd.f32 %v1704, %v1983
    %v2059 = vadd.f32 %v1705, %v1986
    %v2060 = vadd.f32 %v1706, %v1989
    %v2061 = vadd.f32 %v1707, %v1992
    %v2062 = vadd.f32 %v1708, %v1995
    %v2063 = vadd.f32 %v1709, %v1998
    %s2064 = scalar_lea.vmem %s0, 48
    %v2065 = vld [vmem:[%s2064] sm:$0xff]
    %v2066 = vld [vmem:[%s2064 + $0x8] sm:$0xff]
    %v2067 = vld [vmem:[%s2064 + $0x18] sm:$0xff]
    %v2068 = vld [vmem:[%s2064 + $0x20] sm:$0xff]
    %v2069 = vld [vmem:[%s2064 + $0x30] sm:$0xff]
    %v2070 = vld [vmem:[%s2064 + $0x38] sm:$0xff]
    %v2071 = vld [vmem:[%s2064 + $0x48] sm:$0xff]
    %v2072 = vld [vmem:[%s2064 + $0x50] sm:$0xff]
    %v2073 = vld [vmem:[%s2064 + $0x60] sm:$0xff]
    %v2074 = vld [vmem:[%s2064 + $0x68] sm:$0xff]
    %v2075 = vld [vmem:[%s2064 + $0x78] sm:$0xff]
    %v2076 = vld [vmem:[%s2064 + $0x80] sm:$0xff]
    %v2077 = vld [vmem:[%s2064 + $0x90] sm:$0xff]
    %v2078 = vld [vmem:[%s2064 + $0x98] sm:$0xff]
    %v2079 = vld [vmem:[%s2064 + $0xa8] sm:$0xff]
    %v2080 = vld [vmem:[%s2064 + $0xb0] sm:$0xff]
    %v2081 = vld [vmem:[%s2064 + $0xc0] sm:$0xff]
    %v2082 = vld [vmem:[%s2064 + $0xc8] sm:$0xff]
    %v2083 = vld [vmem:[%s2064 + $0xd8] sm:$0xff]
    %v2084 = vld [vmem:[%s2064 + $0xe0] sm:$0xff]
    %v2085 = vld [vmem:[%s2064 + $0xf0] sm:$0xff]
    %v2086 = vld [vmem:[%s2064 + $0xf8] sm:$0xff]
    %v2087 = vld [vmem:[%s2064 + $0x108] sm:$0xff]
    %v2088 = vld [vmem:[%s2064 + $0x110] sm:$0xff]
    %v2089 = vld [vmem:[%s2064 + $0x120] sm:$0xff]
    %v2090 = vld [vmem:[%s2064 + $0x128] sm:$0xff]
    %v2091 = vld [vmem:[%s2064 + $0x138] sm:$0xff]
    %v2092 = vld [vmem:[%s2064 + $0x140] sm:$0xff]
    %v2093 = vld [vmem:[%s2064 + $0x150] sm:$0xff]
    %v2094 = vld [vmem:[%s2064 + $0x158] sm:$0xff]
    %v2095 = vld [vmem:[%s2064 + $0x168] sm:$0xff]
    %v2096 = vld [vmem:[%s2064 + $0x170] sm:$0xff]
    %v2097 = vld [vmem:[%s2064 + $0x1b0] sm:$0xff]
    %v2098 = vld [vmem:[%s2064 + $0x1b8] sm:$0xff]
    %v2099 = vld [vmem:[%s2064 + $0x1c8] sm:$0xff]
    %v2100 = vld [vmem:[%s2064 + $0x1d0] sm:$0xff]
    %v2101 = vld [vmem:[%s2064 + $0x1e0] sm:$0xff]
    %v2102 = vld [vmem:[%s2064 + $0x1e8] sm:$0xff]
    %v2103 = vld [vmem:[%s2064 + $0x1f8] sm:$0xff]
    %v2104 = vld [vmem:[%s2064 + $0x200] sm:$0xff]
    %v2105 = vld [vmem:[%s2064 + $0x210] sm:$0xff]
    %v2106 = vld [vmem:[%s2064 + $0x218] sm:$0xff]
    %v2107 = vld [vmem:[%s2064 + $0x228] sm:$0xff]
    %v2108 = vld [vmem:[%s2064 + $0x230] sm:$0xff]
    %v2109 = vld [vmem:[%s2064 + $0x240] sm:$0xff]
    %v2110 = vld [vmem:[%s2064 + $0x248] sm:$0xff]
    %v2111 = vld [vmem:[%s2064 + $0x258] sm:$0xff]
    %v2112 = vld [vmem:[%s2064 + $0x260] sm:$0xff]
    %v2113 = vld [vmem:[%s2064 + $0x270] sm:$0xff]
    %v2114 = vld [vmem:[%s2064 + $0x278] sm:$0xff]
    %v2115 = vld [vmem:[%s2064 + $0x288] sm:$0xff]
    %v2116 = vld [vmem:[%s2064 + $0x290] sm:$0xff]
    %v2117 = vld [vmem:[%s2064 + $0x2a0] sm:$0xff]
    %v2118 = vld [vmem:[%s2064 + $0x2a8] sm:$0xff]
    %v2119 = vld [vmem:[%s2064 + $0x2b8] sm:$0xff]
    %v2120 = vld [vmem:[%s2064 + $0x2c0] sm:$0xff]
    %v2121 = vld [vmem:[%s2064 + $0x2d0] sm:$0xff]
    %v2122 = vld [vmem:[%s2064 + $0x2d8] sm:$0xff]
    %v2123 = vld [vmem:[%s2064 + $0x2e8] sm:$0xff]
    %v2124 = vld [vmem:[%s2064 + $0x2f0] sm:$0xff]
    %v2125 = vld [vmem:[%s2064 + $0x300] sm:$0xff]
    %v2126 = vld [vmem:[%s2064 + $0x308] sm:$0xff]
    %v2127 = vld [vmem:[%s2064 + $0x318] sm:$0xff]
    %v2128 = vld [vmem:[%s2064 + $0x320] sm:$0xff]
    %s2129 = scalar_lea.vmem %s2, 768
    %v2130 = vld [vmem:[%s2129] sm:$0xff]
    %v2131 = vld [vmem:[%s2129 + $0x8] sm:$0xff]
    %v2132 = vld [vmem:[%s2129 + $0x10] sm:$0xff]
    %v2133 = vld [vmem:[%s2129 + $0x18] sm:$0xff]
    %v2134 = vld [vmem:[%s2129 + $0x20] sm:$0xff]
    %v2135 = vld [vmem:[%s2129 + $0x28] sm:$0xff]
    %v2136 = vld [vmem:[%s2129 + $0x30] sm:$0xff]
    %v2137 = vld [vmem:[%s2129 + $0x38] sm:$0xff]
    %v2138 = vld [vmem:[%s2129 + $0x40] sm:$0xff]
    %v2139 = vld [vmem:[%s2129 + $0x48] sm:$0xff]
    %v2140 = vld [vmem:[%s2129 + $0x50] sm:$0xff]
    %v2141 = vld [vmem:[%s2129 + $0x58] sm:$0xff]
    %v2142 = vld [vmem:[%s2129 + $0x60] sm:$0xff]
    %v2143 = vld [vmem:[%s2129 + $0x68] sm:$0xff]
    %v2144 = vld [vmem:[%s2129 + $0x70] sm:$0xff]
    %v2145 = vld [vmem:[%s2129 + $0x78] sm:$0xff]
    %2146 = vmatpush.msra.mxu0 %v2145
    %2147 = vmatpush.msra.mxu0 %v2144
    %2148 = vmatpush.msra.mxu0 %v2143
    %2149 = vmatpush.msra.mxu0 %v2142
    %2150 = vmatpush.msra.mxu0 %v2141
    %2151 = vmatpush.msra.mxu0 %v2140
    %2152 = vmatpush.msra.mxu0 %v2139
    %2153 = vmatpush.msra.mxu0 %v2138
    %2154 = vmatpush.msra.mxu0 %v2137
    %2155 = vmatpush.msra.mxu0 %v2136
    %2156 = vmatpush.msra.mxu0 %v2135
    %2157 = vmatpush.msra.mxu0 %v2134
    %2158 = vmatpush.msra.mxu0 %v2133
    %2159 = vmatpush.msra.mxu0 %v2132
    %2160 = vmatpush.msra.mxu0 %v2131
    %2161 = vmatpush.msra.mxu0 %v2130
    %2162 = vmatmul.f32.gmra.mxu0 %v2065
    %v2163 = vpop.f32.mrf.mxu0
    %v2164 = vadd.f32 0.0, %v2163
    %2165 = vmatmul.f32.gmra.mxu0 %v2066
    %v2166 = vpop.f32.mrf.mxu0
    %v2167 = vadd.f32 0.0, %v2166
    %2168 = vmatmul.f32.gmra.mxu0 %v2067
    %v2169 = vpop.f32.mrf.mxu0
    %v2170 = vadd.f32 0.0, %v2169
    %2171 = vmatmul.f32.gmra.mxu0 %v2068
    %v2172 = vpop.f32.mrf.mxu0
    %v2173 = vadd.f32 0.0, %v2172
    %2174 = vmatmul.f32.gmra.mxu0 %v2069
    %v2175 = vpop.f32.mrf.mxu0
    %v2176 = vadd.f32 0.0, %v2175
    %2177 = vmatmul.f32.gmra.mxu0 %v2070
    %v2178 = vpop.f32.mrf.mxu0
    %v2179 = vadd.f32 0.0, %v2178
    %2180 = vmatmul.f32.gmra.mxu0 %v2071
    %v2181 = vpop.f32.mrf.mxu0
    %v2182 = vadd.f32 0.0, %v2181
    %2183 = vmatmul.f32.gmra.mxu0 %v2072
    %v2184 = vpop.f32.mrf.mxu0
    %v2185 = vadd.f32 0.0, %v2184
    %2186 = vmatmul.f32.gmra.mxu0 %v2073
    %v2187 = vpop.f32.mrf.mxu0
    %v2188 = vadd.f32 0.0, %v2187
    %2189 = vmatmul.f32.gmra.mxu0 %v2074
    %v2190 = vpop.f32.mrf.mxu0
    %v2191 = vadd.f32 0.0, %v2190
    %2192 = vmatmul.f32.gmra.mxu0 %v2075
    %v2193 = vpop.f32.mrf.mxu0
    %v2194 = vadd.f32 0.0, %v2193
    %2195 = vmatmul.f32.gmra.mxu0 %v2076
    %v2196 = vpop.f32.mrf.mxu0
    %v2197 = vadd.f32 0.0, %v2196
    %2198 = vmatmul.f32.gmra.mxu0 %v2077
    %v2199 = vpop.f32.mrf.mxu0
    %v2200 = vadd.f32 0.0, %v2199
    %2201 = vmatmul.f32.gmra.mxu0 %v2078
    %v2202 = vpop.f32.mrf.mxu0
    %v2203 = vadd.f32 0.0, %v2202
    %2204 = vmatmul.f32.gmra.mxu0 %v2079
    %v2205 = vpop.f32.mrf.mxu0
    %v2206 = vadd.f32 0.0, %v2205
    %2207 = vmatmul.f32.gmra.mxu0 %v2080
    %v2208 = vpop.f32.mrf.mxu0
    %v2209 = vadd.f32 0.0, %v2208
    %2210 = vmatmul.f32.gmra.mxu0 %v2081
    %v2211 = vpop.f32.mrf.mxu0
    %v2212 = vadd.f32 0.0, %v2211
    %2213 = vmatmul.f32.gmra.mxu0 %v2082
    %v2214 = vpop.f32.mrf.mxu0
    %v2215 = vadd.f32 0.0, %v2214
    %2216 = vmatmul.f32.gmra.mxu0 %v2083
    %v2217 = vpop.f32.mrf.mxu0
    %v2218 = vadd.f32 0.0, %v2217
    %2219 = vmatmul.f32.gmra.mxu0 %v2084
    %v2220 = vpop.f32.mrf.mxu0
    %v2221 = vadd.f32 0.0, %v2220
    %2222 = vmatmul.f32.gmra.mxu0 %v2085
    %v2223 = vpop.f32.mrf.mxu0
    %v2224 = vadd.f32 0.0, %v2223
    %2225 = vmatmul.f32.gmra.mxu0 %v2086
    %v2226 = vpop.f32.mrf.mxu0
    %v2227 = vadd.f32 0.0, %v2226
    %2228 = vmatmul.f32.gmra.mxu0 %v2087
    %v2229 = vpop.f32.mrf.mxu0
    %v2230 = vadd.f32 0.0, %v2229
    %2231 = vmatmul.f32.gmra.mxu0 %v2088
    %v2232 = vpop.f32.mrf.mxu0
    %v2233 = vadd.f32 0.0, %v2232
    %2234 = vmatmul.f32.gmra.mxu0 %v2089
    %v2235 = vpop.f32.mrf.mxu0
    %v2236 = vadd.f32 0.0, %v2235
    %2237 = vmatmul.f32.gmra.mxu0 %v2090
    %v2238 = vpop.f32.mrf.mxu0
    %v2239 = vadd.f32 0.0, %v2238
    %2240 = vmatmul.f32.gmra.mxu0 %v2091
    %v2241 = vpop.f32.mrf.mxu0
    %v2242 = vadd.f32 0.0, %v2241
    %2243 = vmatmul.f32.gmra.mxu0 %v2092
    %v2244 = vpop.f32.mrf.mxu0
    %v2245 = vadd.f32 0.0, %v2244
    %2246 = vmatmul.f32.gmra.mxu0 %v2093
    %v2247 = vpop.f32.mrf.mxu0
    %v2248 = vadd.f32 0.0, %v2247
    %2249 = vmatmul.f32.gmra.mxu0 %v2094
    %v2250 = vpop.f32.mrf.mxu0
    %v2251 = vadd.f32 0.0, %v2250
    %2252 = vmatmul.f32.gmra.mxu0 %v2095
    %v2253 = vpop.f32.mrf.mxu0
    %v2254 = vadd.f32 0.0, %v2253
    %2255 = vmatmul.f32.gmra.mxu0 %v2096
    %v2256 = vpop.f32.mrf.mxu0
    %v2257 = vadd.f32 0.0, %v2256
    %2258 = vmatmul.f32.gmra.mxu0 %v2097
    %v2259 = vpop.f32.mrf.mxu0
    %v2260 = vadd.f32 0.0, %v2259
    %2261 = vmatmul.f32.gmra.mxu0 %v2098
    %v2262 = vpop.f32.mrf.mxu0
    %v2263 = vadd.f32 0.0, %v2262
    %2264 = vmatmul.f32.gmra.mxu0 %v2099
    %v2265 = vpop.f32.mrf.mxu0
    %v2266 = vadd.f32 0.0, %v2265
    %2267 = vmatmul.f32.gmra.mxu0 %v2100
    %v2268 = vpop.f32.mrf.mxu0
    %v2269 = vadd.f32 0.0, %v2268
    %2270 = vmatmul.f32.gmra.mxu0 %v2101
    %v2271 = vpop.f32.mrf.mxu0
    %v2272 = vadd.f32 0.0, %v2271
    %2273 = vmatmul.f32.gmra.mxu0 %v2102
    %v2274 = vpop.f32.mrf.mxu0
    %v2275 = vadd.f32 0.0, %v2274
    %2276 = vmatmul.f32.gmra.mxu0 %v2103
    %v2277 = vpop.f32.mrf.mxu0
    %v2278 = vadd.f32 0.0, %v2277
    %2279 = vmatmul.f32.gmra.mxu0 %v2104
    %v2280 = vpop.f32.mrf.mxu0
    %v2281 = vadd.f32 0.0, %v2280
    %2282 = vmatmul.f32.gmra.mxu0 %v2105
    %v2283 = vpop.f32.mrf.mxu0
    %v2284 = vadd.f32 0.0, %v2283
    %2285 = vmatmul.f32.gmra.mxu0 %v2106
    %v2286 = vpop.f32.mrf.mxu0
    %v2287 = vadd.f32 0.0, %v2286
    %2288 = vmatmul.f32.gmra.mxu0 %v2107
    %v2289 = vpop.f32.mrf.mxu0
    %v2290 = vadd.f32 0.0, %v2289
    %2291 = vmatmul.f32.gmra.mxu0 %v2108
    %v2292 = vpop.f32.mrf.mxu0
    %v2293 = vadd.f32 0.0, %v2292
    %2294 = vmatmul.f32.gmra.mxu0 %v2109
    %v2295 = vpop.f32.mrf.mxu0
    %v2296 = vadd.f32 0.0, %v2295
    %2297 = vmatmul.f32.gmra.mxu0 %v2110
    %v2298 = vpop.f32.mrf.mxu0
    %v2299 = vadd.f32 0.0, %v2298
    %2300 = vmatmul.f32.gmra.mxu0 %v2111
    %v2301 = vpop.f32.mrf.mxu0
    %v2302 = vadd.f32 0.0, %v2301
    %2303 = vmatmul.f32.gmra.mxu0 %v2112
    %v2304 = vpop.f32.mrf.mxu0
    %v2305 = vadd.f32 0.0, %v2304
    %2306 = vmatmul.f32.gmra.mxu0 %v2113
    %v2307 = vpop.f32.mrf.mxu0
    %v2308 = vadd.f32 0.0, %v2307
    %2309 = vmatmul.f32.gmra.mxu0 %v2114
    %v2310 = vpop.f32.mrf.mxu0
    %v2311 = vadd.f32 0.0, %v2310
    %2312 = vmatmul.f32.gmra.mxu0 %v2115
    %v2313 = vpop.f32.mrf.mxu0
    %v2314 = vadd.f32 0.0, %v2313
    %2315 = vmatmul.f32.gmra.mxu0 %v2116
    %v2316 = vpop.f32.mrf.mxu0
    %v2317 = vadd.f32 0.0, %v2316
    %2318 = vmatmul.f32.gmra.mxu0 %v2117
    %v2319 = vpop.f32.mrf.mxu0
    %v2320 = vadd.f32 0.0, %v2319
    %2321 = vmatmul.f32.gmra.mxu0 %v2118
    %v2322 = vpop.f32.mrf.mxu0
    %v2323 = vadd.f32 0.0, %v2322
    %2324 = vmatmul.f32.gmra.mxu0 %v2119
    %v2325 = vpop.f32.mrf.mxu0
    %v2326 = vadd.f32 0.0, %v2325
    %2327 = vmatmul.f32.gmra.mxu0 %v2120
    %v2328 = vpop.f32.mrf.mxu0
    %v2329 = vadd.f32 0.0, %v2328
    %2330 = vmatmul.f32.gmra.mxu0 %v2121
    %v2331 = vpop.f32.mrf.mxu0
    %v2332 = vadd.f32 0.0, %v2331
    %2333 = vmatmul.f32.gmra.mxu0 %v2122
    %v2334 = vpop.f32.mrf.mxu0
    %v2335 = vadd.f32 0.0, %v2334
    %2336 = vmatmul.f32.gmra.mxu0 %v2123
    %v2337 = vpop.f32.mrf.mxu0
    %v2338 = vadd.f32 0.0, %v2337
    %2339 = vmatmul.f32.gmra.mxu0 %v2124
    %v2340 = vpop.f32.mrf.mxu0
    %v2341 = vadd.f32 0.0, %v2340
    %2342 = vmatmul.f32.gmra.mxu0 %v2125
    %v2343 = vpop.f32.mrf.mxu0
    %v2344 = vadd.f32 0.0, %v2343
    %2345 = vmatmul.f32.gmra.mxu0 %v2126
    %v2346 = vpop.f32.mrf.mxu0
    %v2347 = vadd.f32 0.0, %v2346
    %2348 = vmatmul.f32.gmra.mxu0 %v2127
    %v2349 = vpop.f32.mrf.mxu0
    %v2350 = vadd.f32 0.0, %v2349
    %2351 = vmatmul.f32.gmra.mxu0 %v2128
    %v2352 = vpop.f32.mrf.mxu0
    %v2353 = vadd.f32 0.0, %v2352
    %2354 = vdwg.mxu0
    %v2355 = vadd.f32 %v2000, %v2164
    %v2356 = vadd.f32 %v2001, %v2167
    %v2357 = vadd.f32 %v2002, %v2170
    %v2358 = vadd.f32 %v2003, %v2173
    %v2359 = vadd.f32 %v2004, %v2176
    %v2360 = vadd.f32 %v2005, %v2179
    %v2361 = vadd.f32 %v2006, %v2182
    %v2362 = vadd.f32 %v2007, %v2185
    %v2363 = vadd.f32 %v2008, %v2188
    %v2364 = vadd.f32 %v2009, %v2191
    %v2365 = vadd.f32 %v2010, %v2194
    %v2366 = vadd.f32 %v2011, %v2197
    %v2367 = vadd.f32 %v2012, %v2200
    %v2368 = vadd.f32 %v2013, %v2203
    %v2369 = vadd.f32 %v2014, %v2206
    %v2370 = vadd.f32 %v2015, %v2209
    %v2371 = vadd.f32 %v2016, %v2212
    %v2372 = vadd.f32 %v2017, %v2215
    %v2373 = vadd.f32 %v2018, %v2218
    %v2374 = vadd.f32 %v2019, %v2221
    %v2375 = vadd.f32 %v2020, %v2224
    %v2376 = vadd.f32 %v2021, %v2227
    %v2377 = vadd.f32 %v2022, %v2230
    %v2378 = vadd.f32 %v2023, %v2233
    %v2379 = vadd.f32 %v2024, %v2236
    %v2380 = vadd.f32 %v2025, %v2239
    %v2381 = vadd.f32 %v2026, %v2242
    %v2382 = vadd.f32 %v2027, %v2245
    %v2383 = vadd.f32 %v2028, %v2248
    %v2384 = vadd.f32 %v2029, %v2251
    %v2385 = vadd.f32 %v2030, %v2254
    %v2386 = vadd.f32 %v2031, %v2257
    %v2387 = vadd.f32 %v2032, %v2260
    %v2388 = vadd.f32 %v2033, %v2263
    %v2389 = vadd.f32 %v2034, %v2266
    %v2390 = vadd.f32 %v2035, %v2269
    %v2391 = vadd.f32 %v2036, %v2272
    %v2392 = vadd.f32 %v2037, %v2275
    %v2393 = vadd.f32 %v2038, %v2278
    %v2394 = vadd.f32 %v2039, %v2281
    %v2395 = vadd.f32 %v2040, %v2284
    %v2396 = vadd.f32 %v2041, %v2287
    %v2397 = vadd.f32 %v2042, %v2290
    %v2398 = vadd.f32 %v2043, %v2293
    %v2399 = vadd.f32 %v2044, %v2296
    %v2400 = vadd.f32 %v2045, %v2299
    %v2401 = vadd.f32 %v2046, %v2302
    %v2402 = vadd.f32 %v2047, %v2305
    %v2403 = vadd.f32 %v2048, %v2308
    %v2404 = vadd.f32 %v2049, %v2311
    %v2405 = vadd.f32 %v2050, %v2314
    %v2406 = vadd.f32 %v2051, %v2317
    %v2407 = vadd.f32 %v2052, %v2320
    %v2408 = vadd.f32 %v2053, %v2323
    %v2409 = vadd.f32 %v2054, %v2326
    %v2410 = vadd.f32 %v2055, %v2329
    %v2411 = vadd.f32 %v2056, %v2332
    %v2412 = vadd.f32 %v2057, %v2335
    %v2413 = vadd.f32 %v2058, %v2338
    %v2414 = vadd.f32 %v2059, %v2341
    %v2415 = vadd.f32 %v2060, %v2344
    %v2416 = vadd.f32 %v2061, %v2347
    %v2417 = vadd.f32 %v2062, %v2350
    %v2418 = vadd.f32 %v2063, %v2353
    %v2419 = vld [vmem:[%s2064 + $0x1] sm:$0xff]
    %v2420 = vld [vmem:[%s2064 + $0x9] sm:$0xff]
    %v2421 = vld [vmem:[%s2064 + $0x19] sm:$0xff]
    %v2422 = vld [vmem:[%s2064 + $0x21] sm:$0xff]
    %v2423 = vld [vmem:[%s2064 + $0x31] sm:$0xff]
    %v2424 = vld [vmem:[%s2064 + $0x39] sm:$0xff]
    %v2425 = vld [vmem:[%s2064 + $0x49] sm:$0xff]
    %v2426 = vld [vmem:[%s2064 + $0x51] sm:$0xff]
    %v2427 = vld [vmem:[%s2064 + $0x61] sm:$0xff]
    %v2428 = vld [vmem:[%s2064 + $0x69] sm:$0xff]
    %v2429 = vld [vmem:[%s2064 + $0x79] sm:$0xff]
    %v2430 = vld [vmem:[%s2064 + $0x81] sm:$0xff]
    %v2431 = vld [vmem:[%s2064 + $0x91] sm:$0xff]
    %v2432 = vld [vmem:[%s2064 + $0x99] sm:$0xff]
    %v2433 = vld [vmem:[%s2064 + $0xa9] sm:$0xff]
    %v2434 = vld [vmem:[%s2064 + $0xb1] sm:$0xff]
    %v2435 = vld [vmem:[%s2064 + $0xc1] sm:$0xff]
    %v2436 = vld [vmem:[%s2064 + $0xc9] sm:$0xff]
    %v2437 = vld [vmem:[%s2064 + $0xd9] sm:$0xff]
    %v2438 = vld [vmem:[%s2064 + $0xe1] sm:$0xff]
    %v2439 = vld [vmem:[%s2064 + $0xf1] sm:$0xff]
    %v2440 = vld [vmem:[%s2064 + $0xf9] sm:$0xff]
    %v2441 = vld [vmem:[%s2064 + $0x109] sm:$0xff]
    %v2442 = vld [vmem:[%s2064 + $0x111] sm:$0xff]
    %v2443 = vld [vmem:[%s2064 + $0x121] sm:$0xff]
    %v2444 = vld [vmem:[%s2064 + $0x129] sm:$0xff]
    %v2445 = vld [vmem:[%s2064 + $0x139] sm:$0xff]
    %v2446 = vld [vmem:[%s2064 + $0x141] sm:$0xff]
    %v2447 = vld [vmem:[%s2064 + $0x151] sm:$0xff]
    %v2448 = vld [vmem:[%s2064 + $0x159] sm:$0xff]
    %v2449 = vld [vmem:[%s2064 + $0x169] sm:$0xff]
    %v2450 = vld [vmem:[%s2064 + $0x171] sm:$0xff]
    %v2451 = vld [vmem:[%s2064 + $0x1b1] sm:$0xff]
    %v2452 = vld [vmem:[%s2064 + $0x1b9] sm:$0xff]
    %v2453 = vld [vmem:[%s2064 + $0x1c9] sm:$0xff]
    %v2454 = vld [vmem:[%s2064 + $0x1d1] sm:$0xff]
    %v2455 = vld [vmem:[%s2064 + $0x1e1] sm:$0xff]
    %v2456 = vld [vmem:[%s2064 + $0x1e9] sm:$0xff]
    %v2457 = vld [vmem:[%s2064 + $0x1f9] sm:$0xff]
    %v2458 = vld [vmem:[%s2064 + $0x201] sm:$0xff]
    %v2459 = vld [vmem:[%s2064 + $0x211] sm:$0xff]
    %v2460 = vld [vmem:[%s2064 + $0x219] sm:$0xff]
    %v2461 = vld [vmem:[%s2064 + $0x229] sm:$0xff]
    %v2462 = vld [vmem:[%s2064 + $0x231] sm:$0xff]
    %v2463 = vld [vmem:[%s2064 + $0x241] sm:$0xff]
    %v2464 = vld [vmem:[%s2064 + $0x249] sm:$0xff]
    %v2465 = vld [vmem:[%s2064 + $0x259] sm:$0xff]
    %v2466 = vld [vmem:[%s2064 + $0x261] sm:$0xff]
    %v2467 = vld [vmem:[%s2064 + $0x271] sm:$0xff]
    %v2468 = vld [vmem:[%s2064 + $0x279] sm:$0xff]
    %v2469 = vld [vmem:[%s2064 + $0x289] sm:$0xff]
    %v2470 = vld [vmem:[%s2064 + $0x291] sm:$0xff]
    %v2471 = vld [vmem:[%s2064 + $0x2a1] sm:$0xff]
    %v2472 = vld [vmem:[%s2064 + $0x2a9] sm:$0xff]
    %v2473 = vld [vmem:[%s2064 + $0x2b9] sm:$0xff]
    %v2474 = vld [vmem:[%s2064 + $0x2c1] sm:$0xff]
    %v2475 = vld [vmem:[%s2064 + $0x2d1] sm:$0xff]
    %v2476 = vld [vmem:[%s2064 + $0x2d9] sm:$0xff]
    %v2477 = vld [vmem:[%s2064 + $0x2e9] sm:$0xff]
    %v2478 = vld [vmem:[%s2064 + $0x2f1] sm:$0xff]
    %v2479 = vld [vmem:[%s2064 + $0x301] sm:$0xff]
    %v2480 = vld [vmem:[%s2064 + $0x309] sm:$0xff]
    %v2481 = vld [vmem:[%s2064 + $0x319] sm:$0xff]
    %v2482 = vld [vmem:[%s2064 + $0x321] sm:$0xff]
    %s2483 = scalar_lea.vmem %s2, 896
    %v2484 = vld [vmem:[%s2483] sm:$0xff]
    %v2485 = vld [vmem:[%s2483 + $0x8] sm:$0xff]
    %v2486 = vld [vmem:[%s2483 + $0x10] sm:$0xff]
    %v2487 = vld [vmem:[%s2483 + $0x18] sm:$0xff]
    %v2488 = vld [vmem:[%s2483 + $0x20] sm:$0xff]
    %v2489 = vld [vmem:[%s2483 + $0x28] sm:$0xff]
    %v2490 = vld [vmem:[%s2483 + $0x30] sm:$0xff]
    %v2491 = vld [vmem:[%s2483 + $0x38] sm:$0xff]
    %v2492 = vld [vmem:[%s2483 + $0x40] sm:$0xff]
    %v2493 = vld [vmem:[%s2483 + $0x48] sm:$0xff]
    %v2494 = vld [vmem:[%s2483 + $0x50] sm:$0xff]
    %v2495 = vld [vmem:[%s2483 + $0x58] sm:$0xff]
    %v2496 = vld [vmem:[%s2483 + $0x60] sm:$0xff]
    %v2497 = vld [vmem:[%s2483 + $0x68] sm:$0xff]
    %v2498 = vld [vmem:[%s2483 + $0x70] sm:$0xff]
    %v2499 = vld [vmem:[%s2483 + $0x78] sm:$0xff]
    %2500 = vmatpush.msra.mxu0 %v2499
    %2501 = vmatpush.msra.mxu0 %v2498
    %2502 = vmatpush.msra.mxu0 %v2497
    %2503 = vmatpush.msra.mxu0 %v2496
    %2504 = vmatpush.msra.mxu0 %v2495
    %2505 = vmatpush.msra.mxu0 %v2494
    %2506 = vmatpush.msra.mxu0 %v2493
    %2507 = vmatpush.msra.mxu0 %v2492
    %2508 = vmatpush.msra.mxu0 %v2491
    %2509 = vmatpush.msra.mxu0 %v2490
    %2510 = vmatpush.msra.mxu0 %v2489
    %2511 = vmatpush.msra.mxu0 %v2488
    %2512 = vmatpush.msra.mxu0 %v2487
    %2513 = vmatpush.msra.mxu0 %v2486
    %2514 = vmatpush.msra.mxu0 %v2485
    %2515 = vmatpush.msra.mxu0 %v2484
    %2516 = vmatmul.f32.gmra.mxu0 %v2419
    %v2517 = vpop.f32.mrf.mxu0
    %v2518 = vadd.f32 0.0, %v2517
    %2519 = vmatmul.f32.gmra.mxu0 %v2420
    %v2520 = vpop.f32.mrf.mxu0
    %v2521 = vadd.f32 0.0, %v2520
    %2522 = vmatmul.f32.gmra.mxu0 %v2421
    %v2523 = vpop.f32.mrf.mxu0
    %v2524 = vadd.f32 0.0, %v2523
    %2525 = vmatmul.f32.gmra.mxu0 %v2422
    %v2526 = vpop.f32.mrf.mxu0
    %v2527 = vadd.f32 0.0, %v2526
    %2528 = vmatmul.f32.gmra.mxu0 %v2423
    %v2529 = vpop.f32.mrf.mxu0
    %v2530 = vadd.f32 0.0, %v2529
    %2531 = vmatmul.f32.gmra.mxu0 %v2424
    %v2532 = vpop.f32.mrf.mxu0
    %v2533 = vadd.f32 0.0, %v2532
    %2534 = vmatmul.f32.gmra.mxu0 %v2425
    %v2535 = vpop.f32.mrf.mxu0
    %v2536 = vadd.f32 0.0, %v2535
    %2537 = vmatmul.f32.gmra.mxu0 %v2426
    %v2538 = vpop.f32.mrf.mxu0
    %v2539 = vadd.f32 0.0, %v2538
    %2540 = vmatmul.f32.gmra.mxu0 %v2427
    %v2541 = vpop.f32.mrf.mxu0
    %v2542 = vadd.f32 0.0, %v2541
    %2543 = vmatmul.f32.gmra.mxu0 %v2428
    %v2544 = vpop.f32.mrf.mxu0
    %v2545 = vadd.f32 0.0, %v2544
    %2546 = vmatmul.f32.gmra.mxu0 %v2429
    %v2547 = vpop.f32.mrf.mxu0
    %v2548 = vadd.f32 0.0, %v2547
    %2549 = vmatmul.f32.gmra.mxu0 %v2430
    %v2550 = vpop.f32.mrf.mxu0
    %v2551 = vadd.f32 0.0, %v2550
    %2552 = vmatmul.f32.gmra.mxu0 %v2431
    %v2553 = vpop.f32.mrf.mxu0
    %v2554 = vadd.f32 0.0, %v2553
    %2555 = vmatmul.f32.gmra.mxu0 %v2432
    %v2556 = vpop.f32.mrf.mxu0
    %v2557 = vadd.f32 0.0, %v2556
    %2558 = vmatmul.f32.gmra.mxu0 %v2433
    %v2559 = vpop.f32.mrf.mxu0
    %v2560 = vadd.f32 0.0, %v2559
    %2561 = vmatmul.f32.gmra.mxu0 %v2434
    %v2562 = vpop.f32.mrf.mxu0
    %v2563 = vadd.f32 0.0, %v2562
    %2564 = vmatmul.f32.gmra.mxu0 %v2435
    %v2565 = vpop.f32.mrf.mxu0
    %v2566 = vadd.f32 0.0, %v2565
    %2567 = vmatmul.f32.gmra.mxu0 %v2436
    %v2568 = vpop.f32.mrf.mxu0
    %v2569 = vadd.f32 0.0, %v2568
    %2570 = vmatmul.f32.gmra.mxu0 %v2437
    %v2571 = vpop.f32.mrf.mxu0
    %v2572 = vadd.f32 0.0, %v2571
    %2573 = vmatmul.f32.gmra.mxu0 %v2438
    %v2574 = vpop.f32.mrf.mxu0
    %v2575 = vadd.f32 0.0, %v2574
    %2576 = vmatmul.f32.gmra.mxu0 %v2439
    %v2577 = vpop.f32.mrf.mxu0
    %v2578 = vadd.f32 0.0, %v2577
    %2579 = vmatmul.f32.gmra.mxu0 %v2440
    %v2580 = vpop.f32.mrf.mxu0
    %v2581 = vadd.f32 0.0, %v2580
    %2582 = vmatmul.f32.gmra.mxu0 %v2441
    %v2583 = vpop.f32.mrf.mxu0
    %v2584 = vadd.f32 0.0, %v2583
    %2585 = vmatmul.f32.gmra.mxu0 %v2442
    %v2586 = vpop.f32.mrf.mxu0
    %v2587 = vadd.f32 0.0, %v2586
    %2588 = vmatmul.f32.gmra.mxu0 %v2443
    %v2589 = vpop.f32.mrf.mxu0
    %v2590 = vadd.f32 0.0, %v2589
    %2591 = vmatmul.f32.gmra.mxu0 %v2444
    %v2592 = vpop.f32.mrf.mxu0
    %v2593 = vadd.f32 0.0, %v2592
    %2594 = vmatmul.f32.gmra.mxu0 %v2445
    %v2595 = vpop.f32.mrf.mxu0
    %v2596 = vadd.f32 0.0, %v2595
    %2597 = vmatmul.f32.gmra.mxu0 %v2446
    %v2598 = vpop.f32.mrf.mxu0
    %v2599 = vadd.f32 0.0, %v2598
    %2600 = vmatmul.f32.gmra.mxu0 %v2447
    %v2601 = vpop.f32.mrf.mxu0
    %v2602 = vadd.f32 0.0, %v2601
    %2603 = vmatmul.f32.gmra.mxu0 %v2448
    %v2604 = vpop.f32.mrf.mxu0
    %v2605 = vadd.f32 0.0, %v2604
    %2606 = vmatmul.f32.gmra.mxu0 %v2449
    %v2607 = vpop.f32.mrf.mxu0
    %v2608 = vadd.f32 0.0, %v2607
    %2609 = vmatmul.f32.gmra.mxu0 %v2450
    %v2610 = vpop.f32.mrf.mxu0
    %v2611 = vadd.f32 0.0, %v2610
    %2612 = vmatmul.f32.gmra.mxu0 %v2451
    %v2613 = vpop.f32.mrf.mxu0
    %v2614 = vadd.f32 0.0, %v2613
    %2615 = vmatmul.f32.gmra.mxu0 %v2452
    %v2616 = vpop.f32.mrf.mxu0
    %v2617 = vadd.f32 0.0, %v2616
    %2618 = vmatmul.f32.gmra.mxu0 %v2453
    %v2619 = vpop.f32.mrf.mxu0
    %v2620 = vadd.f32 0.0, %v2619
    %2621 = vmatmul.f32.gmra.mxu0 %v2454
    %v2622 = vpop.f32.mrf.mxu0
    %v2623 = vadd.f32 0.0, %v2622
    %2624 = vmatmul.f32.gmra.mxu0 %v2455
    %v2625 = vpop.f32.mrf.mxu0
    %v2626 = vadd.f32 0.0, %v2625
    %2627 = vmatmul.f32.gmra.mxu0 %v2456
    %v2628 = vpop.f32.mrf.mxu0
    %v2629 = vadd.f32 0.0, %v2628
    %2630 = vmatmul.f32.gmra.mxu0 %v2457
    %v2631 = vpop.f32.mrf.mxu0
    %v2632 = vadd.f32 0.0, %v2631
    %2633 = vmatmul.f32.gmra.mxu0 %v2458
    %v2634 = vpop.f32.mrf.mxu0
    %v2635 = vadd.f32 0.0, %v2634
    %2636 = vmatmul.f32.gmra.mxu0 %v2459
    %v2637 = vpop.f32.mrf.mxu0
    %v2638 = vadd.f32 0.0, %v2637
    %2639 = vmatmul.f32.gmra.mxu0 %v2460
    %v2640 = vpop.f32.mrf.mxu0
    %v2641 = vadd.f32 0.0, %v2640
    %2642 = vmatmul.f32.gmra.mxu0 %v2461
    %v2643 = vpop.f32.mrf.mxu0
    %v2644 = vadd.f32 0.0, %v2643
    %2645 = vmatmul.f32.gmra.mxu0 %v2462
    %v2646 = vpop.f32.mrf.mxu0
    %v2647 = vadd.f32 0.0, %v2646
    %2648 = vmatmul.f32.gmra.mxu0 %v2463
    %v2649 = vpop.f32.mrf.mxu0
    %v2650 = vadd.f32 0.0, %v2649
    %2651 = vmatmul.f32.gmra.mxu0 %v2464
    %v2652 = vpop.f32.mrf.mxu0
    %v2653 = vadd.f32 0.0, %v2652
    %2654 = vmatmul.f32.gmra.mxu0 %v2465
    %v2655 = vpop.f32.mrf.mxu0
    %v2656 = vadd.f32 0.0, %v2655
    %2657 = vmatmul.f32.gmra.mxu0 %v2466
    %v2658 = vpop.f32.mrf.mxu0
    %v2659 = vadd.f32 0.0, %v2658
    %2660 = vmatmul.f32.gmra.mxu0 %v2467
    %v2661 = vpop.f32.mrf.mxu0
    %v2662 = vadd.f32 0.0, %v2661
    %2663 = vmatmul.f32.gmra.mxu0 %v2468
    %v2664 = vpop.f32.mrf.mxu0
    %v2665 = vadd.f32 0.0, %v2664
    %2666 = vmatmul.f32.gmra.mxu0 %v2469
    %v2667 = vpop.f32.mrf.mxu0
    %v2668 = vadd.f32 0.0, %v2667
    %2669 = vmatmul.f32.gmra.mxu0 %v2470
    %v2670 = vpop.f32.mrf.mxu0
    %v2671 = vadd.f32 0.0, %v2670
    %2672 = vmatmul.f32.gmra.mxu0 %v2471
    %v2673 = vpop.f32.mrf.mxu0
    %v2674 = vadd.f32 0.0, %v2673
    %2675 = vmatmul.f32.gmra.mxu0 %v2472
    %v2676 = vpop.f32.mrf.mxu0
    %v2677 = vadd.f32 0.0, %v2676
    %2678 = vmatmul.f32.gmra.mxu0 %v2473
    %v2679 = vpop.f32.mrf.mxu0
    %v2680 = vadd.f32 0.0, %v2679
    %2681 = vmatmul.f32.gmra.mxu0 %v2474
    %v2682 = vpop.f32.mrf.mxu0
    %v2683 = vadd.f32 0.0, %v2682
    %2684 = vmatmul.f32.gmra.mxu0 %v2475
    %v2685 = vpop.f32.mrf.mxu0
    %v2686 = vadd.f32 0.0, %v2685
    %2687 = vmatmul.f32.gmra.mxu0 %v2476
    %v2688 = vpop.f32.mrf.mxu0
    %v2689 = vadd.f32 0.0, %v2688
    %2690 = vmatmul.f32.gmra.mxu0 %v2477
    %v2691 = vpop.f32.mrf.mxu0
    %v2692 = vadd.f32 0.0, %v2691
    %2693 = vmatmul.f32.gmra.mxu0 %v2478
    %v2694 = vpop.f32.mrf.mxu0
    %v2695 = vadd.f32 0.0, %v2694
    %2696 = vmatmul.f32.gmra.mxu0 %v2479
    %v2697 = vpop.f32.mrf.mxu0
    %v2698 = vadd.f32 0.0, %v2697
    %2699 = vmatmul.f32.gmra.mxu0 %v2480
    %v2700 = vpop.f32.mrf.mxu0
    %v2701 = vadd.f32 0.0, %v2700
    %2702 = vmatmul.f32.gmra.mxu0 %v2481
    %v2703 = vpop.f32.mrf.mxu0
    %v2704 = vadd.f32 0.0, %v2703
    %2705 = vmatmul.f32.gmra.mxu0 %v2482
    %v2706 = vpop.f32.mrf.mxu0
    %v2707 = vadd.f32 0.0, %v2706
    %2708 = vdwg.mxu0
    %v2709 = vadd.f32 %v2355, %v2518
    %v2710 = vadd.f32 %v2356, %v2521
    %v2711 = vadd.f32 %v2357, %v2524
    %v2712 = vadd.f32 %v2358, %v2527
    %v2713 = vadd.f32 %v2359, %v2530
    %v2714 = vadd.f32 %v2360, %v2533
    %v2715 = vadd.f32 %v2361, %v2536
    %v2716 = vadd.f32 %v2362, %v2539
    %v2717 = vadd.f32 %v2363, %v2542
    %v2718 = vadd.f32 %v2364, %v2545
    %v2719 = vadd.f32 %v2365, %v2548
    %v2720 = vadd.f32 %v2366, %v2551
    %v2721 = vadd.f32 %v2367, %v2554
    %v2722 = vadd.f32 %v2368, %v2557
    %v2723 = vadd.f32 %v2369, %v2560
    %v2724 = vadd.f32 %v2370, %v2563
    %v2725 = vadd.f32 %v2371, %v2566
    %v2726 = vadd.f32 %v2372, %v2569
    %v2727 = vadd.f32 %v2373, %v2572
    %v2728 = vadd.f32 %v2374, %v2575
    %v2729 = vadd.f32 %v2375, %v2578
    %v2730 = vadd.f32 %v2376, %v2581
    %v2731 = vadd.f32 %v2377, %v2584
    %v2732 = vadd.f32 %v2378, %v2587
    %v2733 = vadd.f32 %v2379, %v2590
    %v2734 = vadd.f32 %v2380, %v2593
    %v2735 = vadd.f32 %v2381, %v2596
    %v2736 = vadd.f32 %v2382, %v2599
    %v2737 = vadd.f32 %v2383, %v2602
    %v2738 = vadd.f32 %v2384, %v2605
    %v2739 = vadd.f32 %v2385, %v2608
    %v2740 = vadd.f32 %v2386, %v2611
    %v2741 = vadd.f32 %v2387, %v2614
    %v2742 = vadd.f32 %v2388, %v2617
    %v2743 = vadd.f32 %v2389, %v2620
    %v2744 = vadd.f32 %v2390, %v2623
    %v2745 = vadd.f32 %v2391, %v2626
    %v2746 = vadd.f32 %v2392, %v2629
    %v2747 = vadd.f32 %v2393, %v2632
    %v2748 = vadd.f32 %v2394, %v2635
    %v2749 = vadd.f32 %v2395, %v2638
    %v2750 = vadd.f32 %v2396, %v2641
    %v2751 = vadd.f32 %v2397, %v2644
    %v2752 = vadd.f32 %v2398, %v2647
    %v2753 = vadd.f32 %v2399, %v2650
    %v2754 = vadd.f32 %v2400, %v2653
    %v2755 = vadd.f32 %v2401, %v2656
    %v2756 = vadd.f32 %v2402, %v2659
    %v2757 = vadd.f32 %v2403, %v2662
    %v2758 = vadd.f32 %v2404, %v2665
    %v2759 = vadd.f32 %v2405, %v2668
    %v2760 = vadd.f32 %v2406, %v2671
    %v2761 = vadd.f32 %v2407, %v2674
    %v2762 = vadd.f32 %v2408, %v2677
    %v2763 = vadd.f32 %v2409, %v2680
    %v2764 = vadd.f32 %v2410, %v2683
    %v2765 = vadd.f32 %v2411, %v2686
    %v2766 = vadd.f32 %v2412, %v2689
    %v2767 = vadd.f32 %v2413, %v2692
    %v2768 = vadd.f32 %v2414, %v2695
    %v2769 = vadd.f32 %v2415, %v2698
    %v2770 = vadd.f32 %v2416, %v2701
    %v2771 = vadd.f32 %v2417, %v2704
    %v2772 = vadd.f32 %v2418, %v2707
    %v2773 = vld [vmem:[%s2064 + $0x2] sm:$0xff]
    %v2774 = vld [vmem:[%s2064 + $0xa] sm:$0xff]
    %v2775 = vld [vmem:[%s2064 + $0x1a] sm:$0xff]
    %v2776 = vld [vmem:[%s2064 + $0x22] sm:$0xff]
    %v2777 = vld [vmem:[%s2064 + $0x32] sm:$0xff]
    %v2778 = vld [vmem:[%s2064 + $0x3a] sm:$0xff]
    %v2779 = vld [vmem:[%s2064 + $0x4a] sm:$0xff]
    %v2780 = vld [vmem:[%s2064 + $0x52] sm:$0xff]
    %v2781 = vld [vmem:[%s2064 + $0x62] sm:$0xff]
    %v2782 = vld [vmem:[%s2064 + $0x6a] sm:$0xff]
    %v2783 = vld [vmem:[%s2064 + $0x7a] sm:$0xff]
    %v2784 = vld [vmem:[%s2064 + $0x82] sm:$0xff]
    %v2785 = vld [vmem:[%s2064 + $0x92] sm:$0xff]
    %v2786 = vld [vmem:[%s2064 + $0x9a] sm:$0xff]
    %v2787 = vld [vmem:[%s2064 + $0xaa] sm:$0xff]
    %v2788 = vld [vmem:[%s2064 + $0xb2] sm:$0xff]
    %v2789 = vld [vmem:[%s2064 + $0xc2] sm:$0xff]
    %v2790 = vld [vmem:[%s2064 + $0xca] sm:$0xff]
    %v2791 = vld [vmem:[%s2064 + $0xda] sm:$0xff]
    %v2792 = vld [vmem:[%s2064 + $0xe2] sm:$0xff]
    %v2793 = vld [vmem:[%s2064 + $0xf2] sm:$0xff]
    %v2794 = vld [vmem:[%s2064 + $0xfa] sm:$0xff]
    %v2795 = vld [vmem:[%s2064 + $0x10a] sm:$0xff]
    %v2796 = vld [vmem:[%s2064 + $0x112] sm:$0xff]
    %v2797 = vld [vmem:[%s2064 + $0x122] sm:$0xff]
    %v2798 = vld [vmem:[%s2064 + $0x12a] sm:$0xff]
    %v2799 = vld [vmem:[%s2064 + $0x13a] sm:$0xff]
    %v2800 = vld [vmem:[%s2064 + $0x142] sm:$0xff]
    %v2801 = vld [vmem:[%s2064 + $0x152] sm:$0xff]
    %v2802 = vld [vmem:[%s2064 + $0x15a] sm:$0xff]
    %v2803 = vld [vmem:[%s2064 + $0x16a] sm:$0xff]
    %v2804 = vld [vmem:[%s2064 + $0x172] sm:$0xff]
    %v2805 = vld [vmem:[%s2064 + $0x1b2] sm:$0xff]
    %v2806 = vld [vmem:[%s2064 + $0x1ba] sm:$0xff]
    %v2807 = vld [vmem:[%s2064 + $0x1ca] sm:$0xff]
    %v2808 = vld [vmem:[%s2064 + $0x1d2] sm:$0xff]
    %v2809 = vld [vmem:[%s2064 + $0x1e2] sm:$0xff]
    %v2810 = vld [vmem:[%s2064 + $0x1ea] sm:$0xff]
    %v2811 = vld [vmem:[%s2064 + $0x1fa] sm:$0xff]
    %v2812 = vld [vmem:[%s2064 + $0x202] sm:$0xff]
    %v2813 = vld [vmem:[%s2064 + $0x212] sm:$0xff]
    %v2814 = vld [vmem:[%s2064 + $0x21a] sm:$0xff]
    %v2815 = vld [vmem:[%s2064 + $0x22a] sm:$0xff]
    %v2816 = vld [vmem:[%s2064 + $0x232] sm:$0xff]
    %v2817 = vld [vmem:[%s2064 + $0x242] sm:$0xff]
    %v2818 = vld [vmem:[%s2064 + $0x24a] sm:$0xff]
    %v2819 = vld [vmem:[%s2064 + $0x25a] sm:$0xff]
    %v2820 = vld [vmem:[%s2064 + $0x262] sm:$0xff]
    %v2821 = vld [vmem:[%s2064 + $0x272] sm:$0xff]
    %v2822 = vld [vmem:[%s2064 + $0x27a] sm:$0xff]
    %v2823 = vld [vmem:[%s2064 + $0x28a] sm:$0xff]
    %v2824 = vld [vmem:[%s2064 + $0x292] sm:$0xff]
    %v2825 = vld [vmem:[%s2064 + $0x2a2] sm:$0xff]
    %v2826 = vld [vmem:[%s2064 + $0x2aa] sm:$0xff]
    %v2827 = vld [vmem:[%s2064 + $0x2ba] sm:$0xff]
    %v2828 = vld [vmem:[%s2064 + $0x2c2] sm:$0xff]
    %v2829 = vld [vmem:[%s2064 + $0x2d2] sm:$0xff]
    %v2830 = vld [vmem:[%s2064 + $0x2da] sm:$0xff]
    %v2831 = vld [vmem:[%s2064 + $0x2ea] sm:$0xff]
    %v2832 = vld [vmem:[%s2064 + $0x2f2] sm:$0xff]
    %v2833 = vld [vmem:[%s2064 + $0x302] sm:$0xff]
    %v2834 = vld [vmem:[%s2064 + $0x30a] sm:$0xff]
    %v2835 = vld [vmem:[%s2064 + $0x31a] sm:$0xff]
    %v2836 = vld [vmem:[%s2064 + $0x322] sm:$0xff]
    %s2837 = scalar_lea.vmem %s2, 1024
    %v2838 = vld [vmem:[%s2837] sm:$0xff]
    %v2839 = vld [vmem:[%s2837 + $0x8] sm:$0xff]
    %v2840 = vld [vmem:[%s2837 + $0x10] sm:$0xff]
    %v2841 = vld [vmem:[%s2837 + $0x18] sm:$0xff]
    %v2842 = vld [vmem:[%s2837 + $0x20] sm:$0xff]
    %v2843 = vld [vmem:[%s2837 + $0x28] sm:$0xff]
    %v2844 = vld [vmem:[%s2837 + $0x30] sm:$0xff]
    %v2845 = vld [vmem:[%s2837 + $0x38] sm:$0xff]
    %v2846 = vld [vmem:[%s2837 + $0x40] sm:$0xff]
    %v2847 = vld [vmem:[%s2837 + $0x48] sm:$0xff]
    %v2848 = vld [vmem:[%s2837 + $0x50] sm:$0xff]
    %v2849 = vld [vmem:[%s2837 + $0x58] sm:$0xff]
    %v2850 = vld [vmem:[%s2837 + $0x60] sm:$0xff]
    %v2851 = vld [vmem:[%s2837 + $0x68] sm:$0xff]
    %v2852 = vld [vmem:[%s2837 + $0x70] sm:$0xff]
    %v2853 = vld [vmem:[%s2837 + $0x78] sm:$0xff]
    %2854 = vmatpush.msra.mxu0 %v2853
    %2855 = vmatpush.msra.mxu0 %v2852
    %2856 = vmatpush.msra.mxu0 %v2851
    %2857 = vmatpush.msra.mxu0 %v2850
    %2858 = vmatpush.msra.mxu0 %v2849
    %2859 = vmatpush.msra.mxu0 %v2848
    %2860 = vmatpush.msra.mxu0 %v2847
    %2861 = vmatpush.msra.mxu0 %v2846
    %2862 = vmatpush.msra.mxu0 %v2845
    %2863 = vmatpush.msra.mxu0 %v2844
    %2864 = vmatpush.msra.mxu0 %v2843
    %2865 = vmatpush.msra.mxu0 %v2842
    %2866 = vmatpush.msra.mxu0 %v2841
    %2867 = vmatpush.msra.mxu0 %v2840
    %2868 = vmatpush.msra.mxu0 %v2839
    %2869 = vmatpush.msra.mxu0 %v2838
    %2870 = vmatmul.f32.gmra.mxu0 %v2773
    %v2871 = vpop.f32.mrf.mxu0
    %v2872 = vadd.f32 0.0, %v2871
    %2873 = vmatmul.f32.gmra.mxu0 %v2774
    %v2874 = vpop.f32.mrf.mxu0
    %v2875 = vadd.f32 0.0, %v2874
    %2876 = vmatmul.f32.gmra.mxu0 %v2775
    %v2877 = vpop.f32.mrf.mxu0
    %v2878 = vadd.f32 0.0, %v2877
    %2879 = vmatmul.f32.gmra.mxu0 %v2776
    %v2880 = vpop.f32.mrf.mxu0
    %v2881 = vadd.f32 0.0, %v2880
    %2882 = vmatmul.f32.gmra.mxu0 %v2777
    %v2883 = vpop.f32.mrf.mxu0
    %v2884 = vadd.f32 0.0, %v2883
    %2885 = vmatmul.f32.gmra.mxu0 %v2778
    %v2886 = vpop.f32.mrf.mxu0
    %v2887 = vadd.f32 0.0, %v2886
    %2888 = vmatmul.f32.gmra.mxu0 %v2779
    %v2889 = vpop.f32.mrf.mxu0
    %v2890 = vadd.f32 0.0, %v2889
    %2891 = vmatmul.f32.gmra.mxu0 %v2780
    %v2892 = vpop.f32.mrf.mxu0
    %v2893 = vadd.f32 0.0, %v2892
    %2894 = vmatmul.f32.gmra.mxu0 %v2781
    %v2895 = vpop.f32.mrf.mxu0
    %v2896 = vadd.f32 0.0, %v2895
    %2897 = vmatmul.f32.gmra.mxu0 %v2782
    %v2898 = vpop.f32.mrf.mxu0
    %v2899 = vadd.f32 0.0, %v2898
    %2900 = vmatmul.f32.gmra.mxu0 %v2783
    %v2901 = vpop.f32.mrf.mxu0
    %v2902 = vadd.f32 0.0, %v2901
    %2903 = vmatmul.f32.gmra.mxu0 %v2784
    %v2904 = vpop.f32.mrf.mxu0
    %v2905 = vadd.f32 0.0, %v2904
    %2906 = vmatmul.f32.gmra.mxu0 %v2785
    %v2907 = vpop.f32.mrf.mxu0
    %v2908 = vadd.f32 0.0, %v2907
    %2909 = vmatmul.f32.gmra.mxu0 %v2786
    %v2910 = vpop.f32.mrf.mxu0
    %v2911 = vadd.f32 0.0, %v2910
    %2912 = vmatmul.f32.gmra.mxu0 %v2787
    %v2913 = vpop.f32.mrf.mxu0
    %v2914 = vadd.f32 0.0, %v2913
    %2915 = vmatmul.f32.gmra.mxu0 %v2788
    %v2916 = vpop.f32.mrf.mxu0
    %v2917 = vadd.f32 0.0, %v2916
    %2918 = vmatmul.f32.gmra.mxu0 %v2789
    %v2919 = vpop.f32.mrf.mxu0
    %v2920 = vadd.f32 0.0, %v2919
    %2921 = vmatmul.f32.gmra.mxu0 %v2790
    %v2922 = vpop.f32.mrf.mxu0
    %v2923 = vadd.f32 0.0, %v2922
    %2924 = vmatmul.f32.gmra.mxu0 %v2791
    %v2925 = vpop.f32.mrf.mxu0
    %v2926 = vadd.f32 0.0, %v2925
    %2927 = vmatmul.f32.gmra.mxu0 %v2792
    %v2928 = vpop.f32.mrf.mxu0
    %v2929 = vadd.f32 0.0, %v2928
    %2930 = vmatmul.f32.gmra.mxu0 %v2793
    %v2931 = vpop.f32.mrf.mxu0
    %v2932 = vadd.f32 0.0, %v2931
    %2933 = vmatmul.f32.gmra.mxu0 %v2794
    %v2934 = vpop.f32.mrf.mxu0
    %v2935 = vadd.f32 0.0, %v2934
    %2936 = vmatmul.f32.gmra.mxu0 %v2795
    %v2937 = vpop.f32.mrf.mxu0
    %v2938 = vadd.f32 0.0, %v2937
    %2939 = vmatmul.f32.gmra.mxu0 %v2796
    %v2940 = vpop.f32.mrf.mxu0
    %v2941 = vadd.f32 0.0, %v2940
    %2942 = vmatmul.f32.gmra.mxu0 %v2797
    %v2943 = vpop.f32.mrf.mxu0
    %v2944 = vadd.f32 0.0, %v2943
    %2945 = vmatmul.f32.gmra.mxu0 %v2798
    %v2946 = vpop.f32.mrf.mxu0
    %v2947 = vadd.f32 0.0, %v2946
    %2948 = vmatmul.f32.gmra.mxu0 %v2799
    %v2949 = vpop.f32.mrf.mxu0
    %v2950 = vadd.f32 0.0, %v2949
    %2951 = vmatmul.f32.gmra.mxu0 %v2800
    %v2952 = vpop.f32.mrf.mxu0
    %v2953 = vadd.f32 0.0, %v2952
    %2954 = vmatmul.f32.gmra.mxu0 %v2801
    %v2955 = vpop.f32.mrf.mxu0
    %v2956 = vadd.f32 0.0, %v2955
    %2957 = vmatmul.f32.gmra.mxu0 %v2802
    %v2958 = vpop.f32.mrf.mxu0
    %v2959 = vadd.f32 0.0, %v2958
    %2960 = vmatmul.f32.gmra.mxu0 %v2803
    %v2961 = vpop.f32.mrf.mxu0
    %v2962 = vadd.f32 0.0, %v2961
    %2963 = vmatmul.f32.gmra.mxu0 %v2804
    %v2964 = vpop.f32.mrf.mxu0
    %v2965 = vadd.f32 0.0, %v2964
    %2966 = vmatmul.f32.gmra.mxu0 %v2805
    %v2967 = vpop.f32.mrf.mxu0
    %v2968 = vadd.f32 0.0, %v2967
    %2969 = vmatmul.f32.gmra.mxu0 %v2806
    %v2970 = vpop.f32.mrf.mxu0
    %v2971 = vadd.f32 0.0, %v2970
    %2972 = vmatmul.f32.gmra.mxu0 %v2807
    %v2973 = vpop.f32.mrf.mxu0
    %v2974 = vadd.f32 0.0, %v2973
    %2975 = vmatmul.f32.gmra.mxu0 %v2808
    %v2976 = vpop.f32.mrf.mxu0
    %v2977 = vadd.f32 0.0, %v2976
    %2978 = vmatmul.f32.gmra.mxu0 %v2809
    %v2979 = vpop.f32.mrf.mxu0
    %v2980 = vadd.f32 0.0, %v2979
    %2981 = vmatmul.f32.gmra.mxu0 %v2810
    %v2982 = vpop.f32.mrf.mxu0
    %v2983 = vadd.f32 0.0, %v2982
    %2984 = vmatmul.f32.gmra.mxu0 %v2811
    %v2985 = vpop.f32.mrf.mxu0
    %v2986 = vadd.f32 0.0, %v2985
    %2987 = vmatmul.f32.gmra.mxu0 %v2812
    %v2988 = vpop.f32.mrf.mxu0
    %v2989 = vadd.f32 0.0, %v2988
    %2990 = vmatmul.f32.gmra.mxu0 %v2813
    %v2991 = vpop.f32.mrf.mxu0
    %v2992 = vadd.f32 0.0, %v2991
    %2993 = vmatmul.f32.gmra.mxu0 %v2814
    %v2994 = vpop.f32.mrf.mxu0
    %v2995 = vadd.f32 0.0, %v2994
    %2996 = vmatmul.f32.gmra.mxu0 %v2815
    %v2997 = vpop.f32.mrf.mxu0
    %v2998 = vadd.f32 0.0, %v2997
    %2999 = vmatmul.f32.gmra.mxu0 %v2816
    %v3000 = vpop.f32.mrf.mxu0
    %v3001 = vadd.f32 0.0, %v3000
    %3002 = vmatmul.f32.gmra.mxu0 %v2817
    %v3003 = vpop.f32.mrf.mxu0
    %v3004 = vadd.f32 0.0, %v3003
    %3005 = vmatmul.f32.gmra.mxu0 %v2818
    %v3006 = vpop.f32.mrf.mxu0
    %v3007 = vadd.f32 0.0, %v3006
    %3008 = vmatmul.f32.gmra.mxu0 %v2819
    %v3009 = vpop.f32.mrf.mxu0
    %v3010 = vadd.f32 0.0, %v3009
    %3011 = vmatmul.f32.gmra.mxu0 %v2820
    %v3012 = vpop.f32.mrf.mxu0
    %v3013 = vadd.f32 0.0, %v3012
    %3014 = vmatmul.f32.gmra.mxu0 %v2821
    %v3015 = vpop.f32.mrf.mxu0
    %v3016 = vadd.f32 0.0, %v3015
    %3017 = vmatmul.f32.gmra.mxu0 %v2822
    %v3018 = vpop.f32.mrf.mxu0
    %v3019 = vadd.f32 0.0, %v3018
    %3020 = vmatmul.f32.gmra.mxu0 %v2823
    %v3021 = vpop.f32.mrf.mxu0
    %v3022 = vadd.f32 0.0, %v3021
    %3023 = vmatmul.f32.gmra.mxu0 %v2824
    %v3024 = vpop.f32.mrf.mxu0
    %v3025 = vadd.f32 0.0, %v3024
    %3026 = vmatmul.f32.gmra.mxu0 %v2825
    %v3027 = vpop.f32.mrf.mxu0
    %v3028 = vadd.f32 0.0, %v3027
    %3029 = vmatmul.f32.gmra.mxu0 %v2826
    %v3030 = vpop.f32.mrf.mxu0
    %v3031 = vadd.f32 0.0, %v3030
    %3032 = vmatmul.f32.gmra.mxu0 %v2827
    %v3033 = vpop.f32.mrf.mxu0
    %v3034 = vadd.f32 0.0, %v3033
    %3035 = vmatmul.f32.gmra.mxu0 %v2828
    %v3036 = vpop.f32.mrf.mxu0
    %v3037 = vadd.f32 0.0, %v3036
    %3038 = vmatmul.f32.gmra.mxu0 %v2829
    %v3039 = vpop.f32.mrf.mxu0
    %v3040 = vadd.f32 0.0, %v3039
    %3041 = vmatmul.f32.gmra.mxu0 %v2830
    %v3042 = vpop.f32.mrf.mxu0
    %v3043 = vadd.f32 0.0, %v3042
    %3044 = vmatmul.f32.gmra.mxu0 %v2831
    %v3045 = vpop.f32.mrf.mxu0
    %v3046 = vadd.f32 0.0, %v3045
    %3047 = vmatmul.f32.gmra.mxu0 %v2832
    %v3048 = vpop.f32.mrf.mxu0
    %v3049 = vadd.f32 0.0, %v3048
    %3050 = vmatmul.f32.gmra.mxu0 %v2833
    %v3051 = vpop.f32.mrf.mxu0
    %v3052 = vadd.f32 0.0, %v3051
    %3053 = vmatmul.f32.gmra.mxu0 %v2834
    %v3054 = vpop.f32.mrf.mxu0
    %v3055 = vadd.f32 0.0, %v3054
    %3056 = vmatmul.f32.gmra.mxu0 %v2835
    %v3057 = vpop.f32.mrf.mxu0
    %v3058 = vadd.f32 0.0, %v3057
    %3059 = vmatmul.f32.gmra.mxu0 %v2836
    %v3060 = vpop.f32.mrf.mxu0
    %v3061 = vadd.f32 0.0, %v3060
    %3062 = vdwg.mxu0
    %v3063 = vadd.f32 %v2709, %v2872
    %v3064 = vadd.f32 %v2710, %v2875
    %v3065 = vadd.f32 %v2711, %v2878
    %v3066 = vadd.f32 %v2712, %v2881
    %v3067 = vadd.f32 %v2713, %v2884
    %v3068 = vadd.f32 %v2714, %v2887
    %v3069 = vadd.f32 %v2715, %v2890
    %v3070 = vadd.f32 %v2716, %v2893
    %v3071 = vadd.f32 %v2717, %v2896
    %v3072 = vadd.f32 %v2718, %v2899
    %v3073 = vadd.f32 %v2719, %v2902
    %v3074 = vadd.f32 %v2720, %v2905
    %v3075 = vadd.f32 %v2721, %v2908
    %v3076 = vadd.f32 %v2722, %v2911
    %v3077 = vadd.f32 %v2723, %v2914
    %v3078 = vadd.f32 %v2724, %v2917
    %v3079 = vadd.f32 %v2725, %v2920
    %v3080 = vadd.f32 %v2726, %v2923
    %v3081 = vadd.f32 %v2727, %v2926
    %v3082 = vadd.f32 %v2728, %v2929
    %v3083 = vadd.f32 %v2729, %v2932
    %v3084 = vadd.f32 %v2730, %v2935
    %v3085 = vadd.f32 %v2731, %v2938
    %v3086 = vadd.f32 %v2732, %v2941
    %v3087 = vadd.f32 %v2733, %v2944
    %v3088 = vadd.f32 %v2734, %v2947
    %v3089 = vadd.f32 %v2735, %v2950
    %v3090 = vadd.f32 %v2736, %v2953
    %v3091 = vadd.f32 %v2737, %v2956
    %v3092 = vadd.f32 %v2738, %v2959
    %v3093 = vadd.f32 %v2739, %v2962
    %v3094 = vadd.f32 %v2740, %v2965
    %v3095 = vadd.f32 %v2741, %v2968
    %v3096 = vadd.f32 %v2742, %v2971
    %v3097 = vadd.f32 %v2743, %v2974
    %v3098 = vadd.f32 %v2744, %v2977
    %v3099 = vadd.f32 %v2745, %v2980
    %v3100 = vadd.f32 %v2746, %v2983
    %v3101 = vadd.f32 %v2747, %v2986
    %v3102 = vadd.f32 %v2748, %v2989
    %v3103 = vadd.f32 %v2749, %v2992
    %v3104 = vadd.f32 %v2750, %v2995
    %v3105 = vadd.f32 %v2751, %v2998
    %v3106 = vadd.f32 %v2752, %v3001
    %v3107 = vadd.f32 %v2753, %v3004
    %v3108 = vadd.f32 %v2754, %v3007
    %v3109 = vadd.f32 %v2755, %v3010
    %v3110 = vadd.f32 %v2756, %v3013
    %v3111 = vadd.f32 %v2757, %v3016
    %v3112 = vadd.f32 %v2758, %v3019
    %v3113 = vadd.f32 %v2759, %v3022
    %v3114 = vadd.f32 %v2760, %v3025
    %v3115 = vadd.f32 %v2761, %v3028
    %v3116 = vadd.f32 %v2762, %v3031
    %v3117 = vadd.f32 %v2763, %v3034
    %v3118 = vadd.f32 %v2764, %v3037
    %v3119 = vadd.f32 %v2765, %v3040
    %v3120 = vadd.f32 %v2766, %v3043
    %v3121 = vadd.f32 %v2767, %v3046
    %v3122 = vadd.f32 %v2768, %v3049
    %v3123 = vadd.f32 %v2769, %v3052
    %v3124 = vadd.f32 %v2770, %v3055
    %v3125 = vadd.f32 %v2771, %v3058
    %v3126 = vadd.f32 %v2772, %v3061
    %v3127 = vld [vmem:[%s3] sm:$0x1]
    %v3129 = vperm.slane %v3127, 0
    %v3131 = vadd.f32 %v3063, %v3129
    %v3132 = vadd.f32 %v3064, %v3129
    %v3133 = vadd.f32 %v3065, %v3129
    %v3134 = vadd.f32 %v3066, %v3129
    %v3135 = vadd.f32 %v3067, %v3129
    %v3136 = vadd.f32 %v3068, %v3129
    %v3137 = vadd.f32 %v3069, %v3129
    %v3138 = vadd.f32 %v3070, %v3129
    %v3139 = vadd.f32 %v3071, %v3129
    %v3140 = vadd.f32 %v3072, %v3129
    %v3141 = vadd.f32 %v3073, %v3129
    %v3142 = vadd.f32 %v3074, %v3129
    %v3143 = vadd.f32 %v3075, %v3129
    %v3144 = vadd.f32 %v3076, %v3129
    %v3145 = vadd.f32 %v3077, %v3129
    %v3146 = vadd.f32 %v3078, %v3129
    %v3147 = vadd.f32 %v3079, %v3129
    %v3148 = vadd.f32 %v3080, %v3129
    %v3149 = vadd.f32 %v3081, %v3129
    %v3150 = vadd.f32 %v3082, %v3129
    %v3151 = vadd.f32 %v3083, %v3129
    %v3152 = vadd.f32 %v3084, %v3129
    %v3153 = vadd.f32 %v3085, %v3129
    %v3154 = vadd.f32 %v3086, %v3129
    %v3155 = vadd.f32 %v3087, %v3129
    %v3156 = vadd.f32 %v3088, %v3129
    %v3157 = vadd.f32 %v3089, %v3129
    %v3158 = vadd.f32 %v3090, %v3129
    %v3159 = vadd.f32 %v3091, %v3129
    %v3160 = vadd.f32 %v3092, %v3129
    %v3161 = vadd.f32 %v3093, %v3129
    %v3162 = vadd.f32 %v3094, %v3129
    %v3163 = vadd.f32 %v3095, %v3129
    %v3164 = vadd.f32 %v3096, %v3129
    %v3165 = vadd.f32 %v3097, %v3129
    %v3166 = vadd.f32 %v3098, %v3129
    %v3167 = vadd.f32 %v3099, %v3129
    %v3168 = vadd.f32 %v3100, %v3129
    %v3169 = vadd.f32 %v3101, %v3129
    %v3170 = vadd.f32 %v3102, %v3129
    %v3171 = vadd.f32 %v3103, %v3129
    %v3172 = vadd.f32 %v3104, %v3129
    %v3173 = vadd.f32 %v3105, %v3129
    %v3174 = vadd.f32 %v3106, %v3129
    %v3175 = vadd.f32 %v3107, %v3129
    %v3176 = vadd.f32 %v3108, %v3129
    %v3177 = vadd.f32 %v3109, %v3129
    %v3178 = vadd.f32 %v3110, %v3129
    %v3179 = vadd.f32 %v3111, %v3129
    %v3180 = vadd.f32 %v3112, %v3129
    %v3181 = vadd.f32 %v3113, %v3129
    %v3182 = vadd.f32 %v3114, %v3129
    %v3183 = vadd.f32 %v3115, %v3129
    %v3184 = vadd.f32 %v3116, %v3129
    %v3185 = vadd.f32 %v3117, %v3129
    %v3186 = vadd.f32 %v3118, %v3129
    %v3187 = vadd.f32 %v3119, %v3129
    %v3188 = vadd.f32 %v3120, %v3129
    %v3189 = vadd.f32 %v3121, %v3129
    %v3190 = vadd.f32 %v3122, %v3129
    %v3191 = vadd.f32 %v3123, %v3129
    %v3192 = vadd.f32 %v3124, %v3129
    %v3193 = vadd.f32 %v3125, %v3129
    %v3194 = vadd.f32 %v3126, %v3129
    %v3195 = vadd.f32 %v3131, %v3132
    %v3196 = vadd.f32 %v3195, %v3133
    %v3197 = vadd.f32 %v3196, %v3134
    %v3198 = vadd.f32 %v3197, %v3135
    %v3199 = vadd.f32 %v3198, %v3136
    %v3200 = vadd.f32 %v3199, %v3137
    %v3201 = vadd.f32 %v3200, %v3138
    %v3202 = vadd.f32 %v3201, %v3139
    %v3203 = vadd.f32 %v3202, %v3140
    %v3204 = vadd.f32 %v3203, %v3141
    %v3205 = vadd.f32 %v3204, %v3142
    %v3206 = vadd.f32 %v3205, %v3143
    %v3207 = vadd.f32 %v3206, %v3144
    %v3208 = vadd.f32 %v3207, %v3145
    %v3209 = vadd.f32 %v3208, %v3146
    %v3210 = vadd.f32 %v3209, %v3147
    %v3211 = vadd.f32 %v3210, %v3148
    %v3212 = vadd.f32 %v3211, %v3149
    %v3213 = vadd.f32 %v3212, %v3150
    %v3214 = vadd.f32 %v3213, %v3151
    %v3215 = vadd.f32 %v3214, %v3152
    %v3216 = vadd.f32 %v3215, %v3153
    %v3217 = vadd.f32 %v3216, %v3154
    %v3218 = vadd.f32 %v3217, %v3155
    %v3219 = vadd.f32 %v3218, %v3156
    %v3220 = vadd.f32 %v3219, %v3157
    %v3221 = vadd.f32 %v3220, %v3158
    %v3222 = vadd.f32 %v3221, %v3159
    %v3223 = vadd.f32 %v3222, %v3160
    %v3224 = vadd.f32 %v3223, %v3161
    %v3225 = vadd.f32 %v3224, %v3162
    %v3226 = vadd.f32 %v3225, %v3163
    %v3227 = vadd.f32 %v3226, %v3164
    %v3228 = vadd.f32 %v3227, %v3165
    %v3229 = vadd.f32 %v3228, %v3166
    %v3230 = vadd.f32 %v3229, %v3167
    %v3231 = vadd.f32 %v3230, %v3168
    %v3232 = vadd.f32 %v3231, %v3169
    %v3233 = vadd.f32 %v3232, %v3170
    %v3234 = vadd.f32 %v3233, %v3171
    %v3235 = vadd.f32 %v3234, %v3172
    %v3236 = vadd.f32 %v3235, %v3173
    %v3237 = vadd.f32 %v3236, %v3174
    %v3238 = vadd.f32 %v3237, %v3175
    %v3239 = vadd.f32 %v3238, %v3176
    %v3240 = vadd.f32 %v3239, %v3177
    %v3241 = vadd.f32 %v3240, %v3178
    %v3242 = vadd.f32 %v3241, %v3179
    %v3243 = vadd.f32 %v3242, %v3180
    %v3244 = vadd.f32 %v3243, %v3181
    %v3245 = vadd.f32 %v3244, %v3182
    %v3246 = vadd.f32 %v3245, %v3183
    %v3247 = vadd.f32 %v3246, %v3184
    %v3248 = vadd.f32 %v3247, %v3185
    %v3249 = vadd.f32 %v3248, %v3186
    %v3250 = vadd.f32 %v3249, %v3187
    %v3251 = vadd.f32 %v3250, %v3188
    %v3252 = vadd.f32 %v3251, %v3189
    %v3253 = vadd.f32 %v3252, %v3190
    %v3254 = vadd.f32 %v3253, %v3191
    %v3255 = vadd.f32 %v3254, %v3192
    %v3256 = vadd.f32 %v3255, %v3193
    %v3257 = vadd.f32 %v3256, %v3194
    %v3258 = vrot.slane %v3257, 4
    %v3259 = vadd.f32 %v3257, %v3258
    %v3260 = vrot.slane %v3259, 2
    %v3261 = vadd.f32 %v3259, %v3260
    %v3262 = vrot.slane %v3261, 1
    %v3263 = vadd.f32 %v3261, %v3262
    %v3264 = vmul.f32 %v3263, 0.001953125
    %v3265 = vmul.f32 %v3131, %v3131
    %v3266 = vmul.f32 %v3132, %v3132
    %v3267 = vmul.f32 %v3133, %v3133
    %v3268 = vmul.f32 %v3134, %v3134
    %v3269 = vmul.f32 %v3135, %v3135
    %v3270 = vmul.f32 %v3136, %v3136
    %v3271 = vmul.f32 %v3137, %v3137
    %v3272 = vmul.f32 %v3138, %v3138
    %v3273 = vmul.f32 %v3139, %v3139
    %v3274 = vmul.f32 %v3140, %v3140
    %v3275 = vmul.f32 %v3141, %v3141
    %v3276 = vmul.f32 %v3142, %v3142
    %v3277 = vmul.f32 %v3143, %v3143
    %v3278 = vmul.f32 %v3144, %v3144
    %v3279 = vmul.f32 %v3145, %v3145
    %v3280 = vmul.f32 %v3146, %v3146
    %v3281 = vmul.f32 %v3147, %v3147
    %v3282 = vmul.f32 %v3148, %v3148
    %v3283 = vmul.f32 %v3149, %v3149
    %v3284 = vmul.f32 %v3150, %v3150
    %v3285 = vmul.f32 %v3151, %v3151
    %v3286 = vmul.f32 %v3152, %v3152
    %v3287 = vmul.f32 %v3153, %v3153
    %v3288 = vmul.f32 %v3154, %v3154
    %v3289 = vmul.f32 %v3155, %v3155
    %v3290 = vmul.f32 %v3156, %v3156
    %v3291 = vmul.f32 %v3157, %v3157
    %v3292 = vmul.f32 %v3158, %v3158
    %v3293 = vmul.f32 %v3159, %v3159
    %v3294 = vmul.f32 %v3160, %v3160
    %v3295 = vmul.f32 %v3161, %v3161
    %v3296 = vmul.f32 %v3162, %v3162
    %v3297 = vmul.f32 %v3163, %v3163
    %v3298 = vmul.f32 %v3164, %v3164
    %v3299 = vmul.f32 %v3165, %v3165
    %v3300 = vmul.f32 %v3166, %v3166
    %v3301 = vmul.f32 %v3167, %v3167
    %v3302 = vmul.f32 %v3168, %v3168
    %v3303 = vmul.f32 %v3169, %v3169
    %v3304 = vmul.f32 %v3170, %v3170
    %v3305 = vmul.f32 %v3171, %v3171
    %v3306 = vmul.f32 %v3172, %v3172
    %v3307 = vmul.f32 %v3173, %v3173
    %v3308 = vmul.f32 %v3174, %v3174
    %v3309 = vmul.f32 %v3175, %v3175
    %v3310 = vmul.f32 %v3176, %v3176
    %v3311 = vmul.f32 %v3177, %v3177
    %v3312 = vmul.f32 %v3178, %v3178
    %v3313 = vmul.f32 %v3179, %v3179
    %v3314 = vmul.f32 %v3180, %v3180
    %v3315 = vmul.f32 %v3181, %v3181
    %v3316 = vmul.f32 %v3182, %v3182
    %v3317 = vmul.f32 %v3183, %v3183
    %v3318 = vmul.f32 %v3184, %v3184
    %v3319 = vmul.f32 %v3185, %v3185
    %v3320 = vmul.f32 %v3186, %v3186
    %v3321 = vmul.f32 %v3187, %v3187
    %v3322 = vmul.f32 %v3188, %v3188
    %v3323 = vmul.f32 %v3189, %v3189
    %v3324 = vmul.f32 %v3190, %v3190
    %v3325 = vmul.f32 %v3191, %v3191
    %v3326 = vmul.f32 %v3192, %v3192
    %v3327 = vmul.f32 %v3193, %v3193
    %v3328 = vmul.f32 %v3194, %v3194
    %v3329 = vadd.f32 %v3265, %v3266
    %v3330 = vadd.f32 %v3329, %v3267
    %v3331 = vadd.f32 %v3330, %v3268
    %v3332 = vadd.f32 %v3331, %v3269
    %v3333 = vadd.f32 %v3332, %v3270
    %v3334 = vadd.f32 %v3333, %v3271
    %v3335 = vadd.f32 %v3334, %v3272
    %v3336 = vadd.f32 %v3335, %v3273
    %v3337 = vadd.f32 %v3336, %v3274
    %v3338 = vadd.f32 %v3337, %v3275
    %v3339 = vadd.f32 %v3338, %v3276
    %v3340 = vadd.f32 %v3339, %v3277
    %v3341 = vadd.f32 %v3340, %v3278
    %v3342 = vadd.f32 %v3341, %v3279
    %v3343 = vadd.f32 %v3342, %v3280
    %v3344 = vadd.f32 %v3343, %v3281
    %v3345 = vadd.f32 %v3344, %v3282
    %v3346 = vadd.f32 %v3345, %v3283
    %v3347 = vadd.f32 %v3346, %v3284
    %v3348 = vadd.f32 %v3347, %v3285
    %v3349 = vadd.f32 %v3348, %v3286
    %v3350 = vadd.f32 %v3349, %v3287
    %v3351 = vadd.f32 %v3350, %v3288
    %v3352 = vadd.f32 %v3351, %v3289
    %v3353 = vadd.f32 %v3352, %v3290
    %v3354 = vadd.f32 %v3353, %v3291
    %v3355 = vadd.f32 %v3354, %v3292
    %v3356 = vadd.f32 %v3355, %v3293
    %v3357 = vadd.f32 %v3356, %v3294
    %v3358 = vadd.f32 %v3357, %v3295
    %v3359 = vadd.f32 %v3358, %v3296
    %v3360 = vadd.f32 %v3359, %v3297
    %v3361 = vadd.f32 %v3360, %v3298
    %v3362 = vadd.f32 %v3361, %v3299
    %v3363 = vadd.f32 %v3362, %v3300
    %v3364 = vadd.f32 %v3363, %v3301
    %v3365 = vadd.f32 %v3364, %v3302
    %v3366 = vadd.f32 %v3365, %v3303
    %v3367 = vadd.f32 %v3366, %v3304
    %v3368 = vadd.f32 %v3367, %v3305
    %v3369 = vadd.f32 %v3368, %v3306
    %v3370 = vadd.f32 %v3369, %v3307
    %v3371 = vadd.f32 %v3370, %v3308
    %v3372 = vadd.f32 %v3371, %v3309
    %v3373 = vadd.f32 %v3372, %v3310
    %v3374 = vadd.f32 %v3373, %v3311
    %v3375 = vadd.f32 %v3374, %v3312
    %v3376 = vadd.f32 %v3375, %v3313
    %v3377 = vadd.f32 %v3376, %v3314
    %v3378 = vadd.f32 %v3377, %v3315
    %v3379 = vadd.f32 %v3378, %v3316
    %v3380 = vadd.f32 %v3379, %v3317
    %v3381 = vadd.f32 %v3380, %v3318
    %v3382 = vadd.f32 %v3381, %v3319
    %v3383 = vadd.f32 %v3382, %v3320
    %v3384 = vadd.f32 %v3383, %v3321
    %v3385 = vadd.f32 %v3384, %v3322
    %v3386 = vadd.f32 %v3385, %v3323
    %v3387 = vadd.f32 %v3386, %v3324
    %v3388 = vadd.f32 %v3387, %v3325
    %v3389 = vadd.f32 %v3388, %v3326
    %v3390 = vadd.f32 %v3389, %v3327
    %v3391 = vadd.f32 %v3390, %v3328
    %v3392 = vrot.slane %v3391, 4
    %v3393 = vadd.f32 %v3391, %v3392
    %v3394 = vrot.slane %v3393, 2
    %v3395 = vadd.f32 %v3393, %v3394
    %v3396 = vrot.slane %v3395, 1
    %v3397 = vadd.f32 %v3395, %v3396
    %v3398 = vmul.f32 %v3397, 0.001953125
    %v3399 = vmul.f32 %v3264, %v3264
    %v3400 = vsub.f32 %v3398, %v3399
    %v3401 = vadd.f32 %v3400, 1e-05
    %v3402 = vrsqrt.pop %v3401
    %v3403 = vmul.f32 %v3402, %v3401
    %v3404 = vmul.f32 %v3403, %v3402
    %v3405 = vmul.f32 0.5, %v3404
    %v3406 = vsub.f32 1.5, %v3405
    %v3407 = vmul.f32 %v3402, %v3406
    %vm3408 = vweird.f32 %v3401
    %vm3409 = vweird.f32 %v3402
    %vm3410 = vmor %vm3408, %vm3409
    %v3411 = vsel %vm3410, %v3402, %v3407
    %v3412 = vld [vmem:[%s4] sm:$0x1]
    %v3413 = vmul.f32 %v3411, %v3412
    %v3414 = vsub.f32 %v3131, %v3264
    %v3415 = vsub.f32 %v3132, %v3264
    %v3416 = vsub.f32 %v3133, %v3264
    %v3417 = vsub.f32 %v3134, %v3264
    %v3418 = vsub.f32 %v3135, %v3264
    %v3419 = vsub.f32 %v3136, %v3264
    %v3420 = vsub.f32 %v3137, %v3264
    %v3421 = vsub.f32 %v3138, %v3264
    %v3422 = vsub.f32 %v3139, %v3264
    %v3423 = vsub.f32 %v3140, %v3264
    %v3424 = vsub.f32 %v3141, %v3264
    %v3425 = vsub.f32 %v3142, %v3264
    %v3426 = vsub.f32 %v3143, %v3264
    %v3427 = vsub.f32 %v3144, %v3264
    %v3428 = vsub.f32 %v3145, %v3264
    %v3429 = vsub.f32 %v3146, %v3264
    %v3430 = vsub.f32 %v3147, %v3264
    %v3431 = vsub.f32 %v3148, %v3264
    %v3432 = vsub.f32 %v3149, %v3264
    %v3433 = vsub.f32 %v3150, %v3264
    %v3434 = vsub.f32 %v3151, %v3264
    %v3435 = vsub.f32 %v3152, %v3264
    %v3436 = vsub.f32 %v3153, %v3264
    %v3437 = vsub.f32 %v3154, %v3264
    %v3438 = vsub.f32 %v3155, %v3264
    %v3439 = vsub.f32 %v3156, %v3264
    %v3440 = vsub.f32 %v3157, %v3264
    %v3441 = vsub.f32 %v3158, %v3264
    %v3442 = vsub.f32 %v3159, %v3264
    %v3443 = vsub.f32 %v3160, %v3264
    %v3444 = vsub.f32 %v3161, %v3264
    %v3445 = vsub.f32 %v3162, %v3264
    %v3446 = vsub.f32 %v3163, %v3264
    %v3447 = vsub.f32 %v3164, %v3264
    %v3448 = vsub.f32 %v3165, %v3264
    %v3449 = vsub.f32 %v3166, %v3264
    %v3450 = vsub.f32 %v3167, %v3264
    %v3451 = vsub.f32 %v3168, %v3264
    %v3452 = vsub.f32 %v3169, %v3264
    %v3453 = vsub.f32 %v3170, %v3264
    %v3454 = vsub.f32 %v3171, %v3264
    %v3455 = vsub.f32 %v3172, %v3264
    %v3456 = vsub.f32 %v3173, %v3264
    %v3457 = vsub.f32 %v3174, %v3264
    %v3458 = vsub.f32 %v3175, %v3264
    %v3459 = vsub.f32 %v3176, %v3264
    %v3460 = vsub.f32 %v3177, %v3264
    %v3461 = vsub.f32 %v3178, %v3264
    %v3462 = vsub.f32 %v3179, %v3264
    %v3463 = vsub.f32 %v3180, %v3264
    %v3464 = vsub.f32 %v3181, %v3264
    %v3465 = vsub.f32 %v3182, %v3264
    %v3466 = vsub.f32 %v3183, %v3264
    %v3467 = vsub.f32 %v3184, %v3264
    %v3468 = vsub.f32 %v3185, %v3264
    %v3469 = vsub.f32 %v3186, %v3264
    %v3470 = vsub.f32 %v3187, %v3264
    %v3471 = vsub.f32 %v3188, %v3264
    %v3472 = vsub.f32 %v3189, %v3264
    %v3473 = vsub.f32 %v3190, %v3264
    %v3474 = vsub.f32 %v3191, %v3264
    %v3475 = vsub.f32 %v3192, %v3264
    %v3476 = vsub.f32 %v3193, %v3264
    %v3477 = vsub.f32 %v3194, %v3264
    %v3478 = vperm.slane %v3413, 0
    %v3479 = vmul.f32 %v3414, %v3478
    %v3480 = vmul.f32 %v3415, %v3478
    %v3481 = vmul.f32 %v3416, %v3478
    %v3482 = vmul.f32 %v3417, %v3478
    %v3483 = vmul.f32 %v3418, %v3478
    %v3484 = vmul.f32 %v3419, %v3478
    %v3485 = vmul.f32 %v3420, %v3478
    %v3486 = vmul.f32 %v3421, %v3478
    %v3487 = vmul.f32 %v3422, %v3478
    %v3488 = vmul.f32 %v3423, %v3478
    %v3489 = vmul.f32 %v3424, %v3478
    %v3490 = vmul.f32 %v3425, %v3478
    %v3491 = vmul.f32 %v3426, %v3478
    %v3492 = vmul.f32 %v3427, %v3478
    %v3493 = vmul.f32 %v3428, %v3478
    %v3494 = vmul.f32 %v3429, %v3478
    %v3495 = vmul.f32 %v3430, %v3478
    %v3496 = vmul.f32 %v3431, %v3478
    %v3497 = vmul.f32 %v3432, %v3478
    %v3498 = vmul.f32 %v3433, %v3478
    %v3499 = vmul.f32 %v3434, %v3478
    %v3500 = vmul.f32 %v3435, %v3478
    %v3501 = vmul.f32 %v3436, %v3478
    %v3502 = vmul.f32 %v3437, %v3478
    %v3503 = vmul.f32 %v3438, %v3478
    %v3504 = vmul.f32 %v3439, %v3478
    %v3505 = vmul.f32 %v3440, %v3478
    %v3506 = vmul.f32 %v3441, %v3478
    %v3507 = vmul.f32 %v3442, %v3478
    %v3508 = vmul.f32 %v3443, %v3478
    %v3509 = vmul.f32 %v3444, %v3478
    %v3510 = vmul.f32 %v3445, %v3478
    %v3511 = vmul.f32 %v3446, %v3478
    %v3512 = vmul.f32 %v3447, %v3478
    %v3513 = vmul.f32 %v3448, %v3478
    %v3514 = vmul.f32 %v3449, %v3478
    %v3515 = vmul.f32 %v3450, %v3478
    %v3516 = vmul.f32 %v3451, %v3478
    %v3517 = vmul.f32 %v3452, %v3478
    %v3518 = vmul.f32 %v3453, %v3478
    %v3519 = vmul.f32 %v3454, %v3478
    %v3520 = vmul.f32 %v3455, %v3478
    %v3521 = vmul.f32 %v3456, %v3478
    %v3522 = vmul.f32 %v3457, %v3478
    %v3523 = vmul.f32 %v3458, %v3478
    %v3524 = vmul.f32 %v3459, %v3478
    %v3525 = vmul.f32 %v3460, %v3478
    %v3526 = vmul.f32 %v3461, %v3478
    %v3527 = vmul.f32 %v3462, %v3478
    %v3528 = vmul.f32 %v3463, %v3478
    %v3529 = vmul.f32 %v3464, %v3478
    %v3530 = vmul.f32 %v3465, %v3478
    %v3531 = vmul.f32 %v3466, %v3478
    %v3532 = vmul.f32 %v3467, %v3478
    %v3533 = vmul.f32 %v3468, %v3478
    %v3534 = vmul.f32 %v3469, %v3478
    %v3535 = vmul.f32 %v3470, %v3478
    %v3536 = vmul.f32 %v3471, %v3478
    %v3537 = vmul.f32 %v3472, %v3478
    %v3538 = vmul.f32 %v3473, %v3478
    %v3539 = vmul.f32 %v3474, %v3478
    %v3540 = vmul.f32 %v3475, %v3478
    %v3541 = vmul.f32 %v3476, %v3478
    %v3542 = vmul.f32 %v3477, %v3478
    %v3543 = vld [vmem:[%s5] sm:$0x1]
    %v3545 = vperm.slane %v3543, 0
    %v3547 = vadd.f32 %v3479, %v3545
    %v3548 = vadd.f32 %v3480, %v3545
    %v3549 = vadd.f32 %v3481, %v3545
    %v3550 = vadd.f32 %v3482, %v3545
    %v3551 = vadd.f32 %v3483, %v3545
    %v3552 = vadd.f32 %v3484, %v3545
    %v3553 = vadd.f32 %v3485, %v3545
    %v3554 = vadd.f32 %v3486, %v3545
    %v3555 = vadd.f32 %v3487, %v3545
    %v3556 = vadd.f32 %v3488, %v3545
    %v3557 = vadd.f32 %v3489, %v3545
    %v3558 = vadd.f32 %v3490, %v3545
    %v3559 = vadd.f32 %v3491, %v3545
    %v3560 = vadd.f32 %v3492, %v3545
    %v3561 = vadd.f32 %v3493, %v3545
    %v3562 = vadd.f32 %v3494, %v3545
    %v3563 = vadd.f32 %v3495, %v3545
    %v3564 = vadd.f32 %v3496, %v3545
    %v3565 = vadd.f32 %v3497, %v3545
    %v3566 = vadd.f32 %v3498, %v3545
    %v3567 = vadd.f32 %v3499, %v3545
    %v3568 = vadd.f32 %v3500, %v3545
    %v3569 = vadd.f32 %v3501, %v3545
    %v3570 = vadd.f32 %v3502, %v3545
    %v3571 = vadd.f32 %v3503, %v3545
    %v3572 = vadd.f32 %v3504, %v3545
    %v3573 = vadd.f32 %v3505, %v3545
    %v3574 = vadd.f32 %v3506, %v3545
    %v3575 = vadd.f32 %v3507, %v3545
    %v3576 = vadd.f32 %v3508, %v3545
    %v3577 = vadd.f32 %v3509, %v3545
    %v3578 = vadd.f32 %v3510, %v3545
    %v3579 = vadd.f32 %v3511, %v3545
    %v3580 = vadd.f32 %v3512, %v3545
    %v3581 = vadd.f32 %v3513, %v3545
    %v3582 = vadd.f32 %v3514, %v3545
    %v3583 = vadd.f32 %v3515, %v3545
    %v3584 = vadd.f32 %v3516, %v3545
    %v3585 = vadd.f32 %v3517, %v3545
    %v3586 = vadd.f32 %v3518, %v3545
    %v3587 = vadd.f32 %v3519, %v3545
    %v3588 = vadd.f32 %v3520, %v3545
    %v3589 = vadd.f32 %v3521, %v3545
    %v3590 = vadd.f32 %v3522, %v3545
    %v3591 = vadd.f32 %v3523, %v3545
    %v3592 = vadd.f32 %v3524, %v3545
    %v3593 = vadd.f32 %v3525, %v3545
    %v3594 = vadd.f32 %v3526, %v3545
    %v3595 = vadd.f32 %v3527, %v3545
    %v3596 = vadd.f32 %v3528, %v3545
    %v3597 = vadd.f32 %v3529, %v3545
    %v3598 = vadd.f32 %v3530, %v3545
    %v3599 = vadd.f32 %v3531, %v3545
    %v3600 = vadd.f32 %v3532, %v3545
    %v3601 = vadd.f32 %v3533, %v3545
    %v3602 = vadd.f32 %v3534, %v3545
    %v3603 = vadd.f32 %v3535, %v3545
    %v3604 = vadd.f32 %v3536, %v3545
    %v3605 = vadd.f32 %v3537, %v3545
    %v3606 = vadd.f32 %v3538, %v3545
    %v3607 = vadd.f32 %v3539, %v3545
    %v3608 = vadd.f32 %v3540, %v3545
    %v3609 = vadd.f32 %v3541, %v3545
    %v3610 = vadd.f32 %v3542, %v3545
    %v3611 = vmax.f32 %v3547, 0.0
    %v3612 = vmax.f32 %v3548, 0.0
    %v3613 = vmax.f32 %v3549, 0.0
    %v3614 = vmax.f32 %v3550, 0.0
    %v3615 = vmax.f32 %v3551, 0.0
    %v3616 = vmax.f32 %v3552, 0.0
    %v3617 = vmax.f32 %v3553, 0.0
    %v3618 = vmax.f32 %v3554, 0.0
    %v3619 = vmax.f32 %v3555, 0.0
    %v3620 = vmax.f32 %v3556, 0.0
    %v3621 = vmax.f32 %v3557, 0.0
    %v3622 = vmax.f32 %v3558, 0.0
    %v3623 = vmax.f32 %v3559, 0.0
    %v3624 = vmax.f32 %v3560, 0.0
    %v3625 = vmax.f32 %v3561, 0.0
    %v3626 = vmax.f32 %v3562, 0.0
    %v3627 = vmax.f32 %v3563, 0.0
    %v3628 = vmax.f32 %v3564, 0.0
    %v3629 = vmax.f32 %v3565, 0.0
    %v3630 = vmax.f32 %v3566, 0.0
    %v3631 = vmax.f32 %v3567, 0.0
    %v3632 = vmax.f32 %v3568, 0.0
    %v3633 = vmax.f32 %v3569, 0.0
    %v3634 = vmax.f32 %v3570, 0.0
    %v3635 = vmax.f32 %v3571, 0.0
    %v3636 = vmax.f32 %v3572, 0.0
    %v3637 = vmax.f32 %v3573, 0.0
    %v3638 = vmax.f32 %v3574, 0.0
    %v3639 = vmax.f32 %v3575, 0.0
    %v3640 = vmax.f32 %v3576, 0.0
    %v3641 = vmax.f32 %v3577, 0.0
    %v3642 = vmax.f32 %v3578, 0.0
    %v3643 = vmax.f32 %v3579, 0.0
    %v3644 = vmax.f32 %v3580, 0.0
    %v3645 = vmax.f32 %v3581, 0.0
    %v3646 = vmax.f32 %v3582, 0.0
    %v3647 = vmax.f32 %v3583, 0.0
    %v3648 = vmax.f32 %v3584, 0.0
    %v3649 = vmax.f32 %v3585, 0.0
    %v3650 = vmax.f32 %v3586, 0.0
    %v3651 = vmax.f32 %v3587, 0.0
    %v3652 = vmax.f32 %v3588, 0.0
    %v3653 = vmax.f32 %v3589, 0.0
    %v3654 = vmax.f32 %v3590, 0.0
    %v3655 = vmax.f32 %v3591, 0.0
    %v3656 = vmax.f32 %v3592, 0.0
    %v3657 = vmax.f32 %v3593, 0.0
    %v3658 = vmax.f32 %v3594, 0.0
    %v3659 = vmax.f32 %v3595, 0.0
    %v3660 = vmax.f32 %v3596, 0.0
    %v3661 = vmax.f32 %v3597, 0.0
    %v3662 = vmax.f32 %v3598, 0.0
    %v3663 = vmax.f32 %v3599, 0.0
    %v3664 = vmax.f32 %v3600, 0.0
    %v3665 = vmax.f32 %v3601, 0.0
    %v3666 = vmax.f32 %v3602, 0.0
    %v3667 = vmax.f32 %v3603, 0.0
    %v3668 = vmax.f32 %v3604, 0.0
    %v3669 = vmax.f32 %v3605, 0.0
    %v3670 = vmax.f32 %v3606, 0.0
    %v3671 = vmax.f32 %v3607, 0.0
    %v3672 = vmax.f32 %v3608, 0.0
    %v3673 = vmax.f32 %v3609, 0.0
    %v3674 = vmax.f32 %v3610, 0.0
    %3675 = vst [vmem:[#allocation2] sm:$0xff] 0.0
    %3676 = vst [vmem:[#allocation2 + $0x8] sm:$0xff] 0.0
    %3677 = vst [vmem:[#allocation2 + $0x10] sm:$0x3] 0.0
    %3678 = vst [vmem:[#allocation2 + $0x1b0] sm:$0xff] 0.0
    %3679 = vst [vmem:[#allocation2 + $0x1b8] sm:$0xff] 0.0
    %3680 = vst [vmem:[#allocation2 + $0x1c0] sm:$0x3] 0.0
    %s3681 = scalar_lea.vmem [#allocation2], 408
    %3682 = vst [vmem:[%s3681] sm:$0xff] 0.0
    %3683 = vst [vmem:[%s3681 + $0x8] sm:$0xff] 0.0
    %3684 = vst [vmem:[%s3681 + $0x10] sm:$0x3] 0.0
    %3685 = vst [vmem:[%s3681 + $0x1b0] sm:$0xff] 0.0
    %3686 = vst [vmem:[%s3681 + $0x1b8] sm:$0xff] 0.0
    %3687 = vst [vmem:[%s3681 + $0x1c0] sm:$0x3] 0.0
    %s3688 = scalar_lea.vmem [#allocation2], 24
    %3689 = vst [vmem:[%s3688] sm:$0x1] 0.0
    %3690 = vst [vmem:[%s3688 + $0x18] sm:$0x1] 0.0
    %3691 = vst [vmem:[%s3688 + $0x30] sm:$0x1] 0.0
    %3692 = vst [vmem:[%s3688 + $0x48] sm:$0x1] 0.0
    %3693 = vst [vmem:[%s3688 + $0x60] sm:$0x1] 0.0
    %3694 = vst [vmem:[%s3688 + $0x78] sm:$0x1] 0.0
    %3695 = vst [vmem:[%s3688 + $0x90] sm:$0x1] 0.0
    %3696 = vst [vmem:[%s3688 + $0xa8] sm:$0x1] 0.0
    %3697 = vst [vmem:[%s3688 + $0xc0] sm:$0x1] 0.0
    %3698 = vst [vmem:[%s3688 + $0xd8] sm:$0x1] 0.0
    %3699 = vst [vmem:[%s3688 + $0xf0] sm:$0x1] 0.0
    %3700 = vst [vmem:[%s3688 + $0x108] sm:$0x1] 0.0
    %3701 = vst [vmem:[%s3688 + $0x120] sm:$0x1] 0.0
    %3702 = vst [vmem:[%s3688 + $0x138] sm:$0x1] 0.0
    %3703 = vst [vmem:[%s3688 + $0x150] sm:$0x1] 0.0
    %3704 = vst [vmem:[%s3688 + $0x168] sm:$0x1] 0.0
    %3705 = vst [vmem:[%s3688 + $0x1b0] sm:$0x1] 0.0
    %3706 = vst [vmem:[%s3688 + $0x1c8] sm:$0x1] 0.0
    %3707 = vst [vmem:[%s3688 + $0x1e0] sm:$0x1] 0.0
    %3708 = vst [vmem:[%s3688 + $0x1f8] sm:$0x1] 0.0
    %3709 = vst [vmem:[%s3688 + $0x210] sm:$0x1] 0.0
    %3710 = vst [vmem:[%s3688 + $0x228] sm:$0x1] 0.0
    %3711 = vst [vmem:[%s3688 + $0x240] sm:$0x1] 0.0
    %3712 = vst [vmem:[%s3688 + $0x258] sm:$0x1] 0.0
    %3713 = vst [vmem:[%s3688 + $0x270] sm:$0x1] 0.0
    %3714 = vst [vmem:[%s3688 + $0x288] sm:$0x1] 0.0
    %3715 = vst [vmem:[%s3688 + $0x2a0] sm:$0x1] 0.0
    %3716 = vst [vmem:[%s3688 + $0x2b8] sm:$0x1] 0.0
    %3717 = vst [vmem:[%s3688 + $0x2d0] sm:$0x1] 0.0
    %3718 = vst [vmem:[%s3688 + $0x2e8] sm:$0x1] 0.0
    %3719 = vst [vmem:[%s3688 + $0x300] sm:$0x1] 0.0
    %3720 = vst [vmem:[%s3688 + $0x318] sm:$0x1] 0.0
    %3721 = vst [vmem:[%s3688 + $0x11] sm:$0x1] 0.0
    %3722 = vst [vmem:[%s3688 + $0x29] sm:$0x1] 0.0
    %3723 = vst [vmem:[%s3688 + $0x41] sm:$0x1] 0.0
    %3724 = vst [vmem:[%s3688 + $0x59] sm:$0x1] 0.0
    %3725 = vst [vmem:[%s3688 + $0x71] sm:$0x1] 0.0
    %3726 = vst [vmem:[%s3688 + $0x89] sm:$0x1] 0.0
    %3727 = vst [vmem:[%s3688 + $0xa1] sm:$0x1] 0.0
    %3728 = vst [vmem:[%s3688 + $0xb9] sm:$0x1] 0.0
    %3729 = vst [vmem:[%s3688 + $0xd1] sm:$0x1] 0.0
    %3730 = vst [vmem:[%s3688 + $0xe9] sm:$0x1] 0.0
    %3731 = vst [vmem:[%s3688 + $0x101] sm:$0x1] 0.0
    %3732 = vst [vmem:[%s3688 + $0x119] sm:$0x1] 0.0
    %3733 = vst [vmem:[%s3688 + $0x131] sm:$0x1] 0.0
    %3734 = vst [vmem:[%s3688 + $0x149] sm:$0x1] 0.0
    %3735 = vst [vmem:[%s3688 + $0x161] sm:$0x1] 0.0
    %3736 = vst [vmem:[%s3688 + $0x179] sm:$0x1] 0.0
    %3737 = vst [vmem:[%s3688 + $0x1c1] sm:$0x1] 0.0
    %3738 = vst [vmem:[%s3688 + $0x1d9] sm:$0x1] 0.0
    %3739 = vst [vmem:[%s3688 + $0x1f1] sm:$0x1] 0.0
    %3740 = vst [vmem:[%s3688 + $0x209] sm:$0x1] 0.0
    %3741 = vst [vmem:[%s3688 + $0x221] sm:$0x1] 0.0
    %3742 = vst [vmem:[%s3688 + $0x239] sm:$0x1] 0.0
    %3743 = vst [vmem:[%s3688 + $0x251] sm:$0x1] 0.0
    %3744 = vst [vmem:[%s3688 + $0x269] sm:$0x1] 0.0
    %3745 = vst [vmem:[%s3688 + $0x281] sm:$0x1] 0.0
    %3746 = vst [vmem:[%s3688 + $0x299] sm:$0x1] 0.0
    %3747 = vst [vmem:[%s3688 + $0x2b1] sm:$0x1] 0.0
    %3748 = vst [vmem:[%s3688 + $0x2c9] sm:$0x1] 0.0
    %3749 = vst [vmem:[%s3688 + $0x2e1] sm:$0x1] 0.0
    %3750 = vst [vmem:[%s3688 + $0x2f9] sm:$0x1] 0.0
    %3751 = vst [vmem:[%s3688 + $0x311] sm:$0x1] 0.0
    %3752 = vst [vmem:[%s3688 + $0x329] sm:$0x1] 0.0
    %3753 = vst [vmem:[%s3688 + $0x1] sm:$0xff] %v3611
    %3754 = vst [vmem:[%s3688 + $0x9] sm:$0xff] %v3612
    %3755 = vst [vmem:[%s3688 + $0x19] sm:$0xff] %v3613
    %3756 = vst [vmem:[%s3688 + $0x21] sm:$0xff] %v3614
    %3757 = vst [vmem:[%s3688 + $0x31] sm:$0xff] %v3615
    %3758 = vst [vmem:[%s3688 + $0x39] sm:$0xff] %v3616
    %3759 = vst [vmem:[%s3688 + $0x49] sm:$0xff] %v3617
    %3760 = vst [vmem:[%s3688 + $0x51] sm:$0xff] %v3618
    %3761 = vst [vmem:[%s3688 + $0x61] sm:$0xff] %v3619
    %3762 = vst [vmem:[%s3688 + $0x69] sm:$0xff] %v3620
    %3763 = vst [vmem:[%s3688 + $0x79] sm:$0xff] %v3621
    %3764 = vst [vmem:[%s3688 + $0x81] sm:$0xff] %v3622
    %3765 = vst [vmem:[%s3688 + $0x91] sm:$0xff] %v3623
    %3766 = vst [vmem:[%s3688 + $0x99] sm:$0xff] %v3624
    %3767 = vst [vmem:[%s3688 + $0xa9] sm:$0xff] %v3625
    %3768 = vst [vmem:[%s3688 + $0xb1] sm:$0xff] %v3626
    %3769 = vst [vmem:[%s3688 + $0xc1] sm:$0xff] %v3627
    %3770 = vst [vmem:[%s3688 + $0xc9] sm:$0xff] %v3628
    %3771 = vst [vmem:[%s3688 + $0xd9] sm:$0xff] %v3629
    %3772 = vst [vmem:[%s3688 + $0xe1] sm:$0xff] %v3630
    %3773 = vst [vmem:[%s3688 + $0xf1] sm:$0xff] %v3631
    %3774 = vst [vmem:[%s3688 + $0xf9] sm:$0xff] %v3632
    %3775 = vst [vmem:[%s3688 + $0x109] sm:$0xff] %v3633
    %3776 = vst [vmem:[%s3688 + $0x111] sm:$0xff] %v3634
    %3777 = vst [vmem:[%s3688 + $0x121] sm:$0xff] %v3635
    %3778 = vst [vmem:[%s3688 + $0x129] sm:$0xff] %v3636
    %3779 = vst [vmem:[%s3688 + $0x139] sm:$0xff] %v3637
    %3780 = vst [vmem:[%s3688 + $0x141] sm:$0xff] %v3638
    %3781 = vst [vmem:[%s3688 + $0x151] sm:$0xff] %v3639
    %3782 = vst [vmem:[%s3688 + $0x159] sm:$0xff] %v3640
    %3783 = vst [vmem:[%s3688 + $0x169] sm:$0xff] %v3641
    %3784 = vst [vmem:[%s3688 + $0x171] sm:$0xff] %v3642
    %3785 = vst [vmem:[%s3688 + $0x1b1] sm:$0xff] %v3643
    %3786 = vst [vmem:[%s3688 + $0x1b9] sm:$0xff] %v3644
    %3787 = vst [vmem:[%s3688 + $0x1c9] sm:$0xff] %v3645
    %3788 = vst [vmem:[%s3688 + $0x1d1] sm:$0xff] %v3646
    %3789 = vst [vmem:[%s3688 + $0x1e1] sm:$0xff] %v3647
    %3790 = vst [vmem:[%s3688 + $0x1e9] sm:$0xff] %v3648
    %3791 = vst [vmem:[%s3688 + $0x1f9] sm:$0xff] %v3649
    %3792 = vst [vmem:[%s3688 + $0x201] sm:$0xff] %v3650
    %3793 = vst [vmem:[%s3688 + $0x211] sm:$0xff] %v3651
    %3794 = vst [vmem:[%s3688 + $0x219] sm:$0xff] %v3652
    %3795 = vst [vmem:[%s3688 + $0x229] sm:$0xff] %v3653
    %3796 = vst [vmem:[%s3688 + $0x231] sm:$0xff] %v3654
    %3797 = vst [vmem:[%s3688 + $0x241] sm:$0xff] %v3655
    %3798 = vst [vmem:[%s3688 + $0x249] sm:$0xff] %v3656
    %3799 = vst [vmem:[%s3688 + $0x259] sm:$0xff] %v3657
    %3800 = vst [vmem:[%s3688 + $0x261] sm:$0xff] %v3658
    %3801 = vst [vmem:[%s3688 + $0x271] sm:$0xff] %v3659
    %3802 = vst [vmem:[%s3688 + $0x279] sm:$0xff] %v3660
    %3803 = vst [vmem:[%s3688 + $0x289] sm:$0xff] %v3661
    %3804 = vst [vmem:[%s3688 + $0x291] sm:$0xff] %v3662
    %3805 = vst [vmem:[%s3688 + $0x2a1] sm:$0xff] %v3663
    %3806 = vst [vmem:[%s3688 + $0x2a9] sm:$0xff] %v3664
    %3807 = vst [vmem:[%s3688 + $0x2b9] sm:$0xff] %v3665
    %3808 = vst [vmem:[%s3688 + $0x2c1] sm:$0xff] %v3666
    %3809 = vst [vmem:[%s3688 + $0x2d1] sm:$0xff] %v3667
    %3810 = vst [vmem:[%s3688 + $0x2d9] sm:$0xff] %v3668
    %3811 = vst [vmem:[%s3688 + $0x2e9] sm:$0xff] %v3669
    %3812 = vst [vmem:[%s3688 + $0x2f1] sm:$0xff] %v3670
    %3813 = vst [vmem:[%s3688 + $0x301] sm:$0xff] %v3671
    %3814 = vst [vmem:[%s3688 + $0x309] sm:$0xff] %v3672
    %3815 = vst [vmem:[%s3688 + $0x319] sm:$0xff] %v3673
    %3816 = vst [vmem:[%s3688 + $0x321] sm:$0xff] %v3674
    %v3817 = vld [vmem:[#allocation2] sm:$0xff]
    %v3818 = vld [vmem:[#allocation2 + $0x8] sm:$0xff]
    %v3819 = vld [vmem:[#allocation2 + $0x18] sm:$0xff]
    %v3820 = vld [vmem:[#allocation2 + $0x20] sm:$0xff]
    %v3821 = vld [vmem:[#allocation2 + $0x30] sm:$0xff]
    %v3822 = vld [vmem:[#allocation2 + $0x38] sm:$0xff]
    %v3823 = vld [vmem:[#allocation2 + $0x48] sm:$0xff]
    %v3824 = vld [vmem:[#allocation2 + $0x50] sm:$0xff]
    %v3825 = vld [vmem:[#allocation2 + $0x60] sm:$0xff]
    %v3826 = vld [vmem:[#allocation2 + $0x68] sm:$0xff]
    %v3827 = vld [vmem:[#allocation2 + $0x78] sm:$0xff]
    %v3828 = vld [vmem:[#allocation2 + $0x80] sm:$0xff]
    %v3829 = vld [vmem:[#allocation2 + $0x90] sm:$0xff]
    %v3830 = vld [vmem:[#allocation2 + $0x98] sm:$0xff]
    %v3831 = vld [vmem:[#allocation2 + $0xa8] sm:$0xff]
    %v3832 = vld [vmem:[#allocation2 + $0xb0] sm:$0xff]
    %v3833 = vld [vmem:[#allocation2 + $0xc0] sm:$0xff]
    %v3834 = vld [vmem:[#allocation2 + $0xc8] sm:$0xff]
    %v3835 = vld [vmem:[#allocation2 + $0xd8] sm:$0xff]
    %v3836 = vld [vmem:[#allocation2 + $0xe0] sm:$0xff]
    %v3837 = vld [vmem:[#allocation2 + $0xf0] sm:$0xff]
    %v3838 = vld [vmem:[#allocation2 + $0xf8] sm:$0xff]
    %v3839 = vld [vmem:[#allocation2 + $0x108] sm:$0xff]
    %v3840 = vld [vmem:[#allocation2 + $0x110] sm:$0xff]
    %v3841 = vld [vmem:[#allocation2 + $0x120] sm:$0xff]
    %v3842 = vld [vmem:[#allocation2 + $0x128] sm:$0xff]
    %v3843 = vld [vmem:[#allocation2 + $0x138] sm:$0xff]
    %v3844 = vld [vmem:[#allocation2 + $0x140] sm:$0xff]
    %v3845 = vld [vmem:[#allocation2 + $0x150] sm:$0xff]
    %v3846 = vld [vmem:[#allocation2 + $0x158] sm:$0xff]
    %v3847 = vld [vmem:[#allocation2 + $0x168] sm:$0xff]
    %v3848 = vld [vmem:[#allocation2 + $0x170] sm:$0xff]
    %v3849 = vld [vmem:[#allocation2 + $0x1b0] sm:$0xff]
    %v3850 = vld [vmem:[#allocation2 + $0x1b8] sm:$0xff]
    %v3851 = vld [vmem:[#allocation2 + $0x1c8] sm:$0xff]
    %v3852 = vld [vmem:[#allocation2 + $0x1d0] sm:$0xff]
    %v3853 = vld [vmem:[#allocation2 + $0x1e0] sm:$0xff]
    %v3854 = vld [vmem:[#allocation2 + $0x1e8] sm:$0xff]
    %v3855 = vld [vmem:[#allocation2 + $0x1f8] sm:$0xff]
    %v3856 = vld [vmem:[#allocation2 + $0x200] sm:$0xff]
    %v3857 = vld [vmem:[#allocation2 + $0x210] sm:$0xff]
    %v3858 = vld [vmem:[#allocation2 + $0x218] sm:$0xff]
    %v3859 = vld [vmem:[#allocation2 + $0x228] sm:$0xff]
    %v3860 = vld [vmem:[#allocation2 + $0x230] sm:$0xff]
    %v3861 = vld [vmem:[#allocation2 + $0x240] sm:$0xff]
    %v3862 = vld [vmem:[#allocation2 + $0x248] sm:$0xff]
    %v3863 = vld [vmem:[#allocation2 + $0x258] sm:$0xff]
    %v3864 = vld [vmem:[#allocation2 + $0x260] sm:$0xff]
    %v3865 = vld [vmem:[#allocation2 + $0x270] sm:$0xff]
    %v3866 = vld [vmem:[#allocation2 + $0x278] sm:$0xff]
    %v3867 = vld [vmem:[#allocation2 + $0x288] sm:$0xff]
    %v3868 = vld [vmem:[#allocation2 + $0x290] sm:$0xff]
    %v3869 = vld [vmem:[#allocation2 + $0x2a0] sm:$0xff]
    %v3870 = vld [vmem:[#allocation2 + $0x2a8] sm:$0xff]
    %v3871 = vld [vmem:[#allocation2 + $0x2b8] sm:$0xff]
    %v3872 = vld [vmem:[#allocation2 + $0x2c0] sm:$0xff]
    %v3873 = vld [vmem:[#allocation2 + $0x2d0] sm:$0xff]
    %v3874 = vld [vmem:[#allocation2 + $0x2d8] sm:$0xff]
    %v3875 = vld [vmem:[#allocation2 + $0x2e8] sm:$0xff]
    %v3876 = vld [vmem:[#allocation2 + $0x2f0] sm:$0xff]
    %v3877 = vld [vmem:[#allocation2 + $0x300] sm:$0xff]
    %v3878 = vld [vmem:[#allocation2 + $0x308] sm:$0xff]
    %v3879 = vld [vmem:[#allocation2 + $0x318] sm:$0xff]
    %v3880 = vld [vmem:[#allocation2 + $0x320] sm:$0xff]
    %v3881 = vld [vmem:[#allocation6] sm:$0xff]
    %v3882 = vld [vmem:[#allocation6 + $0x8] sm:$0xff]
    %v3883 = vld [vmem:[#allocation6 + $0x10] sm:$0xff]
    %v3884 = vld [vmem:[#allocation6 + $0x18] sm:$0xff]
    %v3885 = vld [vmem:[#allocation6 + $0x20] sm:$0xff]
    %v3886 = vld [vmem:[#allocation6 + $0x28] sm:$0xff]
    %v3887 = vld [vmem:[#allocation6 + $0x30] sm:$0xff]
    %v3888 = vld [vmem:[#allocation6 + $0x38] sm:$0xff]
    %v3889 = vld [vmem:[#allocation6 + $0x40] sm:$0xff]
    %v3890 = vld [vmem:[#allocation6 + $0x48] sm:$0xff]
    %v3891 = vld [vmem:[#allocation6 + $0x50] sm:$0xff]
    %v3892 = vld [vmem:[#allocation6 + $0x58] sm:$0xff]
    %v3893 = vld [vmem:[#allocation6 + $0x60] sm:$0xff]
    %v3894 = vld [vmem:[#allocation6 + $0x68] sm:$0xff]
    %v3895 = vld [vmem:[#allocation6 + $0x70] sm:$0xff]
    %v3896 = vld [vmem:[#allocation6 + $0x78] sm:$0xff]
    %v3897 = vld [vmem:[#allocation2 + $0x1] sm:$0xff]
    %v3898 = vld [vmem:[#allocation2 + $0x9] sm:$0xff]
    %v3899 = vld [vmem:[#allocation2 + $0x19] sm:$0xff]
    %v3900 = vld [vmem:[#allocation2 + $0x21] sm:$0xff]
    %v3901 = vld [vmem:[#allocation2 + $0x31] sm:$0xff]
    %v3902 = vld [vmem:[#allocation2 + $0x39] sm:$0xff]
    %v3903 = vld [vmem:[#allocation2 + $0x49] sm:$0xff]
    %v3904 = vld [vmem:[#allocation2 + $0x51] sm:$0xff]
    %v3905 = vld [vmem:[#allocation2 + $0x61] sm:$0xff]
    %v3906 = vld [vmem:[#allocation2 + $0x69] sm:$0xff]
    %v3907 = vld [vmem:[#allocation2 + $0x79] sm:$0xff]
    %v3908 = vld [vmem:[#allocation2 + $0x81] sm:$0xff]
    %v3909 = vld [vmem:[#allocation2 + $0x91] sm:$0xff]
    %v3910 = vld [vmem:[#allocation2 + $0x99] sm:$0xff]
    %v3911 = vld [vmem:[#allocation2 + $0xa9] sm:$0xff]
    %v3912 = vld [vmem:[#allocation2 + $0xb1] sm:$0xff]
    %v3913 = vld [vmem:[#allocation2 + $0xc1] sm:$0xff]
    %v3914 = vld [vmem:[#allocation2 + $0xc9] sm:$0xff]
    %v3915 = vld [vmem:[#allocation2 + $0xd9] sm:$0xff]
    %v3916 = vld [vmem:[#allocation2 + $0xe1] sm:$0xff]
    %v3917 = vld [vmem:[#allocation2 + $0xf1] sm:$0xff]
    %v3918 = vld [vmem:[#allocation2 + $0xf9] sm:$0xff]
    %v3919 = vld [vmem:[#allocation2 + $0x109] sm:$0xff]
    %v3920 = vld [vmem:[#allocation2 + $0x111] sm:$0xff]
    %v3921 = vld [vmem:[#allocation2 + $0x121] sm:$0xff]
    %v3922 = vld [vmem:[#allocation2 + $0x129] sm:$0xff]
    %v3923 = vld [vmem:[#allocation2 + $0x139] sm:$0xff]
    %v3924 = vld [vmem:[#allocation2 + $0x141] sm:$0xff]
    %v3925 = vld [vmem:[#allocation2 + $0x151] sm:$0xff]
    %v3926 = vld [vmem:[#allocation2 + $0x159] sm:$0xff]
    %v3927 = vld [vmem:[#allocation2 + $0x169] sm:$0xff]
    %v3928 = vld [vmem:[#allocation2 + $0x171] sm:$0xff]
    %v3929 = vld [vmem:[#allocation2 + $0x1b1] sm:$0xff]
    %v3930 = vld [vmem:[#allocation2 + $0x1b9] sm:$0xff]
    %v3931 = vld [vmem:[#allocation2 + $0x1c9] sm:$0xff]
    %v3932 = vld [vmem:[#allocation2 + $0x1d1] sm:$0xff]
    %v3933 = vld [vmem:[#allocation2 + $0x1e1] sm:$0xff]
    %v3934 = vld [vmem:[#allocation2 + $0x1e9] sm:$0xff]
    %v3935 = vld [vmem:[#allocation2 + $0x1f9] sm:$0xff]
    %v3936 = vld [vmem:[#allocation2 + $0x201] sm:$0xff]
    %v3937 = vld [vmem:[#allocation2 + $0x211] sm:$0xff]
    %v3938 = vld [vmem:[#allocation2 + $0x219] sm:$0xff]
    %v3939 = vld [vmem:[#allocation2 + $0x229] sm:$0xff]
    %v3940 = vld [vmem:[#allocation2 + $0x231] sm:$0xff]
    %v3941 = vld [vmem:[#allocation2 + $0x241] sm:$0xff]
    %v3942 = vld [vmem:[#allocation2 + $0x249] sm:$0xff]
    %v3943 = vld [vmem:[#allocation2 + $0x259] sm:$0xff]
    %v3944 = vld [vmem:[#allocation2 + $0x261] sm:$0xff]
    %v3945 = vld [vmem:[#allocation2 + $0x271] sm:$0xff]
    %v3946 = vld [vmem:[#allocation2 + $0x279] sm:$0xff]
    %v3947 = vld [vmem:[#allocation2 + $0x289] sm:$0xff]
    %v3948 = vld [vmem:[#allocation2 + $0x291] sm:$0xff]
    %v3949 = vld [vmem:[#allocation2 + $0x2a1] sm:$0xff]
    %v3950 = vld [vmem:[#allocation2 + $0x2a9] sm:$0xff]
    %v3951 = vld [vmem:[#allocation2 + $0x2b9] sm:$0xff]
    %v3952 = vld [vmem:[#allocation2 + $0x2c1] sm:$0xff]
    %v3953 = vld [vmem:[#allocation2 + $0x2d1] sm:$0xff]
    %v3954 = vld [vmem:[#allocation2 + $0x2d9] sm:$0xff]
    %v3955 = vld [vmem:[#allocation2 + $0x2e9] sm:$0xff]
    %v3956 = vld [vmem:[#allocation2 + $0x2f1] sm:$0xff]
    %v3957 = vld [vmem:[#allocation2 + $0x301] sm:$0xff]
    %v3958 = vld [vmem:[#allocation2 + $0x309] sm:$0xff]
    %v3959 = vld [vmem:[#allocation2 + $0x319] sm:$0xff]
    %v3960 = vld [vmem:[#allocation2 + $0x321] sm:$0xff]
    %s3961 = scalar_lea.vmem [#allocation6], 128
    %v3962 = vld [vmem:[%s3961] sm:$0xff]
    %v3963 = vld [vmem:[%s3961 + $0x8] sm:$0xff]
    %v3964 = vld [vmem:[%s3961 + $0x10] sm:$0xff]
    %v3965 = vld [vmem:[%s3961 + $0x18] sm:$0xff]
    %v3966 = vld [vmem:[%s3961 + $0x20] sm:$0xff]
    %v3967 = vld [vmem:[%s3961 + $0x28] sm:$0xff]
    %v3968 = vld [vmem:[%s3961 + $0x30] sm:$0xff]
    %v3969 = vld [vmem:[%s3961 + $0x38] sm:$0xff]
    %v3970 = vld [vmem:[%s3961 + $0x40] sm:$0xff]
    %v3971 = vld [vmem:[%s3961 + $0x48] sm:$0xff]
    %v3972 = vld [vmem:[%s3961 + $0x50] sm:$0xff]
    %v3973 = vld [vmem:[%s3961 + $0x58] sm:$0xff]
    %v3974 = vld [vmem:[%s3961 + $0x60] sm:$0xff]
    %v3975 = vld [vmem:[%s3961 + $0x68] sm:$0xff]
    %v3976 = vld [vmem:[%s3961 + $0x70] sm:$0xff]
    %v3977 = vld [vmem:[%s3961 + $0x78] sm:$0xff]
    %3978 = vmatpush.msra.mxu0 %v3977
    %3979 = vmatpush.msra.mxu0 %v3976
    %3980 = vmatpush.msra.mxu0 %v3975
    %3981 = vmatpush.msra.mxu0 %v3974
    %3982 = vmatpush.msra.mxu0 %v3973
    %3983 = vmatpush.msra.mxu0 %v3972
    %3984 = vmatpush.msra.mxu0 %v3971
    %3985 = vmatpush.msra.mxu0 %v3970
    %3986 = vmatpush.msra.mxu0 %v3969
    %3987 = vmatpush.msra.mxu0 %v3968
    %3988 = vmatpush.msra.mxu0 %v3967
    %3989 = vmatpush.msra.mxu0 %v3966
    %3990 = vmatpush.msra.mxu0 %v3965
    %3991 = vmatpush.msra.mxu0 %v3964
    %3992 = vmatpush.msra.mxu0 %v3963
    %3993 = vmatpush.msra.mxu0 %v3962
    %3994 = vmatmul.f32.gmra.mxu0 %v3897
    %v3995 = vpop.f32.mrf.mxu0
    %v3996 = vadd.f32 0.0, %v3995
    %3997 = vmatmul.f32.gmra.mxu0 %v3898
    %v3998 = vpop.f32.mrf.mxu0
    %v3999 = vadd.f32 0.0, %v3998
    %4000 = vmatmul.f32.gmra.mxu0 %v3899
    %v4001 = vpop.f32.mrf.mxu0
    %v4002 = vadd.f32 0.0, %v4001
    %4003 = vmatmul.f32.gmra.mxu0 %v3900
    %v4004 = vpop.f32.mrf.mxu0
    %v4005 = vadd.f32 0.0, %v4004
    %4006 = vmatmul.f32.gmra.mxu0 %v3901
    %v4007 = vpop.f32.mrf.mxu0
    %v4008 = vadd.f32 0.0, %v4007
    %4009 = vmatmul.f32.gmra.mxu0 %v3902
    %v4010 = vpop.f32.mrf.mxu0
    %v4011 = vadd.f32 0.0, %v4010
    %4012 = vmatmul.f32.gmra.mxu0 %v3903
    %v4013 = vpop.f32.mrf.mxu0
    %v4014 = vadd.f32 0.0, %v4013
    %4015 = vmatmul.f32.gmra.mxu0 %v3904
    %v4016 = vpop.f32.mrf.mxu0
    %v4017 = vadd.f32 0.0, %v4016
    %4018 = vmatmul.f32.gmra.mxu0 %v3905
    %v4019 = vpop.f32.mrf.mxu0
    %v4020 = vadd.f32 0.0, %v4019
    %4021 = vmatmul.f32.gmra.mxu0 %v3906
    %v4022 = vpop.f32.mrf.mxu0
    %v4023 = vadd.f32 0.0, %v4022
    %4024 = vmatmul.f32.gmra.mxu0 %v3907
    %v4025 = vpop.f32.mrf.mxu0
    %v4026 = vadd.f32 0.0, %v4025
    %4027 = vmatmul.f32.gmra.mxu0 %v3908
    %v4028 = vpop.f32.mrf.mxu0
    %v4029 = vadd.f32 0.0, %v4028
    %4030 = vmatmul.f32.gmra.mxu0 %v3909
    %v4031 = vpop.f32.mrf.mxu0
    %v4032 = vadd.f32 0.0, %v4031
    %4033 = vmatmul.f32.gmra.mxu0 %v3910
    %v4034 = vpop.f32.mrf.mxu0
    %v4035 = vadd.f32 0.0, %v4034
    %4036 = vmatmul.f32.gmra.mxu0 %v3911
    %v4037 = vpop.f32.mrf.mxu0
    %v4038 = vadd.f32 0.0, %v4037
    %4039 = vmatmul.f32.gmra.mxu0 %v3912
    %v4040 = vpop.f32.mrf.mxu0
    %v4041 = vadd.f32 0.0, %v4040
    %4042 = vmatmul.f32.gmra.mxu0 %v3913
    %v4043 = vpop.f32.mrf.mxu0
    %v4044 = vadd.f32 0.0, %v4043
    %4045 = vmatmul.f32.gmra.mxu0 %v3914
    %v4046 = vpop.f32.mrf.mxu0
    %v4047 = vadd.f32 0.0, %v4046
    %4048 = vmatmul.f32.gmra.mxu0 %v3915
    %v4049 = vpop.f32.mrf.mxu0
    %v4050 = vadd.f32 0.0, %v4049
    %4051 = vmatmul.f32.gmra.mxu0 %v3916
    %v4052 = vpop.f32.mrf.mxu0
    %v4053 = vadd.f32 0.0, %v4052
    %4054 = vmatmul.f32.gmra.mxu0 %v3917
    %v4055 = vpop.f32.mrf.mxu0
    %v4056 = vadd.f32 0.0, %v4055
    %4057 = vmatmul.f32.gmra.mxu0 %v3918
    %v4058 = vpop.f32.mrf.mxu0
    %v4059 = vadd.f32 0.0, %v4058
    %4060 = vmatmul.f32.gmra.mxu0 %v3919
    %v4061 = vpop.f32.mrf.mxu0
    %v4062 = vadd.f32 0.0, %v4061
    %4063 = vmatmul.f32.gmra.mxu0 %v3920
    %v4064 = vpop.f32.mrf.mxu0
    %v4065 = vadd.f32 0.0, %v4064
    %4066 = vmatmul.f32.gmra.mxu0 %v3921
    %v4067 = vpop.f32.mrf.mxu0
    %v4068 = vadd.f32 0.0, %v4067
    %4069 = vmatmul.f32.gmra.mxu0 %v3922
    %v4070 = vpop.f32.mrf.mxu0
    %v4071 = vadd.f32 0.0, %v4070
    %4072 = vmatmul.f32.gmra.mxu0 %v3923
    %v4073 = vpop.f32.mrf.mxu0
    %v4074 = vadd.f32 0.0, %v4073
    %4075 = vmatmul.f32.gmra.mxu0 %v3924
    %v4076 = vpop.f32.mrf.mxu0
    %v4077 = vadd.f32 0.0, %v4076
    %4078 = vmatmul.f32.gmra.mxu0 %v3925
    %v4079 = vpop.f32.mrf.mxu0
    %v4080 = vadd.f32 0.0, %v4079
    %4081 = vmatmul.f32.gmra.mxu0 %v3926
    %v4082 = vpop.f32.mrf.mxu0
    %v4083 = vadd.f32 0.0, %v4082
    %4084 = vmatmul.f32.gmra.mxu0 %v3927
    %v4085 = vpop.f32.mrf.mxu0
    %v4086 = vadd.f32 0.0, %v4085
    %4087 = vmatmul.f32.gmra.mxu0 %v3928
    %v4088 = vpop.f32.mrf.mxu0
    %v4089 = vadd.f32 0.0, %v4088
    %4090 = vmatmul.f32.gmra.mxu0 %v3929
    %v4091 = vpop.f32.mrf.mxu0
    %v4092 = vadd.f32 0.0, %v4091
    %4093 = vmatmul.f32.gmra.mxu0 %v3930
    %v4094 = vpop.f32.mrf.mxu0
    %v4095 = vadd.f32 0.0, %v4094
    %4096 = vmatmul.f32.gmra.mxu0 %v3931
    %v4097 = vpop.f32.mrf.mxu0
    %v4098 = vadd.f32 0.0, %v4097
    %4099 = vmatmul.f32.gmra.mxu0 %v3932
    %v4100 = vpop.f32.mrf.mxu0
    %v4101 = vadd.f32 0.0, %v4100
    %4102 = vmatmul.f32.gmra.mxu0 %v3933
    %v4103 = vpop.f32.mrf.mxu0
    %v4104 = vadd.f32 0.0, %v4103
    %4105 = vmatmul.f32.gmra.mxu0 %v3934
    %v4106 = vpop.f32.mrf.mxu0
    %v4107 = vadd.f32 0.0, %v4106
    %4108 = vmatmul.f32.gmra.mxu0 %v3935
    %v4109 = vpop.f32.mrf.mxu0
    %v4110 = vadd.f32 0.0, %v4109
    %4111 = vmatmul.f32.gmra.mxu0 %v3936
    %v4112 = vpop.f32.mrf.mxu0
    %v4113 = vadd.f32 0.0, %v4112
    %4114 = vmatmul.f32.gmra.mxu0 %v3937
    %v4115 = vpop.f32.mrf.mxu0
    %v4116 = vadd.f32 0.0, %v4115
    %4117 = vmatmul.f32.gmra.mxu0 %v3938
    %v4118 = vpop.f32.mrf.mxu0
    %v4119 = vadd.f32 0.0, %v4118
    %4120 = vmatmul.f32.gmra.mxu0 %v3939
    %v4121 = vpop.f32.mrf.mxu0
    %v4122 = vadd.f32 0.0, %v4121
    %4123 = vmatmul.f32.gmra.mxu0 %v3940
    %v4124 = vpop.f32.mrf.mxu0
    %v4125 = vadd.f32 0.0, %v4124
    %4126 = vmatmul.f32.gmra.mxu0 %v3941
    %v4127 = vpop.f32.mrf.mxu0
    %v4128 = vadd.f32 0.0, %v4127
    %4129 = vmatmul.f32.gmra.mxu0 %v3942
    %v4130 = vpop.f32.mrf.mxu0
    %v4131 = vadd.f32 0.0, %v4130
    %4132 = vmatmul.f32.gmra.mxu0 %v3943
    %v4133 = vpop.f32.mrf.mxu0
    %v4134 = vadd.f32 0.0, %v4133
    %4135 = vmatmul.f32.gmra.mxu0 %v3944
    %v4136 = vpop.f32.mrf.mxu0
    %v4137 = vadd.f32 0.0, %v4136
    %4138 = vmatmul.f32.gmra.mxu0 %v3945
    %v4139 = vpop.f32.mrf.mxu0
    %v4140 = vadd.f32 0.0, %v4139
    %4141 = vmatmul.f32.gmra.mxu0 %v3946
    %v4142 = vpop.f32.mrf.mxu0
    %v4143 = vadd.f32 0.0, %v4142
    %4144 = vmatmul.f32.gmra.mxu0 %v3947
    %v4145 = vpop.f32.mrf.mxu0
    %v4146 = vadd.f32 0.0, %v4145
    %4147 = vmatmul.f32.gmra.mxu0 %v3948
    %v4148 = vpop.f32.mrf.mxu0
    %v4149 = vadd.f32 0.0, %v4148
    %4150 = vmatmul.f32.gmra.mxu0 %v3949
    %v4151 = vpop.f32.mrf.mxu0
    %v4152 = vadd.f32 0.0, %v4151
    %4153 = vmatmul.f32.gmra.mxu0 %v3950
    %v4154 = vpop.f32.mrf.mxu0
    %v4155 = vadd.f32 0.0, %v4154
    %4156 = vmatmul.f32.gmra.mxu0 %v3951
    %v4157 = vpop.f32.mrf.mxu0
    %v4158 = vadd.f32 0.0, %v4157
    %4159 = vmatmul.f32.gmra.mxu0 %v3952
    %v4160 = vpop.f32.mrf.mxu0
    %v4161 = vadd.f32 0.0, %v4160
    %4162 = vmatmul.f32.gmra.mxu0 %v3953
    %v4163 = vpop.f32.mrf.mxu0
    %v4164 = vadd.f32 0.0, %v4163
    %4165 = vmatmul.f32.gmra.mxu0 %v3954
    %v4166 = vpop.f32.mrf.mxu0
    %v4167 = vadd.f32 0.0, %v4166
    %4168 = vmatmul.f32.gmra.mxu0 %v3955
    %v4169 = vpop.f32.mrf.mxu0
    %v4170 = vadd.f32 0.0, %v4169
    %4171 = vmatmul.f32.gmra.mxu0 %v3956
    %v4172 = vpop.f32.mrf.mxu0
    %v4173 = vadd.f32 0.0, %v4172
    %4174 = vmatmul.f32.gmra.mxu0 %v3957
    %v4175 = vpop.f32.mrf.mxu0
    %v4176 = vadd.f32 0.0, %v4175
    %4177 = vmatmul.f32.gmra.mxu0 %v3958
    %v4178 = vpop.f32.mrf.mxu0
    %v4179 = vadd.f32 0.0, %v4178
    %4180 = vmatmul.f32.gmra.mxu0 %v3959
    %v4181 = vpop.f32.mrf.mxu0
    %v4182 = vadd.f32 0.0, %v4181
    %4183 = vmatmul.f32.gmra.mxu0 %v3960
    %v4184 = vpop.f32.mrf.mxu0
    %v4185 = vadd.f32 0.0, %v4184
    %4186 = vdwg.mxu0
    %4187 = vmatpush.msra.mxu0 %v3896
    %4188 = vmatpush.msra.mxu0 %v3895
    %4189 = vmatpush.msra.mxu0 %v3894
    %4190 = vmatpush.msra.mxu0 %v3893
    %4191 = vmatpush.msra.mxu0 %v3892
    %4192 = vmatpush.msra.mxu0 %v3891
    %4193 = vmatpush.msra.mxu0 %v3890
    %4194 = vmatpush.msra.mxu0 %v3889
    %4195 = vmatpush.msra.mxu0 %v3888
    %4196 = vmatpush.msra.mxu0 %v3887
    %4197 = vmatpush.msra.mxu0 %v3886
    %4198 = vmatpush.msra.mxu0 %v3885
    %4199 = vmatpush.msra.mxu0 %v3884
    %4200 = vmatpush.msra.mxu0 %v3883
    %4201 = vmatpush.msra.mxu0 %v3882
    %4202 = vmatpush.msra.mxu0 %v3881
    %4203 = vmatmul.f32.gmra.mxu0 %v3817
    %v4204 = vpop.f32.mrf.mxu0
    %v4205 = vadd.f32 %v3996, %v4204
    %4206 = vmatmul.f32.gmra.mxu0 %v3818
    %v4207 = vpop.f32.mrf.mxu0
    %v4208 = vadd.f32 %v3999, %v4207
    %4209 = vmatmul.f32.gmra.mxu0 %v3819
    %v4210 = vpop.f32.mrf.mxu0
    %v4211 = vadd.f32 %v4002, %v4210
    %4212 = vmatmul.f32.gmra.mxu0 %v3820
    %v4213 = vpop.f32.mrf.mxu0
    %v4214 = vadd.f32 %v4005, %v4213
    %4215 = vmatmul.f32.gmra.mxu0 %v3821
    %v4216 = vpop.f32.mrf.mxu0
    %v4217 = vadd.f32 %v4008, %v4216
    %4218 = vmatmul.f32.gmra.mxu0 %v3822
    %v4219 = vpop.f32.mrf.mxu0
    %v4220 = vadd.f32 %v4011, %v4219
    %4221 = vmatmul.f32.gmra.mxu0 %v3823
    %v4222 = vpop.f32.mrf.mxu0
    %v4223 = vadd.f32 %v4014, %v4222
    %4224 = vmatmul.f32.gmra.mxu0 %v3824
    %v4225 = vpop.f32.mrf.mxu0
    %v4226 = vadd.f32 %v4017, %v4225
    %4227 = vmatmul.f32.gmra.mxu0 %v3825
    %v4228 = vpop.f32.mrf.mxu0
    %v4229 = vadd.f32 %v4020, %v4228
    %4230 = vmatmul.f32.gmra.mxu0 %v3826
    %v4231 = vpop.f32.mrf.mxu0
    %v4232 = vadd.f32 %v4023, %v4231
    %4233 = vmatmul.f32.gmra.mxu0 %v3827
    %v4234 = vpop.f32.mrf.mxu0
    %v4235 = vadd.f32 %v4026, %v4234
    %4236 = vmatmul.f32.gmra.mxu0 %v3828
    %v4237 = vpop.f32.mrf.mxu0
    %v4238 = vadd.f32 %v4029, %v4237
    %4239 = vmatmul.f32.gmra.mxu0 %v3829
    %v4240 = vpop.f32.mrf.mxu0
    %v4241 = vadd.f32 %v4032, %v4240
    %4242 = vmatmul.f32.gmra.mxu0 %v3830
    %v4243 = vpop.f32.mrf.mxu0
    %v4244 = vadd.f32 %v4035, %v4243
    %4245 = vmatmul.f32.gmra.mxu0 %v3831
    %v4246 = vpop.f32.mrf.mxu0
    %v4247 = vadd.f32 %v4038, %v4246
    %4248 = vmatmul.f32.gmra.mxu0 %v3832
    %v4249 = vpop.f32.mrf.mxu0
    %v4250 = vadd.f32 %v4041, %v4249
    %4251 = vmatmul.f32.gmra.mxu0 %v3833
    %v4252 = vpop.f32.mrf.mxu0
    %v4253 = vadd.f32 %v4044, %v4252
    %4254 = vmatmul.f32.gmra.mxu0 %v3834
    %v4255 = vpop.f32.mrf.mxu0
    %v4256 = vadd.f32 %v4047, %v4255
    %4257 = vmatmul.f32.gmra.mxu0 %v3835
    %v4258 = vpop.f32.mrf.mxu0
    %v4259 = vadd.f32 %v4050, %v4258
    %4260 = vmatmul.f32.gmra.mxu0 %v3836
    %v4261 = vpop.f32.mrf.mxu0
    %v4262 = vadd.f32 %v4053, %v4261
    %4263 = vmatmul.f32.gmra.mxu0 %v3837
    %v4264 = vpop.f32.mrf.mxu0
    %v4265 = vadd.f32 %v4056, %v4264
    %4266 = vmatmul.f32.gmra.mxu0 %v3838
    %v4267 = vpop.f32.mrf.mxu0
    %v4268 = vadd.f32 %v4059, %v4267
    %4269 = vmatmul.f32.gmra.mxu0 %v3839
    %v4270 = vpop.f32.mrf.mxu0
    %v4271 = vadd.f32 %v4062, %v4270
    %4272 = vmatmul.f32.gmra.mxu0 %v3840
    %v4273 = vpop.f32.mrf.mxu0
    %v4274 = vadd.f32 %v4065, %v4273
    %4275 = vmatmul.f32.gmra.mxu0 %v3841
    %v4276 = vpop.f32.mrf.mxu0
    %v4277 = vadd.f32 %v4068, %v4276
    %4278 = vmatmul.f32.gmra.mxu0 %v3842
    %v4279 = vpop.f32.mrf.mxu0
    %v4280 = vadd.f32 %v4071, %v4279
    %4281 = vmatmul.f32.gmra.mxu0 %v3843
    %v4282 = vpop.f32.mrf.mxu0
    %v4283 = vadd.f32 %v4074, %v4282
    %4284 = vmatmul.f32.gmra.mxu0 %v3844
    %v4285 = vpop.f32.mrf.mxu0
    %v4286 = vadd.f32 %v4077, %v4285
    %4287 = vmatmul.f32.gmra.mxu0 %v3845
    %v4288 = vpop.f32.mrf.mxu0
    %v4289 = vadd.f32 %v4080, %v4288
    %4290 = vmatmul.f32.gmra.mxu0 %v3846
    %v4291 = vpop.f32.mrf.mxu0
    %v4292 = vadd.f32 %v4083, %v4291
    %4293 = vmatmul.f32.gmra.mxu0 %v3847
    %v4294 = vpop.f32.mrf.mxu0
    %v4295 = vadd.f32 %v4086, %v4294
    %4296 = vmatmul.f32.gmra.mxu0 %v3848
    %v4297 = vpop.f32.mrf.mxu0
    %v4298 = vadd.f32 %v4089, %v4297
    %4299 = vmatmul.f32.gmra.mxu0 %v3849
    %v4300 = vpop.f32.mrf.mxu0
    %v4301 = vadd.f32 %v4092, %v4300
    %4302 = vmatmul.f32.gmra.mxu0 %v3850
    %v4303 = vpop.f32.mrf.mxu0
    %v4304 = vadd.f32 %v4095, %v4303
    %4305 = vmatmul.f32.gmra.mxu0 %v3851
    %v4306 = vpop.f32.mrf.mxu0
    %v4307 = vadd.f32 %v4098, %v4306
    %4308 = vmatmul.f32.gmra.mxu0 %v3852
    %v4309 = vpop.f32.mrf.mxu0
    %v4310 = vadd.f32 %v4101, %v4309
    %4311 = vmatmul.f32.gmra.mxu0 %v3853
    %v4312 = vpop.f32.mrf.mxu0
    %v4313 = vadd.f32 %v4104, %v4312
    %4314 = vmatmul.f32.gmra.mxu0 %v3854
    %v4315 = vpop.f32.mrf.mxu0
    %v4316 = vadd.f32 %v4107, %v4315
    %4317 = vmatmul.f32.gmra.mxu0 %v3855
    %v4318 = vpop.f32.mrf.mxu0
    %v4319 = vadd.f32 %v4110, %v4318
    %4320 = vmatmul.f32.gmra.mxu0 %v3856
    %v4321 = vpop.f32.mrf.mxu0
    %v4322 = vadd.f32 %v4113, %v4321
    %4323 = vmatmul.f32.gmra.mxu0 %v3857
    %v4324 = vpop.f32.mrf.mxu0
    %v4325 = vadd.f32 %v4116, %v4324
    %4326 = vmatmul.f32.gmra.mxu0 %v3858
    %v4327 = vpop.f32.mrf.mxu0
    %v4328 = vadd.f32 %v4119, %v4327
    %4329 = vmatmul.f32.gmra.mxu0 %v3859
    %v4330 = vpop.f32.mrf.mxu0
    %v4331 = vadd.f32 %v4122, %v4330
    %4332 = vmatmul.f32.gmra.mxu0 %v3860
    %v4333 = vpop.f32.mrf.mxu0
    %v4334 = vadd.f32 %v4125, %v4333
    %4335 = vmatmul.f32.gmra.mxu0 %v3861
    %v4336 = vpop.f32.mrf.mxu0
    %v4337 = vadd.f32 %v4128, %v4336
    %4338 = vmatmul.f32.gmra.mxu0 %v3862
    %v4339 = vpop.f32.mrf.mxu0
    %v4340 = vadd.f32 %v4131, %v4339
    %4341 = vmatmul.f32.gmra.mxu0 %v3863
    %v4342 = vpop.f32.mrf.mxu0
    %v4343 = vadd.f32 %v4134, %v4342
    %4344 = vmatmul.f32.gmra.mxu0 %v3864
    %v4345 = vpop.f32.mrf.mxu0
    %v4346 = vadd.f32 %v4137, %v4345
    %4347 = vmatmul.f32.gmra.mxu0 %v3865
    %v4348 = vpop.f32.mrf.mxu0
    %v4349 = vadd.f32 %v4140, %v4348
    %4350 = vmatmul.f32.gmra.mxu0 %v3866
    %v4351 = vpop.f32.mrf.mxu0
    %v4352 = vadd.f32 %v4143, %v4351
    %4353 = vmatmul.f32.gmra.mxu0 %v3867
    %v4354 = vpop.f32.mrf.mxu0
    %v4355 = vadd.f32 %v4146, %v4354
    %4356 = vmatmul.f32.gmra.mxu0 %v3868
    %v4357 = vpop.f32.mrf.mxu0
    %v4358 = vadd.f32 %v4149, %v4357
    %4359 = vmatmul.f32.gmra.mxu0 %v3869
    %v4360 = vpop.f32.mrf.mxu0
    %v4361 = vadd.f32 %v4152, %v4360
    %4362 = vmatmul.f32.gmra.mxu0 %v3870
    %v4363 = vpop.f32.mrf.mxu0
    %v4364 = vadd.f32 %v4155, %v4363
    %4365 = vmatmul.f32.gmra.mxu0 %v3871
    %v4366 = vpop.f32.mrf.mxu0
    %v4367 = vadd.f32 %v4158, %v4366
    %4368 = vmatmul.f32.gmra.mxu0 %v3872
    %v4369 = vpop.f32.mrf.mxu0
    %v4370 = vadd.f32 %v4161, %v4369
    %4371 = vmatmul.f32.gmra.mxu0 %v3873
    %v4372 = vpop.f32.mrf.mxu0
    %v4373 = vadd.f32 %v4164, %v4372
    %4374 = vmatmul.f32.gmra.mxu0 %v3874
    %v4375 = vpop.f32.mrf.mxu0
    %v4376 = vadd.f32 %v4167, %v4375
    %4377 = vmatmul.f32.gmra.mxu0 %v3875
    %v4378 = vpop.f32.mrf.mxu0
    %v4379 = vadd.f32 %v4170, %v4378
    %4380 = vmatmul.f32.gmra.mxu0 %v3876
    %v4381 = vpop.f32.mrf.mxu0
    %v4382 = vadd.f32 %v4173, %v4381
    %4383 = vmatmul.f32.gmra.mxu0 %v3877
    %v4384 = vpop.f32.mrf.mxu0
    %v4385 = vadd.f32 %v4176, %v4384
    %4386 = vmatmul.f32.gmra.mxu0 %v3878
    %v4387 = vpop.f32.mrf.mxu0
    %v4388 = vadd.f32 %v4179, %v4387
    %4389 = vmatmul.f32.gmra.mxu0 %v3879
    %v4390 = vpop.f32.mrf.mxu0
    %v4391 = vadd.f32 %v4182, %v4390
    %4392 = vmatmul.f32.gmra.mxu0 %v3880
    %v4393 = vpop.f32.mrf.mxu0
    %v4394 = vadd.f32 %v4185, %v4393
    %4395 = vdwg.mxu0
    %v4396 = vld [vmem:[#allocation2 + $0x2] sm:$0xff]
    %v4397 = vld [vmem:[#allocation2 + $0xa] sm:$0xff]
    %v4398 = vld [vmem:[#allocation2 + $0x1a] sm:$0xff]
    %v4399 = vld [vmem:[#allocation2 + $0x22] sm:$0xff]
    %v4400 = vld [vmem:[#allocation2 + $0x32] sm:$0xff]
    %v4401 = vld [vmem:[#allocation2 + $0x3a] sm:$0xff]
    %v4402 = vld [vmem:[#allocation2 + $0x4a] sm:$0xff]
    %v4403 = vld [vmem:[#allocation2 + $0x52] sm:$0xff]
    %v4404 = vld [vmem:[#allocation2 + $0x62] sm:$0xff]
    %v4405 = vld [vmem:[#allocation2 + $0x6a] sm:$0xff]
    %v4406 = vld [vmem:[#allocation2 + $0x7a] sm:$0xff]
    %v4407 = vld [vmem:[#allocation2 + $0x82] sm:$0xff]
    %v4408 = vld [vmem:[#allocation2 + $0x92] sm:$0xff]
    %v4409 = vld [vmem:[#allocation2 + $0x9a] sm:$0xff]
    %v4410 = vld [vmem:[#allocation2 + $0xaa] sm:$0xff]
    %v4411 = vld [vmem:[#allocation2 + $0xb2] sm:$0xff]
    %v4412 = vld [vmem:[#allocation2 + $0xc2] sm:$0xff]
    %v4413 = vld [vmem:[#allocation2 + $0xca] sm:$0xff]
    %v4414 = vld [vmem:[#allocation2 + $0xda] sm:$0xff]
    %v4415 = vld [vmem:[#allocation2 + $0xe2] sm:$0xff]
    %v4416 = vld [vmem:[#allocation2 + $0xf2] sm:$0xff]
    %v4417 = vld [vmem:[#allocation2 + $0xfa] sm:$0xff]
    %v4418 = vld [vmem:[#allocation2 + $0x10a] sm:$0xff]
    %v4419 = vld [vmem:[#allocation2 + $0x112] sm:$0xff]
    %v4420 = vld [vmem:[#allocation2 + $0x122] sm:$0xff]
    %v4421 = vld [vmem:[#allocation2 + $0x12a] sm:$0xff]
    %v4422 = vld [vmem:[#allocation2 + $0x13a] sm:$0xff]
    %v4423 = vld [vmem:[#allocation2 + $0x142] sm:$0xff]
    %v4424 = vld [vmem:[#allocation2 + $0x152] sm:$0xff]
    %v4425 = vld [vmem:[#allocation2 + $0x15a] sm:$0xff]
    %v4426 = vld [vmem:[#allocation2 + $0x16a] sm:$0xff]
    %v4427 = vld [vmem:[#allocation2 + $0x172] sm:$0xff]
    %v4428 = vld [vmem:[#allocation2 + $0x1b2] sm:$0xff]
    %v4429 = vld [vmem:[#allocation2 + $0x1ba] sm:$0xff]
    %v4430 = vld [vmem:[#allocation2 + $0x1ca] sm:$0xff]
    %v4431 = vld [vmem:[#allocation2 + $0x1d2] sm:$0xff]
    %v4432 = vld [vmem:[#allocation2 + $0x1e2] sm:$0xff]
    %v4433 = vld [vmem:[#allocation2 + $0x1ea] sm:$0xff]
    %v4434 = vld [vmem:[#allocation2 + $0x1fa] sm:$0xff]
    %v4435 = vld [vmem:[#allocation2 + $0x202] sm:$0xff]
    %v4436 = vld [vmem:[#allocation2 + $0x212] sm:$0xff]
    %v4437 = vld [vmem:[#allocation2 + $0x21a] sm:$0xff]
    %v4438 = vld [vmem:[#allocation2 + $0x22a] sm:$0xff]
    %v4439 = vld [vmem:[#allocation2 + $0x232] sm:$0xff]
    %v4440 = vld [vmem:[#allocation2 + $0x242] sm:$0xff]
    %v4441 = vld [vmem:[#allocation2 + $0x24a] sm:$0xff]
    %v4442 = vld [vmem:[#allocation2 + $0x25a] sm:$0xff]
    %v4443 = vld [vmem:[#allocation2 + $0x262] sm:$0xff]
    %v4444 = vld [vmem:[#allocation2 + $0x272] sm:$0xff]
    %v4445 = vld [vmem:[#allocation2 + $0x27a] sm:$0xff]
    %v4446 = vld [vmem:[#allocation2 + $0x28a] sm:$0xff]
    %v4447 = vld [vmem:[#allocation2 + $0x292] sm:$0xff]
    %v4448 = vld [vmem:[#allocation2 + $0x2a2] sm:$0xff]
    %v4449 = vld [vmem:[#allocation2 + $0x2aa] sm:$0xff]
    %v4450 = vld [vmem:[#allocation2 + $0x2ba] sm:$0xff]
    %v4451 = vld [vmem:[#allocation2 + $0x2c2] sm:$0xff]
    %v4452 = vld [vmem:[#allocation2 + $0x2d2] sm:$0xff]
    %v4453 = vld [vmem:[#allocation2 + $0x2da] sm:$0xff]
    %v4454 = vld [vmem:[#allocation2 + $0x2ea] sm:$0xff]
    %v4455 = vld [vmem:[#allocation2 + $0x2f2] sm:$0xff]
    %v4456 = vld [vmem:[#allocation2 + $0x302] sm:$0xff]
    %v4457 = vld [vmem:[#allocation2 + $0x30a] sm:$0xff]
    %v4458 = vld [vmem:[#allocation2 + $0x31a] sm:$0xff]
    %v4459 = vld [vmem:[#allocation2 + $0x322] sm:$0xff]
    %s4460 = scalar_lea.vmem [#allocation6], 256
    %v4461 = vld [vmem:[%s4460] sm:$0xff]
    %v4462 = vld [vmem:[%s4460 + $0x8] sm:$0xff]
    %v4463 = vld [vmem:[%s4460 + $0x10] sm:$0xff]
    %v4464 = vld [vmem:[%s4460 + $0x18] sm:$0xff]
    %v4465 = vld [vmem:[%s4460 + $0x20] sm:$0xff]
    %v4466 = vld [vmem:[%s4460 + $0x28] sm:$0xff]
    %v4467 = vld [vmem:[%s4460 + $0x30] sm:$0xff]
    %v4468 = vld [vmem:[%s4460 + $0x38] sm:$0xff]
    %v4469 = vld [vmem:[%s4460 + $0x40] sm:$0xff]
    %v4470 = vld [vmem:[%s4460 + $0x48] sm:$0xff]
    %v4471 = vld [vmem:[%s4460 + $0x50] sm:$0xff]
    %v4472 = vld [vmem:[%s4460 + $0x58] sm:$0xff]
    %v4473 = vld [vmem:[%s4460 + $0x60] sm:$0xff]
    %v4474 = vld [vmem:[%s4460 + $0x68] sm:$0xff]
    %v4475 = vld [vmem:[%s4460 + $0x70] sm:$0xff]
    %v4476 = vld [vmem:[%s4460 + $0x78] sm:$0xff]
    %4477 = vmatpush.msra.mxu0 %v4476
    %4478 = vmatpush.msra.mxu0 %v4475
    %4479 = vmatpush.msra.mxu0 %v4474
    %4480 = vmatpush.msra.mxu0 %v4473
    %4481 = vmatpush.msra.mxu0 %v4472
    %4482 = vmatpush.msra.mxu0 %v4471
    %4483 = vmatpush.msra.mxu0 %v4470
    %4484 = vmatpush.msra.mxu0 %v4469
    %4485 = vmatpush.msra.mxu0 %v4468
    %4486 = vmatpush.msra.mxu0 %v4467
    %4487 = vmatpush.msra.mxu0 %v4466
    %4488 = vmatpush.msra.mxu0 %v4465
    %4489 = vmatpush.msra.mxu0 %v4464
    %4490 = vmatpush.msra.mxu0 %v4463
    %4491 = vmatpush.msra.mxu0 %v4462
    %4492 = vmatpush.msra.mxu0 %v4461
    %4493 = vmatmul.f32.gmra.mxu0 %v4396
    %v4494 = vpop.f32.mrf.mxu0
    %v4495 = vadd.f32 0.0, %v4494
    %4496 = vmatmul.f32.gmra.mxu0 %v4397
    %v4497 = vpop.f32.mrf.mxu0
    %v4498 = vadd.f32 0.0, %v4497
    %4499 = vmatmul.f32.gmra.mxu0 %v4398
    %v4500 = vpop.f32.mrf.mxu0
    %v4501 = vadd.f32 0.0, %v4500
    %4502 = vmatmul.f32.gmra.mxu0 %v4399
    %v4503 = vpop.f32.mrf.mxu0
    %v4504 = vadd.f32 0.0, %v4503
    %4505 = vmatmul.f32.gmra.mxu0 %v4400
    %v4506 = vpop.f32.mrf.mxu0
    %v4507 = vadd.f32 0.0, %v4506
    %4508 = vmatmul.f32.gmra.mxu0 %v4401
    %v4509 = vpop.f32.mrf.mxu0
    %v4510 = vadd.f32 0.0, %v4509
    %4511 = vmatmul.f32.gmra.mxu0 %v4402
    %v4512 = vpop.f32.mrf.mxu0
    %v4513 = vadd.f32 0.0, %v4512
    %4514 = vmatmul.f32.gmra.mxu0 %v4403
    %v4515 = vpop.f32.mrf.mxu0
    %v4516 = vadd.f32 0.0, %v4515
    %4517 = vmatmul.f32.gmra.mxu0 %v4404
    %v4518 = vpop.f32.mrf.mxu0
    %v4519 = vadd.f32 0.0, %v4518
    %4520 = vmatmul.f32.gmra.mxu0 %v4405
    %v4521 = vpop.f32.mrf.mxu0
    %v4522 = vadd.f32 0.0, %v4521
    %4523 = vmatmul.f32.gmra.mxu0 %v4406
    %v4524 = vpop.f32.mrf.mxu0
    %v4525 = vadd.f32 0.0, %v4524
    %4526 = vmatmul.f32.gmra.mxu0 %v4407
    %v4527 = vpop.f32.mrf.mxu0
    %v4528 = vadd.f32 0.0, %v4527
    %4529 = vmatmul.f32.gmra.mxu0 %v4408
    %v4530 = vpop.f32.mrf.mxu0
    %v4531 = vadd.f32 0.0, %v4530
    %4532 = vmatmul.f32.gmra.mxu0 %v4409
    %v4533 = vpop.f32.mrf.mxu0
    %v4534 = vadd.f32 0.0, %v4533
    %4535 = vmatmul.f32.gmra.mxu0 %v4410
    %v4536 = vpop.f32.mrf.mxu0
    %v4537 = vadd.f32 0.0, %v4536
    %4538 = vmatmul.f32.gmra.mxu0 %v4411
    %v4539 = vpop.f32.mrf.mxu0
    %v4540 = vadd.f32 0.0, %v4539
    %4541 = vmatmul.f32.gmra.mxu0 %v4412
    %v4542 = vpop.f32.mrf.mxu0
    %v4543 = vadd.f32 0.0, %v4542
    %4544 = vmatmul.f32.gmra.mxu0 %v4413
    %v4545 = vpop.f32.mrf.mxu0
    %v4546 = vadd.f32 0.0, %v4545
    %4547 = vmatmul.f32.gmra.mxu0 %v4414
    %v4548 = vpop.f32.mrf.mxu0
    %v4549 = vadd.f32 0.0, %v4548
    %4550 = vmatmul.f32.gmra.mxu0 %v4415
    %v4551 = vpop.f32.mrf.mxu0
    %v4552 = vadd.f32 0.0, %v4551
    %4553 = vmatmul.f32.gmra.mxu0 %v4416
    %v4554 = vpop.f32.mrf.mxu0
    %v4555 = vadd.f32 0.0, %v4554
    %4556 = vmatmul.f32.gmra.mxu0 %v4417
    %v4557 = vpop.f32.mrf.mxu0
    %v4558 = vadd.f32 0.0, %v4557
    %4559 = vmatmul.f32.gmra.mxu0 %v4418
    %v4560 = vpop.f32.mrf.mxu0
    %v4561 = vadd.f32 0.0, %v4560
    %4562 = vmatmul.f32.gmra.mxu0 %v4419
    %v4563 = vpop.f32.mrf.mxu0
    %v4564 = vadd.f32 0.0, %v4563
    %4565 = vmatmul.f32.gmra.mxu0 %v4420
    %v4566 = vpop.f32.mrf.mxu0
    %v4567 = vadd.f32 0.0, %v4566
    %4568 = vmatmul.f32.gmra.mxu0 %v4421
    %v4569 = vpop.f32.mrf.mxu0
    %v4570 = vadd.f32 0.0, %v4569
    %4571 = vmatmul.f32.gmra.mxu0 %v4422
    %v4572 = vpop.f32.mrf.mxu0
    %v4573 = vadd.f32 0.0, %v4572
    %4574 = vmatmul.f32.gmra.mxu0 %v4423
    %v4575 = vpop.f32.mrf.mxu0
    %v4576 = vadd.f32 0.0, %v4575
    %4577 = vmatmul.f32.gmra.mxu0 %v4424
    %v4578 = vpop.f32.mrf.mxu0
    %v4579 = vadd.f32 0.0, %v4578
    %4580 = vmatmul.f32.gmra.mxu0 %v4425
    %v4581 = vpop.f32.mrf.mxu0
    %v4582 = vadd.f32 0.0, %v4581
    %4583 = vmatmul.f32.gmra.mxu0 %v4426
    %v4584 = vpop.f32.mrf.mxu0
    %v4585 = vadd.f32 0.0, %v4584
    %4586 = vmatmul.f32.gmra.mxu0 %v4427
    %v4587 = vpop.f32.mrf.mxu0
    %v4588 = vadd.f32 0.0, %v4587
    %4589 = vmatmul.f32.gmra.mxu0 %v4428
    %v4590 = vpop.f32.mrf.mxu0
    %v4591 = vadd.f32 0.0, %v4590
    %4592 = vmatmul.f32.gmra.mxu0 %v4429
    %v4593 = vpop.f32.mrf.mxu0
    %v4594 = vadd.f32 0.0, %v4593
    %4595 = vmatmul.f32.gmra.mxu0 %v4430
    %v4596 = vpop.f32.mrf.mxu0
    %v4597 = vadd.f32 0.0, %v4596
    %4598 = vmatmul.f32.gmra.mxu0 %v4431
    %v4599 = vpop.f32.mrf.mxu0
    %v4600 = vadd.f32 0.0, %v4599
    %4601 = vmatmul.f32.gmra.mxu0 %v4432
    %v4602 = vpop.f32.mrf.mxu0
    %v4603 = vadd.f32 0.0, %v4602
    %4604 = vmatmul.f32.gmra.mxu0 %v4433
    %v4605 = vpop.f32.mrf.mxu0
    %v4606 = vadd.f32 0.0, %v4605
    %4607 = vmatmul.f32.gmra.mxu0 %v4434
    %v4608 = vpop.f32.mrf.mxu0
    %v4609 = vadd.f32 0.0, %v4608
    %4610 = vmatmul.f32.gmra.mxu0 %v4435
    %v4611 = vpop.f32.mrf.mxu0
    %v4612 = vadd.f32 0.0, %v4611
    %4613 = vmatmul.f32.gmra.mxu0 %v4436
    %v4614 = vpop.f32.mrf.mxu0
    %v4615 = vadd.f32 0.0, %v4614
    %4616 = vmatmul.f32.gmra.mxu0 %v4437
    %v4617 = vpop.f32.mrf.mxu0
    %v4618 = vadd.f32 0.0, %v4617
    %4619 = vmatmul.f32.gmra.mxu0 %v4438
    %v4620 = vpop.f32.mrf.mxu0
    %v4621 = vadd.f32 0.0, %v4620
    %4622 = vmatmul.f32.gmra.mxu0 %v4439
    %v4623 = vpop.f32.mrf.mxu0
    %v4624 = vadd.f32 0.0, %v4623
    %4625 = vmatmul.f32.gmra.mxu0 %v4440
    %v4626 = vpop.f32.mrf.mxu0
    %v4627 = vadd.f32 0.0, %v4626
    %4628 = vmatmul.f32.gmra.mxu0 %v4441
    %v4629 = vpop.f32.mrf.mxu0
    %v4630 = vadd.f32 0.0, %v4629
    %4631 = vmatmul.f32.gmra.mxu0 %v4442
    %v4632 = vpop.f32.mrf.mxu0
    %v4633 = vadd.f32 0.0, %v4632
    %4634 = vmatmul.f32.gmra.mxu0 %v4443
    %v4635 = vpop.f32.mrf.mxu0
    %v4636 = vadd.f32 0.0, %v4635
    %4637 = vmatmul.f32.gmra.mxu0 %v4444
    %v4638 = vpop.f32.mrf.mxu0
    %v4639 = vadd.f32 0.0, %v4638
    %4640 = vmatmul.f32.gmra.mxu0 %v4445
    %v4641 = vpop.f32.mrf.mxu0
    %v4642 = vadd.f32 0.0, %v4641
    %4643 = vmatmul.f32.gmra.mxu0 %v4446
    %v4644 = vpop.f32.mrf.mxu0
    %v4645 = vadd.f32 0.0, %v4644
    %4646 = vmatmul.f32.gmra.mxu0 %v4447
    %v4647 = vpop.f32.mrf.mxu0
    %v4648 = vadd.f32 0.0, %v4647
    %4649 = vmatmul.f32.gmra.mxu0 %v4448
    %v4650 = vpop.f32.mrf.mxu0
    %v4651 = vadd.f32 0.0, %v4650
    %4652 = vmatmul.f32.gmra.mxu0 %v4449
    %v4653 = vpop.f32.mrf.mxu0
    %v4654 = vadd.f32 0.0, %v4653
    %4655 = vmatmul.f32.gmra.mxu0 %v4450
    %v4656 = vpop.f32.mrf.mxu0
    %v4657 = vadd.f32 0.0, %v4656
    %4658 = vmatmul.f32.gmra.mxu0 %v4451
    %v4659 = vpop.f32.mrf.mxu0
    %v4660 = vadd.f32 0.0, %v4659
    %4661 = vmatmul.f32.gmra.mxu0 %v4452
    %v4662 = vpop.f32.mrf.mxu0
    %v4663 = vadd.f32 0.0, %v4662
    %4664 = vmatmul.f32.gmra.mxu0 %v4453
    %v4665 = vpop.f32.mrf.mxu0
    %v4666 = vadd.f32 0.0, %v4665
    %4667 = vmatmul.f32.gmra.mxu0 %v4454
    %v4668 = vpop.f32.mrf.mxu0
    %v4669 = vadd.f32 0.0, %v4668
    %4670 = vmatmul.f32.gmra.mxu0 %v4455
    %v4671 = vpop.f32.mrf.mxu0
    %v4672 = vadd.f32 0.0, %v4671
    %4673 = vmatmul.f32.gmra.mxu0 %v4456
    %v4674 = vpop.f32.mrf.mxu0
    %v4675 = vadd.f32 0.0, %v4674
    %4676 = vmatmul.f32.gmra.mxu0 %v4457
    %v4677 = vpop.f32.mrf.mxu0
    %v4678 = vadd.f32 0.0, %v4677
    %4679 = vmatmul.f32.gmra.mxu0 %v4458
    %v4680 = vpop.f32.mrf.mxu0
    %v4681 = vadd.f32 0.0, %v4680
    %4682 = vmatmul.f32.gmra.mxu0 %v4459
    %v4683 = vpop.f32.mrf.mxu0
    %v4684 = vadd.f32 0.0, %v4683
    %4685 = vdwg.mxu0
    %v4686 = vadd.f32 %v4205, %v4495
    %v4687 = vadd.f32 %v4208, %v4498
    %v4688 = vadd.f32 %v4211, %v4501
    %v4689 = vadd.f32 %v4214, %v4504
    %v4690 = vadd.f32 %v4217, %v4507
    %v4691 = vadd.f32 %v4220, %v4510
    %v4692 = vadd.f32 %v4223, %v4513
    %v4693 = vadd.f32 %v4226, %v4516
    %v4694 = vadd.f32 %v4229, %v4519
    %v4695 = vadd.f32 %v4232, %v4522
    %v4696 = vadd.f32 %v4235, %v4525
    %v4697 = vadd.f32 %v4238, %v4528
    %v4698 = vadd.f32 %v4241, %v4531
    %v4699 = vadd.f32 %v4244, %v4534
    %v4700 = vadd.f32 %v4247, %v4537
    %v4701 = vadd.f32 %v4250, %v4540
    %v4702 = vadd.f32 %v4253, %v4543
    %v4703 = vadd.f32 %v4256, %v4546
    %v4704 = vadd.f32 %v4259, %v4549
    %v4705 = vadd.f32 %v4262, %v4552
    %v4706 = vadd.f32 %v4265, %v4555
    %v4707 = vadd.f32 %v4268, %v4558
    %v4708 = vadd.f32 %v4271, %v4561
    %v4709 = vadd.f32 %v4274, %v4564
    %v4710 = vadd.f32 %v4277, %v4567
    %v4711 = vadd.f32 %v4280, %v4570
    %v4712 = vadd.f32 %v4283, %v4573
    %v4713 = vadd.f32 %v4286, %v4576
    %v4714 = vadd.f32 %v4289, %v4579
    %v4715 = vadd.f32 %v4292, %v4582
    %v4716 = vadd.f32 %v4295, %v4585
    %v4717 = vadd.f32 %v4298, %v4588
    %v4718 = vadd.f32 %v4301, %v4591
    %v4719 = vadd.f32 %v4304, %v4594
    %v4720 = vadd.f32 %v4307, %v4597
    %v4721 = vadd.f32 %v4310, %v4600
    %v4722 = vadd.f32 %v4313, %v4603
    %v4723 = vadd.f32 %v4316, %v4606
    %v4724 = vadd.f32 %v4319, %v4609
    %v4725 = vadd.f32 %v4322, %v4612
    %v4726 = vadd.f32 %v4325, %v4615
    %v4727 = vadd.f32 %v4328, %v4618
    %v4728 = vadd.f32 %v4331, %v4621
    %v4729 = vadd.f32 %v4334, %v4624
    %v4730 = vadd.f32 %v4337, %v4627
    %v4731 = vadd.f32 %v4340, %v4630
    %v4732 = vadd.f32 %v4343, %v4633
    %v4733 = vadd.f32 %v4346, %v4636
    %v4734 = vadd.f32 %v4349, %v4639
    %v4735 = vadd.f32 %v4352, %v4642
    %v4736 = vadd.f32 %v4355, %v4645
    %v4737 = vadd.f32 %v4358, %v4648
    %v4738 = vadd.f32 %v4361, %v4651
    %v4739 = vadd.f32 %v4364, %v4654
    %v4740 = vadd.f32 %v4367, %v4657
    %v4741 = vadd.f32 %v4370, %v4660
    %v4742 = vadd.f32 %v4373, %v4663
    %v4743 = vadd.f32 %v4376, %v4666
    %v4744 = vadd.f32 %v4379, %v4669
    %v4745 = vadd.f32 %v4382, %v4672
    %v4746 = vadd.f32 %v4385, %v4675
    %v4747 = vadd.f32 %v4388, %v4678
    %v4748 = vadd.f32 %v4391, %v4681
    %v4749 = vadd.f32 %v4394, %v4684
    %v4750 = vld [vmem:[%s3688] sm:$0xff]
    %v4751 = vld [vmem:[%s3688 + $0x8] sm:$0xff]
    %v4752 = vld [vmem:[%s3688 + $0x18] sm:$0xff]
    %v4753 = vld [vmem:[%s3688 + $0x20] sm:$0xff]
    %v4754 = vld [vmem:[%s3688 + $0x30] sm:$0xff]
    %v4755 = vld [vmem:[%s3688 + $0x38] sm:$0xff]
    %v4756 = vld [vmem:[%s3688 + $0x48] sm:$0xff]
    %v4757 = vld [vmem:[%s3688 + $0x50] sm:$0xff]
    %v4758 = vld [vmem:[%s3688 + $0x60] sm:$0xff]
    %v4759 = vld [vmem:[%s3688 + $0x68] sm:$0xff]
    %v4760 = vld [vmem:[%s3688 + $0x78] sm:$0xff]
    %v4761 = vld [vmem:[%s3688 + $0x80] sm:$0xff]
    %v4762 = vld [vmem:[%s3688 + $0x90] sm:$0xff]
    %v4763 = vld [vmem:[%s3688 + $0x98] sm:$0xff]
    %v4764 = vld [vmem:[%s3688 + $0xa8] sm:$0xff]
    %v4765 = vld [vmem:[%s3688 + $0xb0] sm:$0xff]
    %v4766 = vld [vmem:[%s3688 + $0xc0] sm:$0xff]
    %v4767 = vld [vmem:[%s3688 + $0xc8] sm:$0xff]
    %v4768 = vld [vmem:[%s3688 + $0xd8] sm:$0xff]
    %v4769 = vld [vmem:[%s3688 + $0xe0] sm:$0xff]
    %v4770 = vld [vmem:[%s3688 + $0xf0] sm:$0xff]
    %v4771 = vld [vmem:[%s3688 + $0xf8] sm:$0xff]
    %v4772 = vld [vmem:[%s3688 + $0x108] sm:$0xff]
    %v4773 = vld [vmem:[%s3688 + $0x110] sm:$0xff]
    %v4774 = vld [vmem:[%s3688 + $0x120] sm:$0xff]
    %v4775 = vld [vmem:[%s3688 + $0x128] sm:$0xff]
    %v4776 = vld [vmem:[%s3688 + $0x138] sm:$0xff]
    %v4777 = vld [vmem:[%s3688 + $0x140] sm:$0xff]
    %v4778 = vld [vmem:[%s3688 + $0x150] sm:$0xff]
    %v4779 = vld [vmem:[%s3688 + $0x158] sm:$0xff]
    %v4780 = vld [vmem:[%s3688 + $0x168] sm:$0xff]
    %v4781 = vld [vmem:[%s3688 + $0x170] sm:$0xff]
    %v4782 = vld [vmem:[%s3688 + $0x1b0] sm:$0xff]
    %v4783 = vld [vmem:[%s3688 + $0x1b8] sm:$0xff]
    %v4784 = vld [vmem:[%s3688 + $0x1c8] sm:$0xff]
    %v4785 = vld [vmem:[%s3688 + $0x1d0] sm:$0xff]
    %v4786 = vld [vmem:[%s3688 + $0x1e0] sm:$0xff]
    %v4787 = vld [vmem:[%s3688 + $0x1e8] sm:$0xff]
    %v4788 = vld [vmem:[%s3688 + $0x1f8] sm:$0xff]
    %v4789 = vld [vmem:[%s3688 + $0x200] sm:$0xff]
    %v4790 = vld [vmem:[%s3688 + $0x210] sm:$0xff]
    %v4791 = vld [vmem:[%s3688 + $0x218] sm:$0xff]
    %v4792 = vld [vmem:[%s3688 + $0x228] sm:$0xff]
    %v4793 = vld [vmem:[%s3688 + $0x230] sm:$0xff]
    %v4794 = vld [vmem:[%s3688 + $0x240] sm:$0xff]
    %v4795 = vld [vmem:[%s3688 + $0x248] sm:$0xff]
    %v4796 = vld [vmem:[%s3688 + $0x258] sm:$0xff]
    %v4797 = vld [vmem:[%s3688 + $0x260] sm:$0xff]
    %v4798 = vld [vmem:[%s3688 + $0x270] sm:$0xff]
    %v4799 = vld [vmem:[%s3688 + $0x278] sm:$0xff]
    %v4800 = vld [vmem:[%s3688 + $0x288] sm:$0xff]
    %v4801 = vld [vmem:[%s3688 + $0x290] sm:$0xff]
    %v4802 = vld [vmem:[%s3688 + $0x2a0] sm:$0xff]
    %v4803 = vld [vmem:[%s3688 + $0x2a8] sm:$0xff]
    %v4804 = vld [vmem:[%s3688 + $0x2b8] sm:$0xff]
    %v4805 = vld [vmem:[%s3688 + $0x2c0] sm:$0xff]
    %v4806 = vld [vmem:[%s3688 + $0x2d0] sm:$0xff]
    %v4807 = vld [vmem:[%s3688 + $0x2d8] sm:$0xff]
    %v4808 = vld [vmem:[%s3688 + $0x2e8] sm:$0xff]
    %v4809 = vld [vmem:[%s3688 + $0x2f0] sm:$0xff]
    %v4810 = vld [vmem:[%s3688 + $0x300] sm:$0xff]
    %v4811 = vld [vmem:[%s3688 + $0x308] sm:$0xff]
    %v4812 = vld [vmem:[%s3688 + $0x318] sm:$0xff]
    %v4813 = vld [vmem:[%s3688 + $0x320] sm:$0xff]
    %s4814 = scalar_lea.vmem [#allocation6], 384
    %v4815 = vld [vmem:[%s4814] sm:$0xff]
    %v4816 = vld [vmem:[%s4814 + $0x8] sm:$0xff]
    %v4817 = vld [vmem:[%s4814 + $0x10] sm:$0xff]
    %v4818 = vld [vmem:[%s4814 + $0x18] sm:$0xff]
    %v4819 = vld [vmem:[%s4814 + $0x20] sm:$0xff]
    %v4820 = vld [vmem:[%s4814 + $0x28] sm:$0xff]
    %v4821 = vld [vmem:[%s4814 + $0x30] sm:$0xff]
    %v4822 = vld [vmem:[%s4814 + $0x38] sm:$0xff]
    %v4823 = vld [vmem:[%s4814 + $0x40] sm:$0xff]
    %v4824 = vld [vmem:[%s4814 + $0x48] sm:$0xff]
    %v4825 = vld [vmem:[%s4814 + $0x50] sm:$0xff]
    %v4826 = vld [vmem:[%s4814 + $0x58] sm:$0xff]
    %v4827 = vld [vmem:[%s4814 + $0x60] sm:$0xff]
    %v4828 = vld [vmem:[%s4814 + $0x68] sm:$0xff]
    %v4829 = vld [vmem:[%s4814 + $0x70] sm:$0xff]
    %v4830 = vld [vmem:[%s4814 + $0x78] sm:$0xff]
    %4831 = vmatpush.msra.mxu0 %v4830
    %4832 = vmatpush.msra.mxu0 %v4829
    %4833 = vmatpush.msra.mxu0 %v4828
    %4834 = vmatpush.msra.mxu0 %v4827
    %4835 = vmatpush.msra.mxu0 %v4826
    %4836 = vmatpush.msra.mxu0 %v4825
    %4837 = vmatpush.msra.mxu0 %v4824
    %4838 = vmatpush.msra.mxu0 %v4823
    %4839 = vmatpush.msra.mxu0 %v4822
    %4840 = vmatpush.msra.mxu0 %v4821
    %4841 = vmatpush.msra.mxu0 %v4820
    %4842 = vmatpush.msra.mxu0 %v4819
    %4843 = vmatpush.msra.mxu0 %v4818
    %4844 = vmatpush.msra.mxu0 %v4817
    %4845 = vmatpush.msra.mxu0 %v4816
    %4846 = vmatpush.msra.mxu0 %v4815
    %4847 = vmatmul.f32.gmra.mxu0 %v4750
    %v4848 = vpop.f32.mrf.mxu0
    %v4849 = vadd.f32 0.0, %v4848
    %4850 = vmatmul.f32.gmra.mxu0 %v4751
    %v4851 = vpop.f32.mrf.mxu0
    %v4852 = vadd.f32 0.0, %v4851
    %4853 = vmatmul.f32.gmra.mxu0 %v4752
    %v4854 = vpop.f32.mrf.mxu0
    %v4855 = vadd.f32 0.0, %v4854
    %4856 = vmatmul.f32.gmra.mxu0 %v4753
    %v4857 = vpop.f32.mrf.mxu0
    %v4858 = vadd.f32 0.0, %v4857
    %4859 = vmatmul.f32.gmra.mxu0 %v4754
    %v4860 = vpop.f32.mrf.mxu0
    %v4861 = vadd.f32 0.0, %v4860
    %4862 = vmatmul.f32.gmra.mxu0 %v4755
    %v4863 = vpop.f32.mrf.mxu0
    %v4864 = vadd.f32 0.0, %v4863
    %4865 = vmatmul.f32.gmra.mxu0 %v4756
    %v4866 = vpop.f32.mrf.mxu0
    %v4867 = vadd.f32 0.0, %v4866
    %4868 = vmatmul.f32.gmra.mxu0 %v4757
    %v4869 = vpop.f32.mrf.mxu0
    %v4870 = vadd.f32 0.0, %v4869
    %4871 = vmatmul.f32.gmra.mxu0 %v4758
    %v4872 = vpop.f32.mrf.mxu0
    %v4873 = vadd.f32 0.0, %v4872
    %4874 = vmatmul.f32.gmra.mxu0 %v4759
    %v4875 = vpop.f32.mrf.mxu0
    %v4876 = vadd.f32 0.0, %v4875
    %4877 = vmatmul.f32.gmra.mxu0 %v4760
    %v4878 = vpop.f32.mrf.mxu0
    %v4879 = vadd.f32 0.0, %v4878
    %4880 = vmatmul.f32.gmra.mxu0 %v4761
    %v4881 = vpop.f32.mrf.mxu0
    %v4882 = vadd.f32 0.0, %v4881
    %4883 = vmatmul.f32.gmra.mxu0 %v4762
    %v4884 = vpop.f32.mrf.mxu0
    %v4885 = vadd.f32 0.0, %v4884
    %4886 = vmatmul.f32.gmra.mxu0 %v4763
    %v4887 = vpop.f32.mrf.mxu0
    %v4888 = vadd.f32 0.0, %v4887
    %4889 = vmatmul.f32.gmra.mxu0 %v4764
    %v4890 = vpop.f32.mrf.mxu0
    %v4891 = vadd.f32 0.0, %v4890
    %4892 = vmatmul.f32.gmra.mxu0 %v4765
    %v4893 = vpop.f32.mrf.mxu0
    %v4894 = vadd.f32 0.0, %v4893
    %4895 = vmatmul.f32.gmra.mxu0 %v4766
    %v4896 = vpop.f32.mrf.mxu0
    %v4897 = vadd.f32 0.0, %v4896
    %4898 = vmatmul.f32.gmra.mxu0 %v4767
    %v4899 = vpop.f32.mrf.mxu0
    %v4900 = vadd.f32 0.0, %v4899
    %4901 = vmatmul.f32.gmra.mxu0 %v4768
    %v4902 = vpop.f32.mrf.mxu0
    %v4903 = vadd.f32 0.0, %v4902
    %4904 = vmatmul.f32.gmra.mxu0 %v4769
    %v4905 = vpop.f32.mrf.mxu0
    %v4906 = vadd.f32 0.0, %v4905
    %4907 = vmatmul.f32.gmra.mxu0 %v4770
    %v4908 = vpop.f32.mrf.mxu0
    %v4909 = vadd.f32 0.0, %v4908
    %4910 = vmatmul.f32.gmra.mxu0 %v4771
    %v4911 = vpop.f32.mrf.mxu0
    %v4912 = vadd.f32 0.0, %v4911
    %4913 = vmatmul.f32.gmra.mxu0 %v4772
    %v4914 = vpop.f32.mrf.mxu0
    %v4915 = vadd.f32 0.0, %v4914
    %4916 = vmatmul.f32.gmra.mxu0 %v4773
    %v4917 = vpop.f32.mrf.mxu0
    %v4918 = vadd.f32 0.0, %v4917
    %4919 = vmatmul.f32.gmra.mxu0 %v4774
    %v4920 = vpop.f32.mrf.mxu0
    %v4921 = vadd.f32 0.0, %v4920
    %4922 = vmatmul.f32.gmra.mxu0 %v4775
    %v4923 = vpop.f32.mrf.mxu0
    %v4924 = vadd.f32 0.0, %v4923
    %4925 = vmatmul.f32.gmra.mxu0 %v4776
    %v4926 = vpop.f32.mrf.mxu0
    %v4927 = vadd.f32 0.0, %v4926
    %4928 = vmatmul.f32.gmra.mxu0 %v4777
    %v4929 = vpop.f32.mrf.mxu0
    %v4930 = vadd.f32 0.0, %v4929
    %4931 = vmatmul.f32.gmra.mxu0 %v4778
    %v4932 = vpop.f32.mrf.mxu0
    %v4933 = vadd.f32 0.0, %v4932
    %4934 = vmatmul.f32.gmra.mxu0 %v4779
    %v4935 = vpop.f32.mrf.mxu0
    %v4936 = vadd.f32 0.0, %v4935
    %4937 = vmatmul.f32.gmra.mxu0 %v4780
    %v4938 = vpop.f32.mrf.mxu0
    %v4939 = vadd.f32 0.0, %v4938
    %4940 = vmatmul.f32.gmra.mxu0 %v4781
    %v4941 = vpop.f32.mrf.mxu0
    %v4942 = vadd.f32 0.0, %v4941
    %4943 = vmatmul.f32.gmra.mxu0 %v4782
    %v4944 = vpop.f32.mrf.mxu0
    %v4945 = vadd.f32 0.0, %v4944
    %4946 = vmatmul.f32.gmra.mxu0 %v4783
    %v4947 = vpop.f32.mrf.mxu0
    %v4948 = vadd.f32 0.0, %v4947
    %4949 = vmatmul.f32.gmra.mxu0 %v4784
    %v4950 = vpop.f32.mrf.mxu0
    %v4951 = vadd.f32 0.0, %v4950
    %4952 = vmatmul.f32.gmra.mxu0 %v4785
    %v4953 = vpop.f32.mrf.mxu0
    %v4954 = vadd.f32 0.0, %v4953
    %4955 = vmatmul.f32.gmra.mxu0 %v4786
    %v4956 = vpop.f32.mrf.mxu0
    %v4957 = vadd.f32 0.0, %v4956
    %4958 = vmatmul.f32.gmra.mxu0 %v4787
    %v4959 = vpop.f32.mrf.mxu0
    %v4960 = vadd.f32 0.0, %v4959
    %4961 = vmatmul.f32.gmra.mxu0 %v4788
    %v4962 = vpop.f32.mrf.mxu0
    %v4963 = vadd.f32 0.0, %v4962
    %4964 = vmatmul.f32.gmra.mxu0 %v4789
    %v4965 = vpop.f32.mrf.mxu0
    %v4966 = vadd.f32 0.0, %v4965
    %4967 = vmatmul.f32.gmra.mxu0 %v4790
    %v4968 = vpop.f32.mrf.mxu0
    %v4969 = vadd.f32 0.0, %v4968
    %4970 = vmatmul.f32.gmra.mxu0 %v4791
    %v4971 = vpop.f32.mrf.mxu0
    %v4972 = vadd.f32 0.0, %v4971
    %4973 = vmatmul.f32.gmra.mxu0 %v4792
    %v4974 = vpop.f32.mrf.mxu0
    %v4975 = vadd.f32 0.0, %v4974
    %4976 = vmatmul.f32.gmra.mxu0 %v4793
    %v4977 = vpop.f32.mrf.mxu0
    %v4978 = vadd.f32 0.0, %v4977
    %4979 = vmatmul.f32.gmra.mxu0 %v4794
    %v4980 = vpop.f32.mrf.mxu0
    %v4981 = vadd.f32 0.0, %v4980
    %4982 = vmatmul.f32.gmra.mxu0 %v4795
    %v4983 = vpop.f32.mrf.mxu0
    %v4984 = vadd.f32 0.0, %v4983
    %4985 = vmatmul.f32.gmra.mxu0 %v4796
    %v4986 = vpop.f32.mrf.mxu0
    %v4987 = vadd.f32 0.0, %v4986
    %4988 = vmatmul.f32.gmra.mxu0 %v4797
    %v4989 = vpop.f32.mrf.mxu0
    %v4990 = vadd.f32 0.0, %v4989
    %4991 = vmatmul.f32.gmra.mxu0 %v4798
    %v4992 = vpop.f32.mrf.mxu0
    %v4993 = vadd.f32 0.0, %v4992
    %4994 = vmatmul.f32.gmra.mxu0 %v4799
    %v4995 = vpop.f32.mrf.mxu0
    %v4996 = vadd.f32 0.0, %v4995
    %4997 = vmatmul.f32.gmra.mxu0 %v4800
    %v4998 = vpop.f32.mrf.mxu0
    %v4999 = vadd.f32 0.0, %v4998
    %5000 = vmatmul.f32.gmra.mxu0 %v4801
    %v5001 = vpop.f32.mrf.mxu0
    %v5002 = vadd.f32 0.0, %v5001
    %5003 = vmatmul.f32.gmra.mxu0 %v4802
    %v5004 = vpop.f32.mrf.mxu0
    %v5005 = vadd.f32 0.0, %v5004
    %5006 = vmatmul.f32.gmra.mxu0 %v4803
    %v5007 = vpop.f32.mrf.mxu0
    %v5008 = vadd.f32 0.0, %v5007
    %5009 = vmatmul.f32.gmra.mxu0 %v4804
    %v5010 = vpop.f32.mrf.mxu0
    %v5011 = vadd.f32 0.0, %v5010
    %5012 = vmatmul.f32.gmra.mxu0 %v4805
    %v5013 = vpop.f32.mrf.mxu0
    %v5014 = vadd.f32 0.0, %v5013
    %5015 = vmatmul.f32.gmra.mxu0 %v4806
    %v5016 = vpop.f32.mrf.mxu0
    %v5017 = vadd.f32 0.0, %v5016
    %5018 = vmatmul.f32.gmra.mxu0 %v4807
    %v5019 = vpop.f32.mrf.mxu0
    %v5020 = vadd.f32 0.0, %v5019
    %5021 = vmatmul.f32.gmra.mxu0 %v4808
    %v5022 = vpop.f32.mrf.mxu0
    %v5023 = vadd.f32 0.0, %v5022
    %5024 = vmatmul.f32.gmra.mxu0 %v4809
    %v5025 = vpop.f32.mrf.mxu0
    %v5026 = vadd.f32 0.0, %v5025
    %5027 = vmatmul.f32.gmra.mxu0 %v4810
    %v5028 = vpop.f32.mrf.mxu0
    %v5029 = vadd.f32 0.0, %v5028
    %5030 = vmatmul.f32.gmra.mxu0 %v4811
    %v5031 = vpop.f32.mrf.mxu0
    %v5032 = vadd.f32 0.0, %v5031
    %5033 = vmatmul.f32.gmra.mxu0 %v4812
    %v5034 = vpop.f32.mrf.mxu0
    %v5035 = vadd.f32 0.0, %v5034
    %5036 = vmatmul.f32.gmra.mxu0 %v4813
    %v5037 = vpop.f32.mrf.mxu0
    %v5038 = vadd.f32 0.0, %v5037
    %5039 = vdwg.mxu0
    %v5040 = vadd.f32 %v4686, %v4849
    %v5041 = vadd.f32 %v4687, %v4852
    %v5042 = vadd.f32 %v4688, %v4855
    %v5043 = vadd.f32 %v4689, %v4858
    %v5044 = vadd.f32 %v4690, %v4861
    %v5045 = vadd.f32 %v4691, %v4864
    %v5046 = vadd.f32 %v4692, %v4867
    %v5047 = vadd.f32 %v4693, %v4870
    %v5048 = vadd.f32 %v4694, %v4873
    %v5049 = vadd.f32 %v4695, %v4876
    %v5050 = vadd.f32 %v4696, %v4879
    %v5051 = vadd.f32 %v4697, %v4882
    %v5052 = vadd.f32 %v4698, %v4885
    %v5053 = vadd.f32 %v4699, %v4888
    %v5054 = vadd.f32 %v4700, %v4891
    %v5055 = vadd.f32 %v4701, %v4894
    %v5056 = vadd.f32 %v4702, %v4897
    %v5057 = vadd.f32 %v4703, %v4900
    %v5058 = vadd.f32 %v4704, %v4903
    %v5059 = vadd.f32 %v4705, %v4906
    %v5060 = vadd.f32 %v4706, %v4909
    %v5061 = vadd.f32 %v4707, %v4912
    %v5062 = vadd.f32 %v4708, %v4915
    %v5063 = vadd.f32 %v4709, %v4918
    %v5064 = vadd.f32 %v4710, %v4921
    %v5065 = vadd.f32 %v4711, %v4924
    %v5066 = vadd.f32 %v4712, %v4927
    %v5067 = vadd.f32 %v4713, %v4930
    %v5068 = vadd.f32 %v4714, %v4933
    %v5069 = vadd.f32 %v4715, %v4936
    %v5070 = vadd.f32 %v4716, %v4939
    %v5071 = vadd.f32 %v4717, %v4942
    %v5072 = vadd.f32 %v4718, %v4945
    %v5073 = vadd.f32 %v4719, %v4948
    %v5074 = vadd.f32 %v4720, %v4951
    %v5075 = vadd.f32 %v4721, %v4954
    %v5076 = vadd.f32 %v4722, %v4957
    %v5077 = vadd.f32 %v4723, %v4960
    %v5078 = vadd.f32 %v4724, %v4963
    %v5079 = vadd.f32 %v4725, %v4966
    %v5080 = vadd.f32 %v4726, %v4969
    %v5081 = vadd.f32 %v4727, %v4972
    %v5082 = vadd.f32 %v4728, %v4975
    %v5083 = vadd.f32 %v4729, %v4978
    %v5084 = vadd.f32 %v4730, %v4981
    %v5085 = vadd.f32 %v4731, %v4984
    %v5086 = vadd.f32 %v4732, %v4987
    %v5087 = vadd.f32 %v4733, %v4990
    %v5088 = vadd.f32 %v4734, %v4993
    %v5089 = vadd.f32 %v4735, %v4996
    %v5090 = vadd.f32 %v4736, %v4999
    %v5091 = vadd.f32 %v4737, %v5002
    %v5092 = vadd.f32 %v4738, %v5005
    %v5093 = vadd.f32 %v4739, %v5008
    %v5094 = vadd.f32 %v4740, %v5011
    %v5095 = vadd.f32 %v4741, %v5014
    %v5096 = vadd.f32 %v4742, %v5017
    %v5097 = vadd.f32 %v4743, %v5020
    %v5098 = vadd.f32 %v4744, %v5023
    %v5099 = vadd.f32 %v4745, %v5026
    %v5100 = vadd.f32 %v4746, %v5029
    %v5101 = vadd.f32 %v4747, %v5032
    %v5102 = vadd.f32 %v4748, %v5035
    %v5103 = vadd.f32 %v4749, %v5038
    %v5104 = vld [vmem:[%s3688 + $0x1] sm:$0xff]
    %v5105 = vld [vmem:[%s3688 + $0x9] sm:$0xff]
    %v5106 = vld [vmem:[%s3688 + $0x19] sm:$0xff]
    %v5107 = vld [vmem:[%s3688 + $0x21] sm:$0xff]
    %v5108 = vld [vmem:[%s3688 + $0x31] sm:$0xff]
    %v5109 = vld [vmem:[%s3688 + $0x39] sm:$0xff]
    %v5110 = vld [vmem:[%s3688 + $0x49] sm:$0xff]
    %v5111 = vld [vmem:[%s3688 + $0x51] sm:$0xff]
    %v5112 = vld [vmem:[%s3688 + $0x61] sm:$0xff]
    %v5113 = vld [vmem:[%s3688 + $0x69] sm:$0xff]
    %v5114 = vld [vmem:[%s3688 + $0x79] sm:$0xff]
    %v5115 = vld [vmem:[%s3688 + $0x81] sm:$0xff]
    %v5116 = vld [vmem:[%s3688 + $0x91] sm:$0xff]
    %v5117 = vld [vmem:[%s3688 + $0x99] sm:$0xff]
    %v5118 = vld [vmem:[%s3688 + $0xa9] sm:$0xff]
    %v5119 = vld [vmem:[%s3688 + $0xb1] sm:$0xff]
    %v5120 = vld [vmem:[%s3688 + $0xc1] sm:$0xff]
    %v5121 = vld [vmem:[%s3688 + $0xc9] sm:$0xff]
    %v5122 = vld [vmem:[%s3688 + $0xd9] sm:$0xff]
    %v5123 = vld [vmem:[%s3688 + $0xe1] sm:$0xff]
    %v5124 = vld [vmem:[%s3688 + $0xf1] sm:$0xff]
    %v5125 = vld [vmem:[%s3688 + $0xf9] sm:$0xff]
    %v5126 = vld [vmem:[%s3688 + $0x109] sm:$0xff]
    %v5127 = vld [vmem:[%s3688 + $0x111] sm:$0xff]
    %v5128 = vld [vmem:[%s3688 + $0x121] sm:$0xff]
    %v5129 = vld [vmem:[%s3688 + $0x129] sm:$0xff]
    %v5130 = vld [vmem:[%s3688 + $0x139] sm:$0xff]
    %v5131 = vld [vmem:[%s3688 + $0x141] sm:$0xff]
    %v5132 = vld [vmem:[%s3688 + $0x151] sm:$0xff]
    %v5133 = vld [vmem:[%s3688 + $0x159] sm:$0xff]
    %v5134 = vld [vmem:[%s3688 + $0x169] sm:$0xff]
    %v5135 = vld [vmem:[%s3688 + $0x171] sm:$0xff]
    %v5136 = vld [vmem:[%s3688 + $0x1b1] sm:$0xff]
    %v5137 = vld [vmem:[%s3688 + $0x1b9] sm:$0xff]
    %v5138 = vld [vmem:[%s3688 + $0x1c9] sm:$0xff]
    %v5139 = vld [vmem:[%s3688 + $0x1d1] sm:$0xff]
    %v5140 = vld [vmem:[%s3688 + $0x1e1] sm:$0xff]
    %v5141 = vld [vmem:[%s3688 + $0x1e9] sm:$0xff]
    %v5142 = vld [vmem:[%s3688 + $0x1f9] sm:$0xff]
    %v5143 = vld [vmem:[%s3688 + $0x201] sm:$0xff]
    %v5144 = vld [vmem:[%s3688 + $0x211] sm:$0xff]
    %v5145 = vld [vmem:[%s3688 + $0x219] sm:$0xff]
    %v5146 = vld [vmem:[%s3688 + $0x229] sm:$0xff]
    %v5147 = vld [vmem:[%s3688 + $0x231] sm:$0xff]
    %v5148 = vld [vmem:[%s3688 + $0x241] sm:$0xff]
    %v5149 = vld [vmem:[%s3688 + $0x249] sm:$0xff]
    %v5150 = vld [vmem:[%s3688 + $0x259] sm:$0xff]
    %v5151 = vld [vmem:[%s3688 + $0x261] sm:$0xff]
    %v5152 = vld [vmem:[%s3688 + $0x271] sm:$0xff]
    %v5153 = vld [vmem:[%s3688 + $0x279] sm:$0xff]
    %v5154 = vld [vmem:[%s3688 + $0x289] sm:$0xff]
    %v5155 = vld [vmem:[%s3688 + $0x291] sm:$0xff]
    %v5156 = vld [vmem:[%s3688 + $0x2a1] sm:$0xff]
    %v5157 = vld [vmem:[%s3688 + $0x2a9] sm:$0xff]
    %v5158 = vld [vmem:[%s3688 + $0x2b9] sm:$0xff]
    %v5159 = vld [vmem:[%s3688 + $0x2c1] sm:$0xff]
    %v5160 = vld [vmem:[%s3688 + $0x2d1] sm:$0xff]
    %v5161 = vld [vmem:[%s3688 + $0x2d9] sm:$0xff]
    %v5162 = vld [vmem:[%s3688 + $0x2e9] sm:$0xff]
    %v5163 = vld [vmem:[%s3688 + $0x2f1] sm:$0xff]
    %v5164 = vld [vmem:[%s3688 + $0x301] sm:$0xff]
    %v5165 = vld [vmem:[%s3688 + $0x309] sm:$0xff]
    %v5166 = vld [vmem:[%s3688 + $0x319] sm:$0xff]
    %v5167 = vld [vmem:[%s3688 + $0x321] sm:$0xff]
    %s5168 = scalar_lea.vmem [#allocation6], 512
    %v5169 = vld [vmem:[%s5168] sm:$0xff]
    %v5170 = vld [vmem:[%s5168 + $0x8] sm:$0xff]
    %v5171 = vld [vmem:[%s5168 + $0x10] sm:$0xff]
    %v5172 = vld [vmem:[%s5168 + $0x18] sm:$0xff]
    %v5173 = vld [vmem:[%s5168 + $0x20] sm:$0xff]
    %v5174 = vld [vmem:[%s5168 + $0x28] sm:$0xff]
    %v5175 = vld [vmem:[%s5168 + $0x30] sm:$0xff]
    %v5176 = vld [vmem:[%s5168 + $0x38] sm:$0xff]
    %v5177 = vld [vmem:[%s5168 + $0x40] sm:$0xff]
    %v5178 = vld [vmem:[%s5168 + $0x48] sm:$0xff]
    %v5179 = vld [vmem:[%s5168 + $0x50] sm:$0xff]
    %v5180 = vld [vmem:[%s5168 + $0x58] sm:$0xff]
    %v5181 = vld [vmem:[%s5168 + $0x60] sm:$0xff]
    %v5182 = vld [vmem:[%s5168 + $0x68] sm:$0xff]
    %v5183 = vld [vmem:[%s5168 + $0x70] sm:$0xff]
    %v5184 = vld [vmem:[%s5168 + $0x78] sm:$0xff]
    %5185 = vmatpush.msra.mxu0 %v5184
    %5186 = vmatpush.msra.mxu0 %v5183
    %5187 = vmatpush.msra.mxu0 %v5182
    %5188 = vmatpush.msra.mxu0 %v5181
    %5189 = vmatpush.msra.mxu0 %v5180
    %5190 = vmatpush.msra.mxu0 %v5179
    %5191 = vmatpush.msra.mxu0 %v5178
    %5192 = vmatpush.msra.mxu0 %v5177
    %5193 = vmatpush.msra.mxu0 %v5176
    %5194 = vmatpush.msra.mxu0 %v5175
    %5195 = vmatpush.msra.mxu0 %v5174
    %5196 = vmatpush.msra.mxu0 %v5173
    %5197 = vmatpush.msra.mxu0 %v5172
    %5198 = vmatpush.msra.mxu0 %v5171
    %5199 = vmatpush.msra.mxu0 %v5170
    %5200 = vmatpush.msra.mxu0 %v5169
    %5201 = vmatmul.f32.gmra.mxu0 %v5104
    %v5202 = vpop.f32.mrf.mxu0
    %v5203 = vadd.f32 0.0, %v5202
    %5204 = vmatmul.f32.gmra.mxu0 %v5105
    %v5205 = vpop.f32.mrf.mxu0
    %v5206 = vadd.f32 0.0, %v5205
    %5207 = vmatmul.f32.gmra.mxu0 %v5106
    %v5208 = vpop.f32.mrf.mxu0
    %v5209 = vadd.f32 0.0, %v5208
    %5210 = vmatmul.f32.gmra.mxu0 %v5107
    %v5211 = vpop.f32.mrf.mxu0
    %v5212 = vadd.f32 0.0, %v5211
    %5213 = vmatmul.f32.gmra.mxu0 %v5108
    %v5214 = vpop.f32.mrf.mxu0
    %v5215 = vadd.f32 0.0, %v5214
    %5216 = vmatmul.f32.gmra.mxu0 %v5109
    %v5217 = vpop.f32.mrf.mxu0
    %v5218 = vadd.f32 0.0, %v5217
    %5219 = vmatmul.f32.gmra.mxu0 %v5110
    %v5220 = vpop.f32.mrf.mxu0
    %v5221 = vadd.f32 0.0, %v5220
    %5222 = vmatmul.f32.gmra.mxu0 %v5111
    %v5223 = vpop.f32.mrf.mxu0
    %v5224 = vadd.f32 0.0, %v5223
    %5225 = vmatmul.f32.gmra.mxu0 %v5112
    %v5226 = vpop.f32.mrf.mxu0
    %v5227 = vadd.f32 0.0, %v5226
    %5228 = vmatmul.f32.gmra.mxu0 %v5113
    %v5229 = vpop.f32.mrf.mxu0
    %v5230 = vadd.f32 0.0, %v5229
    %5231 = vmatmul.f32.gmra.mxu0 %v5114
    %v5232 = vpop.f32.mrf.mxu0
    %v5233 = vadd.f32 0.0, %v5232
    %5234 = vmatmul.f32.gmra.mxu0 %v5115
    %v5235 = vpop.f32.mrf.mxu0
    %v5236 = vadd.f32 0.0, %v5235
    %5237 = vmatmul.f32.gmra.mxu0 %v5116
    %v5238 = vpop.f32.mrf.mxu0
    %v5239 = vadd.f32 0.0, %v5238
    %5240 = vmatmul.f32.gmra.mxu0 %v5117
    %v5241 = vpop.f32.mrf.mxu0
    %v5242 = vadd.f32 0.0, %v5241
    %5243 = vmatmul.f32.gmra.mxu0 %v5118
    %v5244 = vpop.f32.mrf.mxu0
    %v5245 = vadd.f32 0.0, %v5244
    %5246 = vmatmul.f32.gmra.mxu0 %v5119
    %v5247 = vpop.f32.mrf.mxu0
    %v5248 = vadd.f32 0.0, %v5247
    %5249 = vmatmul.f32.gmra.mxu0 %v5120
    %v5250 = vpop.f32.mrf.mxu0
    %v5251 = vadd.f32 0.0, %v5250
    %5252 = vmatmul.f32.gmra.mxu0 %v5121
    %v5253 = vpop.f32.mrf.mxu0
    %v5254 = vadd.f32 0.0, %v5253
    %5255 = vmatmul.f32.gmra.mxu0 %v5122
    %v5256 = vpop.f32.mrf.mxu0
    %v5257 = vadd.f32 0.0, %v5256
    %5258 = vmatmul.f32.gmra.mxu0 %v5123
    %v5259 = vpop.f32.mrf.mxu0
    %v5260 = vadd.f32 0.0, %v5259
    %5261 = vmatmul.f32.gmra.mxu0 %v5124
    %v5262 = vpop.f32.mrf.mxu0
    %v5263 = vadd.f32 0.0, %v5262
    %5264 = vmatmul.f32.gmra.mxu0 %v5125
    %v5265 = vpop.f32.mrf.mxu0
    %v5266 = vadd.f32 0.0, %v5265
    %5267 = vmatmul.f32.gmra.mxu0 %v5126
    %v5268 = vpop.f32.mrf.mxu0
    %v5269 = vadd.f32 0.0, %v5268
    %5270 = vmatmul.f32.gmra.mxu0 %v5127
    %v5271 = vpop.f32.mrf.mxu0
    %v5272 = vadd.f32 0.0, %v5271
    %5273 = vmatmul.f32.gmra.mxu0 %v5128
    %v5274 = vpop.f32.mrf.mxu0
    %v5275 = vadd.f32 0.0, %v5274
    %5276 = vmatmul.f32.gmra.mxu0 %v5129
    %v5277 = vpop.f32.mrf.mxu0
    %v5278 = vadd.f32 0.0, %v5277
    %5279 = vmatmul.f32.gmra.mxu0 %v5130
    %v5280 = vpop.f32.mrf.mxu0
    %v5281 = vadd.f32 0.0, %v5280
    %5282 = vmatmul.f32.gmra.mxu0 %v5131
    %v5283 = vpop.f32.mrf.mxu0
    %v5284 = vadd.f32 0.0, %v5283
    %5285 = vmatmul.f32.gmra.mxu0 %v5132
    %v5286 = vpop.f32.mrf.mxu0
    %v5287 = vadd.f32 0.0, %v5286
    %5288 = vmatmul.f32.gmra.mxu0 %v5133
    %v5289 = vpop.f32.mrf.mxu0
    %v5290 = vadd.f32 0.0, %v5289
    %5291 = vmatmul.f32.gmra.mxu0 %v5134
    %v5292 = vpop.f32.mrf.mxu0
    %v5293 = vadd.f32 0.0, %v5292
    %5294 = vmatmul.f32.gmra.mxu0 %v5135
    %v5295 = vpop.f32.mrf.mxu0
    %v5296 = vadd.f32 0.0, %v5295
    %5297 = vmatmul.f32.gmra.mxu0 %v5136
    %v5298 = vpop.f32.mrf.mxu0
    %v5299 = vadd.f32 0.0, %v5298
    %5300 = vmatmul.f32.gmra.mxu0 %v5137
    %v5301 = vpop.f32.mrf.mxu0
    %v5302 = vadd.f32 0.0, %v5301
    %5303 = vmatmul.f32.gmra.mxu0 %v5138
    %v5304 = vpop.f32.mrf.mxu0
    %v5305 = vadd.f32 0.0, %v5304
    %5306 = vmatmul.f32.gmra.mxu0 %v5139
    %v5307 = vpop.f32.mrf.mxu0
    %v5308 = vadd.f32 0.0, %v5307
    %5309 = vmatmul.f32.gmra.mxu0 %v5140
    %v5310 = vpop.f32.mrf.mxu0
    %v5311 = vadd.f32 0.0, %v5310
    %5312 = vmatmul.f32.gmra.mxu0 %v5141
    %v5313 = vpop.f32.mrf.mxu0
    %v5314 = vadd.f32 0.0, %v5313
    %5315 = vmatmul.f32.gmra.mxu0 %v5142
    %v5316 = vpop.f32.mrf.mxu0
    %v5317 = vadd.f32 0.0, %v5316
    %5318 = vmatmul.f32.gmra.mxu0 %v5143
    %v5319 = vpop.f32.mrf.mxu0
    %v5320 = vadd.f32 0.0, %v5319
    %5321 = vmatmul.f32.gmra.mxu0 %v5144
    %v5322 = vpop.f32.mrf.mxu0
    %v5323 = vadd.f32 0.0, %v5322
    %5324 = vmatmul.f32.gmra.mxu0 %v5145
    %v5325 = vpop.f32.mrf.mxu0
    %v5326 = vadd.f32 0.0, %v5325
    %5327 = vmatmul.f32.gmra.mxu0 %v5146
    %v5328 = vpop.f32.mrf.mxu0
    %v5329 = vadd.f32 0.0, %v5328
    %5330 = vmatmul.f32.gmra.mxu0 %v5147
    %v5331 = vpop.f32.mrf.mxu0
    %v5332 = vadd.f32 0.0, %v5331
    %5333 = vmatmul.f32.gmra.mxu0 %v5148
    %v5334 = vpop.f32.mrf.mxu0
    %v5335 = vadd.f32 0.0, %v5334
    %5336 = vmatmul.f32.gmra.mxu0 %v5149
    %v5337 = vpop.f32.mrf.mxu0
    %v5338 = vadd.f32 0.0, %v5337
    %5339 = vmatmul.f32.gmra.mxu0 %v5150
    %v5340 = vpop.f32.mrf.mxu0
    %v5341 = vadd.f32 0.0, %v5340
    %5342 = vmatmul.f32.gmra.mxu0 %v5151
    %v5343 = vpop.f32.mrf.mxu0
    %v5344 = vadd.f32 0.0, %v5343
    %5345 = vmatmul.f32.gmra.mxu0 %v5152
    %v5346 = vpop.f32.mrf.mxu0
    %v5347 = vadd.f32 0.0, %v5346
    %5348 = vmatmul.f32.gmra.mxu0 %v5153
    %v5349 = vpop.f32.mrf.mxu0
    %v5350 = vadd.f32 0.0, %v5349
    %5351 = vmatmul.f32.gmra.mxu0 %v5154
    %v5352 = vpop.f32.mrf.mxu0
    %v5353 = vadd.f32 0.0, %v5352
    %5354 = vmatmul.f32.gmra.mxu0 %v5155
    %v5355 = vpop.f32.mrf.mxu0
    %v5356 = vadd.f32 0.0, %v5355
    %5357 = vmatmul.f32.gmra.mxu0 %v5156
    %v5358 = vpop.f32.mrf.mxu0
    %v5359 = vadd.f32 0.0, %v5358
    %5360 = vmatmul.f32.gmra.mxu0 %v5157
    %v5361 = vpop.f32.mrf.mxu0
    %v5362 = vadd.f32 0.0, %v5361
    %5363 = vmatmul.f32.gmra.mxu0 %v5158
    %v5364 = vpop.f32.mrf.mxu0
    %v5365 = vadd.f32 0.0, %v5364
    %5366 = vmatmul.f32.gmra.mxu0 %v5159
    %v5367 = vpop.f32.mrf.mxu0
    %v5368 = vadd.f32 0.0, %v5367
    %5369 = vmatmul.f32.gmra.mxu0 %v5160
    %v5370 = vpop.f32.mrf.mxu0
    %v5371 = vadd.f32 0.0, %v5370
    %5372 = vmatmul.f32.gmra.mxu0 %v5161
    %v5373 = vpop.f32.mrf.mxu0
    %v5374 = vadd.f32 0.0, %v5373
    %5375 = vmatmul.f32.gmra.mxu0 %v5162
    %v5376 = vpop.f32.mrf.mxu0
    %v5377 = vadd.f32 0.0, %v5376
    %5378 = vmatmul.f32.gmra.mxu0 %v5163
    %v5379 = vpop.f32.mrf.mxu0
    %v5380 = vadd.f32 0.0, %v5379
    %5381 = vmatmul.f32.gmra.mxu0 %v5164
    %v5382 = vpop.f32.mrf.mxu0
    %v5383 = vadd.f32 0.0, %v5382
    %5384 = vmatmul.f32.gmra.mxu0 %v5165
    %v5385 = vpop.f32.mrf.mxu0
    %v5386 = vadd.f32 0.0, %v5385
    %5387 = vmatmul.f32.gmra.mxu0 %v5166
    %v5388 = vpop.f32.mrf.mxu0
    %v5389 = vadd.f32 0.0, %v5388
    %5390 = vmatmul.f32.gmra.mxu0 %v5167
    %v5391 = vpop.f32.mrf.mxu0
    %v5392 = vadd.f32 0.0, %v5391
    %5393 = vdwg.mxu0
    %v5394 = vadd.f32 %v5040, %v5203
    %v5395 = vadd.f32 %v5041, %v5206
    %v5396 = vadd.f32 %v5042, %v5209
    %v5397 = vadd.f32 %v5043, %v5212
    %v5398 = vadd.f32 %v5044, %v5215
    %v5399 = vadd.f32 %v5045, %v5218
    %v5400 = vadd.f32 %v5046, %v5221
    %v5401 = vadd.f32 %v5047, %v5224
    %v5402 = vadd.f32 %v5048, %v5227
    %v5403 = vadd.f32 %v5049, %v5230
    %v5404 = vadd.f32 %v5050, %v5233
    %v5405 = vadd.f32 %v5051, %v5236
    %v5406 = vadd.f32 %v5052, %v5239
    %v5407 = vadd.f32 %v5053, %v5242
    %v5408 = vadd.f32 %v5054, %v5245
    %v5409 = vadd.f32 %v5055, %v5248
    %v5410 = vadd.f32 %v5056, %v5251
    %v5411 = vadd.f32 %v5057, %v5254
    %v5412 = vadd.f32 %v5058, %v5257
    %v5413 = vadd.f32 %v5059, %v5260
    %v5414 = vadd.f32 %v5060, %v5263
    %v5415 = vadd.f32 %v5061, %v5266
    %v5416 = vadd.f32 %v5062, %v5269
    %v5417 = vadd.f32 %v5063, %v5272
    %v5418 = vadd.f32 %v5064, %v5275
    %v5419 = vadd.f32 %v5065, %v5278
    %v5420 = vadd.f32 %v5066, %v5281
    %v5421 = vadd.f32 %v5067, %v5284
    %v5422 = vadd.f32 %v5068, %v5287
    %v5423 = vadd.f32 %v5069, %v5290
    %v5424 = vadd.f32 %v5070, %v5293
    %v5425 = vadd.f32 %v5071, %v5296
    %v5426 = vadd.f32 %v5072, %v5299
    %v5427 = vadd.f32 %v5073, %v5302
    %v5428 = vadd.f32 %v5074, %v5305
    %v5429 = vadd.f32 %v5075, %v5308
    %v5430 = vadd.f32 %v5076, %v5311
    %v5431 = vadd.f32 %v5077, %v5314
    %v5432 = vadd.f32 %v5078, %v5317
    %v5433 = vadd.f32 %v5079, %v5320
    %v5434 = vadd.f32 %v5080, %v5323
    %v5435 = vadd.f32 %v5081, %v5326
    %v5436 = vadd.f32 %v5082, %v5329
    %v5437 = vadd.f32 %v5083, %v5332
    %v5438 = vadd.f32 %v5084, %v5335
    %v5439 = vadd.f32 %v5085, %v5338
    %v5440 = vadd.f32 %v5086, %v5341
    %v5441 = vadd.f32 %v5087, %v5344
    %v5442 = vadd.f32 %v5088, %v5347
    %v5443 = vadd.f32 %v5089, %v5350
    %v5444 = vadd.f32 %v5090, %v5353
    %v5445 = vadd.f32 %v5091, %v5356
    %v5446 = vadd.f32 %v5092, %v5359
    %v5447 = vadd.f32 %v5093, %v5362
    %v5448 = vadd.f32 %v5094, %v5365
    %v5449 = vadd.f32 %v5095, %v5368
    %v5450 = vadd.f32 %v5096, %v5371
    %v5451 = vadd.f32 %v5097, %v5374
    %v5452 = vadd.f32 %v5098, %v5377
    %v5453 = vadd.f32 %v5099, %v5380
    %v5454 = vadd.f32 %v5100, %v5383
    %v5455 = vadd.f32 %v5101, %v5386
    %v5456 = vadd.f32 %v5102, %v5389
    %v5457 = vadd.f32 %v5103, %v5392
    %v5458 = vld [vmem:[%s3688 + $0x2] sm:$0xff]
    %v5459 = vld [vmem:[%s3688 + $0xa] sm:$0xff]
    %v5460 = vld [vmem:[%s3688 + $0x1a] sm:$0xff]
    %v5461 = vld [vmem:[%s3688 + $0x22] sm:$0xff]
    %v5462 = vld [vmem:[%s3688 + $0x32] sm:$0xff]
    %v5463 = vld [vmem:[%s3688 + $0x3a] sm:$0xff]
    %v5464 = vld [vmem:[%s3688 + $0x4a] sm:$0xff]
    %v5465 = vld [vmem:[%s3688 + $0x52] sm:$0xff]
    %v5466 = vld [vmem:[%s3688 + $0x62] sm:$0xff]
    %v5467 = vld [vmem:[%s3688 + $0x6a] sm:$0xff]
    %v5468 = vld [vmem:[%s3688 + $0x7a] sm:$0xff]
    %v5469 = vld [vmem:[%s3688 + $0x82] sm:$0xff]
    %v5470 = vld [vmem:[%s3688 + $0x92] sm:$0xff]
    %v5471 = vld [vmem:[%s3688 + $0x9a] sm:$0xff]
    %v5472 = vld [vmem:[%s3688 + $0xaa] sm:$0xff]
    %v5473 = vld [vmem:[%s3688 + $0xb2] sm:$0xff]
    %v5474 = vld [vmem:[%s3688 + $0xc2] sm:$0xff]
    %v5475 = vld [vmem:[%s3688 + $0xca] sm:$0xff]
    %v5476 = vld [vmem:[%s3688 + $0xda] sm:$0xff]
    %v5477 = vld [vmem:[%s3688 + $0xe2] sm:$0xff]
    %v5478 = vld [vmem:[%s3688 + $0xf2] sm:$0xff]
    %v5479 = vld [vmem:[%s3688 + $0xfa] sm:$0xff]
    %v5480 = vld [vmem:[%s3688 + $0x10a] sm:$0xff]
    %v5481 = vld [vmem:[%s3688 + $0x112] sm:$0xff]
    %v5482 = vld [vmem:[%s3688 + $0x122] sm:$0xff]
    %v5483 = vld [vmem:[%s3688 + $0x12a] sm:$0xff]
    %v5484 = vld [vmem:[%s3688 + $0x13a] sm:$0xff]
    %v5485 = vld [vmem:[%s3688 + $0x142] sm:$0xff]
    %v5486 = vld [vmem:[%s3688 + $0x152] sm:$0xff]
    %v5487 = vld [vmem:[%s3688 + $0x15a] sm:$0xff]
    %v5488 = vld [vmem:[%s3688 + $0x16a] sm:$0xff]
    %v5489 = vld [vmem:[%s3688 + $0x172] sm:$0xff]
    %v5490 = vld [vmem:[%s3688 + $0x1b2] sm:$0xff]
    %v5491 = vld [vmem:[%s3688 + $0x1ba] sm:$0xff]
    %v5492 = vld [vmem:[%s3688 + $0x1ca] sm:$0xff]
    %v5493 = vld [vmem:[%s3688 + $0x1d2] sm:$0xff]
    %v5494 = vld [vmem:[%s3688 + $0x1e2] sm:$0xff]
    %v5495 = vld [vmem:[%s3688 + $0x1ea] sm:$0xff]
    %v5496 = vld [vmem:[%s3688 + $0x1fa] sm:$0xff]
    %v5497 = vld [vmem:[%s3688 + $0x202] sm:$0xff]
    %v5498 = vld [vmem:[%s3688 + $0x212] sm:$0xff]
    %v5499 = vld [vmem:[%s3688 + $0x21a] sm:$0xff]
    %v5500 = vld [vmem:[%s3688 + $0x22a] sm:$0xff]
    %v5501 = vld [vmem:[%s3688 + $0x232] sm:$0xff]
    %v5502 = vld [vmem:[%s3688 + $0x242] sm:$0xff]
    %v5503 = vld [vmem:[%s3688 + $0x24a] sm:$0xff]
    %v5504 = vld [vmem:[%s3688 + $0x25a] sm:$0xff]
    %v5505 = vld [vmem:[%s3688 + $0x262] sm:$0xff]
    %v5506 = vld [vmem:[%s3688 + $0x272] sm:$0xff]
    %v5507 = vld [vmem:[%s3688 + $0x27a] sm:$0xff]
    %v5508 = vld [vmem:[%s3688 + $0x28a] sm:$0xff]
    %v5509 = vld [vmem:[%s3688 + $0x292] sm:$0xff]
    %v5510 = vld [vmem:[%s3688 + $0x2a2] sm:$0xff]
    %v5511 = vld [vmem:[%s3688 + $0x2aa] sm:$0xff]
    %v5512 = vld [vmem:[%s3688 + $0x2ba] sm:$0xff]
    %v5513 = vld [vmem:[%s3688 + $0x2c2] sm:$0xff]
    %v5514 = vld [vmem:[%s3688 + $0x2d2] sm:$0xff]
    %v5515 = vld [vmem:[%s3688 + $0x2da] sm:$0xff]
    %v5516 = vld [vmem:[%s3688 + $0x2ea] sm:$0xff]
    %v5517 = vld [vmem:[%s3688 + $0x2f2] sm:$0xff]
    %v5518 = vld [vmem:[%s3688 + $0x302] sm:$0xff]
    %v5519 = vld [vmem:[%s3688 + $0x30a] sm:$0xff]
    %v5520 = vld [vmem:[%s3688 + $0x31a] sm:$0xff]
    %v5521 = vld [vmem:[%s3688 + $0x322] sm:$0xff]
    %s5522 = scalar_lea.vmem [#allocation6], 640
    %v5523 = vld [vmem:[%s5522] sm:$0xff]
    %v5524 = vld [vmem:[%s5522 + $0x8] sm:$0xff]
    %v5525 = vld [vmem:[%s5522 + $0x10] sm:$0xff]
    %v5526 = vld [vmem:[%s5522 + $0x18] sm:$0xff]
    %v5527 = vld [vmem:[%s5522 + $0x20] sm:$0xff]
    %v5528 = vld [vmem:[%s5522 + $0x28] sm:$0xff]
    %v5529 = vld [vmem:[%s5522 + $0x30] sm:$0xff]
    %v5530 = vld [vmem:[%s5522 + $0x38] sm:$0xff]
    %v5531 = vld [vmem:[%s5522 + $0x40] sm:$0xff]
    %v5532 = vld [vmem:[%s5522 + $0x48] sm:$0xff]
    %v5533 = vld [vmem:[%s5522 + $0x50] sm:$0xff]
    %v5534 = vld [vmem:[%s5522 + $0x58] sm:$0xff]
    %v5535 = vld [vmem:[%s5522 + $0x60] sm:$0xff]
    %v5536 = vld [vmem:[%s5522 + $0x68] sm:$0xff]
    %v5537 = vld [vmem:[%s5522 + $0x70] sm:$0xff]
    %v5538 = vld [vmem:[%s5522 + $0x78] sm:$0xff]
    %5539 = vmatpush.msra.mxu0 %v5538
    %5540 = vmatpush.msra.mxu0 %v5537
    %5541 = vmatpush.msra.mxu0 %v5536
    %5542 = vmatpush.msra.mxu0 %v5535
    %5543 = vmatpush.msra.mxu0 %v5534
    %5544 = vmatpush.msra.mxu0 %v5533
    %5545 = vmatpush.msra.mxu0 %v5532
    %5546 = vmatpush.msra.mxu0 %v5531
    %5547 = vmatpush.msra.mxu0 %v5530
    %5548 = vmatpush.msra.mxu0 %v5529
    %5549 = vmatpush.msra.mxu0 %v5528
    %5550 = vmatpush.msra.mxu0 %v5527
    %5551 = vmatpush.msra.mxu0 %v5526
    %5552 = vmatpush.msra.mxu0 %v5525
    %5553 = vmatpush.msra.mxu0 %v5524
    %5554 = vmatpush.msra.mxu0 %v5523
    %5555 = vmatmul.f32.gmra.mxu0 %v5458
    %v5556 = vpop.f32.mrf.mxu0
    %v5557 = vadd.f32 0.0, %v5556
    %5558 = vmatmul.f32.gmra.mxu0 %v5459
    %v5559 = vpop.f32.mrf.mxu0
    %v5560 = vadd.f32 0.0, %v5559
    %5561 = vmatmul.f32.gmra.mxu0 %v5460
    %v5562 = vpop.f32.mrf.mxu0
    %v5563 = vadd.f32 0.0, %v5562
    %5564 = vmatmul.f32.gmra.mxu0 %v5461
    %v5565 = vpop.f32.mrf.mxu0
    %v5566 = vadd.f32 0.0, %v5565
    %5567 = vmatmul.f32.gmra.mxu0 %v5462
    %v5568 = vpop.f32.mrf.mxu0
    %v5569 = vadd.f32 0.0, %v5568
    %5570 = vmatmul.f32.gmra.mxu0 %v5463
    %v5571 = vpop.f32.mrf.mxu0
    %v5572 = vadd.f32 0.0, %v5571
    %5573 = vmatmul.f32.gmra.mxu0 %v5464
    %v5574 = vpop.f32.mrf.mxu0
    %v5575 = vadd.f32 0.0, %v5574
    %5576 = vmatmul.f32.gmra.mxu0 %v5465
    %v5577 = vpop.f32.mrf.mxu0
    %v5578 = vadd.f32 0.0, %v5577
    %5579 = vmatmul.f32.gmra.mxu0 %v5466
    %v5580 = vpop.f32.mrf.mxu0
    %v5581 = vadd.f32 0.0, %v5580
    %5582 = vmatmul.f32.gmra.mxu0 %v5467
    %v5583 = vpop.f32.mrf.mxu0
    %v5584 = vadd.f32 0.0, %v5583
    %5585 = vmatmul.f32.gmra.mxu0 %v5468
    %v5586 = vpop.f32.mrf.mxu0
    %v5587 = vadd.f32 0.0, %v5586
    %5588 = vmatmul.f32.gmra.mxu0 %v5469
    %v5589 = vpop.f32.mrf.mxu0
    %v5590 = vadd.f32 0.0, %v5589
    %5591 = vmatmul.f32.gmra.mxu0 %v5470
    %v5592 = vpop.f32.mrf.mxu0
    %v5593 = vadd.f32 0.0, %v5592
    %5594 = vmatmul.f32.gmra.mxu0 %v5471
    %v5595 = vpop.f32.mrf.mxu0
    %v5596 = vadd.f32 0.0, %v5595
    %5597 = vmatmul.f32.gmra.mxu0 %v5472
    %v5598 = vpop.f32.mrf.mxu0
    %v5599 = vadd.f32 0.0, %v5598
    %5600 = vmatmul.f32.gmra.mxu0 %v5473
    %v5601 = vpop.f32.mrf.mxu0
    %v5602 = vadd.f32 0.0, %v5601
    %5603 = vmatmul.f32.gmra.mxu0 %v5474
    %v5604 = vpop.f32.mrf.mxu0
    %v5605 = vadd.f32 0.0, %v5604
    %5606 = vmatmul.f32.gmra.mxu0 %v5475
    %v5607 = vpop.f32.mrf.mxu0
    %v5608 = vadd.f32 0.0, %v5607
    %5609 = vmatmul.f32.gmra.mxu0 %v5476
    %v5610 = vpop.f32.mrf.mxu0
    %v5611 = vadd.f32 0.0, %v5610
    %5612 = vmatmul.f32.gmra.mxu0 %v5477
    %v5613 = vpop.f32.mrf.mxu0
    %v5614 = vadd.f32 0.0, %v5613
    %5615 = vmatmul.f32.gmra.mxu0 %v5478
    %v5616 = vpop.f32.mrf.mxu0
    %v5617 = vadd.f32 0.0, %v5616
    %5618 = vmatmul.f32.gmra.mxu0 %v5479
    %v5619 = vpop.f32.mrf.mxu0
    %v5620 = vadd.f32 0.0, %v5619
    %5621 = vmatmul.f32.gmra.mxu0 %v5480
    %v5622 = vpop.f32.mrf.mxu0
    %v5623 = vadd.f32 0.0, %v5622
    %5624 = vmatmul.f32.gmra.mxu0 %v5481
    %v5625 = vpop.f32.mrf.mxu0
    %v5626 = vadd.f32 0.0, %v5625
    %5627 = vmatmul.f32.gmra.mxu0 %v5482
    %v5628 = vpop.f32.mrf.mxu0
    %v5629 = vadd.f32 0.0, %v5628
    %5630 = vmatmul.f32.gmra.mxu0 %v5483
    %v5631 = vpop.f32.mrf.mxu0
    %v5632 = vadd.f32 0.0, %v5631
    %5633 = vmatmul.f32.gmra.mxu0 %v5484
    %v5634 = vpop.f32.mrf.mxu0
    %v5635 = vadd.f32 0.0, %v5634
    %5636 = vmatmul.f32.gmra.mxu0 %v5485
    %v5637 = vpop.f32.mrf.mxu0
    %v5638 = vadd.f32 0.0, %v5637
    %5639 = vmatmul.f32.gmra.mxu0 %v5486
    %v5640 = vpop.f32.mrf.mxu0
    %v5641 = vadd.f32 0.0, %v5640
    %5642 = vmatmul.f32.gmra.mxu0 %v5487
    %v5643 = vpop.f32.mrf.mxu0
    %v5644 = vadd.f32 0.0, %v5643
    %5645 = vmatmul.f32.gmra.mxu0 %v5488
    %v5646 = vpop.f32.mrf.mxu0
    %v5647 = vadd.f32 0.0, %v5646
    %5648 = vmatmul.f32.gmra.mxu0 %v5489
    %v5649 = vpop.f32.mrf.mxu0
    %v5650 = vadd.f32 0.0, %v5649
    %5651 = vmatmul.f32.gmra.mxu0 %v5490
    %v5652 = vpop.f32.mrf.mxu0
    %v5653 = vadd.f32 0.0, %v5652
    %5654 = vmatmul.f32.gmra.mxu0 %v5491
    %v5655 = vpop.f32.mrf.mxu0
    %v5656 = vadd.f32 0.0, %v5655
    %5657 = vmatmul.f32.gmra.mxu0 %v5492
    %v5658 = vpop.f32.mrf.mxu0
    %v5659 = vadd.f32 0.0, %v5658
    %5660 = vmatmul.f32.gmra.mxu0 %v5493
    %v5661 = vpop.f32.mrf.mxu0
    %v5662 = vadd.f32 0.0, %v5661
    %5663 = vmatmul.f32.gmra.mxu0 %v5494
    %v5664 = vpop.f32.mrf.mxu0
    %v5665 = vadd.f32 0.0, %v5664
    %5666 = vmatmul.f32.gmra.mxu0 %v5495
    %v5667 = vpop.f32.mrf.mxu0
    %v5668 = vadd.f32 0.0, %v5667
    %5669 = vmatmul.f32.gmra.mxu0 %v5496
    %v5670 = vpop.f32.mrf.mxu0
    %v5671 = vadd.f32 0.0, %v5670
    %5672 = vmatmul.f32.gmra.mxu0 %v5497
    %v5673 = vpop.f32.mrf.mxu0
    %v5674 = vadd.f32 0.0, %v5673
    %5675 = vmatmul.f32.gmra.mxu0 %v5498
    %v5676 = vpop.f32.mrf.mxu0
    %v5677 = vadd.f32 0.0, %v5676
    %5678 = vmatmul.f32.gmra.mxu0 %v5499
    %v5679 = vpop.f32.mrf.mxu0
    %v5680 = vadd.f32 0.0, %v5679
    %5681 = vmatmul.f32.gmra.mxu0 %v5500
    %v5682 = vpop.f32.mrf.mxu0
    %v5683 = vadd.f32 0.0, %v5682
    %5684 = vmatmul.f32.gmra.mxu0 %v5501
    %v5685 = vpop.f32.mrf.mxu0
    %v5686 = vadd.f32 0.0, %v5685
    %5687 = vmatmul.f32.gmra.mxu0 %v5502
    %v5688 = vpop.f32.mrf.mxu0
    %v5689 = vadd.f32 0.0, %v5688
    %5690 = vmatmul.f32.gmra.mxu0 %v5503
    %v5691 = vpop.f32.mrf.mxu0
    %v5692 = vadd.f32 0.0, %v5691
    %5693 = vmatmul.f32.gmra.mxu0 %v5504
    %v5694 = vpop.f32.mrf.mxu0
    %v5695 = vadd.f32 0.0, %v5694
    %5696 = vmatmul.f32.gmra.mxu0 %v5505
    %v5697 = vpop.f32.mrf.mxu0
    %v5698 = vadd.f32 0.0, %v5697
    %5699 = vmatmul.f32.gmra.mxu0 %v5506
    %v5700 = vpop.f32.mrf.mxu0
    %v5701 = vadd.f32 0.0, %v5700
    %5702 = vmatmul.f32.gmra.mxu0 %v5507
    %v5703 = vpop.f32.mrf.mxu0
    %v5704 = vadd.f32 0.0, %v5703
    %5705 = vmatmul.f32.gmra.mxu0 %v5508
    %v5706 = vpop.f32.mrf.mxu0
    %v5707 = vadd.f32 0.0, %v5706
    %5708 = vmatmul.f32.gmra.mxu0 %v5509
    %v5709 = vpop.f32.mrf.mxu0
    %v5710 = vadd.f32 0.0, %v5709
    %5711 = vmatmul.f32.gmra.mxu0 %v5510
    %v5712 = vpop.f32.mrf.mxu0
    %v5713 = vadd.f32 0.0, %v5712
    %5714 = vmatmul.f32.gmra.mxu0 %v5511
    %v5715 = vpop.f32.mrf.mxu0
    %v5716 = vadd.f32 0.0, %v5715
    %5717 = vmatmul.f32.gmra.mxu0 %v5512
    %v5718 = vpop.f32.mrf.mxu0
    %v5719 = vadd.f32 0.0, %v5718
    %5720 = vmatmul.f32.gmra.mxu0 %v5513
    %v5721 = vpop.f32.mrf.mxu0
    %v5722 = vadd.f32 0.0, %v5721
    %5723 = vmatmul.f32.gmra.mxu0 %v5514
    %v5724 = vpop.f32.mrf.mxu0
    %v5725 = vadd.f32 0.0, %v5724
    %5726 = vmatmul.f32.gmra.mxu0 %v5515
    %v5727 = vpop.f32.mrf.mxu0
    %v5728 = vadd.f32 0.0, %v5727
    %5729 = vmatmul.f32.gmra.mxu0 %v5516
    %v5730 = vpop.f32.mrf.mxu0
    %v5731 = vadd.f32 0.0, %v5730
    %5732 = vmatmul.f32.gmra.mxu0 %v5517
    %v5733 = vpop.f32.mrf.mxu0
    %v5734 = vadd.f32 0.0, %v5733
    %5735 = vmatmul.f32.gmra.mxu0 %v5518
    %v5736 = vpop.f32.mrf.mxu0
    %v5737 = vadd.f32 0.0, %v5736
    %5738 = vmatmul.f32.gmra.mxu0 %v5519
    %v5739 = vpop.f32.mrf.mxu0
    %v5740 = vadd.f32 0.0, %v5739
    %5741 = vmatmul.f32.gmra.mxu0 %v5520
    %v5742 = vpop.f32.mrf.mxu0
    %v5743 = vadd.f32 0.0, %v5742
    %5744 = vmatmul.f32.gmra.mxu0 %v5521
    %v5745 = vpop.f32.mrf.mxu0
    %v5746 = vadd.f32 0.0, %v5745
    %5747 = vdwg.mxu0
    %v5748 = vadd.f32 %v5394, %v5557
    %v5749 = vadd.f32 %v5395, %v5560
    %v5750 = vadd.f32 %v5396, %v5563
    %v5751 = vadd.f32 %v5397, %v5566
    %v5752 = vadd.f32 %v5398, %v5569
    %v5753 = vadd.f32 %v5399, %v5572
    %v5754 = vadd.f32 %v5400, %v5575
    %v5755 = vadd.f32 %v5401, %v5578
    %v5756 = vadd.f32 %v5402, %v5581
    %v5757 = vadd.f32 %v5403, %v5584
    %v5758 = vadd.f32 %v5404, %v5587
    %v5759 = vadd.f32 %v5405, %v5590
    %v5760 = vadd.f32 %v5406, %v5593
    %v5761 = vadd.f32 %v5407, %v5596
    %v5762 = vadd.f32 %v5408, %v5599
    %v5763 = vadd.f32 %v5409, %v5602
    %v5764 = vadd.f32 %v5410, %v5605
    %v5765 = vadd.f32 %v5411, %v5608
    %v5766 = vadd.f32 %v5412, %v5611
    %v5767 = vadd.f32 %v5413, %v5614
    %v5768 = vadd.f32 %v5414, %v5617
    %v5769 = vadd.f32 %v5415, %v5620
    %v5770 = vadd.f32 %v5416, %v5623
    %v5771 = vadd.f32 %v5417, %v5626
    %v5772 = vadd.f32 %v5418, %v5629
    %v5773 = vadd.f32 %v5419, %v5632
    %v5774 = vadd.f32 %v5420, %v5635
    %v5775 = vadd.f32 %v5421, %v5638
    %v5776 = vadd.f32 %v5422, %v5641
    %v5777 = vadd.f32 %v5423, %v5644
    %v5778 = vadd.f32 %v5424, %v5647
    %v5779 = vadd.f32 %v5425, %v5650
    %v5780 = vadd.f32 %v5426, %v5653
    %v5781 = vadd.f32 %v5427, %v5656
    %v5782 = vadd.f32 %v5428, %v5659
    %v5783 = vadd.f32 %v5429, %v5662
    %v5784 = vadd.f32 %v5430, %v5665
    %v5785 = vadd.f32 %v5431, %v5668
    %v5786 = vadd.f32 %v5432, %v5671
    %v5787 = vadd.f32 %v5433, %v5674
    %v5788 = vadd.f32 %v5434, %v5677
    %v5789 = vadd.f32 %v5435, %v5680
    %v5790 = vadd.f32 %v5436, %v5683
    %v5791 = vadd.f32 %v5437, %v5686
    %v5792 = vadd.f32 %v5438, %v5689
    %v5793 = vadd.f32 %v5439, %v5692
    %v5794 = vadd.f32 %v5440, %v5695
    %v5795 = vadd.f32 %v5441, %v5698
    %v5796 = vadd.f32 %v5442, %v5701
    %v5797 = vadd.f32 %v5443, %v5704
    %v5798 = vadd.f32 %v5444, %v5707
    %v5799 = vadd.f32 %v5445, %v5710
    %v5800 = vadd.f32 %v5446, %v5713
    %v5801 = vadd.f32 %v5447, %v5716
    %v5802 = vadd.f32 %v5448, %v5719
    %v5803 = vadd.f32 %v5449, %v5722
    %v5804 = vadd.f32 %v5450, %v5725
    %v5805 = vadd.f32 %v5451, %v5728
    %v5806 = vadd.f32 %v5452, %v5731
    %v5807 = vadd.f32 %v5453, %v5734
    %v5808 = vadd.f32 %v5454, %v5737
    %v5809 = vadd.f32 %v5455, %v5740
    %v5810 = vadd.f32 %v5456, %v5743
    %v5811 = vadd.f32 %v5457, %v5746
    %s5812 = scalar_lea.vmem [#allocation2], 48
    %v5813 = vld [vmem:[%s5812] sm:$0xff]
    %v5814 = vld [vmem:[%s5812 + $0x8] sm:$0xff]
    %v5815 = vld [vmem:[%s5812 + $0x18] sm:$0xff]
    %v5816 = vld [vmem:[%s5812 + $0x20] sm:$0xff]
    %v5817 = vld [vmem:[%s5812 + $0x30] sm:$0xff]
    %v5818 = vld [vmem:[%s5812 + $0x38] sm:$0xff]
    %v5819 = vld [vmem:[%s5812 + $0x48] sm:$0xff]
    %v5820 = vld [vmem:[%s5812 + $0x50] sm:$0xff]
    %v5821 = vld [vmem:[%s5812 + $0x60] sm:$0xff]
    %v5822 = vld [vmem:[%s5812 + $0x68] sm:$0xff]
    %v5823 = vld [vmem:[%s5812 + $0x78] sm:$0xff]
    %v5824 = vld [vmem:[%s5812 + $0x80] sm:$0xff]
    %v5825 = vld [vmem:[%s5812 + $0x90] sm:$0xff]
    %v5826 = vld [vmem:[%s5812 + $0x98] sm:$0xff]
    %v5827 = vld [vmem:[%s5812 + $0xa8] sm:$0xff]
    %v5828 = vld [vmem:[%s5812 + $0xb0] sm:$0xff]
    %v5829 = vld [vmem:[%s5812 + $0xc0] sm:$0xff]
    %v5830 = vld [vmem:[%s5812 + $0xc8] sm:$0xff]
    %v5831 = vld [vmem:[%s5812 + $0xd8] sm:$0xff]
    %v5832 = vld [vmem:[%s5812 + $0xe0] sm:$0xff]
    %v5833 = vld [vmem:[%s5812 + $0xf0] sm:$0xff]
    %v5834 = vld [vmem:[%s5812 + $0xf8] sm:$0xff]
    %v5835 = vld [vmem:[%s5812 + $0x108] sm:$0xff]
    %v5836 = vld [vmem:[%s5812 + $0x110] sm:$0xff]
    %v5837 = vld [vmem:[%s5812 + $0x120] sm:$0xff]
    %v5838 = vld [vmem:[%s5812 + $0x128] sm:$0xff]
    %v5839 = vld [vmem:[%s5812 + $0x138] sm:$0xff]
    %v5840 = vld [vmem:[%s5812 + $0x140] sm:$0xff]
    %v5841 = vld [vmem:[%s5812 + $0x150] sm:$0xff]
    %v5842 = vld [vmem:[%s5812 + $0x158] sm:$0xff]
    %v5843 = vld [vmem:[%s5812 + $0x168] sm:$0xff]
    %v5844 = vld [vmem:[%s5812 + $0x170] sm:$0xff]
    %v5845 = vld [vmem:[%s5812 + $0x1b0] sm:$0xff]
    %v5846 = vld [vmem:[%s5812 + $0x1b8] sm:$0xff]
    %v5847 = vld [vmem:[%s5812 + $0x1c8] sm:$0xff]
    %v5848 = vld [vmem:[%s5812 + $0x1d0] sm:$0xff]
    %v5849 = vld [vmem:[%s5812 + $0x1e0] sm:$0xff]
    %v5850 = vld [vmem:[%s5812 + $0x1e8] sm:$0xff]
    %v5851 = vld [vmem:[%s5812 + $0x1f8] sm:$0xff]
    %v5852 = vld [vmem:[%s5812 + $0x200] sm:$0xff]
    %v5853 = vld [vmem:[%s5812 + $0x210] sm:$0xff]
    %v5854 = vld [vmem:[%s5812 + $0x218] sm:$0xff]
    %v5855 = vld [vmem:[%s5812 + $0x228] sm:$0xff]
    %v5856 = vld [vmem:[%s5812 + $0x230] sm:$0xff]
    %v5857 = vld [vmem:[%s5812 + $0x240] sm:$0xff]
    %v5858 = vld [vmem:[%s5812 + $0x248] sm:$0xff]
    %v5859 = vld [vmem:[%s5812 + $0x258] sm:$0xff]
    %v5860 = vld [vmem:[%s5812 + $0x260] sm:$0xff]
    %v5861 = vld [vmem:[%s5812 + $0x270] sm:$0xff]
    %v5862 = vld [vmem:[%s5812 + $0x278] sm:$0xff]
    %v5863 = vld [vmem:[%s5812 + $0x288] sm:$0xff]
    %v5864 = vld [vmem:[%s5812 + $0x290] sm:$0xff]
    %v5865 = vld [vmem:[%s5812 + $0x2a0] sm:$0xff]
    %v5866 = vld [vmem:[%s5812 + $0x2a8] sm:$0xff]
    %v5867 = vld [vmem:[%s5812 + $0x2b8] sm:$0xff]
    %v5868 = vld [vmem:[%s5812 + $0x2c0] sm:$0xff]
    %v5869 = vld [vmem:[%s5812 + $0x2d0] sm:$0xff]
    %v5870 = vld [vmem:[%s5812 + $0x2d8] sm:$0xff]
    %v5871 = vld [vmem:[%s5812 + $0x2e8] sm:$0xff]
    %v5872 = vld [vmem:[%s5812 + $0x2f0] sm:$0xff]
    %v5873 = vld [vmem:[%s5812 + $0x300] sm:$0xff]
    %v5874 = vld [vmem:[%s5812 + $0x308] sm:$0xff]
    %v5875 = vld [vmem:[%s5812 + $0x318] sm:$0xff]
    %v5876 = vld [vmem:[%s5812 + $0x320] sm:$0xff]
    %s5877 = scalar_lea.vmem [#allocation6], 768
    %v5878 = vld [vmem:[%s5877] sm:$0xff]
    %v5879 = vld [vmem:[%s5877 + $0x8] sm:$0xff]
    %v5880 = vld [vmem:[%s5877 + $0x10] sm:$0xff]
    %v5881 = vld [vmem:[%s5877 + $0x18] sm:$0xff]
    %v5882 = vld [vmem:[%s5877 + $0x20] sm:$0xff]
    %v5883 = vld [vmem:[%s5877 + $0x28] sm:$0xff]
    %v5884 = vld [vmem:[%s5877 + $0x30] sm:$0xff]
    %v5885 = vld [vmem:[%s5877 + $0x38] sm:$0xff]
    %v5886 = vld [vmem:[%s5877 + $0x40] sm:$0xff]
    %v5887 = vld [vmem:[%s5877 + $0x48] sm:$0xff]
    %v5888 = vld [vmem:[%s5877 + $0x50] sm:$0xff]
    %v5889 = vld [vmem:[%s5877 + $0x58] sm:$0xff]
    %v5890 = vld [vmem:[%s5877 + $0x60] sm:$0xff]
    %v5891 = vld [vmem:[%s5877 + $0x68] sm:$0xff]
    %v5892 = vld [vmem:[%s5877 + $0x70] sm:$0xff]
    %v5893 = vld [vmem:[%s5877 + $0x78] sm:$0xff]
    %5894 = vmatpush.msra.mxu0 %v5893
    %5895 = vmatpush.msra.mxu0 %v5892
    %5896 = vmatpush.msra.mxu0 %v5891
    %5897 = vmatpush.msra.mxu0 %v5890
    %5898 = vmatpush.msra.mxu0 %v5889
    %5899 = vmatpush.msra.mxu0 %v5888
    %5900 = vmatpush.msra.mxu0 %v5887
    %5901 = vmatpush.msra.mxu0 %v5886
    %5902 = vmatpush.msra.mxu0 %v5885
    %5903 = vmatpush.msra.mxu0 %v5884
    %5904 = vmatpush.msra.mxu0 %v5883
    %5905 = vmatpush.msra.mxu0 %v5882
    %5906 = vmatpush.msra.mxu0 %v5881
    %5907 = vmatpush.msra.mxu0 %v5880
    %5908 = vmatpush.msra.mxu0 %v5879
    %5909 = vmatpush.msra.mxu0 %v5878
    %5910 = vmatmul.f32.gmra.mxu0 %v5813
    %v5911 = vpop.f32.mrf.mxu0
    %v5912 = vadd.f32 0.0, %v5911
    %5913 = vmatmul.f32.gmra.mxu0 %v5814
    %v5914 = vpop.f32.mrf.mxu0
    %v5915 = vadd.f32 0.0, %v5914
    %5916 = vmatmul.f32.gmra.mxu0 %v5815
    %v5917 = vpop.f32.mrf.mxu0
    %v5918 = vadd.f32 0.0, %v5917
    %5919 = vmatmul.f32.gmra.mxu0 %v5816
    %v5920 = vpop.f32.mrf.mxu0
    %v5921 = vadd.f32 0.0, %v5920
    %5922 = vmatmul.f32.gmra.mxu0 %v5817
    %v5923 = vpop.f32.mrf.mxu0
    %v5924 = vadd.f32 0.0, %v5923
    %5925 = vmatmul.f32.gmra.mxu0 %v5818
    %v5926 = vpop.f32.mrf.mxu0
    %v5927 = vadd.f32 0.0, %v5926
    %5928 = vmatmul.f32.gmra.mxu0 %v5819
    %v5929 = vpop.f32.mrf.mxu0
    %v5930 = vadd.f32 0.0, %v5929
    %5931 = vmatmul.f32.gmra.mxu0 %v5820
    %v5932 = vpop.f32.mrf.mxu0
    %v5933 = vadd.f32 0.0, %v5932
    %5934 = vmatmul.f32.gmra.mxu0 %v5821
    %v5935 = vpop.f32.mrf.mxu0
    %v5936 = vadd.f32 0.0, %v5935
    %5937 = vmatmul.f32.gmra.mxu0 %v5822
    %v5938 = vpop.f32.mrf.mxu0
    %v5939 = vadd.f32 0.0, %v5938
    %5940 = vmatmul.f32.gmra.mxu0 %v5823
    %v5941 = vpop.f32.mrf.mxu0
    %v5942 = vadd.f32 0.0, %v5941
    %5943 = vmatmul.f32.gmra.mxu0 %v5824
    %v5944 = vpop.f32.mrf.mxu0
    %v5945 = vadd.f32 0.0, %v5944
    %5946 = vmatmul.f32.gmra.mxu0 %v5825
    %v5947 = vpop.f32.mrf.mxu0
    %v5948 = vadd.f32 0.0, %v5947
    %5949 = vmatmul.f32.gmra.mxu0 %v5826
    %v5950 = vpop.f32.mrf.mxu0
    %v5951 = vadd.f32 0.0, %v5950
    %5952 = vmatmul.f32.gmra.mxu0 %v5827
    %v5953 = vpop.f32.mrf.mxu0
    %v5954 = vadd.f32 0.0, %v5953
    %5955 = vmatmul.f32.gmra.mxu0 %v5828
    %v5956 = vpop.f32.mrf.mxu0
    %v5957 = vadd.f32 0.0, %v5956
    %5958 = vmatmul.f32.gmra.mxu0 %v5829
    %v5959 = vpop.f32.mrf.mxu0
    %v5960 = vadd.f32 0.0, %v5959
    %5961 = vmatmul.f32.gmra.mxu0 %v5830
    %v5962 = vpop.f32.mrf.mxu0
    %v5963 = vadd.f32 0.0, %v5962
    %5964 = vmatmul.f32.gmra.mxu0 %v5831
    %v5965 = vpop.f32.mrf.mxu0
    %v5966 = vadd.f32 0.0, %v5965
    %5967 = vmatmul.f32.gmra.mxu0 %v5832
    %v5968 = vpop.f32.mrf.mxu0
    %v5969 = vadd.f32 0.0, %v5968
    %5970 = vmatmul.f32.gmra.mxu0 %v5833
    %v5971 = vpop.f32.mrf.mxu0
    %v5972 = vadd.f32 0.0, %v5971
    %5973 = vmatmul.f32.gmra.mxu0 %v5834
    %v5974 = vpop.f32.mrf.mxu0
    %v5975 = vadd.f32 0.0, %v5974
    %5976 = vmatmul.f32.gmra.mxu0 %v5835
    %v5977 = vpop.f32.mrf.mxu0
    %v5978 = vadd.f32 0.0, %v5977
    %5979 = vmatmul.f32.gmra.mxu0 %v5836
    %v5980 = vpop.f32.mrf.mxu0
    %v5981 = vadd.f32 0.0, %v5980
    %5982 = vmatmul.f32.gmra.mxu0 %v5837
    %v5983 = vpop.f32.mrf.mxu0
    %v5984 = vadd.f32 0.0, %v5983
    %5985 = vmatmul.f32.gmra.mxu0 %v5838
    %v5986 = vpop.f32.mrf.mxu0
    %v5987 = vadd.f32 0.0, %v5986
    %5988 = vmatmul.f32.gmra.mxu0 %v5839
    %v5989 = vpop.f32.mrf.mxu0
    %v5990 = vadd.f32 0.0, %v5989
    %5991 = vmatmul.f32.gmra.mxu0 %v5840
    %v5992 = vpop.f32.mrf.mxu0
    %v5993 = vadd.f32 0.0, %v5992
    %5994 = vmatmul.f32.gmra.mxu0 %v5841
    %v5995 = vpop.f32.mrf.mxu0
    %v5996 = vadd.f32 0.0, %v5995
    %5997 = vmatmul.f32.gmra.mxu0 %v5842
    %v5998 = vpop.f32.mrf.mxu0
    %v5999 = vadd.f32 0.0, %v5998
    %6000 = vmatmul.f32.gmra.mxu0 %v5843
    %v6001 = vpop.f32.mrf.mxu0
    %v6002 = vadd.f32 0.0, %v6001
    %6003 = vmatmul.f32.gmra.mxu0 %v5844
    %v6004 = vpop.f32.mrf.mxu0
    %v6005 = vadd.f32 0.0, %v6004
    %6006 = vmatmul.f32.gmra.mxu0 %v5845
    %v6007 = vpop.f32.mrf.mxu0
    %v6008 = vadd.f32 0.0, %v6007
    %6009 = vmatmul.f32.gmra.mxu0 %v5846
    %v6010 = vpop.f32.mrf.mxu0
    %v6011 = vadd.f32 0.0, %v6010
    %6012 = vmatmul.f32.gmra.mxu0 %v5847
    %v6013 = vpop.f32.mrf.mxu0
    %v6014 = vadd.f32 0.0, %v6013
    %6015 = vmatmul.f32.gmra.mxu0 %v5848
    %v6016 = vpop.f32.mrf.mxu0
    %v6017 = vadd.f32 0.0, %v6016
    %6018 = vmatmul.f32.gmra.mxu0 %v5849
    %v6019 = vpop.f32.mrf.mxu0
    %v6020 = vadd.f32 0.0, %v6019
    %6021 = vmatmul.f32.gmra.mxu0 %v5850
    %v6022 = vpop.f32.mrf.mxu0
    %v6023 = vadd.f32 0.0, %v6022
    %6024 = vmatmul.f32.gmra.mxu0 %v5851
    %v6025 = vpop.f32.mrf.mxu0
    %v6026 = vadd.f32 0.0, %v6025
    %6027 = vmatmul.f32.gmra.mxu0 %v5852
    %v6028 = vpop.f32.mrf.mxu0
    %v6029 = vadd.f32 0.0, %v6028
    %6030 = vmatmul.f32.gmra.mxu0 %v5853
    %v6031 = vpop.f32.mrf.mxu0
    %v6032 = vadd.f32 0.0, %v6031
    %6033 = vmatmul.f32.gmra.mxu0 %v5854
    %v6034 = vpop.f32.mrf.mxu0
    %v6035 = vadd.f32 0.0, %v6034
    %6036 = vmatmul.f32.gmra.mxu0 %v5855
    %v6037 = vpop.f32.mrf.mxu0
    %v6038 = vadd.f32 0.0, %v6037
    %6039 = vmatmul.f32.gmra.mxu0 %v5856
    %v6040 = vpop.f32.mrf.mxu0
    %v6041 = vadd.f32 0.0, %v6040
    %6042 = vmatmul.f32.gmra.mxu0 %v5857
    %v6043 = vpop.f32.mrf.mxu0
    %v6044 = vadd.f32 0.0, %v6043
    %6045 = vmatmul.f32.gmra.mxu0 %v5858
    %v6046 = vpop.f32.mrf.mxu0
    %v6047 = vadd.f32 0.0, %v6046
    %6048 = vmatmul.f32.gmra.mxu0 %v5859
    %v6049 = vpop.f32.mrf.mxu0
    %v6050 = vadd.f32 0.0, %v6049
    %6051 = vmatmul.f32.gmra.mxu0 %v5860
    %v6052 = vpop.f32.mrf.mxu0
    %v6053 = vadd.f32 0.0, %v6052
    %6054 = vmatmul.f32.gmra.mxu0 %v5861
    %v6055 = vpop.f32.mrf.mxu0
    %v6056 = vadd.f32 0.0, %v6055
    %6057 = vmatmul.f32.gmra.mxu0 %v5862
    %v6058 = vpop.f32.mrf.mxu0
    %v6059 = vadd.f32 0.0, %v6058
    %6060 = vmatmul.f32.gmra.mxu0 %v5863
    %v6061 = vpop.f32.mrf.mxu0
    %v6062 = vadd.f32 0.0, %v6061
    %6063 = vmatmul.f32.gmra.mxu0 %v5864
    %v6064 = vpop.f32.mrf.mxu0
    %v6065 = vadd.f32 0.0, %v6064
    %6066 = vmatmul.f32.gmra.mxu0 %v5865
    %v6067 = vpop.f32.mrf.mxu0
    %v6068 = vadd.f32 0.0, %v6067
    %6069 = vmatmul.f32.gmra.mxu0 %v5866
    %v6070 = vpop.f32.mrf.mxu0
    %v6071 = vadd.f32 0.0, %v6070
    %6072 = vmatmul.f32.gmra.mxu0 %v5867
    %v6073 = vpop.f32.mrf.mxu0
    %v6074 = vadd.f32 0.0, %v6073
    %6075 = vmatmul.f32.gmra.mxu0 %v5868
    %v6076 = vpop.f32.mrf.mxu0
    %v6077 = vadd.f32 0.0, %v6076
    %6078 = vmatmul.f32.gmra.mxu0 %v5869
    %v6079 = vpop.f32.mrf.mxu0
    %v6080 = vadd.f32 0.0, %v6079
    %6081 = vmatmul.f32.gmra.mxu0 %v5870
    %v6082 = vpop.f32.mrf.mxu0
    %v6083 = vadd.f32 0.0, %v6082
    %6084 = vmatmul.f32.gmra.mxu0 %v5871
    %v6085 = vpop.f32.mrf.mxu0
    %v6086 = vadd.f32 0.0, %v6085
    %6087 = vmatmul.f32.gmra.mxu0 %v5872
    %v6088 = vpop.f32.mrf.mxu0
    %v6089 = vadd.f32 0.0, %v6088
    %6090 = vmatmul.f32.gmra.mxu0 %v5873
    %v6091 = vpop.f32.mrf.mxu0
    %v6092 = vadd.f32 0.0, %v6091
    %6093 = vmatmul.f32.gmra.mxu0 %v5874
    %v6094 = vpop.f32.mrf.mxu0
    %v6095 = vadd.f32 0.0, %v6094
    %6096 = vmatmul.f32.gmra.mxu0 %v5875
    %v6097 = vpop.f32.mrf.mxu0
    %v6098 = vadd.f32 0.0, %v6097
    %6099 = vmatmul.f32.gmra.mxu0 %v5876
    %v6100 = vpop.f32.mrf.mxu0
    %v6101 = vadd.f32 0.0, %v6100
    %6102 = vdwg.mxu0
    %v6103 = vadd.f32 %v5748, %v5912
    %v6104 = vadd.f32 %v5749, %v5915
    %v6105 = vadd.f32 %v5750, %v5918
    %v6106 = vadd.f32 %v5751, %v5921
    %v6107 = vadd.f32 %v5752, %v5924
    %v6108 = vadd.f32 %v5753, %v5927
    %v6109 = vadd.f32 %v5754, %v5930
    %v6110 = vadd.f32 %v5755, %v5933
    %v6111 = vadd.f32 %v5756, %v5936
    %v6112 = vadd.f32 %v5757, %v5939
    %v6113 = vadd.f32 %v5758, %v5942
    %v6114 = vadd.f32 %v5759, %v5945
    %v6115 = vadd.f32 %v5760, %v5948
    %v6116 = vadd.f32 %v5761, %v5951
    %v6117 = vadd.f32 %v5762, %v5954
    %v6118 = vadd.f32 %v5763, %v5957
    %v6119 = vadd.f32 %v5764, %v5960
    %v6120 = vadd.f32 %v5765, %v5963
    %v6121 = vadd.f32 %v5766, %v5966
    %v6122 = vadd.f32 %v5767, %v5969
    %v6123 = vadd.f32 %v5768, %v5972
    %v6124 = vadd.f32 %v5769, %v5975
    %v6125 = vadd.f32 %v5770, %v5978
    %v6126 = vadd.f32 %v5771, %v5981
    %v6127 = vadd.f32 %v5772, %v5984
    %v6128 = vadd.f32 %v5773, %v5987
    %v6129 = vadd.f32 %v5774, %v5990
    %v6130 = vadd.f32 %v5775, %v5993
    %v6131 = vadd.f32 %v5776, %v5996
    %v6132 = vadd.f32 %v5777, %v5999
    %v6133 = vadd.f32 %v5778, %v6002
    %v6134 = vadd.f32 %v5779, %v6005
    %v6135 = vadd.f32 %v5780, %v6008
    %v6136 = vadd.f32 %v5781, %v6011
    %v6137 = vadd.f32 %v5782, %v6014
    %v6138 = vadd.f32 %v5783, %v6017
    %v6139 = vadd.f32 %v5784, %v6020
    %v6140 = vadd.f32 %v5785, %v6023
    %v6141 = vadd.f32 %v5786, %v6026
    %v6142 = vadd.f32 %v5787, %v6029
    %v6143 = vadd.f32 %v5788, %v6032
    %v6144 = vadd.f32 %v5789, %v6035
    %v6145 = vadd.f32 %v5790, %v6038
    %v6146 = vadd.f32 %v5791, %v6041
    %v6147 = vadd.f32 %v5792, %v6044
    %v6148 = vadd.f32 %v5793, %v6047
    %v6149 = vadd.f32 %v5794, %v6050
    %v6150 = vadd.f32 %v5795, %v6053
    %v6151 = vadd.f32 %v5796, %v6056
    %v6152 = vadd.f32 %v5797, %v6059
    %v6153 = vadd.f32 %v5798, %v6062
    %v6154 = vadd.f32 %v5799, %v6065
    %v6155 = vadd.f32 %v5800, %v6068
    %v6156 = vadd.f32 %v5801, %v6071
    %v6157 = vadd.f32 %v5802, %v6074
    %v6158 = vadd.f32 %v5803, %v6077
    %v6159 = vadd.f32 %v5804, %v6080
    %v6160 = vadd.f32 %v5805, %v6083
    %v6161 = vadd.f32 %v5806, %v6086
    %v6162 = vadd.f32 %v5807, %v6089
    %v6163 = vadd.f32 %v5808, %v6092
    %v6164 = vadd.f32 %v5809, %v6095
    %v6165 = vadd.f32 %v5810, %v6098
    %v6166 = vadd.f32 %v5811, %v6101
    %v6167 = vld [vmem:[%s5812 + $0x1] sm:$0xff]
    %v6168 = vld [vmem:[%s5812 + $0x9] sm:$0xff]
    %v6169 = vld [vmem:[%s5812 + $0x19] sm:$0xff]
    %v6170 = vld [vmem:[%s5812 + $0x21] sm:$0xff]
    %v6171 = vld [vmem:[%s5812 + $0x31] sm:$0xff]
    %v6172 = vld [vmem:[%s5812 + $0x39] sm:$0xff]
    %v6173 = vld [vmem:[%s5812 + $0x49] sm:$0xff]
    %v6174 = vld [vmem:[%s5812 + $0x51] sm:$0xff]
    %v6175 = vld [vmem:[%s5812 + $0x61] sm:$0xff]
    %v6176 = vld [vmem:[%s5812 + $0x69] sm:$0xff]
    %v6177 = vld [vmem:[%s5812 + $0x79] sm:$0xff]
    %v6178 = vld [vmem:[%s5812 + $0x81] sm:$0xff]
    %v6179 = vld [vmem:[%s5812 + $0x91] sm:$0xff]
    %v6180 = vld [vmem:[%s5812 + $0x99] sm:$0xff]
    %v6181 = vld [vmem:[%s5812 + $0xa9] sm:$0xff]
    %v6182 = vld [vmem:[%s5812 + $0xb1] sm:$0xff]
    %v6183 = vld [vmem:[%s5812 + $0xc1] sm:$0xff]
    %v6184 = vld [vmem:[%s5812 + $0xc9] sm:$0xff]
    %v6185 = vld [vmem:[%s5812 + $0xd9] sm:$0xff]
    %v6186 = vld [vmem:[%s5812 + $0xe1] sm:$0xff]
    %v6187 = vld [vmem:[%s5812 + $0xf1] sm:$0xff]
    %v6188 = vld [vmem:[%s5812 + $0xf9] sm:$0xff]
    %v6189 = vld [vmem:[%s5812 + $0x109] sm:$0xff]
    %v6190 = vld [vmem:[%s5812 + $0x111] sm:$0xff]
    %v6191 = vld [vmem:[%s5812 + $0x121] sm:$0xff]
    %v6192 = vld [vmem:[%s5812 + $0x129] sm:$0xff]
    %v6193 = vld [vmem:[%s5812 + $0x139] sm:$0xff]
    %v6194 = vld [vmem:[%s5812 + $0x141] sm:$0xff]
    %v6195 = vld [vmem:[%s5812 + $0x151] sm:$0xff]
    %v6196 = vld [vmem:[%s5812 + $0x159] sm:$0xff]
    %v6197 = vld [vmem:[%s5812 + $0x169] sm:$0xff]
    %v6198 = vld [vmem:[%s5812 + $0x171] sm:$0xff]
    %v6199 = vld [vmem:[%s5812 + $0x1b1] sm:$0xff]
    %v6200 = vld [vmem:[%s5812 + $0x1b9] sm:$0xff]
    %v6201 = vld [vmem:[%s5812 + $0x1c9] sm:$0xff]
    %v6202 = vld [vmem:[%s5812 + $0x1d1] sm:$0xff]
    %v6203 = vld [vmem:[%s5812 + $0x1e1] sm:$0xff]
    %v6204 = vld [vmem:[%s5812 + $0x1e9] sm:$0xff]
    %v6205 = vld [vmem:[%s5812 + $0x1f9] sm:$0xff]
    %v6206 = vld [vmem:[%s5812 + $0x201] sm:$0xff]
    %v6207 = vld [vmem:[%s5812 + $0x211] sm:$0xff]
    %v6208 = vld [vmem:[%s5812 + $0x219] sm:$0xff]
    %v6209 = vld [vmem:[%s5812 + $0x229] sm:$0xff]
    %v6210 = vld [vmem:[%s5812 + $0x231] sm:$0xff]
    %v6211 = vld [vmem:[%s5812 + $0x241] sm:$0xff]
    %v6212 = vld [vmem:[%s5812 + $0x249] sm:$0xff]
    %v6213 = vld [vmem:[%s5812 + $0x259] sm:$0xff]
    %v6214 = vld [vmem:[%s5812 + $0x261] sm:$0xff]
    %v6215 = vld [vmem:[%s5812 + $0x271] sm:$0xff]
    %v6216 = vld [vmem:[%s5812 + $0x279] sm:$0xff]
    %v6217 = vld [vmem:[%s5812 + $0x289] sm:$0xff]
    %v6218 = vld [vmem:[%s5812 + $0x291] sm:$0xff]
    %v6219 = vld [vmem:[%s5812 + $0x2a1] sm:$0xff]
    %v6220 = vld [vmem:[%s5812 + $0x2a9] sm:$0xff]
    %v6221 = vld [vmem:[%s5812 + $0x2b9] sm:$0xff]
    %v6222 = vld [vmem:[%s5812 + $0x2c1] sm:$0xff]
    %v6223 = vld [vmem:[%s5812 + $0x2d1] sm:$0xff]
    %v6224 = vld [vmem:[%s5812 + $0x2d9] sm:$0xff]
    %v6225 = vld [vmem:[%s5812 + $0x2e9] sm:$0xff]
    %v6226 = vld [vmem:[%s5812 + $0x2f1] sm:$0xff]
    %v6227 = vld [vmem:[%s5812 + $0x301] sm:$0xff]
    %v6228 = vld [vmem:[%s5812 + $0x309] sm:$0xff]
    %v6229 = vld [vmem:[%s5812 + $0x319] sm:$0xff]
    %v6230 = vld [vmem:[%s5812 + $0x321] sm:$0xff]
    %s6231 = scalar_lea.vmem [#allocation6], 896
    %v6232 = vld [vmem:[%s6231] sm:$0xff]
    %v6233 = vld [vmem:[%s6231 + $0x8] sm:$0xff]
    %v6234 = vld [vmem:[%s6231 + $0x10] sm:$0xff]
    %v6235 = vld [vmem:[%s6231 + $0x18] sm:$0xff]
    %v6236 = vld [vmem:[%s6231 + $0x20] sm:$0xff]
    %v6237 = vld [vmem:[%s6231 + $0x28] sm:$0xff]
    %v6238 = vld [vmem:[%s6231 + $0x30] sm:$0xff]
    %v6239 = vld [vmem:[%s6231 + $0x38] sm:$0xff]
    %v6240 = vld [vmem:[%s6231 + $0x40] sm:$0xff]
    %v6241 = vld [vmem:[%s6231 + $0x48] sm:$0xff]
    %v6242 = vld [vmem:[%s6231 + $0x50] sm:$0xff]
    %v6243 = vld [vmem:[%s6231 + $0x58] sm:$0xff]
    %v6244 = vld [vmem:[%s6231 + $0x60] sm:$0xff]
    %v6245 = vld [vmem:[%s6231 + $0x68] sm:$0xff]
    %v6246 = vld [vmem:[%s6231 + $0x70] sm:$0xff]
    %v6247 = vld [vmem:[%s6231 + $0x78] sm:$0xff]
    %6248 = vmatpush.msra.mxu0 %v6247
    %6249 = vmatpush.msra.mxu0 %v6246
    %6250 = vmatpush.msra.mxu0 %v6245
    %6251 = vmatpush.msra.mxu0 %v6244
    %6252 = vmatpush.msra.mxu0 %v6243
    %6253 = vmatpush.msra.mxu0 %v6242
    %6254 = vmatpush.msra.mxu0 %v6241
    %6255 = vmatpush.msra.mxu0 %v6240
    %6256 = vmatpush.msra.mxu0 %v6239
    %6257 = vmatpush.msra.mxu0 %v6238
    %6258 = vmatpush.msra.mxu0 %v6237
    %6259 = vmatpush.msra.mxu0 %v6236
    %6260 = vmatpush.msra.mxu0 %v6235
    %6261 = vmatpush.msra.mxu0 %v6234
    %6262 = vmatpush.msra.mxu0 %v6233
    %6263 = vmatpush.msra.mxu0 %v6232
    %6264 = vmatmul.f32.gmra.mxu0 %v6167
    %v6265 = vpop.f32.mrf.mxu0
    %v6266 = vadd.f32 0.0, %v6265
    %6267 = vmatmul.f32.gmra.mxu0 %v6168
    %v6268 = vpop.f32.mrf.mxu0
    %v6269 = vadd.f32 0.0, %v6268
    %6270 = vmatmul.f32.gmra.mxu0 %v6169
    %v6271 = vpop.f32.mrf.mxu0
    %v6272 = vadd.f32 0.0, %v6271
    %6273 = vmatmul.f32.gmra.mxu0 %v6170
    %v6274 = vpop.f32.mrf.mxu0
    %v6275 = vadd.f32 0.0, %v6274
    %6276 = vmatmul.f32.gmra.mxu0 %v6171
    %v6277 = vpop.f32.mrf.mxu0
    %v6278 = vadd.f32 0.0, %v6277
    %6279 = vmatmul.f32.gmra.mxu0 %v6172
    %v6280 = vpop.f32.mrf.mxu0
    %v6281 = vadd.f32 0.0, %v6280
    %6282 = vmatmul.f32.gmra.mxu0 %v6173
    %v6283 = vpop.f32.mrf.mxu0
    %v6284 = vadd.f32 0.0, %v6283
    %6285 = vmatmul.f32.gmra.mxu0 %v6174
    %v6286 = vpop.f32.mrf.mxu0
    %v6287 = vadd.f32 0.0, %v6286
    %6288 = vmatmul.f32.gmra.mxu0 %v6175
    %v6289 = vpop.f32.mrf.mxu0
    %v6290 = vadd.f32 0.0, %v6289
    %6291 = vmatmul.f32.gmra.mxu0 %v6176
    %v6292 = vpop.f32.mrf.mxu0
    %v6293 = vadd.f32 0.0, %v6292
    %6294 = vmatmul.f32.gmra.mxu0 %v6177
    %v6295 = vpop.f32.mrf.mxu0
    %v6296 = vadd.f32 0.0, %v6295
    %6297 = vmatmul.f32.gmra.mxu0 %v6178
    %v6298 = vpop.f32.mrf.mxu0
    %v6299 = vadd.f32 0.0, %v6298
    %6300 = vmatmul.f32.gmra.mxu0 %v6179
    %v6301 = vpop.f32.mrf.mxu0
    %v6302 = vadd.f32 0.0, %v6301
    %6303 = vmatmul.f32.gmra.mxu0 %v6180
    %v6304 = vpop.f32.mrf.mxu0
    %v6305 = vadd.f32 0.0, %v6304
    %6306 = vmatmul.f32.gmra.mxu0 %v6181
    %v6307 = vpop.f32.mrf.mxu0
    %v6308 = vadd.f32 0.0, %v6307
    %6309 = vmatmul.f32.gmra.mxu0 %v6182
    %v6310 = vpop.f32.mrf.mxu0
    %v6311 = vadd.f32 0.0, %v6310
    %6312 = vmatmul.f32.gmra.mxu0 %v6183
    %v6313 = vpop.f32.mrf.mxu0
    %v6314 = vadd.f32 0.0, %v6313
    %6315 = vmatmul.f32.gmra.mxu0 %v6184
    %v6316 = vpop.f32.mrf.mxu0
    %v6317 = vadd.f32 0.0, %v6316
    %6318 = vmatmul.f32.gmra.mxu0 %v6185
    %v6319 = vpop.f32.mrf.mxu0
    %v6320 = vadd.f32 0.0, %v6319
    %6321 = vmatmul.f32.gmra.mxu0 %v6186
    %v6322 = vpop.f32.mrf.mxu0
    %v6323 = vadd.f32 0.0, %v6322
    %6324 = vmatmul.f32.gmra.mxu0 %v6187
    %v6325 = vpop.f32.mrf.mxu0
    %v6326 = vadd.f32 0.0, %v6325
    %6327 = vmatmul.f32.gmra.mxu0 %v6188
    %v6328 = vpop.f32.mrf.mxu0
    %v6329 = vadd.f32 0.0, %v6328
    %6330 = vmatmul.f32.gmra.mxu0 %v6189
    %v6331 = vpop.f32.mrf.mxu0
    %v6332 = vadd.f32 0.0, %v6331
    %6333 = vmatmul.f32.gmra.mxu0 %v6190
    %v6334 = vpop.f32.mrf.mxu0
    %v6335 = vadd.f32 0.0, %v6334
    %6336 = vmatmul.f32.gmra.mxu0 %v6191
    %v6337 = vpop.f32.mrf.mxu0
    %v6338 = vadd.f32 0.0, %v6337
    %6339 = vmatmul.f32.gmra.mxu0 %v6192
    %v6340 = vpop.f32.mrf.mxu0
    %v6341 = vadd.f32 0.0, %v6340
    %6342 = vmatmul.f32.gmra.mxu0 %v6193
    %v6343 = vpop.f32.mrf.mxu0
    %v6344 = vadd.f32 0.0, %v6343
    %6345 = vmatmul.f32.gmra.mxu0 %v6194
    %v6346 = vpop.f32.mrf.mxu0
    %v6347 = vadd.f32 0.0, %v6346
    %6348 = vmatmul.f32.gmra.mxu0 %v6195
    %v6349 = vpop.f32.mrf.mxu0
    %v6350 = vadd.f32 0.0, %v6349
    %6351 = vmatmul.f32.gmra.mxu0 %v6196
    %v6352 = vpop.f32.mrf.mxu0
    %v6353 = vadd.f32 0.0, %v6352
    %6354 = vmatmul.f32.gmra.mxu0 %v6197
    %v6355 = vpop.f32.mrf.mxu0
    %v6356 = vadd.f32 0.0, %v6355
    %6357 = vmatmul.f32.gmra.mxu0 %v6198
    %v6358 = vpop.f32.mrf.mxu0
    %v6359 = vadd.f32 0.0, %v6358
    %6360 = vmatmul.f32.gmra.mxu0 %v6199
    %v6361 = vpop.f32.mrf.mxu0
    %v6362 = vadd.f32 0.0, %v6361
    %6363 = vmatmul.f32.gmra.mxu0 %v6200
    %v6364 = vpop.f32.mrf.mxu0
    %v6365 = vadd.f32 0.0, %v6364
    %6366 = vmatmul.f32.gmra.mxu0 %v6201
    %v6367 = vpop.f32.mrf.mxu0
    %v6368 = vadd.f32 0.0, %v6367
    %6369 = vmatmul.f32.gmra.mxu0 %v6202
    %v6370 = vpop.f32.mrf.mxu0
    %v6371 = vadd.f32 0.0, %v6370
    %6372 = vmatmul.f32.gmra.mxu0 %v6203
    %v6373 = vpop.f32.mrf.mxu0
    %v6374 = vadd.f32 0.0, %v6373
    %6375 = vmatmul.f32.gmra.mxu0 %v6204
    %v6376 = vpop.f32.mrf.mxu0
    %v6377 = vadd.f32 0.0, %v6376
    %6378 = vmatmul.f32.gmra.mxu0 %v6205
    %v6379 = vpop.f32.mrf.mxu0
    %v6380 = vadd.f32 0.0, %v6379
    %6381 = vmatmul.f32.gmra.mxu0 %v6206
    %v6382 = vpop.f32.mrf.mxu0
    %v6383 = vadd.f32 0.0, %v6382
    %6384 = vmatmul.f32.gmra.mxu0 %v6207
    %v6385 = vpop.f32.mrf.mxu0
    %v6386 = vadd.f32 0.0, %v6385
    %6387 = vmatmul.f32.gmra.mxu0 %v6208
    %v6388 = vpop.f32.mrf.mxu0
    %v6389 = vadd.f32 0.0, %v6388
    %6390 = vmatmul.f32.gmra.mxu0 %v6209
    %v6391 = vpop.f32.mrf.mxu0
    %v6392 = vadd.f32 0.0, %v6391
    %6393 = vmatmul.f32.gmra.mxu0 %v6210
    %v6394 = vpop.f32.mrf.mxu0
    %v6395 = vadd.f32 0.0, %v6394
    %6396 = vmatmul.f32.gmra.mxu0 %v6211
    %v6397 = vpop.f32.mrf.mxu0
    %v6398 = vadd.f32 0.0, %v6397
    %6399 = vmatmul.f32.gmra.mxu0 %v6212
    %v6400 = vpop.f32.mrf.mxu0
    %v6401 = vadd.f32 0.0, %v6400
    %6402 = vmatmul.f32.gmra.mxu0 %v6213
    %v6403 = vpop.f32.mrf.mxu0
    %v6404 = vadd.f32 0.0, %v6403
    %6405 = vmatmul.f32.gmra.mxu0 %v6214
    %v6406 = vpop.f32.mrf.mxu0
    %v6407 = vadd.f32 0.0, %v6406
    %6408 = vmatmul.f32.gmra.mxu0 %v6215
    %v6409 = vpop.f32.mrf.mxu0
    %v6410 = vadd.f32 0.0, %v6409
    %6411 = vmatmul.f32.gmra.mxu0 %v6216
    %v6412 = vpop.f32.mrf.mxu0
    %v6413 = vadd.f32 0.0, %v6412
    %6414 = vmatmul.f32.gmra.mxu0 %v6217
    %v6415 = vpop.f32.mrf.mxu0
    %v6416 = vadd.f32 0.0, %v6415
    %6417 = vmatmul.f32.gmra.mxu0 %v6218
    %v6418 = vpop.f32.mrf.mxu0
    %v6419 = vadd.f32 0.0, %v6418
    %6420 = vmatmul.f32.gmra.mxu0 %v6219
    %v6421 = vpop.f32.mrf.mxu0
    %v6422 = vadd.f32 0.0, %v6421
    %6423 = vmatmul.f32.gmra.mxu0 %v6220
    %v6424 = vpop.f32.mrf.mxu0
    %v6425 = vadd.f32 0.0, %v6424
    %6426 = vmatmul.f32.gmra.mxu0 %v6221
    %v6427 = vpop.f32.mrf.mxu0
    %v6428 = vadd.f32 0.0, %v6427
    %6429 = vmatmul.f32.gmra.mxu0 %v6222
    %v6430 = vpop.f32.mrf.mxu0
    %v6431 = vadd.f32 0.0, %v6430
    %6432 = vmatmul.f32.gmra.mxu0 %v6223
    %v6433 = vpop.f32.mrf.mxu0
    %v6434 = vadd.f32 0.0, %v6433
    %6435 = vmatmul.f32.gmra.mxu0 %v6224
    %v6436 = vpop.f32.mrf.mxu0
    %v6437 = vadd.f32 0.0, %v6436
    %6438 = vmatmul.f32.gmra.mxu0 %v6225
    %v6439 = vpop.f32.mrf.mxu0
    %v6440 = vadd.f32 0.0, %v6439
    %6441 = vmatmul.f32.gmra.mxu0 %v6226
    %v6442 = vpop.f32.mrf.mxu0
    %v6443 = vadd.f32 0.0, %v6442
    %6444 = vmatmul.f32.gmra.mxu0 %v6227
    %v6445 = vpop.f32.mrf.mxu0
    %v6446 = vadd.f32 0.0, %v6445
    %6447 = vmatmul.f32.gmra.mxu0 %v6228
    %v6448 = vpop.f32.mrf.mxu0
    %v6449 = vadd.f32 0.0, %v6448
    %6450 = vmatmul.f32.gmra.mxu0 %v6229
    %v6451 = vpop.f32.mrf.mxu0
    %v6452 = vadd.f32 0.0, %v6451
    %6453 = vmatmul.f32.gmra.mxu0 %v6230
    %v6454 = vpop.f32.mrf.mxu0
    %v6455 = vadd.f32 0.0, %v6454
    %6456 = vdwg.mxu0
    %v6457 = vadd.f32 %v6103, %v6266
    %v6458 = vadd.f32 %v6104, %v6269
    %v6459 = vadd.f32 %v6105, %v6272
    %v6460 = vadd.f32 %v6106, %v6275
    %v6461 = vadd.f32 %v6107, %v6278
    %v6462 = vadd.f32 %v6108, %v6281
    %v6463 = vadd.f32 %v6109, %v6284
    %v6464 = vadd.f32 %v6110, %v6287
    %v6465 = vadd.f32 %v6111, %v6290
    %v6466 = vadd.f32 %v6112, %v6293
    %v6467 = vadd.f32 %v6113, %v6296
    %v6468 = vadd.f32 %v6114, %v6299
    %v6469 = vadd.f32 %v6115, %v6302
    %v6470 = vadd.f32 %v6116, %v6305
    %v6471 = vadd.f32 %v6117, %v6308
    %v6472 = vadd.f32 %v6118, %v6311
    %v6473 = vadd.f32 %v6119, %v6314
    %v6474 = vadd.f32 %v6120, %v6317
    %v6475 = vadd.f32 %v6121, %v6320
    %v6476 = vadd.f32 %v6122, %v6323
    %v6477 = vadd.f32 %v6123, %v6326
    %v6478 = vadd.f32 %v6124, %v6329
    %v6479 = vadd.f32 %v6125, %v6332
    %v6480 = vadd.f32 %v6126, %v6335
    %v6481 = vadd.f32 %v6127, %v6338
    %v6482 = vadd.f32 %v6128, %v6341
    %v6483 = vadd.f32 %v6129, %v6344
    %v6484 = vadd.f32 %v6130, %v6347
    %v6485 = vadd.f32 %v6131, %v6350
    %v6486 = vadd.f32 %v6132, %v6353
    %v6487 = vadd.f32 %v6133, %v6356
    %v6488 = vadd.f32 %v6134, %v6359
    %v6489 = vadd.f32 %v6135, %v6362
    %v6490 = vadd.f32 %v6136, %v6365
    %v6491 = vadd.f32 %v6137, %v6368
    %v6492 = vadd.f32 %v6138, %v6371
    %v6493 = vadd.f32 %v6139, %v6374
    %v6494 = vadd.f32 %v6140, %v6377
    %v6495 = vadd.f32 %v6141, %v6380
    %v6496 = vadd.f32 %v6142, %v6383
    %v6497 = vadd.f32 %v6143, %v6386
    %v6498 = vadd.f32 %v6144, %v6389
    %v6499 = vadd.f32 %v6145, %v6392
    %v6500 = vadd.f32 %v6146, %v6395
    %v6501 = vadd.f32 %v6147, %v6398
    %v6502 = vadd.f32 %v6148, %v6401
    %v6503 = vadd.f32 %v6149, %v6404
    %v6504 = vadd.f32 %v6150, %v6407
    %v6505 = vadd.f32 %v6151, %v6410
    %v6506 = vadd.f32 %v6152, %v6413
    %v6507 = vadd.f32 %v6153, %v6416
    %v6508 = vadd.f32 %v6154, %v6419
    %v6509 = vadd.f32 %v6155, %v6422
    %v6510 = vadd.f32 %v6156, %v6425
    %v6511 = vadd.f32 %v6157, %v6428
    %v6512 = vadd.f32 %v6158, %v6431
    %v6513 = vadd.f32 %v6159, %v6434
    %v6514 = vadd.f32 %v6160, %v6437
    %v6515 = vadd.f32 %v6161, %v6440
    %v6516 = vadd.f32 %v6162, %v6443
    %v6517 = vadd.f32 %v6163, %v6446
    %v6518 = vadd.f32 %v6164, %v6449
    %v6519 = vadd.f32 %v6165, %v6452
    %v6520 = vadd.f32 %v6166, %v6455
    %v6521 = vld [vmem:[%s5812 + $0x2] sm:$0xff]
    %v6522 = vld [vmem:[%s5812 + $0xa] sm:$0xff]
    %v6523 = vld [vmem:[%s5812 + $0x1a] sm:$0xff]
    %v6524 = vld [vmem:[%s5812 + $0x22] sm:$0xff]
    %v6525 = vld [vmem:[%s5812 + $0x32] sm:$0xff]
    %v6526 = vld [vmem:[%s5812 + $0x3a] sm:$0xff]
    %v6527 = vld [vmem:[%s5812 + $0x4a] sm:$0xff]
    %v6528 = vld [vmem:[%s5812 + $0x52] sm:$0xff]
    %v6529 = vld [vmem:[%s5812 + $0x62] sm:$0xff]
    %v6530 = vld [vmem:[%s5812 + $0x6a] sm:$0xff]
    %v6531 = vld [vmem:[%s5812 + $0x7a] sm:$0xff]
    %v6532 = vld [vmem:[%s5812 + $0x82] sm:$0xff]
    %v6533 = vld [vmem:[%s5812 + $0x92] sm:$0xff]
    %v6534 = vld [vmem:[%s5812 + $0x9a] sm:$0xff]
    %v6535 = vld [vmem:[%s5812 + $0xaa] sm:$0xff]
    %v6536 = vld [vmem:[%s5812 + $0xb2] sm:$0xff]
    %v6537 = vld [vmem:[%s5812 + $0xc2] sm:$0xff]
    %v6538 = vld [vmem:[%s5812 + $0xca] sm:$0xff]
    %v6539 = vld [vmem:[%s5812 + $0xda] sm:$0xff]
    %v6540 = vld [vmem:[%s5812 + $0xe2] sm:$0xff]
    %v6541 = vld [vmem:[%s5812 + $0xf2] sm:$0xff]
    %v6542 = vld [vmem:[%s5812 + $0xfa] sm:$0xff]
    %v6543 = vld [vmem:[%s5812 + $0x10a] sm:$0xff]
    %v6544 = vld [vmem:[%s5812 + $0x112] sm:$0xff]
    %v6545 = vld [vmem:[%s5812 + $0x122] sm:$0xff]
    %v6546 = vld [vmem:[%s5812 + $0x12a] sm:$0xff]
    %v6547 = vld [vmem:[%s5812 + $0x13a] sm:$0xff]
    %v6548 = vld [vmem:[%s5812 + $0x142] sm:$0xff]
    %v6549 = vld [vmem:[%s5812 + $0x152] sm:$0xff]
    %v6550 = vld [vmem:[%s5812 + $0x15a] sm:$0xff]
    %v6551 = vld [vmem:[%s5812 + $0x16a] sm:$0xff]
    %v6552 = vld [vmem:[%s5812 + $0x172] sm:$0xff]
    %v6553 = vld [vmem:[%s5812 + $0x1b2] sm:$0xff]
    %v6554 = vld [vmem:[%s5812 + $0x1ba] sm:$0xff]
    %v6555 = vld [vmem:[%s5812 + $0x1ca] sm:$0xff]
    %v6556 = vld [vmem:[%s5812 + $0x1d2] sm:$0xff]
    %v6557 = vld [vmem:[%s5812 + $0x1e2] sm:$0xff]
    %v6558 = vld [vmem:[%s5812 + $0x1ea] sm:$0xff]
    %v6559 = vld [vmem:[%s5812 + $0x1fa] sm:$0xff]
    %v6560 = vld [vmem:[%s5812 + $0x202] sm:$0xff]
    %v6561 = vld [vmem:[%s5812 + $0x212] sm:$0xff]
    %v6562 = vld [vmem:[%s5812 + $0x21a] sm:$0xff]
    %v6563 = vld [vmem:[%s5812 + $0x22a] sm:$0xff]
    %v6564 = vld [vmem:[%s5812 + $0x232] sm:$0xff]
    %v6565 = vld [vmem:[%s5812 + $0x242] sm:$0xff]
    %v6566 = vld [vmem:[%s5812 + $0x24a] sm:$0xff]
    %v6567 = vld [vmem:[%s5812 + $0x25a] sm:$0xff]
    %v6568 = vld [vmem:[%s5812 + $0x262] sm:$0xff]
    %v6569 = vld [vmem:[%s5812 + $0x272] sm:$0xff]
    %v6570 = vld [vmem:[%s5812 + $0x27a] sm:$0xff]
    %v6571 = vld [vmem:[%s5812 + $0x28a] sm:$0xff]
    %v6572 = vld [vmem:[%s5812 + $0x292] sm:$0xff]
    %v6573 = vld [vmem:[%s5812 + $0x2a2] sm:$0xff]
    %v6574 = vld [vmem:[%s5812 + $0x2aa] sm:$0xff]
    %v6575 = vld [vmem:[%s5812 + $0x2ba] sm:$0xff]
    %v6576 = vld [vmem:[%s5812 + $0x2c2] sm:$0xff]
    %v6577 = vld [vmem:[%s5812 + $0x2d2] sm:$0xff]
    %v6578 = vld [vmem:[%s5812 + $0x2da] sm:$0xff]
    %v6579 = vld [vmem:[%s5812 + $0x2ea] sm:$0xff]
    %v6580 = vld [vmem:[%s5812 + $0x2f2] sm:$0xff]
    %v6581 = vld [vmem:[%s5812 + $0x302] sm:$0xff]
    %v6582 = vld [vmem:[%s5812 + $0x30a] sm:$0xff]
    %v6583 = vld [vmem:[%s5812 + $0x31a] sm:$0xff]
    %v6584 = vld [vmem:[%s5812 + $0x322] sm:$0xff]
    %s6585 = scalar_lea.vmem [#allocation6], 1024
    %v6586 = vld [vmem:[%s6585] sm:$0xff]
    %v6587 = vld [vmem:[%s6585 + $0x8] sm:$0xff]
    %v6588 = vld [vmem:[%s6585 + $0x10] sm:$0xff]
    %v6589 = vld [vmem:[%s6585 + $0x18] sm:$0xff]
    %v6590 = vld [vmem:[%s6585 + $0x20] sm:$0xff]
    %v6591 = vld [vmem:[%s6585 + $0x28] sm:$0xff]
    %v6592 = vld [vmem:[%s6585 + $0x30] sm:$0xff]
    %v6593 = vld [vmem:[%s6585 + $0x38] sm:$0xff]
    %v6594 = vld [vmem:[%s6585 + $0x40] sm:$0xff]
    %v6595 = vld [vmem:[%s6585 + $0x48] sm:$0xff]
    %v6596 = vld [vmem:[%s6585 + $0x50] sm:$0xff]
    %v6597 = vld [vmem:[%s6585 + $0x58] sm:$0xff]
    %v6598 = vld [vmem:[%s6585 + $0x60] sm:$0xff]
    %v6599 = vld [vmem:[%s6585 + $0x68] sm:$0xff]
    %v6600 = vld [vmem:[%s6585 + $0x70] sm:$0xff]
    %v6601 = vld [vmem:[%s6585 + $0x78] sm:$0xff]
    %6602 = vmatpush.msra.mxu0 %v6601
    %6603 = vmatpush.msra.mxu0 %v6600
    %6604 = vmatpush.msra.mxu0 %v6599
    %6605 = vmatpush.msra.mxu0 %v6598
    %6606 = vmatpush.msra.mxu0 %v6597
    %6607 = vmatpush.msra.mxu0 %v6596
    %6608 = vmatpush.msra.mxu0 %v6595
    %6609 = vmatpush.msra.mxu0 %v6594
    %6610 = vmatpush.msra.mxu0 %v6593
    %6611 = vmatpush.msra.mxu0 %v6592
    %6612 = vmatpush.msra.mxu0 %v6591
    %6613 = vmatpush.msra.mxu0 %v6590
    %6614 = vmatpush.msra.mxu0 %v6589
    %6615 = vmatpush.msra.mxu0 %v6588
    %6616 = vmatpush.msra.mxu0 %v6587
    %6617 = vmatpush.msra.mxu0 %v6586
    %6618 = vmatmul.f32.gmra.mxu0 %v6521
    %v6619 = vpop.f32.mrf.mxu0
    %v6620 = vadd.f32 0.0, %v6619
    %6621 = vmatmul.f32.gmra.mxu0 %v6522
    %v6622 = vpop.f32.mrf.mxu0
    %v6623 = vadd.f32 0.0, %v6622
    %6624 = vmatmul.f32.gmra.mxu0 %v6523
    %v6625 = vpop.f32.mrf.mxu0
    %v6626 = vadd.f32 0.0, %v6625
    %6627 = vmatmul.f32.gmra.mxu0 %v6524
    %v6628 = vpop.f32.mrf.mxu0
    %v6629 = vadd.f32 0.0, %v6628
    %6630 = vmatmul.f32.gmra.mxu0 %v6525
    %v6631 = vpop.f32.mrf.mxu0
    %v6632 = vadd.f32 0.0, %v6631
    %6633 = vmatmul.f32.gmra.mxu0 %v6526
    %v6634 = vpop.f32.mrf.mxu0
    %v6635 = vadd.f32 0.0, %v6634
    %6636 = vmatmul.f32.gmra.mxu0 %v6527
    %v6637 = vpop.f32.mrf.mxu0
    %v6638 = vadd.f32 0.0, %v6637
    %6639 = vmatmul.f32.gmra.mxu0 %v6528
    %v6640 = vpop.f32.mrf.mxu0
    %v6641 = vadd.f32 0.0, %v6640
    %6642 = vmatmul.f32.gmra.mxu0 %v6529
    %v6643 = vpop.f32.mrf.mxu0
    %v6644 = vadd.f32 0.0, %v6643
    %6645 = vmatmul.f32.gmra.mxu0 %v6530
    %v6646 = vpop.f32.mrf.mxu0
    %v6647 = vadd.f32 0.0, %v6646
    %6648 = vmatmul.f32.gmra.mxu0 %v6531
    %v6649 = vpop.f32.mrf.mxu0
    %v6650 = vadd.f32 0.0, %v6649
    %6651 = vmatmul.f32.gmra.mxu0 %v6532
    %v6652 = vpop.f32.mrf.mxu0
    %v6653 = vadd.f32 0.0, %v6652
    %6654 = vmatmul.f32.gmra.mxu0 %v6533
    %v6655 = vpop.f32.mrf.mxu0
    %v6656 = vadd.f32 0.0, %v6655
    %6657 = vmatmul.f32.gmra.mxu0 %v6534
    %v6658 = vpop.f32.mrf.mxu0
    %v6659 = vadd.f32 0.0, %v6658
    %6660 = vmatmul.f32.gmra.mxu0 %v6535
    %v6661 = vpop.f32.mrf.mxu0
    %v6662 = vadd.f32 0.0, %v6661
    %6663 = vmatmul.f32.gmra.mxu0 %v6536
    %v6664 = vpop.f32.mrf.mxu0
    %v6665 = vadd.f32 0.0, %v6664
    %6666 = vmatmul.f32.gmra.mxu0 %v6537
    %v6667 = vpop.f32.mrf.mxu0
    %v6668 = vadd.f32 0.0, %v6667
    %6669 = vmatmul.f32.gmra.mxu0 %v6538
    %v6670 = vpop.f32.mrf.mxu0
    %v6671 = vadd.f32 0.0, %v6670
    %6672 = vmatmul.f32.gmra.mxu0 %v6539
    %v6673 = vpop.f32.mrf.mxu0
    %v6674 = vadd.f32 0.0, %v6673
    %6675 = vmatmul.f32.gmra.mxu0 %v6540
    %v6676 = vpop.f32.mrf.mxu0
    %v6677 = vadd.f32 0.0, %v6676
    %6678 = vmatmul.f32.gmra.mxu0 %v6541
    %v6679 = vpop.f32.mrf.mxu0
    %v6680 = vadd.f32 0.0, %v6679
    %6681 = vmatmul.f32.gmra.mxu0 %v6542
    %v6682 = vpop.f32.mrf.mxu0
    %v6683 = vadd.f32 0.0, %v6682
    %6684 = vmatmul.f32.gmra.mxu0 %v6543
    %v6685 = vpop.f32.mrf.mxu0
    %v6686 = vadd.f32 0.0, %v6685
    %6687 = vmatmul.f32.gmra.mxu0 %v6544
    %v6688 = vpop.f32.mrf.mxu0
    %v6689 = vadd.f32 0.0, %v6688
    %6690 = vmatmul.f32.gmra.mxu0 %v6545
    %v6691 = vpop.f32.mrf.mxu0
    %v6692 = vadd.f32 0.0, %v6691
    %6693 = vmatmul.f32.gmra.mxu0 %v6546
    %v6694 = vpop.f32.mrf.mxu0
    %v6695 = vadd.f32 0.0, %v6694
    %6696 = vmatmul.f32.gmra.mxu0 %v6547
    %v6697 = vpop.f32.mrf.mxu0
    %v6698 = vadd.f32 0.0, %v6697
    %6699 = vmatmul.f32.gmra.mxu0 %v6548
    %v6700 = vpop.f32.mrf.mxu0
    %v6701 = vadd.f32 0.0, %v6700
    %6702 = vmatmul.f32.gmra.mxu0 %v6549
    %v6703 = vpop.f32.mrf.mxu0
    %v6704 = vadd.f32 0.0, %v6703
    %6705 = vmatmul.f32.gmra.mxu0 %v6550
    %v6706 = vpop.f32.mrf.mxu0
    %v6707 = vadd.f32 0.0, %v6706
    %6708 = vmatmul.f32.gmra.mxu0 %v6551
    %v6709 = vpop.f32.mrf.mxu0
    %v6710 = vadd.f32 0.0, %v6709
    %6711 = vmatmul.f32.gmra.mxu0 %v6552
    %v6712 = vpop.f32.mrf.mxu0
    %v6713 = vadd.f32 0.0, %v6712
    %6714 = vmatmul.f32.gmra.mxu0 %v6553
    %v6715 = vpop.f32.mrf.mxu0
    %v6716 = vadd.f32 0.0, %v6715
    %6717 = vmatmul.f32.gmra.mxu0 %v6554
    %v6718 = vpop.f32.mrf.mxu0
    %v6719 = vadd.f32 0.0, %v6718
    %6720 = vmatmul.f32.gmra.mxu0 %v6555
    %v6721 = vpop.f32.mrf.mxu0
    %v6722 = vadd.f32 0.0, %v6721
    %6723 = vmatmul.f32.gmra.mxu0 %v6556
    %v6724 = vpop.f32.mrf.mxu0
    %v6725 = vadd.f32 0.0, %v6724
    %6726 = vmatmul.f32.gmra.mxu0 %v6557
    %v6727 = vpop.f32.mrf.mxu0
    %v6728 = vadd.f32 0.0, %v6727
    %6729 = vmatmul.f32.gmra.mxu0 %v6558
    %v6730 = vpop.f32.mrf.mxu0
    %v6731 = vadd.f32 0.0, %v6730
    %6732 = vmatmul.f32.gmra.mxu0 %v6559
    %v6733 = vpop.f32.mrf.mxu0
    %v6734 = vadd.f32 0.0, %v6733
    %6735 = vmatmul.f32.gmra.mxu0 %v6560
    %v6736 = vpop.f32.mrf.mxu0
    %v6737 = vadd.f32 0.0, %v6736
    %6738 = vmatmul.f32.gmra.mxu0 %v6561
    %v6739 = vpop.f32.mrf.mxu0
    %v6740 = vadd.f32 0.0, %v6739
    %6741 = vmatmul.f32.gmra.mxu0 %v6562
    %v6742 = vpop.f32.mrf.mxu0
    %v6743 = vadd.f32 0.0, %v6742
    %6744 = vmatmul.f32.gmra.mxu0 %v6563
    %v6745 = vpop.f32.mrf.mxu0
    %v6746 = vadd.f32 0.0, %v6745
    %6747 = vmatmul.f32.gmra.mxu0 %v6564
    %v6748 = vpop.f32.mrf.mxu0
    %v6749 = vadd.f32 0.0, %v6748
    %6750 = vmatmul.f32.gmra.mxu0 %v6565
    %v6751 = vpop.f32.mrf.mxu0
    %v6752 = vadd.f32 0.0, %v6751
    %6753 = vmatmul.f32.gmra.mxu0 %v6566
    %v6754 = vpop.f32.mrf.mxu0
    %v6755 = vadd.f32 0.0, %v6754
    %6756 = vmatmul.f32.gmra.mxu0 %v6567
    %v6757 = vpop.f32.mrf.mxu0
    %v6758 = vadd.f32 0.0, %v6757
    %6759 = vmatmul.f32.gmra.mxu0 %v6568
    %v6760 = vpop.f32.mrf.mxu0
    %v6761 = vadd.f32 0.0, %v6760
    %6762 = vmatmul.f32.gmra.mxu0 %v6569
    %v6763 = vpop.f32.mrf.mxu0
    %v6764 = vadd.f32 0.0, %v6763
    %6765 = vmatmul.f32.gmra.mxu0 %v6570
    %v6766 = vpop.f32.mrf.mxu0
    %v6767 = vadd.f32 0.0, %v6766
    %6768 = vmatmul.f32.gmra.mxu0 %v6571
    %v6769 = vpop.f32.mrf.mxu0
    %v6770 = vadd.f32 0.0, %v6769
    %6771 = vmatmul.f32.gmra.mxu0 %v6572
    %v6772 = vpop.f32.mrf.mxu0
    %v6773 = vadd.f32 0.0, %v6772
    %6774 = vmatmul.f32.gmra.mxu0 %v6573
    %v6775 = vpop.f32.mrf.mxu0
    %v6776 = vadd.f32 0.0, %v6775
    %6777 = vmatmul.f32.gmra.mxu0 %v6574
    %v6778 = vpop.f32.mrf.mxu0
    %v6779 = vadd.f32 0.0, %v6778
    %6780 = vmatmul.f32.gmra.mxu0 %v6575
    %v6781 = vpop.f32.mrf.mxu0
    %v6782 = vadd.f32 0.0, %v6781
    %6783 = vmatmul.f32.gmra.mxu0 %v6576
    %v6784 = vpop.f32.mrf.mxu0
    %v6785 = vadd.f32 0.0, %v6784
    %6786 = vmatmul.f32.gmra.mxu0 %v6577
    %v6787 = vpop.f32.mrf.mxu0
    %v6788 = vadd.f32 0.0, %v6787
    %6789 = vmatmul.f32.gmra.mxu0 %v6578
    %v6790 = vpop.f32.mrf.mxu0
    %v6791 = vadd.f32 0.0, %v6790
    %6792 = vmatmul.f32.gmra.mxu0 %v6579
    %v6793 = vpop.f32.mrf.mxu0
    %v6794 = vadd.f32 0.0, %v6793
    %6795 = vmatmul.f32.gmra.mxu0 %v6580
    %v6796 = vpop.f32.mrf.mxu0
    %v6797 = vadd.f32 0.0, %v6796
    %6798 = vmatmul.f32.gmra.mxu0 %v6581
    %v6799 = vpop.f32.mrf.mxu0
    %v6800 = vadd.f32 0.0, %v6799
    %6801 = vmatmul.f32.gmra.mxu0 %v6582
    %v6802 = vpop.f32.mrf.mxu0
    %v6803 = vadd.f32 0.0, %v6802
    %6804 = vmatmul.f32.gmra.mxu0 %v6583
    %v6805 = vpop.f32.mrf.mxu0
    %v6806 = vadd.f32 0.0, %v6805
    %6807 = vmatmul.f32.gmra.mxu0 %v6584
    %v6808 = vpop.f32.mrf.mxu0
    %v6809 = vadd.f32 0.0, %v6808
    %6810 = vdwg.mxu0
    %v6811 = vadd.f32 %v6457, %v6620
    %v6812 = vadd.f32 %v6458, %v6623
    %v6813 = vadd.f32 %v6459, %v6626
    %v6814 = vadd.f32 %v6460, %v6629
    %v6815 = vadd.f32 %v6461, %v6632
    %v6816 = vadd.f32 %v6462, %v6635
    %v6817 = vadd.f32 %v6463, %v6638
    %v6818 = vadd.f32 %v6464, %v6641
    %v6819 = vadd.f32 %v6465, %v6644
    %v6820 = vadd.f32 %v6466, %v6647
    %v6821 = vadd.f32 %v6467, %v6650
    %v6822 = vadd.f32 %v6468, %v6653
    %v6823 = vadd.f32 %v6469, %v6656
    %v6824 = vadd.f32 %v6470, %v6659
    %v6825 = vadd.f32 %v6471, %v6662
    %v6826 = vadd.f32 %v6472, %v6665
    %v6827 = vadd.f32 %v6473, %v6668
    %v6828 = vadd.f32 %v6474, %v6671
    %v6829 = vadd.f32 %v6475, %v6674
    %v6830 = vadd.f32 %v6476, %v6677
    %v6831 = vadd.f32 %v6477, %v6680
    %v6832 = vadd.f32 %v6478, %v6683
    %v6833 = vadd.f32 %v6479, %v6686
    %v6834 = vadd.f32 %v6480, %v6689
    %v6835 = vadd.f32 %v6481, %v6692
    %v6836 = vadd.f32 %v6482, %v6695
    %v6837 = vadd.f32 %v6483, %v6698
    %v6838 = vadd.f32 %v6484, %v6701
    %v6839 = vadd.f32 %v6485, %v6704
    %v6840 = vadd.f32 %v6486, %v6707
    %v6841 = vadd.f32 %v6487, %v6710
    %v6842 = vadd.f32 %v6488, %v6713
    %v6843 = vadd.f32 %v6489, %v6716
    %v6844 = vadd.f32 %v6490, %v6719
    %v6845 = vadd.f32 %v6491, %v6722
    %v6846 = vadd.f32 %v6492, %v6725
    %v6847 = vadd.f32 %v6493, %v6728
    %v6848 = vadd.f32 %v6494, %v6731
    %v6849 = vadd.f32 %v6495, %v6734
    %v6850 = vadd.f32 %v6496, %v6737
    %v6851 = vadd.f32 %v6497, %v6740
    %v6852 = vadd.f32 %v6498, %v6743
    %v6853 = vadd.f32 %v6499, %v6746
    %v6854 = vadd.f32 %v6500, %v6749
    %v6855 = vadd.f32 %v6501, %v6752
    %v6856 = vadd.f32 %v6502, %v6755
    %v6857 = vadd.f32 %v6503, %v6758
    %v6858 = vadd.f32 %v6504, %v6761
    %v6859 = vadd.f32 %v6505, %v6764
    %v6860 = vadd.f32 %v6506, %v6767
    %v6861 = vadd.f32 %v6507, %v6770
    %v6862 = vadd.f32 %v6508, %v6773
    %v6863 = vadd.f32 %v6509, %v6776
    %v6864 = vadd.f32 %v6510, %v6779
    %v6865 = vadd.f32 %v6511, %v6782
    %v6866 = vadd.f32 %v6512, %v6785
    %v6867 = vadd.f32 %v6513, %v6788
    %v6868 = vadd.f32 %v6514, %v6791
    %v6869 = vadd.f32 %v6515, %v6794
    %v6870 = vadd.f32 %v6516, %v6797
    %v6871 = vadd.f32 %v6517, %v6800
    %v6872 = vadd.f32 %v6518, %v6803
    %v6873 = vadd.f32 %v6519, %v6806
    %v6874 = vadd.f32 %v6520, %v6809
    %v6875 = vld [vmem:[%s7] sm:$0x1]
    %v6877 = vperm.slane %v6875, 0
    %v6879 = vadd.f32 %v6811, %v6877
    %v6880 = vadd.f32 %v6812, %v6877
    %v6881 = vadd.f32 %v6813, %v6877
    %v6882 = vadd.f32 %v6814, %v6877
    %v6883 = vadd.f32 %v6815, %v6877
    %v6884 = vadd.f32 %v6816, %v6877
    %v6885 = vadd.f32 %v6817, %v6877
    %v6886 = vadd.f32 %v6818, %v6877
    %v6887 = vadd.f32 %v6819, %v6877
    %v6888 = vadd.f32 %v6820, %v6877
    %v6889 = vadd.f32 %v6821, %v6877
    %v6890 = vadd.f32 %v6822, %v6877
    %v6891 = vadd.f32 %v6823, %v6877
    %v6892 = vadd.f32 %v6824, %v6877
    %v6893 = vadd.f32 %v6825, %v6877
    %v6894 = vadd.f32 %v6826, %v6877
    %v6895 = vadd.f32 %v6827, %v6877
    %v6896 = vadd.f32 %v6828, %v6877
    %v6897 = vadd.f32 %v6829, %v6877
    %v6898 = vadd.f32 %v6830, %v6877
    %v6899 = vadd.f32 %v6831, %v6877
    %v6900 = vadd.f32 %v6832, %v6877
    %v6901 = vadd.f32 %v6833, %v6877
    %v6902 = vadd.f32 %v6834, %v6877
    %v6903 = vadd.f32 %v6835, %v6877
    %v6904 = vadd.f32 %v6836, %v6877
    %v6905 = vadd.f32 %v6837, %v6877
    %v6906 = vadd.f32 %v6838, %v6877
    %v6907 = vadd.f32 %v6839, %v6877
    %v6908 = vadd.f32 %v6840, %v6877
    %v6909 = vadd.f32 %v6841, %v6877
    %v6910 = vadd.f32 %v6842, %v6877
    %v6911 = vadd.f32 %v6843, %v6877
    %v6912 = vadd.f32 %v6844, %v6877
    %v6913 = vadd.f32 %v6845, %v6877
    %v6914 = vadd.f32 %v6846, %v6877
    %v6915 = vadd.f32 %v6847, %v6877
    %v6916 = vadd.f32 %v6848, %v6877
    %v6917 = vadd.f32 %v6849, %v6877
    %v6918 = vadd.f32 %v6850, %v6877
    %v6919 = vadd.f32 %v6851, %v6877
    %v6920 = vadd.f32 %v6852, %v6877
    %v6921 = vadd.f32 %v6853, %v6877
    %v6922 = vadd.f32 %v6854, %v6877
    %v6923 = vadd.f32 %v6855, %v6877
    %v6924 = vadd.f32 %v6856, %v6877
    %v6925 = vadd.f32 %v6857, %v6877
    %v6926 = vadd.f32 %v6858, %v6877
    %v6927 = vadd.f32 %v6859, %v6877
    %v6928 = vadd.f32 %v6860, %v6877
    %v6929 = vadd.f32 %v6861, %v6877
    %v6930 = vadd.f32 %v6862, %v6877
    %v6931 = vadd.f32 %v6863, %v6877
    %v6932 = vadd.f32 %v6864, %v6877
    %v6933 = vadd.f32 %v6865, %v6877
    %v6934 = vadd.f32 %v6866, %v6877
    %v6935 = vadd.f32 %v6867, %v6877
    %v6936 = vadd.f32 %v6868, %v6877
    %v6937 = vadd.f32 %v6869, %v6877
    %v6938 = vadd.f32 %v6870, %v6877
    %v6939 = vadd.f32 %v6871, %v6877
    %v6940 = vadd.f32 %v6872, %v6877
    %v6941 = vadd.f32 %v6873, %v6877
    %v6942 = vadd.f32 %v6874, %v6877
    %v6943 = vadd.f32 %v6879, %v6880
    %v6944 = vadd.f32 %v6943, %v6881
    %v6945 = vadd.f32 %v6944, %v6882
    %v6946 = vadd.f32 %v6945, %v6883
    %v6947 = vadd.f32 %v6946, %v6884
    %v6948 = vadd.f32 %v6947, %v6885
    %v6949 = vadd.f32 %v6948, %v6886
    %v6950 = vadd.f32 %v6949, %v6887
    %v6951 = vadd.f32 %v6950, %v6888
    %v6952 = vadd.f32 %v6951, %v6889
    %v6953 = vadd.f32 %v6952, %v6890
    %v6954 = vadd.f32 %v6953, %v6891
    %v6955 = vadd.f32 %v6954, %v6892
    %v6956 = vadd.f32 %v6955, %v6893
    %v6957 = vadd.f32 %v6956, %v6894
    %v6958 = vadd.f32 %v6957, %v6895
    %v6959 = vadd.f32 %v6958, %v6896
    %v6960 = vadd.f32 %v6959, %v6897
    %v6961 = vadd.f32 %v6960, %v6898
    %v6962 = vadd.f32 %v6961, %v6899
    %v6963 = vadd.f32 %v6962, %v6900
    %v6964 = vadd.f32 %v6963, %v6901
    %v6965 = vadd.f32 %v6964, %v6902
    %v6966 = vadd.f32 %v6965, %v6903
    %v6967 = vadd.f32 %v6966, %v6904
    %v6968 = vadd.f32 %v6967, %v6905
    %v6969 = vadd.f32 %v6968, %v6906
    %v6970 = vadd.f32 %v6969, %v6907
    %v6971 = vadd.f32 %v6970, %v6908
    %v6972 = vadd.f32 %v6971, %v6909
    %v6973 = vadd.f32 %v6972, %v6910
    %v6974 = vadd.f32 %v6973, %v6911
    %v6975 = vadd.f32 %v6974, %v6912
    %v6976 = vadd.f32 %v6975, %v6913
    %v6977 = vadd.f32 %v6976, %v6914
    %v6978 = vadd.f32 %v6977, %v6915
    %v6979 = vadd.f32 %v6978, %v6916
    %v6980 = vadd.f32 %v6979, %v6917
    %v6981 = vadd.f32 %v6980, %v6918
    %v6982 = vadd.f32 %v6981, %v6919
    %v6983 = vadd.f32 %v6982, %v6920
    %v6984 = vadd.f32 %v6983, %v6921
    %v6985 = vadd.f32 %v6984, %v6922
    %v6986 = vadd.f32 %v6985, %v6923
    %v6987 = vadd.f32 %v6986, %v6924
    %v6988 = vadd.f32 %v6987, %v6925
    %v6989 = vadd.f32 %v6988, %v6926
    %v6990 = vadd.f32 %v6989, %v6927
    %v6991 = vadd.f32 %v6990, %v6928
    %v6992 = vadd.f32 %v6991, %v6929
    %v6993 = vadd.f32 %v6992, %v6930
    %v6994 = vadd.f32 %v6993, %v6931
    %v6995 = vadd.f32 %v6994, %v6932
    %v6996 = vadd.f32 %v6995, %v6933
    %v6997 = vadd.f32 %v6996, %v6934
    %v6998 = vadd.f32 %v6997, %v6935
    %v6999 = vadd.f32 %v6998, %v6936
    %v7000 = vadd.f32 %v6999, %v6937
    %v7001 = vadd.f32 %v7000, %v6938
    %v7002 = vadd.f32 %v7001, %v6939
    %v7003 = vadd.f32 %v7002, %v6940
    %v7004 = vadd.f32 %v7003, %v6941
    %v7005 = vadd.f32 %v7004, %v6942
    %v7006 = vrot.slane %v7005, 4
    %v7007 = vadd.f32 %v7005, %v7006
    %v7008 = vrot.slane %v7007, 2
    %v7009 = vadd.f32 %v7007, %v7008
    %v7010 = vrot.slane %v7009, 1
    %v7011 = vadd.f32 %v7009, %v7010
    %v7012 = vmul.f32 %v7011, 0.001953125
    %v7013 = vmul.f32 %v6879, %v6879
    %v7014 = vmul.f32 %v6880, %v6880
    %v7015 = vmul.f32 %v6881, %v6881
    %v7016 = vmul.f32 %v6882, %v6882
    %v7017 = vmul.f32 %v6883, %v6883
    %v7018 = vmul.f32 %v6884, %v6884
    %v7019 = vmul.f32 %v6885, %v6885
    %v7020 = vmul.f32 %v6886, %v6886
    %v7021 = vmul.f32 %v6887, %v6887
    %v7022 = vmul.f32 %v6888, %v6888
    %v7023 = vmul.f32 %v6889, %v6889
    %v7024 = vmul.f32 %v6890, %v6890
    %v7025 = vmul.f32 %v6891, %v6891
    %v7026 = vmul.f32 %v6892, %v6892
    %v7027 = vmul.f32 %v6893, %v6893
    %v7028 = vmul.f32 %v6894, %v6894
    %v7029 = vmul.f32 %v6895, %v6895
    %v7030 = vmul.f32 %v6896, %v6896
    %v7031 = vmul.f32 %v6897, %v6897
    %v7032 = vmul.f32 %v6898, %v6898
    %v7033 = vmul.f32 %v6899, %v6899
    %v7034 = vmul.f32 %v6900, %v6900
    %v7035 = vmul.f32 %v6901, %v6901
    %v7036 = vmul.f32 %v6902, %v6902
    %v7037 = vmul.f32 %v6903, %v6903
    %v7038 = vmul.f32 %v6904, %v6904
    %v7039 = vmul.f32 %v6905, %v6905
    %v7040 = vmul.f32 %v6906, %v6906
    %v7041 = vmul.f32 %v6907, %v6907
    %v7042 = vmul.f32 %v6908, %v6908
    %v7043 = vmul.f32 %v6909, %v6909
    %v7044 = vmul.f32 %v6910, %v6910
    %v7045 = vmul.f32 %v6911, %v6911
    %v7046 = vmul.f32 %v6912, %v6912
    %v7047 = vmul.f32 %v6913, %v6913
    %v7048 = vmul.f32 %v6914, %v6914
    %v7049 = vmul.f32 %v6915, %v6915
    %v7050 = vmul.f32 %v6916, %v6916
    %v7051 = vmul.f32 %v6917, %v6917
    %v7052 = vmul.f32 %v6918, %v6918
    %v7053 = vmul.f32 %v6919, %v6919
    %v7054 = vmul.f32 %v6920, %v6920
    %v7055 = vmul.f32 %v6921, %v6921
    %v7056 = vmul.f32 %v6922, %v6922
    %v7057 = vmul.f32 %v6923, %v6923
    %v7058 = vmul.f32 %v6924, %v6924
    %v7059 = vmul.f32 %v6925, %v6925
    %v7060 = vmul.f32 %v6926, %v6926
    %v7061 = vmul.f32 %v6927, %v6927
    %v7062 = vmul.f32 %v6928, %v6928
    %v7063 = vmul.f32 %v6929, %v6929
    %v7064 = vmul.f32 %v6930, %v6930
    %v7065 = vmul.f32 %v6931, %v6931
    %v7066 = vmul.f32 %v6932, %v6932
    %v7067 = vmul.f32 %v6933, %v6933
    %v7068 = vmul.f32 %v6934, %v6934
    %v7069 = vmul.f32 %v6935, %v6935
    %v7070 = vmul.f32 %v6936, %v6936
    %v7071 = vmul.f32 %v6937, %v6937
    %v7072 = vmul.f32 %v6938, %v6938
    %v7073 = vmul.f32 %v6939, %v6939
    %v7074 = vmul.f32 %v6940, %v6940
    %v7075 = vmul.f32 %v6941, %v6941
    %v7076 = vmul.f32 %v6942, %v6942
    %v7077 = vadd.f32 %v7013, %v7014
    %v7078 = vadd.f32 %v7077, %v7015
    %v7079 = vadd.f32 %v7078, %v7016
    %v7080 = vadd.f32 %v7079, %v7017
    %v7081 = vadd.f32 %v7080, %v7018
    %v7082 = vadd.f32 %v7081, %v7019
    %v7083 = vadd.f32 %v7082, %v7020
    %v7084 = vadd.f32 %v7083, %v7021
    %v7085 = vadd.f32 %v7084, %v7022
    %v7086 = vadd.f32 %v7085, %v7023
    %v7087 = vadd.f32 %v7086, %v7024
    %v7088 = vadd.f32 %v7087, %v7025
    %v7089 = vadd.f32 %v7088, %v7026
    %v7090 = vadd.f32 %v7089, %v7027
    %v7091 = vadd.f32 %v7090, %v7028
    %v7092 = vadd.f32 %v7091, %v7029
    %v7093 = vadd.f32 %v7092, %v7030
    %v7094 = vadd.f32 %v7093, %v7031
    %v7095 = vadd.f32 %v7094, %v7032
    %v7096 = vadd.f32 %v7095, %v7033
    %v7097 = vadd.f32 %v7096, %v7034
    %v7098 = vadd.f32 %v7097, %v7035
    %v7099 = vadd.f32 %v7098, %v7036
    %v7100 = vadd.f32 %v7099, %v7037
    %v7101 = vadd.f32 %v7100, %v7038
    %v7102 = vadd.f32 %v7101, %v7039
    %v7103 = vadd.f32 %v7102, %v7040
    %v7104 = vadd.f32 %v7103, %v7041
    %v7105 = vadd.f32 %v7104, %v7042
    %v7106 = vadd.f32 %v7105, %v7043
    %v7107 = vadd.f32 %v7106, %v7044
    %v7108 = vadd.f32 %v7107, %v7045
    %v7109 = vadd.f32 %v7108, %v7046
    %v7110 = vadd.f32 %v7109, %v7047
    %v7111 = vadd.f32 %v7110, %v7048
    %v7112 = vadd.f32 %v7111, %v7049
    %v7113 = vadd.f32 %v7112, %v7050
    %v7114 = vadd.f32 %v7113, %v7051
    %v7115 = vadd.f32 %v7114, %v7052
    %v7116 = vadd.f32 %v7115, %v7053
    %v7117 = vadd.f32 %v7116, %v7054
    %v7118 = vadd.f32 %v7117, %v7055
    %v7119 = vadd.f32 %v7118, %v7056
    %v7120 = vadd.f32 %v7119, %v7057
    %v7121 = vadd.f32 %v7120, %v7058
    %v7122 = vadd.f32 %v7121, %v7059
    %v7123 = vadd.f32 %v7122, %v7060
    %v7124 = vadd.f32 %v7123, %v7061
    %v7125 = vadd.f32 %v7124, %v7062
    %v7126 = vadd.f32 %v7125, %v7063
    %v7127 = vadd.f32 %v7126, %v7064
    %v7128 = vadd.f32 %v7127, %v7065
    %v7129 = vadd.f32 %v7128, %v7066
    %v7130 = vadd.f32 %v7129, %v7067
    %v7131 = vadd.f32 %v7130, %v7068
    %v7132 = vadd.f32 %v7131, %v7069
    %v7133 = vadd.f32 %v7132, %v7070
    %v7134 = vadd.f32 %v7133, %v7071
    %v7135 = vadd.f32 %v7134, %v7072
    %v7136 = vadd.f32 %v7135, %v7073
    %v7137 = vadd.f32 %v7136, %v7074
    %v7138 = vadd.f32 %v7137, %v7075
    %v7139 = vadd.f32 %v7138, %v7076
    %v7140 = vrot.slane %v7139, 4
    %v7141 = vadd.f32 %v7139, %v7140
    %v7142 = vrot.slane %v7141, 2
    %v7143 = vadd.f32 %v7141, %v7142
    %v7144 = vrot.slane %v7143, 1
    %v7145 = vadd.f32 %v7143, %v7144
    %v7146 = vmul.f32 %v7145, 0.001953125
    %v7147 = vmul.f32 %v7012, %v7012
    %v7148 = vsub.f32 %v7146, %v7147
    %v7149 = vadd.f32 %v7148, 1e-05
    %v7150 = vrsqrt.pop %v7149
    %v7151 = vmul.f32 %v7150, %v7149
    %v7152 = vmul.f32 %v7151, %v7150
    %v7153 = vmul.f32 0.5, %v7152
    %v7154 = vsub.f32 1.5, %v7153
    %v7155 = vmul.f32 %v7150, %v7154
    %vm7156 = vweird.f32 %v7149
    %vm7157 = vweird.f32 %v7150
    %vm7158 = vmor %vm7156, %vm7157
    %v7159 = vsel %vm7158, %v7150, %v7155
    %v7160 = vld [vmem:[%s8] sm:$0x1]
    %v7161 = vmul.f32 %v7159, %v7160
    %v7162 = vsub.f32 %v6879, %v7012
    %v7163 = vsub.f32 %v6880, %v7012
    %v7164 = vsub.f32 %v6881, %v7012
    %v7165 = vsub.f32 %v6882, %v7012
    %v7166 = vsub.f32 %v6883, %v7012
    %v7167 = vsub.f32 %v6884, %v7012
    %v7168 = vsub.f32 %v6885, %v7012
    %v7169 = vsub.f32 %v6886, %v7012
    %v7170 = vsub.f32 %v6887, %v7012
    %v7171 = vsub.f32 %v6888, %v7012
    %v7172 = vsub.f32 %v6889, %v7012
    %v7173 = vsub.f32 %v6890, %v7012
    %v7174 = vsub.f32 %v6891, %v7012
    %v7175 = vsub.f32 %v6892, %v7012
    %v7176 = vsub.f32 %v6893, %v7012
    %v7177 = vsub.f32 %v6894, %v7012
    %v7178 = vsub.f32 %v6895, %v7012
    %v7179 = vsub.f32 %v6896, %v7012
    %v7180 = vsub.f32 %v6897, %v7012
    %v7181 = vsub.f32 %v6898, %v7012
    %v7182 = vsub.f32 %v6899, %v7012
    %v7183 = vsub.f32 %v6900, %v7012
    %v7184 = vsub.f32 %v6901, %v7012
    %v7185 = vsub.f32 %v6902, %v7012
    %v7186 = vsub.f32 %v6903, %v7012
    %v7187 = vsub.f32 %v6904, %v7012
    %v7188 = vsub.f32 %v6905, %v7012
    %v7189 = vsub.f32 %v6906, %v7012
    %v7190 = vsub.f32 %v6907, %v7012
    %v7191 = vsub.f32 %v6908, %v7012
    %v7192 = vsub.f32 %v6909, %v7012
    %v7193 = vsub.f32 %v6910, %v7012
    %v7194 = vsub.f32 %v6911, %v7012
    %v7195 = vsub.f32 %v6912, %v7012
    %v7196 = vsub.f32 %v6913, %v7012
    %v7197 = vsub.f32 %v6914, %v7012
    %v7198 = vsub.f32 %v6915, %v7012
    %v7199 = vsub.f32 %v6916, %v7012
    %v7200 = vsub.f32 %v6917, %v7012
    %v7201 = vsub.f32 %v6918, %v7012
    %v7202 = vsub.f32 %v6919, %v7012
    %v7203 = vsub.f32 %v6920, %v7012
    %v7204 = vsub.f32 %v6921, %v7012
    %v7205 = vsub.f32 %v6922, %v7012
    %v7206 = vsub.f32 %v6923, %v7012
    %v7207 = vsub.f32 %v6924, %v7012
    %v7208 = vsub.f32 %v6925, %v7012
    %v7209 = vsub.f32 %v6926, %v7012
    %v7210 = vsub.f32 %v6927, %v7012
    %v7211 = vsub.f32 %v6928, %v7012
    %v7212 = vsub.f32 %v6929, %v7012
    %v7213 = vsub.f32 %v6930, %v7012
    %v7214 = vsub.f32 %v6931, %v7012
    %v7215 = vsub.f32 %v6932, %v7012
    %v7216 = vsub.f32 %v6933, %v7012
    %v7217 = vsub.f32 %v6934, %v7012
    %v7218 = vsub.f32 %v6935, %v7012
    %v7219 = vsub.f32 %v6936, %v7012
    %v7220 = vsub.f32 %v6937, %v7012
    %v7221 = vsub.f32 %v6938, %v7012
    %v7222 = vsub.f32 %v6939, %v7012
    %v7223 = vsub.f32 %v6940, %v7012
    %v7224 = vsub.f32 %v6941, %v7012
    %v7225 = vsub.f32 %v6942, %v7012
    %v7226 = vperm.slane %v7161, 0
    %v7227 = vmul.f32 %v7162, %v7226
    %v7228 = vmul.f32 %v7163, %v7226
    %v7229 = vmul.f32 %v7164, %v7226
    %v7230 = vmul.f32 %v7165, %v7226
    %v7231 = vmul.f32 %v7166, %v7226
    %v7232 = vmul.f32 %v7167, %v7226
    %v7233 = vmul.f32 %v7168, %v7226
    %v7234 = vmul.f32 %v7169, %v7226
    %v7235 = vmul.f32 %v7170, %v7226
    %v7236 = vmul.f32 %v7171, %v7226
    %v7237 = vmul.f32 %v7172, %v7226
    %v7238 = vmul.f32 %v7173, %v7226
    %v7239 = vmul.f32 %v7174, %v7226
    %v7240 = vmul.f32 %v7175, %v7226
    %v7241 = vmul.f32 %v7176, %v7226
    %v7242 = vmul.f32 %v7177, %v7226
    %v7243 = vmul.f32 %v7178, %v7226
    %v7244 = vmul.f32 %v7179, %v7226
    %v7245 = vmul.f32 %v7180, %v7226
    %v7246 = vmul.f32 %v7181, %v7226
    %v7247 = vmul.f32 %v7182, %v7226
    %v7248 = vmul.f32 %v7183, %v7226
    %v7249 = vmul.f32 %v7184, %v7226
    %v7250 = vmul.f32 %v7185, %v7226
    %v7251 = vmul.f32 %v7186, %v7226
    %v7252 = vmul.f32 %v7187, %v7226
    %v7253 = vmul.f32 %v7188, %v7226
    %v7254 = vmul.f32 %v7189, %v7226
    %v7255 = vmul.f32 %v7190, %v7226
    %v7256 = vmul.f32 %v7191, %v7226
    %v7257 = vmul.f32 %v7192, %v7226
    %v7258 = vmul.f32 %v7193, %v7226
    %v7259 = vmul.f32 %v7194, %v7226
    %v7260 = vmul.f32 %v7195, %v7226
    %v7261 = vmul.f32 %v7196, %v7226
    %v7262 = vmul.f32 %v7197, %v7226
    %v7263 = vmul.f32 %v7198, %v7226
    %v7264 = vmul.f32 %v7199, %v7226
    %v7265 = vmul.f32 %v7200, %v7226
    %v7266 = vmul.f32 %v7201, %v7226
    %v7267 = vmul.f32 %v7202, %v7226
    %v7268 = vmul.f32 %v7203, %v7226
    %v7269 = vmul.f32 %v7204, %v7226
    %v7270 = vmul.f32 %v7205, %v7226
    %v7271 = vmul.f32 %v7206, %v7226
    %v7272 = vmul.f32 %v7207, %v7226
    %v7273 = vmul.f32 %v7208, %v7226
    %v7274 = vmul.f32 %v7209, %v7226
    %v7275 = vmul.f32 %v7210, %v7226
    %v7276 = vmul.f32 %v7211, %v7226
    %v7277 = vmul.f32 %v7212, %v7226
    %v7278 = vmul.f32 %v7213, %v7226
    %v7279 = vmul.f32 %v7214, %v7226
    %v7280 = vmul.f32 %v7215, %v7226
    %v7281 = vmul.f32 %v7216, %v7226
    %v7282 = vmul.f32 %v7217, %v7226
    %v7283 = vmul.f32 %v7218, %v7226
    %v7284 = vmul.f32 %v7219, %v7226
    %v7285 = vmul.f32 %v7220, %v7226
    %v7286 = vmul.f32 %v7221, %v7226
    %v7287 = vmul.f32 %v7222, %v7226
    %v7288 = vmul.f32 %v7223, %v7226
    %v7289 = vmul.f32 %v7224, %v7226
    %v7290 = vmul.f32 %v7225, %v7226
    %v7291 = vld [vmem:[%s9] sm:$0x1]
    %v7293 = vperm.slane %v7291, 0
    %v7295 = vadd.f32 %v7227, %v7293
    %v7296 = vadd.f32 %v7228, %v7293
    %v7297 = vadd.f32 %v7229, %v7293
    %v7298 = vadd.f32 %v7230, %v7293
    %v7299 = vadd.f32 %v7231, %v7293
    %v7300 = vadd.f32 %v7232, %v7293
    %v7301 = vadd.f32 %v7233, %v7293
    %v7302 = vadd.f32 %v7234, %v7293
    %v7303 = vadd.f32 %v7235, %v7293
    %v7304 = vadd.f32 %v7236, %v7293
    %v7305 = vadd.f32 %v7237, %v7293
    %v7306 = vadd.f32 %v7238, %v7293
    %v7307 = vadd.f32 %v7239, %v7293
    %v7308 = vadd.f32 %v7240, %v7293
    %v7309 = vadd.f32 %v7241, %v7293
    %v7310 = vadd.f32 %v7242, %v7293
    %v7311 = vadd.f32 %v7243, %v7293
    %v7312 = vadd.f32 %v7244, %v7293
    %v7313 = vadd.f32 %v7245, %v7293
    %v7314 = vadd.f32 %v7246, %v7293
    %v7315 = vadd.f32 %v7247, %v7293
    %v7316 = vadd.f32 %v7248, %v7293
    %v7317 = vadd.f32 %v7249, %v7293
    %v7318 = vadd.f32 %v7250, %v7293
    %v7319 = vadd.f32 %v7251, %v7293
    %v7320 = vadd.f32 %v7252, %v7293
    %v7321 = vadd.f32 %v7253, %v7293
    %v7322 = vadd.f32 %v7254, %v7293
    %v7323 = vadd.f32 %v7255, %v7293
    %v7324 = vadd.f32 %v7256, %v7293
    %v7325 = vadd.f32 %v7257, %v7293
    %v7326 = vadd.f32 %v7258, %v7293
    %v7327 = vadd.f32 %v7259, %v7293
    %v7328 = vadd.f32 %v7260, %v7293
    %v7329 = vadd.f32 %v7261, %v7293
    %v7330 = vadd.f32 %v7262, %v7293
    %v7331 = vadd.f32 %v7263, %v7293
    %v7332 = vadd.f32 %v7264, %v7293
    %v7333 = vadd.f32 %v7265, %v7293
    %v7334 = vadd.f32 %v7266, %v7293
    %v7335 = vadd.f32 %v7267, %v7293
    %v7336 = vadd.f32 %v7268, %v7293
    %v7337 = vadd.f32 %v7269, %v7293
    %v7338 = vadd.f32 %v7270, %v7293
    %v7339 = vadd.f32 %v7271, %v7293
    %v7340 = vadd.f32 %v7272, %v7293
    %v7341 = vadd.f32 %v7273, %v7293
    %v7342 = vadd.f32 %v7274, %v7293
    %v7343 = vadd.f32 %v7275, %v7293
    %v7344 = vadd.f32 %v7276, %v7293
    %v7345 = vadd.f32 %v7277, %v7293
    %v7346 = vadd.f32 %v7278, %v7293
    %v7347 = vadd.f32 %v7279, %v7293
    %v7348 = vadd.f32 %v7280, %v7293
    %v7349 = vadd.f32 %v7281, %v7293
    %v7350 = vadd.f32 %v7282, %v7293
    %v7351 = vadd.f32 %v7283, %v7293
    %v7352 = vadd.f32 %v7284, %v7293
    %v7353 = vadd.f32 %v7285, %v7293
    %v7354 = vadd.f32 %v7286, %v7293
    %v7355 = vadd.f32 %v7287, %v7293
    %v7356 = vadd.f32 %v7288, %v7293
    %v7357 = vadd.f32 %v7289, %v7293
    %v7358 = vadd.f32 %v7290, %v7293
    %v7359 = vld [vmem:[#allocation3] sm:$0xff]
    %v7360 = vld [vmem:[#allocation3 + $0x8] sm:$0xff]
    %v7361 = vld [vmem:[#allocation3 + $0x10] sm:$0xff]
    %v7362 = vld [vmem:[#allocation3 + $0x18] sm:$0xff]
    %v7363 = vld [vmem:[#allocation3 + $0x20] sm:$0xff]
    %v7364 = vld [vmem:[#allocation3 + $0x28] sm:$0xff]
    %v7365 = vld [vmem:[#allocation3 + $0x30] sm:$0xff]
    %v7366 = vld [vmem:[#allocation3 + $0x38] sm:$0xff]
    %v7367 = vld [vmem:[#allocation3 + $0x40] sm:$0xff]
    %v7368 = vld [vmem:[#allocation3 + $0x48] sm:$0xff]
    %v7369 = vld [vmem:[#allocation3 + $0x50] sm:$0xff]
    %v7370 = vld [vmem:[#allocation3 + $0x58] sm:$0xff]
    %v7371 = vld [vmem:[#allocation3 + $0x60] sm:$0xff]
    %v7372 = vld [vmem:[#allocation3 + $0x68] sm:$0xff]
    %v7373 = vld [vmem:[#allocation3 + $0x70] sm:$0xff]
    %v7374 = vld [vmem:[#allocation3 + $0x78] sm:$0xff]
    %v7375 = vld [vmem:[#allocation3 + $0x80] sm:$0xff]
    %v7376 = vld [vmem:[#allocation3 + $0x88] sm:$0xff]
    %v7377 = vld [vmem:[#allocation3 + $0x90] sm:$0xff]
    %v7378 = vld [vmem:[#allocation3 + $0x98] sm:$0xff]
    %v7379 = vld [vmem:[#allocation3 + $0xa0] sm:$0xff]
    %v7380 = vld [vmem:[#allocation3 + $0xa8] sm:$0xff]
    %v7381 = vld [vmem:[#allocation3 + $0xb0] sm:$0xff]
    %v7382 = vld [vmem:[#allocation3 + $0xb8] sm:$0xff]
    %v7383 = vld [vmem:[#allocation3 + $0xc0] sm:$0xff]
    %v7384 = vld [vmem:[#allocation3 + $0xc8] sm:$0xff]
    %v7385 = vld [vmem:[#allocation3 + $0xd0] sm:$0xff]
    %v7386 = vld [vmem:[#allocation3 + $0xd8] sm:$0xff]
    %v7387 = vld [vmem:[#allocation3 + $0xe0] sm:$0xff]
    %v7388 = vld [vmem:[#allocation3 + $0xe8] sm:$0xff]
    %v7389 = vld [vmem:[#allocation3 + $0xf0] sm:$0xff]
    %v7390 = vld [vmem:[#allocation3 + $0xf8] sm:$0xff]
    %v7391 = vld [vmem:[#allocation3 + $0x100] sm:$0xff]
    %v7392 = vld [vmem:[#allocation3 + $0x108] sm:$0xff]
    %v7393 = vld [vmem:[#allocation3 + $0x110] sm:$0xff]
    %v7394 = vld [vmem:[#allocation3 + $0x118] sm:$0xff]
    %v7395 = vld [vmem:[#allocation3 + $0x120] sm:$0xff]
    %v7396 = vld [vmem:[#allocation3 + $0x128] sm:$0xff]
    %v7397 = vld [vmem:[#allocation3 + $0x130] sm:$0xff]
    %v7398 = vld [vmem:[#allocation3 + $0x138] sm:$0xff]
    %v7399 = vld [vmem:[#allocation3 + $0x140] sm:$0xff]
    %v7400 = vld [vmem:[#allocation3 + $0x148] sm:$0xff]
    %v7401 = vld [vmem:[#allocation3 + $0x150] sm:$0xff]
    %v7402 = vld [vmem:[#allocation3 + $0x158] sm:$0xff]
    %v7403 = vld [vmem:[#allocation3 + $0x160] sm:$0xff]
    %v7404 = vld [vmem:[#allocation3 + $0x168] sm:$0xff]
    %v7405 = vld [vmem:[#allocation3 + $0x170] sm:$0xff]
    %v7406 = vld [vmem:[#allocation3 + $0x178] sm:$0xff]
    %v7407 = vld [vmem:[#allocation3 + $0x180] sm:$0xff]
    %v7408 = vld [vmem:[#allocation3 + $0x188] sm:$0xff]
    %v7409 = vld [vmem:[#allocation3 + $0x190] sm:$0xff]
    %v7410 = vld [vmem:[#allocation3 + $0x198] sm:$0xff]
    %v7411 = vld [vmem:[#allocation3 + $0x1a0] sm:$0xff]
    %v7412 = vld [vmem:[#allocation3 + $0x1a8] sm:$0xff]
    %v7413 = vld [vmem:[#allocation3 + $0x1b0] sm:$0xff]
    %v7414 = vld [vmem:[#allocation3 + $0x1b8] sm:$0xff]
    %v7415 = vld [vmem:[#allocation3 + $0x1c0] sm:$0xff]
    %v7416 = vld [vmem:[#allocation3 + $0x1c8] sm:$0xff]
    %v7417 = vld [vmem:[#allocation3 + $0x1d0] sm:$0xff]
    %v7418 = vld [vmem:[#allocation3 + $0x1d8] sm:$0xff]
    %v7419 = vld [vmem:[#allocation3 + $0x1e0] sm:$0xff]
    %v7420 = vld [vmem:[#allocation3 + $0x1e8] sm:$0xff]
    %v7421 = vld [vmem:[#allocation3 + $0x1f0] sm:$0xff]
    %v7422 = vld [vmem:[#allocation3 + $0x1f8] sm:$0xff]
    %v7423 = vadd.f32 %v7295, %v7359
    %v7424 = vadd.f32 %v7296, %v7360
    %v7425 = vadd.f32 %v7297, %v7361
    %v7426 = vadd.f32 %v7298, %v7362
    %v7427 = vadd.f32 %v7299, %v7363
    %v7428 = vadd.f32 %v7300, %v7364
    %v7429 = vadd.f32 %v7301, %v7365
    %v7430 = vadd.f32 %v7302, %v7366
    %v7431 = vadd.f32 %v7303, %v7367
    %v7432 = vadd.f32 %v7304, %v7368
    %v7433 = vadd.f32 %v7305, %v7369
    %v7434 = vadd.f32 %v7306, %v7370
    %v7435 = vadd.f32 %v7307, %v7371
    %v7436 = vadd.f32 %v7308, %v7372
    %v7437 = vadd.f32 %v7309, %v7373
    %v7438 = vadd.f32 %v7310, %v7374
    %v7439 = vadd.f32 %v7311, %v7375
    %v7440 = vadd.f32 %v7312, %v7376
    %v7441 = vadd.f32 %v7313, %v7377
    %v7442 = vadd.f32 %v7314, %v7378
    %v7443 = vadd.f32 %v7315, %v7379
    %v7444 = vadd.f32 %v7316, %v7380
    %v7445 = vadd.f32 %v7317, %v7381
    %v7446 = vadd.f32 %v7318, %v7382
    %v7447 = vadd.f32 %v7319, %v7383
    %v7448 = vadd.f32 %v7320, %v7384
    %v7449 = vadd.f32 %v7321, %v7385
    %v7450 = vadd.f32 %v7322, %v7386
    %v7451 = vadd.f32 %v7323, %v7387
    %v7452 = vadd.f32 %v7324, %v7388
    %v7453 = vadd.f32 %v7325, %v7389
    %v7454 = vadd.f32 %v7326, %v7390
    %v7455 = vadd.f32 %v7327, %v7391
    %v7456 = vadd.f32 %v7328, %v7392
    %v7457 = vadd.f32 %v7329, %v7393
    %v7458 = vadd.f32 %v7330, %v7394
    %v7459 = vadd.f32 %v7331, %v7395
    %v7460 = vadd.f32 %v7332, %v7396
    %v7461 = vadd.f32 %v7333, %v7397
    %v7462 = vadd.f32 %v7334, %v7398
    %v7463 = vadd.f32 %v7335, %v7399
    %v7464 = vadd.f32 %v7336, %v7400
    %v7465 = vadd.f32 %v7337, %v7401
    %v7466 = vadd.f32 %v7338, %v7402
    %v7467 = vadd.f32 %v7339, %v7403
    %v7468 = vadd.f32 %v7340, %v7404
    %v7469 = vadd.f32 %v7341, %v7405
    %v7470 = vadd.f32 %v7342, %v7406
    %v7471 = vadd.f32 %v7343, %v7407
    %v7472 = vadd.f32 %v7344, %v7408
    %v7473 = vadd.f32 %v7345, %v7409
    %v7474 = vadd.f32 %v7346, %v7410
    %v7475 = vadd.f32 %v7347, %v7411
    %v7476 = vadd.f32 %v7348, %v7412
    %v7477 = vadd.f32 %v7349, %v7413
    %v7478 = vadd.f32 %v7350, %v7414
    %v7479 = vadd.f32 %v7351, %v7415
    %v7480 = vadd.f32 %v7352, %v7416
    %v7481 = vadd.f32 %v7353, %v7417
    %v7482 = vadd.f32 %v7354, %v7418
    %v7483 = vadd.f32 %v7355, %v7419
    %v7484 = vadd.f32 %v7356, %v7420
    %v7485 = vadd.f32 %v7357, %v7421
    %v7486 = vadd.f32 %v7358, %v7422
    %v7487 = vmax.f32 %v7423, 0.0
    %v7488 = vmax.f32 %v7424, 0.0
    %v7489 = vmax.f32 %v7425, 0.0
    %v7490 = vmax.f32 %v7426, 0.0
    %v7491 = vmax.f32 %v7427, 0.0
    %v7492 = vmax.f32 %v7428, 0.0
    %v7493 = vmax.f32 %v7429, 0.0
    %v7494 = vmax.f32 %v7430, 0.0
    %v7495 = vmax.f32 %v7431, 0.0
    %v7496 = vmax.f32 %v7432, 0.0
    %v7497 = vmax.f32 %v7433, 0.0
    %v7498 = vmax.f32 %v7434, 0.0
    %v7499 = vmax.f32 %v7435, 0.0
    %v7500 = vmax.f32 %v7436, 0.0
    %v7501 = vmax.f32 %v7437, 0.0
    %v7502 = vmax.f32 %v7438, 0.0
    %v7503 = vmax.f32 %v7439, 0.0
    %v7504 = vmax.f32 %v7440, 0.0
    %v7505 = vmax.f32 %v7441, 0.0
    %v7506 = vmax.f32 %v7442, 0.0
    %v7507 = vmax.f32 %v7443, 0.0
    %v7508 = vmax.f32 %v7444, 0.0
    %v7509 = vmax.f32 %v7445, 0.0
    %v7510 = vmax.f32 %v7446, 0.0
    %v7511 = vmax.f32 %v7447, 0.0
    %v7512 = vmax.f32 %v7448, 0.0
    %v7513 = vmax.f32 %v7449, 0.0
    %v7514 = vmax.f32 %v7450, 0.0
    %v7515 = vmax.f32 %v7451, 0.0
    %v7516 = vmax.f32 %v7452, 0.0
    %v7517 = vmax.f32 %v7453, 0.0
    %v7518 = vmax.f32 %v7454, 0.0
    %v7519 = vmax.f32 %v7455, 0.0
    %v7520 = vmax.f32 %v7456, 0.0
    %v7521 = vmax.f32 %v7457, 0.0
    %v7522 = vmax.f32 %v7458, 0.0
    %v7523 = vmax.f32 %v7459, 0.0
    %v7524 = vmax.f32 %v7460, 0.0
    %v7525 = vmax.f32 %v7461, 0.0
    %v7526 = vmax.f32 %v7462, 0.0
    %v7527 = vmax.f32 %v7463, 0.0
    %v7528 = vmax.f32 %v7464, 0.0
    %v7529 = vmax.f32 %v7465, 0.0
    %v7530 = vmax.f32 %v7466, 0.0
    %v7531 = vmax.f32 %v7467, 0.0
    %v7532 = vmax.f32 %v7468, 0.0
    %v7533 = vmax.f32 %v7469, 0.0
    %v7534 = vmax.f32 %v7470, 0.0
    %v7535 = vmax.f32 %v7471, 0.0
    %v7536 = vmax.f32 %v7472, 0.0
    %v7537 = vmax.f32 %v7473, 0.0
    %v7538 = vmax.f32 %v7474, 0.0
    %v7539 = vmax.f32 %v7475, 0.0
    %v7540 = vmax.f32 %v7476, 0.0
    %v7541 = vmax.f32 %v7477, 0.0
    %v7542 = vmax.f32 %v7478, 0.0
    %v7543 = vmax.f32 %v7479, 0.0
    %v7544 = vmax.f32 %v7480, 0.0
    %v7545 = vmax.f32 %v7481, 0.0
    %v7546 = vmax.f32 %v7482, 0.0
    %v7547 = vmax.f32 %v7483, 0.0
    %v7548 = vmax.f32 %v7484, 0.0
    %v7549 = vmax.f32 %v7485, 0.0
    %v7550 = vmax.f32 %v7486, 0.0
    %7551 = vst [vmem:[#allocation8] sm:$0xff] %v7487
    %7552 = vst [vmem:[#allocation8 + $0x8] sm:$0xff] %v7488
    %7553 = vst [vmem:[#allocation8 + $0x10] sm:$0xff] %v7489
    %7554 = vst [vmem:[#allocation8 + $0x18] sm:$0xff] %v7490
    %7555 = vst [vmem:[#allocation8 + $0x20] sm:$0xff] %v7491
    %7556 = vst [vmem:[#allocation8 + $0x28] sm:$0xff] %v7492
    %7557 = vst [vmem:[#allocation8 + $0x30] sm:$0xff] %v7493
    %7558 = vst [vmem:[#allocation8 + $0x38] sm:$0xff] %v7494
    %7559 = vst [vmem:[#allocation8 + $0x40] sm:$0xff] %v7495
    %7560 = vst [vmem:[#allocation8 + $0x48] sm:$0xff] %v7496
    %7561 = vst [vmem:[#allocation8 + $0x50] sm:$0xff] %v7497
    %7562 = vst [vmem:[#allocation8 + $0x58] sm:$0xff] %v7498
    %7563 = vst [vmem:[#allocation8 + $0x60] sm:$0xff] %v7499
    %7564 = vst [vmem:[#allocation8 + $0x68] sm:$0xff] %v7500
    %7565 = vst [vmem:[#allocation8 + $0x70] sm:$0xff] %v7501
    %7566 = vst [vmem:[#allocation8 + $0x78] sm:$0xff] %v7502
    %7567 = vst [vmem:[#allocation8 + $0x80] sm:$0xff] %v7503
    %7568 = vst [vmem:[#allocation8 + $0x88] sm:$0xff] %v7504
    %7569 = vst [vmem:[#allocation8 + $0x90] sm:$0xff] %v7505
    %7570 = vst [vmem:[#allocation8 + $0x98] sm:$0xff] %v7506
    %7571 = vst [vmem:[#allocation8 + $0xa0] sm:$0xff] %v7507
    %7572 = vst [vmem:[#allocation8 + $0xa8] sm:$0xff] %v7508
    %7573 = vst [vmem:[#allocation8 + $0xb0] sm:$0xff] %v7509
    %7574 = vst [vmem:[#allocation8 + $0xb8] sm:$0xff] %v7510
    %7575 = vst [vmem:[#allocation8 + $0xc0] sm:$0xff] %v7511
    %7576 = vst [vmem:[#allocation8 + $0xc8] sm:$0xff] %v7512
    %7577 = vst [vmem:[#allocation8 + $0xd0] sm:$0xff] %v7513
    %7578 = vst [vmem:[#allocation8 + $0xd8] sm:$0xff] %v7514
    %7579 = vst [vmem:[#allocation8 + $0xe0] sm:$0xff] %v7515
    %7580 = vst [vmem:[#allocation8 + $0xe8] sm:$0xff] %v7516
    %7581 = vst [vmem:[#allocation8 + $0xf0] sm:$0xff] %v7517
    %7582 = vst [vmem:[#allocation8 + $0xf8] sm:$0xff] %v7518
    %7583 = vst [vmem:[#allocation8 + $0x100] sm:$0xff] %v7519
    %7584 = vst [vmem:[#allocation8 + $0x108] sm:$0xff] %v7520
    %7585 = vst [vmem:[#allocation8 + $0x110] sm:$0xff] %v7521
    %7586 = vst [vmem:[#allocation8 + $0x118] sm:$0xff] %v7522
    %7587 = vst [vmem:[#allocation8 + $0x120] sm:$0xff] %v7523
    %7588 = vst [vmem:[#allocation8 + $0x128] sm:$0xff] %v7524
    %7589 = vst [vmem:[#allocation8 + $0x130] sm:$0xff] %v7525
    %7590 = vst [vmem:[#allocation8 + $0x138] sm:$0xff] %v7526
    %7591 = vst [vmem:[#allocation8 + $0x140] sm:$0xff] %v7527
    %7592 = vst [vmem:[#allocation8 + $0x148] sm:$0xff] %v7528
    %7593 = vst [vmem:[#allocation8 + $0x150] sm:$0xff] %v7529
    %7594 = vst [vmem:[#allocation8 + $0x158] sm:$0xff] %v7530
    %7595 = vst [vmem:[#allocation8 + $0x160] sm:$0xff] %v7531
    %7596 = vst [vmem:[#allocation8 + $0x168] sm:$0xff] %v7532
    %7597 = vst [vmem:[#allocation8 + $0x170] sm:$0xff] %v7533
    %7598 = vst [vmem:[#allocation8 + $0x178] sm:$0xff] %v7534
    %7599 = vst [vmem:[#allocation8 + $0x180] sm:$0xff] %v7535
    %7600 = vst [vmem:[#allocation8 + $0x188] sm:$0xff] %v7536
    %7601 = vst [vmem:[#allocation8 + $0x190] sm:$0xff] %v7537
    %7602 = vst [vmem:[#allocation8 + $0x198] sm:$0xff] %v7538
    %7603 = vst [vmem:[#allocation8 + $0x1a0] sm:$0xff] %v7539
    %7604 = vst [vmem:[#allocation8 + $0x1a8] sm:$0xff] %v7540
    %7605 = vst [vmem:[#allocation8 + $0x1b0] sm:$0xff] %v7541
    %7606 = vst [vmem:[#allocation8 + $0x1b8] sm:$0xff] %v7542
    %7607 = vst [vmem:[#allocation8 + $0x1c0] sm:$0xff] %v7543
    %7608 = vst [vmem:[#allocation8 + $0x1c8] sm:$0xff] %v7544
    %7609 = vst [vmem:[#allocation8 + $0x1d0] sm:$0xff] %v7545
    %7610 = vst [vmem:[#allocation8 + $0x1d8] sm:$0xff] %v7546
    %7611 = vst [vmem:[#allocation8 + $0x1e0] sm:$0xff] %v7547
    %7612 = vst [vmem:[#allocation8 + $0x1e8] sm:$0xff] %v7548
    %7613 = vst [vmem:[#allocation8 + $0x1f0] sm:$0xff] %v7549
    %7614 = vst [vmem:[#allocation8 + $0x1f8] sm:$0xff] %v7550
    // Predicated region
    $region50: #{tpu_custom_call.1} parent=1 // pred_check
      _
    $region51: #{tpu_custom_call.1} parent=1 // pred_check_branch
      %7616 = sbr.rel (0) target = $region53
    $region52: #{tpu_custom_call.1} parent=1 // pred_region
      %7618 = vsyncadd [#allocation5], 0
      %s7619 = sshll.u32 [#allocation8], 4
      %s7620 = int_to_ptr.vmem [resolvable:$true] %s7619
      %s7621 = sshll.u32 %s10, 4
      %s7622 = int_to_ptr.hbm [resolvable:$true] %s7621
      %7627 = dma.vmem_to_hbm [thread:$0]  %s7620, 8192, %s7622, [#allocation5], 128, 128, 8
    $region53: #{tpu_custom_call.1} parent=1 // pred_fallthru
      _
    // Predicated region
    $region54: #{tpu_custom_call.1} parent=1 // pred_check
      _
    $region55: #{tpu_custom_call.1} parent=1 // pred_check_branch
      %7629 = sbr.rel (0) target = $region57
    $region56: #{tpu_custom_call.1} parent=1 // pred_region
      %7631 = dma.done [#allocation5], 8192
    $region57: #{tpu_custom_call.1} parent=1 // pred_fallthru
      _
    %7632 = vsyncpa [#allocation4], 1
    %7633 = vsyncpa [#allocation7], 1
    %7634 = vsyncpa [#allocation5], 1

</llo_original>
